<compile_context>
chip_gen: v6e
topology: v6e:2x2x1
jax: 0.10.0
libtpu: 0.0.40
codegen_flags: <defaults>
</compile_context>

<pallas_src>
import math
from functools import partial

import numpy as np
import jax
import jax.numpy as jnp
from jax.experimental import pallas as pl
from jax.experimental.pallas import tpu as pltpu


def _align8(n):
    return ((n + 7) // 8) * 8


# ----------------------------------------------------------------------------
# In-kernel helpers (only ops with guaranteed Mosaic lowerings)
# ----------------------------------------------------------------------------

def _erf(x):
    """Abramowitz & Stegun 7.1.26 polynomial erf, |error| <= 1.5e-7 (f32-exact)."""
    a1, a2, a3, a4, a5 = (0.254829592, -0.284496736, 1.421413741,
                          -1.453152027, 1.061405429)
    p = 0.3275911
    ax = jnp.abs(x)
    t = 1.0 / (1.0 + p * ax)
    poly = ((((a5 * t + a4) * t + a3) * t + a2) * t + a1) * t
    y = 1.0 - poly * jnp.exp(-ax * ax)
    return jnp.where(x < 0, -y, y)


def _gelu(x):
    # torch.nn.GELU() (exact erf variant), accurate to float32 precision.
    return 0.5 * x * (1.0 + _erf(x * (1.0 / math.sqrt(2.0))))


def _dwconv3x3(xpad, wts, out_h, out_w):
    """Depthwise 3x3 conv on a zero-haloed (>= out_h+2, >= out_w+2, C) f32 map.

    Column-shifted slices (sublane-misaligned) are hoisted: one per column tap,
    reused for the 3 row taps (row shifts on the major dim are cheap).
    wts: (9, C) f32, row-major taps (ki*3 + kj)."""
    acc = None
    for dj in range(3):
        xj = xpad[:, dj:dj + out_w, :]
        for di in range(3):
            term = xj[di:di + out_h, :, :] * wts[di * 3 + dj]
            acc = term if acc is None else acc + term
    return acc


# ----------------------------------------------------------------------------
# Fused per-batch kernel
# ----------------------------------------------------------------------------

def _make_lea_kernel(h, w, C, num_heads, scale):
    N = h * w
    Hp, Wp = h + 4, _align8(w + 4)        # 2-pixel halo for conv1/conv2, 8-aligned width
    Hp2, Wp2 = h + 2, _align8(w + 2)      # 1-pixel halo for the v-upsample conv
    D = C // num_heads
    bf16 = jnp.bfloat16

    def kernel(xp_ref, wv_ref,
               c1w_ref, c1s_ref, c1o_ref,
               c2w_ref, c2s_ref, c2o_ref,
               pool_ref, upk_ref, uppad_ref, mask_ref,
               vuw_ref, vus_ref, vuo_ref,
               pw_ref, pb_ref,
               o_ref, attn_acc):
        # ---- proj_v on the zero-padded bf16 input (bias-free -> halo stays 0) ----
        V = jnp.dot(xp_ref[0], wv_ref[...],
                    preferred_element_type=jnp.float32).reshape(Hp, Wp, C)
        v_tok = V[2:2 + h, 2:2 + w, :].reshape(N, C).astype(bf16)     # attention "v"

        # ---- conv1 (depthwise 3x3, no bias) + BN1 on the (h+2, w+2) extended domain
        #      so conv2's zero halo comes for free ----
        c1 = _dwconv3x3(V, c1w_ref[...], h + 2, w + 2)
        c1 = c1 * c1s_ref[0] + c1o_ref[0]

        # ---- q = AvgPool_sr(conv1+BN) of the interior (pool BEFORE gelu, as in the
        #      reference); pooling is an MXU matmul; scale folded in once here ----
        c1_int = c1[1:1 + h, 1:1 + w, :].reshape(N, C)
        q = jnp.dot(pool_ref[...], c1_int.astype(bf16),
                    preferred_element_type=jnp.float32) * scale        # (Ns, C)

        # ---- GELU, then re-zero the 1-pixel ring (precomputed mask) so conv2 sees
        #      exact zero padding ----
        g = _gelu(c1) * mask_ref[...]

        # ---- conv2 (depthwise 3x3, no bias) + BN2 ----
        c2 = _dwconv3x3(g, c2w_ref[...], h, w)
        c2 = c2 * c2s_ref[0] + c2o_ref[0]
        c2f = c2.reshape(N, C)

        # ---- k = AvgPool_sr(conv2+BN); skip = gelu(conv2+BN) ----
        k = jnp.dot(pool_ref[...], c2f.astype(bf16),
                    preferred_element_type=jnp.float32)                # (Ns, C)
        skip = _gelu(c2f)                                              # (N, C) f32

        # ---- bilinear key upsample moved onto K (upsample is PRE-softmax in the
        #      reference and linear):  Upsample(q k^T) == q (Upsample k)^T ----
        k_up = jnp.dot(upk_ref[...], k.astype(bf16),
                       preferred_element_type=jnp.float32)             # (N, C)

        # ---- per-head attention; heads write disjoint lane slices of the scratch
        #      (D=16 contractions: accepted MXU under-use, kernel is VPU/XLU bound) ----
        for hd in range(num_heads):
            sl = slice(hd * D, (hd + 1) * D)
            qh = q[:, sl].astype(bf16)                                 # (Ns, D)
            kh = k_up[:, sl].astype(bf16)                              # (N, D)
            s = jax.lax.dot_general(qh, kh, (((1,), (1,)), ((), ())),
                                    preferred_element_type=jnp.float32)  # (Ns, N)
            s = s - jnp.max(s, axis=-1, keepdims=True)
            e = jnp.exp(s)
            p = e * pl.reciprocal(jnp.sum(e, axis=-1, keepdims=True), approx=True)
            attn_acc[:, sl] = jnp.dot(p.astype(bf16), v_tok[:, sl],
                                      preferred_element_type=jnp.float32)  # (Ns, D)

        # ---- v_upsample: bilinear upsample with the 1-pixel zero halo baked into
        #      the matrix, then depthwise 3x3 conv (no bias) + BN affine ----
        U = jnp.dot(uppad_ref[...], attn_acc[...].astype(bf16),
                    preferred_element_type=jnp.float32).reshape(Hp2, Wp2, C)
        y = _dwconv3x3(U, vuw_ref[...], h, w)
        y = y * vus_ref[0] + vuo_ref[0]

        # ---- residual with the skip path, then the output projection (with bias) ----
        y = y.reshape(N, C) + skip
        out = jnp.dot(y.astype(bf16), pw_ref[...],
                      preferred_element_type=jnp.float32) + pb_ref[0]
        o_ref[...] = out.reshape(1, N, C).astype(o_ref.dtype)

    return kernel


# ----------------------------------------------------------------------------
# Host-side constants (interpolation / pooling matrices, bf16; halo mask, f32)
# ----------------------------------------------------------------------------

def bilinear_matrix(out_size, in_size):
    """1-D matrix matching nn.Upsample(scale_factor, mode='bilinear', align_corners=False)."""
    U = np.zeros((out_size, in_size), dtype=np.float64)
    scale = in_size / out_size
    for dst in range(out_size):
        src = max((dst + 0.5) * scale - 0.5, 0.0)
        i0 = min(int(np.floor(src)), in_size - 1)
        i1 = min(i0 + 1, in_size - 1)
        lam = src - i0
        U[dst, i0] += 1.0 - lam
        U[dst, i1] += lam
    return U


def make_constants(reso, sr, dim):
    h = w = reso
    hs = ws = reso // sr
    N, Ns = h * w, hs * ws
    U1 = bilinear_matrix(h, hs)
    kron_u = np.kron(U1, U1)                                    # (N, Ns) key upsample
    # v-upsample matrix with the conv's 1-pixel zero halo (and 8-lane width
    # alignment) baked into zero rows.
    Hp2, Wp2 = h + 2, _align8(w + 2)
    kron_pad = np.zeros((Hp2 * Wp2, Ns))
    for i in range(h):
        kron_pad[(i + 1) * Wp2 + 1:(i + 1) * Wp2 + 1 + w, :] = kron_u[i * w:(i + 1) * w, :]
    # AvgPool2d(kernel_size=sr) as a matmul (rows sum to exactly 1)
    P1 = np.zeros((hs, h))
    for a in range(hs):
        P1[a, a * sr:(a + 1) * sr] = 1.0 / sr
    pool = np.kron(P1, P1)                                      # (Ns, N)
    # interior mask: zeroes the 1-pixel ring of the extended conv1 output
    mask2d = np.zeros((h + 2, w + 2), np.float32)
    mask2d[1:1 + h, 1:1 + w] = 1.0
    mask = np.repeat(mask2d[:, :, None], dim, axis=2)
    return (jnp.asarray(kron_u, jnp.bfloat16),
            jnp.asarray(kron_pad, jnp.bfloat16),
            jnp.asarray(pool, jnp.bfloat16),
            jnp.asarray(mask, jnp.float32))


def make_params(key, dim):
    keys = iter(jax.random.split(key, 32))

    def nrm(shape, std=0.02):
        return std * jax.random.normal(next(keys), shape, jnp.float32)

    def bn(c):  # eval-mode BatchNorm folded to (scale, offset)
        gamma = 1.0 + 0.1 * jax.random.normal(next(keys), (c,), jnp.float32)
        beta = 0.05 * jax.random.normal(next(keys), (c,), jnp.float32)
        mean = 0.1 * jax.random.normal(next(keys), (c,), jnp.float32)
        var = 1.0 + 0.1 * jnp.abs(jax.random.normal(next(keys), (c,), jnp.float32))
        s = gamma / jnp.sqrt(var + 1e-5)
        return s, beta - mean * s

    p = {}
    p['wv'] = nrm((dim, dim)).astype(jnp.bfloat16)              # proj_v (qkv_bias=False)
    p['c1_w'] = nrm((9, dim)); p['c1_s'], p['c1_o'] = bn(dim)   # conv1 + BN1
    p['c2_w'] = nrm((9, dim)); p['c2_s'], p['c2_o'] = bn(dim)   # conv2 + BN2
    p['vu_w'] = nrm((9, dim)); p['vu_s'], p['vu_o'] = bn(dim)   # v_upsample conv + BN
    p['proj_w'] = nrm((dim, dim)).astype(jnp.bfloat16)
    p['proj_b'] = nrm((dim,))
    return p


# ----------------------------------------------------------------------------
# Forward wrapper (ONE pallas_call)
# ----------------------------------------------------------------------------

def lea_forward(x, params, consts, *, num_heads, sr, reso):
    B, N, C = x.shape
    h = w = reso
    hs = reso // sr
    Ns = hs * hs
    Hp, Wp = h + 4, _align8(w + 4)
    Hp2, Wp2 = h + 2, _align8(w + 2)
    upk, uppad, pool, mask = consts

    # Single wrapper-side zero pad of the (bf16) input: 2-pixel conv halo, width
    # aligned to 8 sublanes.  proj_v is bias-free, so the halo stays zero after
    # the in-kernel x @ Wv matmul and both depthwise convs get exact zero padding.
    xs = x.astype(jnp.bfloat16).reshape(B, h, w, C)
    xp = jnp.pad(xs, ((0, 0), (2, 2), (2, Wp - w - 2), (0, 0))).reshape(B, Hp * Wp, C)

    inv2 = lambda b: (0, 0)       # grid-invariant constants
    inv3 = lambda b: (0, 0, 0)

    out = pl.pallas_call(
        _make_lea_kernel(h, w, C, num_heads, C ** (-0.5)),   # module uses dim**-0.5
        out_shape=jax.ShapeDtypeStruct((B, N, C), jnp.float32),
        grid=(B,),
        in_specs=[
            pl.BlockSpec((1, Hp * Wp, C), lambda b: (b, 0, 0)),   # padded bf16 x
            pl.BlockSpec((C, C), inv2),                           # proj_v weight
            pl.BlockSpec((9, C), inv2),                           # conv1 weight
            pl.BlockSpec((1, C), inv2),                           # BN1 scale
            pl.BlockSpec((1, C), inv2),                           # BN1 offset
            pl.BlockSpec((9, C), inv2),                           # conv2 weight
            pl.BlockSpec((1, C), inv2),                           # BN2 scale
            pl.BlockSpec((1, C), inv2),                           # BN2 offset
            pl.BlockSpec((Ns, N), inv2),                          # AvgPool matrix
            pl.BlockSpec((N, Ns), inv2),                          # key-upsample matrix
            pl.BlockSpec((Hp2 * Wp2, Ns), inv2),                  # haloed v-upsample matrix
            pl.BlockSpec((h + 2, w + 2, C), inv3),                # interior mask
            pl.BlockSpec((9, C), inv2),                           # v_upsample conv weight
            pl.BlockSpec((1, C), inv2),                           # v_upsample BN scale
            pl.BlockSpec((1, C), inv2),                           # v_upsample BN offset
            pl.BlockSpec((C, C), inv2),                           # proj weight
            pl.BlockSpec((1, C), inv2),                           # proj bias
        ],
        out_specs=pl.BlockSpec((1, N, C), lambda b: (b, 0, 0)),
        scratch_shapes=[pltpu.VMEM((Ns, C), jnp.float32)],        # per-head attn output
        compiler_params=pltpu.CompilerParams(
            dimension_semantics=("parallel",)),                   # default VMEM budget ok
    )(xp, params['wv'],
      params['c1_w'], params['c1_s'].reshape(1, C), params['c1_o'].reshape(1, C),
      params['c2_w'], params['c2_s'].reshape(1, C), params['c2_o'].reshape(1, C),
      pool, upk, uppad, mask,
      params['vu_w'], params['vu_s'].reshape(1, C), params['vu_o'].reshape(1, C),
      params['proj_w'], params['proj_b'].reshape(1, C))
    return out


if __name__ == "__main__":
    # small, self-consistent shapes: dim=32, 16x16 feature map (N=256), 2 heads, sr=2
    B, dim, reso, num_heads, sr = 2, 32, 16, 2, 2
    N = reso * reso

    key = jax.random.PRNGKey(0)
    kx, kp = jax.random.split(key)
    x = jax.random.normal(kx, (B, N, dim), jnp.float32)
    params = make_params(kp, dim)
    consts = make_constants(reso, sr, dim)

    fwd = jax.jit(partial(lea_forward, num_heads=num_heads, sr=sr, reso=reso))
    out = fwd(x, params, consts)
    jax.block_until_ready(out)
    assert out.shape == (B, N, dim) and out.dtype == jnp.float32
    assert bool(jnp.all(jnp.isfinite(out)))
    print("KERNEL_OK")
</pallas_src>

<mosaic_0001>
module attributes {stable_mosaic.version = 11 : i64} {
  func.func @kernel(%arg0: i32, %arg1: memref<1x480x32xbf16, #tpu.memory_space<vmem>>, %arg2: memref<32x32xbf16, #tpu.memory_space<vmem>>, %arg3: memref<9x32xf32, #tpu.memory_space<vmem>>, %arg4: memref<1x32xf32, #tpu.memory_space<vmem>>, %arg5: memref<1x32xf32, #tpu.memory_space<vmem>>, %arg6: memref<9x32xf32, #tpu.memory_space<vmem>>, %arg7: memref<1x32xf32, #tpu.memory_space<vmem>>, %arg8: memref<1x32xf32, #tpu.memory_space<vmem>>, %arg9: memref<64x256xbf16, #tpu.memory_space<vmem>>, %arg10: memref<256x64xbf16, #tpu.memory_space<vmem>>, %arg11: memref<432x64xbf16, #tpu.memory_space<vmem>>, %arg12: memref<18x18x32xf32, #tpu.memory_space<vmem>>, %arg13: memref<9x32xf32, #tpu.memory_space<vmem>>, %arg14: memref<1x32xf32, #tpu.memory_space<vmem>>, %arg15: memref<1x32xf32, #tpu.memory_space<vmem>>, %arg16: memref<32x32xbf16, #tpu.memory_space<vmem>>, %arg17: memref<1x32xf32, #tpu.memory_space<vmem>>, %arg18: memref<1x256x32xf32, #tpu.memory_space<vmem>>, %arg19: memref<64x32xf32, #tpu.memory_space<vmem>>) attributes {dimension_semantics = [#tpu.dimension_semantics<parallel>], iteration_bounds = array<i64: 2>, scalar_prefetch = 0 : i64, scratch_operands = 1 : i64, tpu.core_type = #tpu.core_type<tc>, window_params = [{transform_indices = @transform_0, window_bounds = array<i64: 1, 480, 32>}, {pipeline_mode = #tpu.pipeline_mode<synchronous>, transform_indices = @transform_1, window_bounds = array<i64: 32, 32>}, {pipeline_mode = #tpu.pipeline_mode<synchronous>, transform_indices = @transform_2, window_bounds = array<i64: 9, 32>}, {pipeline_mode = #tpu.pipeline_mode<synchronous>, transform_indices = @transform_3, window_bounds = array<i64: 1, 32>}, {pipeline_mode = #tpu.pipeline_mode<synchronous>, transform_indices = @transform_4, window_bounds = array<i64: 1, 32>}, {pipeline_mode = #tpu.pipeline_mode<synchronous>, transform_indices = @transform_5, window_bounds = array<i64: 9, 32>}, {pipeline_mode = #tpu.pipeline_mode<synchronous>, transform_indices = @transform_6, window_bounds = array<i64: 1, 32>}, {pipeline_mode = #tpu.pipeline_mode<synchronous>, transform_indices = @transform_7, window_bounds = array<i64: 1, 32>}, {pipeline_mode = #tpu.pipeline_mode<synchronous>, transform_indices = @transform_8, window_bounds = array<i64: 64, 256>}, {pipeline_mode = #tpu.pipeline_mode<synchronous>, transform_indices = @transform_9, window_bounds = array<i64: 256, 64>}, {pipeline_mode = #tpu.pipeline_mode<synchronous>, transform_indices = @transform_10, window_bounds = array<i64: 432, 64>}, {pipeline_mode = #tpu.pipeline_mode<synchronous>, transform_indices = @transform_11, window_bounds = array<i64: 18, 18, 32>}, {pipeline_mode = #tpu.pipeline_mode<synchronous>, transform_indices = @transform_12, window_bounds = array<i64: 9, 32>}, {pipeline_mode = #tpu.pipeline_mode<synchronous>, transform_indices = @transform_13, window_bounds = array<i64: 1, 32>}, {pipeline_mode = #tpu.pipeline_mode<synchronous>, transform_indices = @transform_14, window_bounds = array<i64: 1, 32>}, {pipeline_mode = #tpu.pipeline_mode<synchronous>, transform_indices = @transform_15, window_bounds = array<i64: 32, 32>}, {pipeline_mode = #tpu.pipeline_mode<synchronous>, transform_indices = @transform_16, window_bounds = array<i64: 1, 32>}, {transform_indices = @transform_17, window_bounds = array<i64: 1, 256, 32>}]} {
    %c0 = arith.constant 0 : index
    %c0_0 = arith.constant 0 : index
    %c0_1 = arith.constant 0 : index
    %0 = vector.load %arg1[%c0, %c0_0, %c0_1] : memref<1x480x32xbf16, #tpu.memory_space<vmem>>, vector<1x480x32xbf16>
    %1 = vector.shape_cast %0 : vector<1x480x32xbf16> to vector<480x32xbf16>
    %c0_2 = arith.constant 0 : index
    %c0_3 = arith.constant 0 : index
    %2 = vector.load %arg2[%c0_2, %c0_3] : memref<32x32xbf16, #tpu.memory_space<vmem>>, vector<32x32xbf16>
    %cst = arith.constant dense<0.000000e+00> : vector<480x32xf32>
    %3 = tpu.matmul %1, %2, %cst {dimension_numbers = #tpu.dot_dimension_numbers<[1], [0], [0], [1], [0, 0, 1, 1], [], []>} : vector<480x32xbf16>, vector<32x32xbf16>, vector<480x32xf32> -> vector<480x32xf32>
    %4 = vector.shape_cast %3 : vector<480x32xf32> to vector<20x24x32xf32>
    %5 = vector.extract_strided_slice %4 {offsets = [2, 2, 0], sizes = [16, 16, 32], strides = [1, 1, 1]} : vector<20x24x32xf32> to vector<16x16x32xf32>
    %6 = vector.shape_cast %5 : vector<16x16x32xf32> to vector<256x32xf32>
    %7 = arith.truncf %6 : vector<256x32xf32> to vector<256x32xbf16>
    %c0_4 = arith.constant 0 : index
    %c0_5 = arith.constant 0 : index
    %8 = vector.load %arg3[%c0_4, %c0_5] : memref<9x32xf32, #tpu.memory_space<vmem>>, vector<9x32xf32>
    %9 = vector.extract_strided_slice %4 {offsets = [0, 0, 0], sizes = [20, 18, 32], strides = [1, 1, 1]} : vector<20x24x32xf32> to vector<20x18x32xf32>
    %10 = vector.extract_strided_slice %9 {offsets = [0, 0, 0], sizes = [18, 18, 32], strides = [1, 1, 1]} : vector<20x18x32xf32> to vector<18x18x32xf32>
    %11 = vector.extract_strided_slice %8 {offsets = [0, 0], sizes = [1, 32], strides = [1, 1]} : vector<9x32xf32> to vector<1x32xf32>
    %12 = vector.shape_cast %11 : vector<1x32xf32> to vector<32xf32>
    %13 = vector.shape_cast %12 : vector<32xf32> to vector<1x1x32xf32>
    %14 = vector.broadcast %13 : vector<1x1x32xf32> to vector<18x18x32xf32>
    %15 = arith.mulf %10, %14 : vector<18x18x32xf32>
    %16 = vector.extract_strided_slice %9 {offsets = [1, 0, 0], sizes = [18, 18, 32], strides = [1, 1, 1]} : vector<20x18x32xf32> to vector<18x18x32xf32>
    %17 = vector.extract_strided_slice %8 {offsets = [3, 0], sizes = [1, 32], strides = [1, 1]} : vector<9x32xf32> to vector<1x32xf32>
    %18 = vector.shape_cast %17 : vector<1x32xf32> to vector<32xf32>
    %19 = vector.shape_cast %18 : vector<32xf32> to vector<1x1x32xf32>
    %20 = vector.broadcast %19 : vector<1x1x32xf32> to vector<18x18x32xf32>
    %21 = arith.mulf %16, %20 : vector<18x18x32xf32>
    %22 = arith.addf %15, %21 : vector<18x18x32xf32>
    %23 = vector.extract_strided_slice %9 {offsets = [2, 0, 0], sizes = [18, 18, 32], strides = [1, 1, 1]} : vector<20x18x32xf32> to vector<18x18x32xf32>
    %24 = vector.extract_strided_slice %8 {offsets = [6, 0], sizes = [1, 32], strides = [1, 1]} : vector<9x32xf32> to vector<1x32xf32>
    %25 = vector.shape_cast %24 : vector<1x32xf32> to vector<32xf32>
    %26 = vector.shape_cast %25 : vector<32xf32> to vector<1x1x32xf32>
    %27 = vector.broadcast %26 : vector<1x1x32xf32> to vector<18x18x32xf32>
    %28 = arith.mulf %23, %27 : vector<18x18x32xf32>
    %29 = arith.addf %22, %28 : vector<18x18x32xf32>
    %30 = vector.extract_strided_slice %4 {offsets = [0, 1, 0], sizes = [20, 18, 32], strides = [1, 1, 1]} : vector<20x24x32xf32> to vector<20x18x32xf32>
    %31 = vector.extract_strided_slice %30 {offsets = [0, 0, 0], sizes = [18, 18, 32], strides = [1, 1, 1]} : vector<20x18x32xf32> to vector<18x18x32xf32>
    %32 = vector.extract_strided_slice %8 {offsets = [1, 0], sizes = [1, 32], strides = [1, 1]} : vector<9x32xf32> to vector<1x32xf32>
    %33 = vector.shape_cast %32 : vector<1x32xf32> to vector<32xf32>
    %34 = vector.shape_cast %33 : vector<32xf32> to vector<1x1x32xf32>
    %35 = vector.broadcast %34 : vector<1x1x32xf32> to vector<18x18x32xf32>
    %36 = arith.mulf %31, %35 : vector<18x18x32xf32>
    %37 = arith.addf %29, %36 : vector<18x18x32xf32>
    %38 = vector.extract_strided_slice %30 {offsets = [1, 0, 0], sizes = [18, 18, 32], strides = [1, 1, 1]} : vector<20x18x32xf32> to vector<18x18x32xf32>
    %39 = vector.extract_strided_slice %8 {offsets = [4, 0], sizes = [1, 32], strides = [1, 1]} : vector<9x32xf32> to vector<1x32xf32>
    %40 = vector.shape_cast %39 : vector<1x32xf32> to vector<32xf32>
    %41 = vector.shape_cast %40 : vector<32xf32> to vector<1x1x32xf32>
    %42 = vector.broadcast %41 : vector<1x1x32xf32> to vector<18x18x32xf32>
    %43 = arith.mulf %38, %42 : vector<18x18x32xf32>
    %44 = arith.addf %37, %43 : vector<18x18x32xf32>
    %45 = vector.extract_strided_slice %30 {offsets = [2, 0, 0], sizes = [18, 18, 32], strides = [1, 1, 1]} : vector<20x18x32xf32> to vector<18x18x32xf32>
    %46 = vector.extract_strided_slice %8 {offsets = [7, 0], sizes = [1, 32], strides = [1, 1]} : vector<9x32xf32> to vector<1x32xf32>
    %47 = vector.shape_cast %46 : vector<1x32xf32> to vector<32xf32>
    %48 = vector.shape_cast %47 : vector<32xf32> to vector<1x1x32xf32>
    %49 = vector.broadcast %48 : vector<1x1x32xf32> to vector<18x18x32xf32>
    %50 = arith.mulf %45, %49 : vector<18x18x32xf32>
    %51 = arith.addf %44, %50 : vector<18x18x32xf32>
    %52 = vector.extract_strided_slice %4 {offsets = [0, 2, 0], sizes = [20, 18, 32], strides = [1, 1, 1]} : vector<20x24x32xf32> to vector<20x18x32xf32>
    %53 = vector.extract_strided_slice %52 {offsets = [0, 0, 0], sizes = [18, 18, 32], strides = [1, 1, 1]} : vector<20x18x32xf32> to vector<18x18x32xf32>
    %54 = vector.extract_strided_slice %8 {offsets = [2, 0], sizes = [1, 32], strides = [1, 1]} : vector<9x32xf32> to vector<1x32xf32>
    %55 = vector.shape_cast %54 : vector<1x32xf32> to vector<32xf32>
    %56 = vector.shape_cast %55 : vector<32xf32> to vector<1x1x32xf32>
    %57 = vector.broadcast %56 : vector<1x1x32xf32> to vector<18x18x32xf32>
    %58 = arith.mulf %53, %57 : vector<18x18x32xf32>
    %59 = arith.addf %51, %58 : vector<18x18x32xf32>
    %60 = vector.extract_strided_slice %52 {offsets = [1, 0, 0], sizes = [18, 18, 32], strides = [1, 1, 1]} : vector<20x18x32xf32> to vector<18x18x32xf32>
    %61 = vector.extract_strided_slice %8 {offsets = [5, 0], sizes = [1, 32], strides = [1, 1]} : vector<9x32xf32> to vector<1x32xf32>
    %62 = vector.shape_cast %61 : vector<1x32xf32> to vector<32xf32>
    %63 = vector.shape_cast %62 : vector<32xf32> to vector<1x1x32xf32>
    %64 = vector.broadcast %63 : vector<1x1x32xf32> to vector<18x18x32xf32>
    %65 = arith.mulf %60, %64 : vector<18x18x32xf32>
    %66 = arith.addf %59, %65 : vector<18x18x32xf32>
    %67 = vector.extract_strided_slice %52 {offsets = [2, 0, 0], sizes = [18, 18, 32], strides = [1, 1, 1]} : vector<20x18x32xf32> to vector<18x18x32xf32>
    %68 = vector.extract_strided_slice %8 {offsets = [8, 0], sizes = [1, 32], strides = [1, 1]} : vector<9x32xf32> to vector<1x32xf32>
    %69 = vector.shape_cast %68 : vector<1x32xf32> to vector<32xf32>
    %70 = vector.shape_cast %69 : vector<32xf32> to vector<1x1x32xf32>
    %71 = vector.broadcast %70 : vector<1x1x32xf32> to vector<18x18x32xf32>
    %72 = arith.mulf %67, %71 : vector<18x18x32xf32>
    %73 = arith.addf %66, %72 : vector<18x18x32xf32>
    %c0_6 = arith.constant 0 : index
    %c0_7 = arith.constant 0 : index
    %74 = vector.load %arg4[%c0_6, %c0_7] : memref<1x32xf32, #tpu.memory_space<vmem>>, vector<1x32xf32>
    %75 = vector.shape_cast %74 : vector<1x32xf32> to vector<32xf32>
    %76 = vector.shape_cast %75 : vector<32xf32> to vector<1x1x32xf32>
    %77 = vector.broadcast %76 : vector<1x1x32xf32> to vector<18x18x32xf32>
    %78 = arith.mulf %73, %77 : vector<18x18x32xf32>
    %c0_8 = arith.constant 0 : index
    %c0_9 = arith.constant 0 : index
    %79 = vector.load %arg5[%c0_8, %c0_9] : memref<1x32xf32, #tpu.memory_space<vmem>>, vector<1x32xf32>
    %80 = vector.shape_cast %79 : vector<1x32xf32> to vector<32xf32>
    %81 = vector.shape_cast %80 : vector<32xf32> to vector<1x1x32xf32>
    %82 = vector.broadcast %81 : vector<1x1x32xf32> to vector<18x18x32xf32>
    %83 = arith.addf %78, %82 : vector<18x18x32xf32>
    %84 = vector.extract_strided_slice %83 {offsets = [1, 1, 0], sizes = [16, 16, 32], strides = [1, 1, 1]} : vector<18x18x32xf32> to vector<16x16x32xf32>
    %85 = vector.shape_cast %84 : vector<16x16x32xf32> to vector<256x32xf32>
    %c0_10 = arith.constant 0 : index
    %c0_11 = arith.constant 0 : index
    %86 = vector.load %arg9[%c0_10, %c0_11] : memref<64x256xbf16, #tpu.memory_space<vmem>>, vector<64x256xbf16>
    %87 = arith.truncf %85 : vector<256x32xf32> to vector<256x32xbf16>
    %cst_12 = arith.constant dense<0.000000e+00> : vector<64x32xf32>
    %88 = tpu.matmul %86, %87, %cst_12 {dimension_numbers = #tpu.dot_dimension_numbers<[1], [0], [0], [1], [0, 0, 1, 1], [], []>} : vector<64x256xbf16>, vector<256x32xbf16>, vector<64x32xf32> -> vector<64x32xf32>
    %cst_13 = arith.constant 0.176776692 : f32
    %89 = vector.broadcast %cst_13 : f32 to vector<64x32xf32>
    %90 = arith.mulf %88, %89 : vector<64x32xf32>
    %cst_14 = arith.constant 5.000000e-01 : f32
    %91 = vector.broadcast %cst_14 : f32 to vector<18x18x32xf32>
    %92 = arith.mulf %91, %83 : vector<18x18x32xf32>
    %cst_15 = arith.constant 0.707106769 : f32
    %93 = vector.broadcast %cst_15 : f32 to vector<18x18x32xf32>
    %94 = arith.mulf %83, %93 : vector<18x18x32xf32>
    %95 = math.absf %94 : vector<18x18x32xf32>
    %cst_16 = arith.constant 0.327591091 : f32
    %96 = vector.broadcast %cst_16 : f32 to vector<18x18x32xf32>
    %97 = arith.mulf %96, %95 : vector<18x18x32xf32>
    %cst_17 = arith.constant 1.000000e+00 : f32
    %98 = vector.broadcast %cst_17 : f32 to vector<18x18x32xf32>
    %99 = arith.addf %98, %97 : vector<18x18x32xf32>
    %cst_18 = arith.constant 1.000000e+00 : f32
    %100 = vector.broadcast %cst_18 : f32 to vector<18x18x32xf32>
    %101 = arith.divf %100, %99 : vector<18x18x32xf32>
    %cst_19 = arith.constant 1.06140542 : f32
    %102 = vector.broadcast %cst_19 : f32 to vector<18x18x32xf32>
    %103 = arith.mulf %102, %101 : vector<18x18x32xf32>
    %cst_20 = arith.constant -1.45315206 : f32
    %104 = vector.broadcast %cst_20 : f32 to vector<18x18x32xf32>
    %105 = arith.addf %103, %104 : vector<18x18x32xf32>
    %106 = arith.mulf %105, %101 : vector<18x18x32xf32>
    %cst_21 = arith.constant 1.42141378 : f32
    %107 = vector.broadcast %cst_21 : f32 to vector<18x18x32xf32>
    %108 = arith.addf %106, %107 : vector<18x18x32xf32>
    %109 = arith.mulf %108, %101 : vector<18x18x32xf32>
    %cst_22 = arith.constant -0.284496725 : f32
    %110 = vector.broadcast %cst_22 : f32 to vector<18x18x32xf32>
    %111 = arith.addf %109, %110 : vector<18x18x32xf32>
    %112 = arith.mulf %111, %101 : vector<18x18x32xf32>
    %cst_23 = arith.constant 0.254829586 : f32
    %113 = vector.broadcast %cst_23 : f32 to vector<18x18x32xf32>
    %114 = arith.addf %112, %113 : vector<18x18x32xf32>
    %115 = arith.mulf %114, %101 : vector<18x18x32xf32>
    %cst_24 = arith.constant 0.000000e+00 : f32
    %116 = vector.broadcast %cst_24 : f32 to vector<18x18x32xf32>
    %117 = arith.subf %116, %95 : vector<18x18x32xf32>
    %118 = arith.mulf %117, %95 : vector<18x18x32xf32>
    %119 = math.exp %118 : vector<18x18x32xf32>
    %120 = arith.mulf %115, %119 : vector<18x18x32xf32>
    %cst_25 = arith.constant 1.000000e+00 : f32
    %121 = vector.broadcast %cst_25 : f32 to vector<18x18x32xf32>
    %122 = arith.subf %121, %120 : vector<18x18x32xf32>
    %cst_26 = arith.constant 0.000000e+00 : f32
    %123 = vector.broadcast %cst_26 : f32 to vector<18x18x32xf32>
    %124 = arith.cmpf olt, %94, %123 : vector<18x18x32xf32>
    %cst_27 = arith.constant 0.000000e+00 : f32
    %125 = vector.broadcast %cst_27 : f32 to vector<18x18x32xf32>
    %126 = arith.subf %125, %122 : vector<18x18x32xf32>
    %127 = arith.select %124, %126, %122 : vector<18x18x32xi1>, vector<18x18x32xf32>
    %cst_28 = arith.constant 1.000000e+00 : f32
    %128 = vector.broadcast %cst_28 : f32 to vector<18x18x32xf32>
    %129 = arith.addf %128, %127 : vector<18x18x32xf32>
    %130 = arith.mulf %92, %129 : vector<18x18x32xf32>
    %c0_29 = arith.constant 0 : index
    %c0_30 = arith.constant 0 : index
    %c0_31 = arith.constant 0 : index
    %131 = vector.load %arg12[%c0_29, %c0_30, %c0_31] : memref<18x18x32xf32, #tpu.memory_space<vmem>>, vector<18x18x32xf32>
    %132 = arith.mulf %130, %131 : vector<18x18x32xf32>
    %c0_32 = arith.constant 0 : index
    %c0_33 = arith.constant 0 : index
    %133 = vector.load %arg6[%c0_32, %c0_33] : memref<9x32xf32, #tpu.memory_space<vmem>>, vector<9x32xf32>
    %134 = vector.extract_strided_slice %132 {offsets = [0, 0, 0], sizes = [18, 16, 32], strides = [1, 1, 1]} : vector<18x18x32xf32> to vector<18x16x32xf32>
    %135 = vector.extract_strided_slice %134 {offsets = [0, 0, 0], sizes = [16, 16, 32], strides = [1, 1, 1]} : vector<18x16x32xf32> to vector<16x16x32xf32>
    %136 = vector.extract_strided_slice %133 {offsets = [0, 0], sizes = [1, 32], strides = [1, 1]} : vector<9x32xf32> to vector<1x32xf32>
    %137 = vector.shape_cast %136 : vector<1x32xf32> to vector<32xf32>
    %138 = vector.shape_cast %137 : vector<32xf32> to vector<1x1x32xf32>
    %139 = vector.broadcast %138 : vector<1x1x32xf32> to vector<16x16x32xf32>
    %140 = arith.mulf %135, %139 : vector<16x16x32xf32>
    %141 = vector.extract_strided_slice %134 {offsets = [1, 0, 0], sizes = [16, 16, 32], strides = [1, 1, 1]} : vector<18x16x32xf32> to vector<16x16x32xf32>
    %142 = vector.extract_strided_slice %133 {offsets = [3, 0], sizes = [1, 32], strides = [1, 1]} : vector<9x32xf32> to vector<1x32xf32>
    %143 = vector.shape_cast %142 : vector<1x32xf32> to vector<32xf32>
    %144 = vector.shape_cast %143 : vector<32xf32> to vector<1x1x32xf32>
    %145 = vector.broadcast %144 : vector<1x1x32xf32> to vector<16x16x32xf32>
    %146 = arith.mulf %141, %145 : vector<16x16x32xf32>
    %147 = arith.addf %140, %146 : vector<16x16x32xf32>
    %148 = vector.extract_strided_slice %134 {offsets = [2, 0, 0], sizes = [16, 16, 32], strides = [1, 1, 1]} : vector<18x16x32xf32> to vector<16x16x32xf32>
    %149 = vector.extract_strided_slice %133 {offsets = [6, 0], sizes = [1, 32], strides = [1, 1]} : vector<9x32xf32> to vector<1x32xf32>
    %150 = vector.shape_cast %149 : vector<1x32xf32> to vector<32xf32>
    %151 = vector.shape_cast %150 : vector<32xf32> to vector<1x1x32xf32>
    %152 = vector.broadcast %151 : vector<1x1x32xf32> to vector<16x16x32xf32>
    %153 = arith.mulf %148, %152 : vector<16x16x32xf32>
    %154 = arith.addf %147, %153 : vector<16x16x32xf32>
    %155 = vector.extract_strided_slice %132 {offsets = [0, 1, 0], sizes = [18, 16, 32], strides = [1, 1, 1]} : vector<18x18x32xf32> to vector<18x16x32xf32>
    %156 = vector.extract_strided_slice %155 {offsets = [0, 0, 0], sizes = [16, 16, 32], strides = [1, 1, 1]} : vector<18x16x32xf32> to vector<16x16x32xf32>
    %157 = vector.extract_strided_slice %133 {offsets = [1, 0], sizes = [1, 32], strides = [1, 1]} : vector<9x32xf32> to vector<1x32xf32>
    %158 = vector.shape_cast %157 : vector<1x32xf32> to vector<32xf32>
    %159 = vector.shape_cast %158 : vector<32xf32> to vector<1x1x32xf32>
    %160 = vector.broadcast %159 : vector<1x1x32xf32> to vector<16x16x32xf32>
    %161 = arith.mulf %156, %160 : vector<16x16x32xf32>
    %162 = arith.addf %154, %161 : vector<16x16x32xf32>
    %163 = vector.extract_strided_slice %155 {offsets = [1, 0, 0], sizes = [16, 16, 32], strides = [1, 1, 1]} : vector<18x16x32xf32> to vector<16x16x32xf32>
    %164 = vector.extract_strided_slice %133 {offsets = [4, 0], sizes = [1, 32], strides = [1, 1]} : vector<9x32xf32> to vector<1x32xf32>
    %165 = vector.shape_cast %164 : vector<1x32xf32> to vector<32xf32>
    %166 = vector.shape_cast %165 : vector<32xf32> to vector<1x1x32xf32>
    %167 = vector.broadcast %166 : vector<1x1x32xf32> to vector<16x16x32xf32>
    %168 = arith.mulf %163, %167 : vector<16x16x32xf32>
    %169 = arith.addf %162, %168 : vector<16x16x32xf32>
    %170 = vector.extract_strided_slice %155 {offsets = [2, 0, 0], sizes = [16, 16, 32], strides = [1, 1, 1]} : vector<18x16x32xf32> to vector<16x16x32xf32>
    %171 = vector.extract_strided_slice %133 {offsets = [7, 0], sizes = [1, 32], strides = [1, 1]} : vector<9x32xf32> to vector<1x32xf32>
    %172 = vector.shape_cast %171 : vector<1x32xf32> to vector<32xf32>
    %173 = vector.shape_cast %172 : vector<32xf32> to vector<1x1x32xf32>
    %174 = vector.broadcast %173 : vector<1x1x32xf32> to vector<16x16x32xf32>
    %175 = arith.mulf %170, %174 : vector<16x16x32xf32>
    %176 = arith.addf %169, %175 : vector<16x16x32xf32>
    %177 = vector.extract_strided_slice %132 {offsets = [0, 2, 0], sizes = [18, 16, 32], strides = [1, 1, 1]} : vector<18x18x32xf32> to vector<18x16x32xf32>
    %178 = vector.extract_strided_slice %177 {offsets = [0, 0, 0], sizes = [16, 16, 32], strides = [1, 1, 1]} : vector<18x16x32xf32> to vector<16x16x32xf32>
    %179 = vector.extract_strided_slice %133 {offsets = [2, 0], sizes = [1, 32], strides = [1, 1]} : vector<9x32xf32> to vector<1x32xf32>
    %180 = vector.shape_cast %179 : vector<1x32xf32> to vector<32xf32>
    %181 = vector.shape_cast %180 : vector<32xf32> to vector<1x1x32xf32>
    %182 = vector.broadcast %181 : vector<1x1x32xf32> to vector<16x16x32xf32>
    %183 = arith.mulf %178, %182 : vector<16x16x32xf32>
    %184 = arith.addf %176, %183 : vector<16x16x32xf32>
    %185 = vector.extract_strided_slice %177 {offsets = [1, 0, 0], sizes = [16, 16, 32], strides = [1, 1, 1]} : vector<18x16x32xf32> to vector<16x16x32xf32>
    %186 = vector.extract_strided_slice %133 {offsets = [5, 0], sizes = [1, 32], strides = [1, 1]} : vector<9x32xf32> to vector<1x32xf32>
    %187 = vector.shape_cast %186 : vector<1x32xf32> to vector<32xf32>
    %188 = vector.shape_cast %187 : vector<32xf32> to vector<1x1x32xf32>
    %189 = vector.broadcast %188 : vector<1x1x32xf32> to vector<16x16x32xf32>
    %190 = arith.mulf %185, %189 : vector<16x16x32xf32>
    %191 = arith.addf %184, %190 : vector<16x16x32xf32>
    %192 = vector.extract_strided_slice %177 {offsets = [2, 0, 0], sizes = [16, 16, 32], strides = [1, 1, 1]} : vector<18x16x32xf32> to vector<16x16x32xf32>
    %193 = vector.extract_strided_slice %133 {offsets = [8, 0], sizes = [1, 32], strides = [1, 1]} : vector<9x32xf32> to vector<1x32xf32>
    %194 = vector.shape_cast %193 : vector<1x32xf32> to vector<32xf32>
    %195 = vector.shape_cast %194 : vector<32xf32> to vector<1x1x32xf32>
    %196 = vector.broadcast %195 : vector<1x1x32xf32> to vector<16x16x32xf32>
    %197 = arith.mulf %192, %196 : vector<16x16x32xf32>
    %198 = arith.addf %191, %197 : vector<16x16x32xf32>
    %c0_34 = arith.constant 0 : index
    %c0_35 = arith.constant 0 : index
    %199 = vector.load %arg7[%c0_34, %c0_35] : memref<1x32xf32, #tpu.memory_space<vmem>>, vector<1x32xf32>
    %200 = vector.shape_cast %199 : vector<1x32xf32> to vector<32xf32>
    %201 = vector.shape_cast %200 : vector<32xf32> to vector<1x1x32xf32>
    %202 = vector.broadcast %201 : vector<1x1x32xf32> to vector<16x16x32xf32>
    %203 = arith.mulf %198, %202 : vector<16x16x32xf32>
    %c0_36 = arith.constant 0 : index
    %c0_37 = arith.constant 0 : index
    %204 = vector.load %arg8[%c0_36, %c0_37] : memref<1x32xf32, #tpu.memory_space<vmem>>, vector<1x32xf32>
    %205 = vector.shape_cast %204 : vector<1x32xf32> to vector<32xf32>
    %206 = vector.shape_cast %205 : vector<32xf32> to vector<1x1x32xf32>
    %207 = vector.broadcast %206 : vector<1x1x32xf32> to vector<16x16x32xf32>
    %208 = arith.addf %203, %207 : vector<16x16x32xf32>
    %209 = vector.shape_cast %208 : vector<16x16x32xf32> to vector<256x32xf32>
    %c0_38 = arith.constant 0 : index
    %c0_39 = arith.constant 0 : index
    %210 = vector.load %arg9[%c0_38, %c0_39] : memref<64x256xbf16, #tpu.memory_space<vmem>>, vector<64x256xbf16>
    %211 = arith.truncf %209 : vector<256x32xf32> to vector<256x32xbf16>
    %cst_40 = arith.constant dense<0.000000e+00> : vector<64x32xf32>
    %212 = tpu.matmul %210, %211, %cst_40 {dimension_numbers = #tpu.dot_dimension_numbers<[1], [0], [0], [1], [0, 0, 1, 1], [], []>} : vector<64x256xbf16>, vector<256x32xbf16>, vector<64x32xf32> -> vector<64x32xf32>
    %cst_41 = arith.constant 5.000000e-01 : f32
    %213 = vector.broadcast %cst_41 : f32 to vector<256x32xf32>
    %214 = arith.mulf %213, %209 : vector<256x32xf32>
    %cst_42 = arith.constant 0.707106769 : f32
    %215 = vector.broadcast %cst_42 : f32 to vector<256x32xf32>
    %216 = arith.mulf %209, %215 : vector<256x32xf32>
    %217 = math.absf %216 : vector<256x32xf32>
    %cst_43 = arith.constant 0.327591091 : f32
    %218 = vector.broadcast %cst_43 : f32 to vector<256x32xf32>
    %219 = arith.mulf %218, %217 : vector<256x32xf32>
    %cst_44 = arith.constant 1.000000e+00 : f32
    %220 = vector.broadcast %cst_44 : f32 to vector<256x32xf32>
    %221 = arith.addf %220, %219 : vector<256x32xf32>
    %cst_45 = arith.constant 1.000000e+00 : f32
    %222 = vector.broadcast %cst_45 : f32 to vector<256x32xf32>
    %223 = arith.divf %222, %221 : vector<256x32xf32>
    %cst_46 = arith.constant 1.06140542 : f32
    %224 = vector.broadcast %cst_46 : f32 to vector<256x32xf32>
    %225 = arith.mulf %224, %223 : vector<256x32xf32>
    %cst_47 = arith.constant -1.45315206 : f32
    %226 = vector.broadcast %cst_47 : f32 to vector<256x32xf32>
    %227 = arith.addf %225, %226 : vector<256x32xf32>
    %228 = arith.mulf %227, %223 : vector<256x32xf32>
    %cst_48 = arith.constant 1.42141378 : f32
    %229 = vector.broadcast %cst_48 : f32 to vector<256x32xf32>
    %230 = arith.addf %228, %229 : vector<256x32xf32>
    %231 = arith.mulf %230, %223 : vector<256x32xf32>
    %cst_49 = arith.constant -0.284496725 : f32
    %232 = vector.broadcast %cst_49 : f32 to vector<256x32xf32>
    %233 = arith.addf %231, %232 : vector<256x32xf32>
    %234 = arith.mulf %233, %223 : vector<256x32xf32>
    %cst_50 = arith.constant 0.254829586 : f32
    %235 = vector.broadcast %cst_50 : f32 to vector<256x32xf32>
    %236 = arith.addf %234, %235 : vector<256x32xf32>
    %237 = arith.mulf %236, %223 : vector<256x32xf32>
    %cst_51 = arith.constant 0.000000e+00 : f32
    %238 = vector.broadcast %cst_51 : f32 to vector<256x32xf32>
    %239 = arith.subf %238, %217 : vector<256x32xf32>
    %240 = arith.mulf %239, %217 : vector<256x32xf32>
    %241 = math.exp %240 : vector<256x32xf32>
    %242 = arith.mulf %237, %241 : vector<256x32xf32>
    %cst_52 = arith.constant 1.000000e+00 : f32
    %243 = vector.broadcast %cst_52 : f32 to vector<256x32xf32>
    %244 = arith.subf %243, %242 : vector<256x32xf32>
    %cst_53 = arith.constant 0.000000e+00 : f32
    %245 = vector.broadcast %cst_53 : f32 to vector<256x32xf32>
    %246 = arith.cmpf olt, %216, %245 : vector<256x32xf32>
    %cst_54 = arith.constant 0.000000e+00 : f32
    %247 = vector.broadcast %cst_54 : f32 to vector<256x32xf32>
    %248 = arith.subf %247, %244 : vector<256x32xf32>
    %249 = arith.select %246, %248, %244 : vector<256x32xi1>, vector<256x32xf32>
    %cst_55 = arith.constant 1.000000e+00 : f32
    %250 = vector.broadcast %cst_55 : f32 to vector<256x32xf32>
    %251 = arith.addf %250, %249 : vector<256x32xf32>
    %252 = arith.mulf %214, %251 : vector<256x32xf32>
    %c0_56 = arith.constant 0 : index
    %c0_57 = arith.constant 0 : index
    %253 = vector.load %arg10[%c0_56, %c0_57] : memref<256x64xbf16, #tpu.memory_space<vmem>>, vector<256x64xbf16>
    %254 = arith.truncf %212 : vector<64x32xf32> to vector<64x32xbf16>
    %cst_58 = arith.constant dense<0.000000e+00> : vector<256x32xf32>
    %255 = tpu.matmul %253, %254, %cst_58 {dimension_numbers = #tpu.dot_dimension_numbers<[1], [0], [0], [1], [0, 0, 1, 1], [], []>} : vector<256x64xbf16>, vector<64x32xbf16>, vector<256x32xf32> -> vector<256x32xf32>
    %256 = vector.extract_strided_slice %90 {offsets = [0, 0], sizes = [64, 16], strides = [1, 1]} : vector<64x32xf32> to vector<64x16xf32>
    %257 = arith.truncf %256 : vector<64x16xf32> to vector<64x16xbf16>
    %258 = vector.extract_strided_slice %255 {offsets = [0, 0], sizes = [256, 16], strides = [1, 1]} : vector<256x32xf32> to vector<256x16xf32>
    %259 = arith.truncf %258 : vector<256x16xf32> to vector<256x16xbf16>
    %cst_59 = arith.constant dense<0.000000e+00> : vector<64x256xf32>
    %260 = tpu.matmul %257, %259, %cst_59 {dimension_numbers = #tpu.dot_dimension_numbers<[1], [1], [0], [0], [0, 0, 1, 0], [], []>} : vector<64x16xbf16>, vector<256x16xbf16>, vector<64x256xf32> -> vector<64x256xf32>
    %cst_60 = arith.constant dense<0xFF800000> : vector<64xf32>
    %261 = vector.multi_reduction <maximumf>, %260, %cst_60 [1] : vector<64x256xf32> to vector<64xf32>
    %262 = vector.shape_cast %261 : vector<64xf32> to vector<64x1xf32>
    %263 = vector.broadcast %262 : vector<64x1xf32> to vector<64x256xf32>
    %264 = arith.subf %260, %263 : vector<64x256xf32>
    %265 = math.exp %264 : vector<64x256xf32>
    %cst_61 = arith.constant dense<0.000000e+00> : vector<64xf32>
    %266 = vector.multi_reduction <add>, %265, %cst_61 [1] : vector<64x256xf32> to vector<64xf32>
    %267 = vector.shape_cast %266 : vector<64xf32> to vector<64x1xf32>
    %268 = tpu.reciprocal %267 {approx = true} : vector<64x1xf32> -> vector<64x1xf32>
    %269 = vector.broadcast %268 : vector<64x1xf32> to vector<64x256xf32>
    %270 = arith.mulf %265, %269 : vector<64x256xf32>
    %271 = arith.truncf %270 : vector<64x256xf32> to vector<64x256xbf16>
    %272 = vector.extract_strided_slice %7 {offsets = [0, 0], sizes = [256, 16], strides = [1, 1]} : vector<256x32xbf16> to vector<256x16xbf16>
    %cst_62 = arith.constant dense<0.000000e+00> : vector<64x16xf32>
    %273 = tpu.matmul %271, %272, %cst_62 {dimension_numbers = #tpu.dot_dimension_numbers<[1], [0], [0], [1], [0, 0, 1, 1], [], []>} : vector<64x256xbf16>, vector<256x16xbf16>, vector<64x16xf32> -> vector<64x16xf32>
    %c0_63 = arith.constant 0 : index
    %c0_64 = arith.constant 0 : index
    %274 = vector.load %arg19[%c0_63, %c0_64] : memref<64x32xf32, #tpu.memory_space<vmem>>, vector<64x16xf32>
    tpu.vector_store %arg19[%c0_63, %c0_64], %273 {strides = array<i32>} : memref<64x32xf32, #tpu.memory_space<vmem>>, vector<64x16xf32>,
    %275 = vector.extract_strided_slice %90 {offsets = [0, 16], sizes = [64, 16], strides = [1, 1]} : vector<64x32xf32> to vector<64x16xf32>
    %276 = arith.truncf %275 : vector<64x16xf32> to vector<64x16xbf16>
    %277 = vector.extract_strided_slice %255 {offsets = [0, 16], sizes = [256, 16], strides = [1, 1]} : vector<256x32xf32> to vector<256x16xf32>
    %278 = arith.truncf %277 : vector<256x16xf32> to vector<256x16xbf16>
    %cst_65 = arith.constant dense<0.000000e+00> : vector<64x256xf32>
    %279 = tpu.matmul %276, %278, %cst_65 {dimension_numbers = #tpu.dot_dimension_numbers<[1], [1], [0], [0], [0, 0, 1, 0], [], []>} : vector<64x16xbf16>, vector<256x16xbf16>, vector<64x256xf32> -> vector<64x256xf32>
    %cst_66 = arith.constant dense<0xFF800000> : vector<64xf32>
    %280 = vector.multi_reduction <maximumf>, %279, %cst_66 [1] : vector<64x256xf32> to vector<64xf32>
    %281 = vector.shape_cast %280 : vector<64xf32> to vector<64x1xf32>
    %282 = vector.broadcast %281 : vector<64x1xf32> to vector<64x256xf32>
    %283 = arith.subf %279, %282 : vector<64x256xf32>
    %284 = math.exp %283 : vector<64x256xf32>
    %cst_67 = arith.constant dense<0.000000e+00> : vector<64xf32>
    %285 = vector.multi_reduction <add>, %284, %cst_67 [1] : vector<64x256xf32> to vector<64xf32>
    %286 = vector.shape_cast %285 : vector<64xf32> to vector<64x1xf32>
    %287 = tpu.reciprocal %286 {approx = true} : vector<64x1xf32> -> vector<64x1xf32>
    %288 = vector.broadcast %287 : vector<64x1xf32> to vector<64x256xf32>
    %289 = arith.mulf %284, %288 : vector<64x256xf32>
    %290 = arith.truncf %289 : vector<64x256xf32> to vector<64x256xbf16>
    %291 = vector.extract_strided_slice %7 {offsets = [0, 16], sizes = [256, 16], strides = [1, 1]} : vector<256x32xbf16> to vector<256x16xbf16>
    %cst_68 = arith.constant dense<0.000000e+00> : vector<64x16xf32>
    %292 = tpu.matmul %290, %291, %cst_68 {dimension_numbers = #tpu.dot_dimension_numbers<[1], [0], [0], [1], [0, 0, 1, 1], [], []>} : vector<64x256xbf16>, vector<256x16xbf16>, vector<64x16xf32> -> vector<64x16xf32>
    %c0_69 = arith.constant 0 : index
    %c16 = arith.constant 16 : index
    %293 = vector.load %arg19[%c0_69, %c16] : memref<64x32xf32, #tpu.memory_space<vmem>>, vector<64x16xf32>
    tpu.vector_store %arg19[%c0_69, %c16], %292 {strides = array<i32>} : memref<64x32xf32, #tpu.memory_space<vmem>>, vector<64x16xf32>,
    %c0_70 = arith.constant 0 : index
    %c0_71 = arith.constant 0 : index
    %294 = vector.load %arg11[%c0_70, %c0_71] : memref<432x64xbf16, #tpu.memory_space<vmem>>, vector<432x64xbf16>
    %c0_72 = arith.constant 0 : index
    %c0_73 = arith.constant 0 : index
    %295 = vector.load %arg19[%c0_72, %c0_73] : memref<64x32xf32, #tpu.memory_space<vmem>>, vector<64x32xf32>
    %296 = arith.truncf %295 : vector<64x32xf32> to vector<64x32xbf16>
    %cst_74 = arith.constant dense<0.000000e+00> : vector<432x32xf32>
    %297 = tpu.matmul %294, %296, %cst_74 {dimension_numbers = #tpu.dot_dimension_numbers<[1], [0], [0], [1], [0, 0, 1, 1], [], []>} : vector<432x64xbf16>, vector<64x32xbf16>, vector<432x32xf32> -> vector<432x32xf32>
    %298 = vector.shape_cast %297 : vector<432x32xf32> to vector<18x24x32xf32>
    %c0_75 = arith.constant 0 : index
    %c0_76 = arith.constant 0 : index
    %299 = vector.load %arg13[%c0_75, %c0_76] : memref<9x32xf32, #tpu.memory_space<vmem>>, vector<9x32xf32>
    %300 = vector.extract_strided_slice %298 {offsets = [0, 0, 0], sizes = [18, 16, 32], strides = [1, 1, 1]} : vector<18x24x32xf32> to vector<18x16x32xf32>
    %301 = vector.extract_strided_slice %300 {offsets = [0, 0, 0], sizes = [16, 16, 32], strides = [1, 1, 1]} : vector<18x16x32xf32> to vector<16x16x32xf32>
    %302 = vector.extract_strided_slice %299 {offsets = [0, 0], sizes = [1, 32], strides = [1, 1]} : vector<9x32xf32> to vector<1x32xf32>
    %303 = vector.shape_cast %302 : vector<1x32xf32> to vector<32xf32>
    %304 = vector.shape_cast %303 : vector<32xf32> to vector<1x1x32xf32>
    %305 = vector.broadcast %304 : vector<1x1x32xf32> to vector<16x16x32xf32>
    %306 = arith.mulf %301, %305 : vector<16x16x32xf32>
    %307 = vector.extract_strided_slice %300 {offsets = [1, 0, 0], sizes = [16, 16, 32], strides = [1, 1, 1]} : vector<18x16x32xf32> to vector<16x16x32xf32>
    %308 = vector.extract_strided_slice %299 {offsets = [3, 0], sizes = [1, 32], strides = [1, 1]} : vector<9x32xf32> to vector<1x32xf32>
    %309 = vector.shape_cast %308 : vector<1x32xf32> to vector<32xf32>
    %310 = vector.shape_cast %309 : vector<32xf32> to vector<1x1x32xf32>
    %311 = vector.broadcast %310 : vector<1x1x32xf32> to vector<16x16x32xf32>
    %312 = arith.mulf %307, %311 : vector<16x16x32xf32>
    %313 = arith.addf %306, %312 : vector<16x16x32xf32>
    %314 = vector.extract_strided_slice %300 {offsets = [2, 0, 0], sizes = [16, 16, 32], strides = [1, 1, 1]} : vector<18x16x32xf32> to vector<16x16x32xf32>
    %315 = vector.extract_strided_slice %299 {offsets = [6, 0], sizes = [1, 32], strides = [1, 1]} : vector<9x32xf32> to vector<1x32xf32>
    %316 = vector.shape_cast %315 : vector<1x32xf32> to vector<32xf32>
    %317 = vector.shape_cast %316 : vector<32xf32> to vector<1x1x32xf32>
    %318 = vector.broadcast %317 : vector<1x1x32xf32> to vector<16x16x32xf32>
    %319 = arith.mulf %314, %318 : vector<16x16x32xf32>
    %320 = arith.addf %313, %319 : vector<16x16x32xf32>
    %321 = vector.extract_strided_slice %298 {offsets = [0, 1, 0], sizes = [18, 16, 32], strides = [1, 1, 1]} : vector<18x24x32xf32> to vector<18x16x32xf32>
    %322 = vector.extract_strided_slice %321 {offsets = [0, 0, 0], sizes = [16, 16, 32], strides = [1, 1, 1]} : vector<18x16x32xf32> to vector<16x16x32xf32>
    %323 = vector.extract_strided_slice %299 {offsets = [1, 0], sizes = [1, 32], strides = [1, 1]} : vector<9x32xf32> to vector<1x32xf32>
    %324 = vector.shape_cast %323 : vector<1x32xf32> to vector<32xf32>
    %325 = vector.shape_cast %324 : vector<32xf32> to vector<1x1x32xf32>
    %326 = vector.broadcast %325 : vector<1x1x32xf32> to vector<16x16x32xf32>
    %327 = arith.mulf %322, %326 : vector<16x16x32xf32>
    %328 = arith.addf %320, %327 : vector<16x16x32xf32>
    %329 = vector.extract_strided_slice %321 {offsets = [1, 0, 0], sizes = [16, 16, 32], strides = [1, 1, 1]} : vector<18x16x32xf32> to vector<16x16x32xf32>
    %330 = vector.extract_strided_slice %299 {offsets = [4, 0], sizes = [1, 32], strides = [1, 1]} : vector<9x32xf32> to vector<1x32xf32>
    %331 = vector.shape_cast %330 : vector<1x32xf32> to vector<32xf32>
    %332 = vector.shape_cast %331 : vector<32xf32> to vector<1x1x32xf32>
    %333 = vector.broadcast %332 : vector<1x1x32xf32> to vector<16x16x32xf32>
    %334 = arith.mulf %329, %333 : vector<16x16x32xf32>
    %335 = arith.addf %328, %334 : vector<16x16x32xf32>
    %336 = vector.extract_strided_slice %321 {offsets = [2, 0, 0], sizes = [16, 16, 32], strides = [1, 1, 1]} : vector<18x16x32xf32> to vector<16x16x32xf32>
    %337 = vector.extract_strided_slice %299 {offsets = [7, 0], sizes = [1, 32], strides = [1, 1]} : vector<9x32xf32> to vector<1x32xf32>
    %338 = vector.shape_cast %337 : vector<1x32xf32> to vector<32xf32>
    %339 = vector.shape_cast %338 : vector<32xf32> to vector<1x1x32xf32>
    %340 = vector.broadcast %339 : vector<1x1x32xf32> to vector<16x16x32xf32>
    %341 = arith.mulf %336, %340 : vector<16x16x32xf32>
    %342 = arith.addf %335, %341 : vector<16x16x32xf32>
    %343 = vector.extract_strided_slice %298 {offsets = [0, 2, 0], sizes = [18, 16, 32], strides = [1, 1, 1]} : vector<18x24x32xf32> to vector<18x16x32xf32>
    %344 = vector.extract_strided_slice %343 {offsets = [0, 0, 0], sizes = [16, 16, 32], strides = [1, 1, 1]} : vector<18x16x32xf32> to vector<16x16x32xf32>
    %345 = vector.extract_strided_slice %299 {offsets = [2, 0], sizes = [1, 32], strides = [1, 1]} : vector<9x32xf32> to vector<1x32xf32>
    %346 = vector.shape_cast %345 : vector<1x32xf32> to vector<32xf32>
    %347 = vector.shape_cast %346 : vector<32xf32> to vector<1x1x32xf32>
    %348 = vector.broadcast %347 : vector<1x1x32xf32> to vector<16x16x32xf32>
    %349 = arith.mulf %344, %348 : vector<16x16x32xf32>
    %350 = arith.addf %342, %349 : vector<16x16x32xf32>
    %351 = vector.extract_strided_slice %343 {offsets = [1, 0, 0], sizes = [16, 16, 32], strides = [1, 1, 1]} : vector<18x16x32xf32> to vector<16x16x32xf32>
    %352 = vector.extract_strided_slice %299 {offsets = [5, 0], sizes = [1, 32], strides = [1, 1]} : vector<9x32xf32> to vector<1x32xf32>
    %353 = vector.shape_cast %352 : vector<1x32xf32> to vector<32xf32>
    %354 = vector.shape_cast %353 : vector<32xf32> to vector<1x1x32xf32>
    %355 = vector.broadcast %354 : vector<1x1x32xf32> to vector<16x16x32xf32>
    %356 = arith.mulf %351, %355 : vector<16x16x32xf32>
    %357 = arith.addf %350, %356 : vector<16x16x32xf32>
    %358 = vector.extract_strided_slice %343 {offsets = [2, 0, 0], sizes = [16, 16, 32], strides = [1, 1, 1]} : vector<18x16x32xf32> to vector<16x16x32xf32>
    %359 = vector.extract_strided_slice %299 {offsets = [8, 0], sizes = [1, 32], strides = [1, 1]} : vector<9x32xf32> to vector<1x32xf32>
    %360 = vector.shape_cast %359 : vector<1x32xf32> to vector<32xf32>
    %361 = vector.shape_cast %360 : vector<32xf32> to vector<1x1x32xf32>
    %362 = vector.broadcast %361 : vector<1x1x32xf32> to vector<16x16x32xf32>
    %363 = arith.mulf %358, %362 : vector<16x16x32xf32>
    %364 = arith.addf %357, %363 : vector<16x16x32xf32>
    %c0_77 = arith.constant 0 : index
    %c0_78 = arith.constant 0 : index
    %365 = vector.load %arg14[%c0_77, %c0_78] : memref<1x32xf32, #tpu.memory_space<vmem>>, vector<1x32xf32>
    %366 = vector.shape_cast %365 : vector<1x32xf32> to vector<32xf32>
    %367 = vector.shape_cast %366 : vector<32xf32> to vector<1x1x32xf32>
    %368 = vector.broadcast %367 : vector<1x1x32xf32> to vector<16x16x32xf32>
    %369 = arith.mulf %364, %368 : vector<16x16x32xf32>
    %c0_79 = arith.constant 0 : index
    %c0_80 = arith.constant 0 : index
    %370 = vector.load %arg15[%c0_79, %c0_80] : memref<1x32xf32, #tpu.memory_space<vmem>>, vector<1x32xf32>
    %371 = vector.shape_cast %370 : vector<1x32xf32> to vector<32xf32>
    %372 = vector.shape_cast %371 : vector<32xf32> to vector<1x1x32xf32>
    %373 = vector.broadcast %372 : vector<1x1x32xf32> to vector<16x16x32xf32>
    %374 = arith.addf %369, %373 : vector<16x16x32xf32>
    %375 = vector.shape_cast %374 : vector<16x16x32xf32> to vector<256x32xf32>
    %376 = arith.addf %375, %252 : vector<256x32xf32>
    %377 = arith.truncf %376 : vector<256x32xf32> to vector<256x32xbf16>
    %c0_81 = arith.constant 0 : index
    %c0_82 = arith.constant 0 : index
    %378 = vector.load %arg16[%c0_81, %c0_82] : memref<32x32xbf16, #tpu.memory_space<vmem>>, vector<32x32xbf16>
    %cst_83 = arith.constant dense<0.000000e+00> : vector<256x32xf32>
    %379 = tpu.matmul %377, %378, %cst_83 {dimension_numbers = #tpu.dot_dimension_numbers<[1], [0], [0], [1], [0, 0, 1, 1], [], []>} : vector<256x32xbf16>, vector<32x32xbf16>, vector<256x32xf32> -> vector<256x32xf32>
    %c0_84 = arith.constant 0 : index
    %c0_85 = arith.constant 0 : index
    %380 = vector.load %arg17[%c0_84, %c0_85] : memref<1x32xf32, #tpu.memory_space<vmem>>, vector<1x32xf32>
    %381 = vector.shape_cast %380 : vector<1x32xf32> to vector<32xf32>
    %382 = vector.shape_cast %381 : vector<32xf32> to vector<1x32xf32>
    %383 = vector.broadcast %382 : vector<1x32xf32> to vector<256x32xf32>
    %384 = arith.addf %379, %383 : vector<256x32xf32>
    %385 = vector.shape_cast %384 : vector<256x32xf32> to vector<1x256x32xf32>
    %c0_86 = arith.constant 0 : index
    %c0_87 = arith.constant 0 : index
    %c0_88 = arith.constant 0 : index
    %386 = vector.load %arg18[%c0_86, %c0_87, %c0_88] : memref<1x256x32xf32, #tpu.memory_space<vmem>>, vector<1x256x32xf32>
    tpu.vector_store %arg18[%c0_86, %c0_87, %c0_88], %385 {strides = array<i32>} : memref<1x256x32xf32, #tpu.memory_space<vmem>>, vector<1x256x32xf32>,
    return
  }
  func.func @transform_0(%arg0: i32) -> (i32, i32, i32) {
    %c0_i32 = arith.constant 0 : i32
    %c0_i32_0 = arith.constant 0 : i32
    %c0_i32_1 = arith.constant 0 : i32
    return %arg0, %c0_i32, %c0_i32_0 : i32, i32, i32
  }
  func.func @transform_1(%arg0: i32) -> (i32, i32) {
    %c0_i32 = arith.constant 0 : i32
    %c0_i32_0 = arith.constant 0 : i32
    %c0_i32_1 = arith.constant 0 : i32
    return %c0_i32, %c0_i32_0 : i32, i32
  }
  func.func @transform_2(%arg0: i32) -> (i32, i32) {
    %c0_i32 = arith.constant 0 : i32
    %c0_i32_0 = arith.constant 0 : i32
    %c0_i32_1 = arith.constant 0 : i32
    return %c0_i32, %c0_i32_0 : i32, i32
  }
  func.func @transform_3(%arg0: i32) -> (i32, i32) {
    %c0_i32 = arith.constant 0 : i32
    %c0_i32_0 = arith.constant 0 : i32
    %c0_i32_1 = arith.constant 0 : i32
    return %c0_i32, %c0_i32_0 : i32, i32
  }
  func.func @transform_4(%arg0: i32) -> (i32, i32) {
    %c0_i32 = arith.constant 0 : i32
    %c0_i32_0 = arith.constant 0 : i32
    %c0_i32_1 = arith.constant 0 : i32
    return %c0_i32, %c0_i32_0 : i32, i32
  }
  func.func @transform_5(%arg0: i32) -> (i32, i32) {
    %c0_i32 = arith.constant 0 : i32
    %c0_i32_0 = arith.constant 0 : i32
    %c0_i32_1 = arith.constant 0 : i32
    return %c0_i32, %c0_i32_0 : i32, i32
  }
  func.func @transform_6(%arg0: i32) -> (i32, i32) {
    %c0_i32 = arith.constant 0 : i32
    %c0_i32_0 = arith.constant 0 : i32
    %c0_i32_1 = arith.constant 0 : i32
    return %c0_i32, %c0_i32_0 : i32, i32
  }
  func.func @transform_7(%arg0: i32) -> (i32, i32) {
    %c0_i32 = arith.constant 0 : i32
    %c0_i32_0 = arith.constant 0 : i32
    %c0_i32_1 = arith.constant 0 : i32
    return %c0_i32, %c0_i32_0 : i32, i32
  }
  func.func @transform_8(%arg0: i32) -> (i32, i32) {
    %c0_i32 = arith.constant 0 : i32
    %c0_i32_0 = arith.constant 0 : i32
    %c0_i32_1 = arith.constant 0 : i32
    return %c0_i32, %c0_i32_0 : i32, i32
  }
  func.func @transform_9(%arg0: i32) -> (i32, i32) {
    %c0_i32 = arith.constant 0 : i32
    %c0_i32_0 = arith.constant 0 : i32
    %c0_i32_1 = arith.constant 0 : i32
    return %c0_i32, %c0_i32_0 : i32, i32
  }
  func.func @transform_10(%arg0: i32) -> (i32, i32) {
    %c0_i32 = arith.constant 0 : i32
    %c0_i32_0 = arith.constant 0 : i32
    %c0_i32_1 = arith.constant 0 : i32
    return %c0_i32, %c0_i32_0 : i32, i32
  }
  func.func @transform_11(%arg0: i32) -> (i32, i32, i32) {
    %c0_i32 = arith.constant 0 : i32
    %c0_i32_0 = arith.constant 0 : i32
    %c0_i32_1 = arith.constant 0 : i32
    %c0_i32_2 = arith.constant 0 : i32
    return %c0_i32, %c0_i32_0, %c0_i32_1 : i32, i32, i32
  }
  func.func @transform_12(%arg0: i32) -> (i32, i32) {
    %c0_i32 = arith.constant 0 : i32
    %c0_i32_0 = arith.constant 0 : i32
    %c0_i32_1 = arith.constant 0 : i32
    return %c0_i32, %c0_i32_0 : i32, i32
  }
  func.func @transform_13(%arg0: i32) -> (i32, i32) {
    %c0_i32 = arith.constant 0 : i32
    %c0_i32_0 = arith.constant 0 : i32
    %c0_i32_1 = arith.constant 0 : i32
    return %c0_i32, %c0_i32_0 : i32, i32
  }
  func.func @transform_14(%arg0: i32) -> (i32, i32) {
    %c0_i32 = arith.constant 0 : i32
    %c0_i32_0 = arith.constant 0 : i32
    %c0_i32_1 = arith.constant 0 : i32
    return %c0_i32, %c0_i32_0 : i32, i32
  }
  func.func @transform_15(%arg0: i32) -> (i32, i32) {
    %c0_i32 = arith.constant 0 : i32
    %c0_i32_0 = arith.constant 0 : i32
    %c0_i32_1 = arith.constant 0 : i32
    return %c0_i32, %c0_i32_0 : i32, i32
  }
  func.func @transform_16(%arg0: i32) -> (i32, i32) {
    %c0_i32 = arith.constant 0 : i32
    %c0_i32_0 = arith.constant 0 : i32
    %c0_i32_1 = arith.constant 0 : i32
    return %c0_i32, %c0_i32_0 : i32, i32
  }
  func.func @transform_17(%arg0: i32) -> (i32, i32, i32) {
    %c0_i32 = arith.constant 0 : i32
    %c0_i32_0 = arith.constant 0 : i32
    %c0_i32_1 = arith.constant 0 : i32
    return %arg0, %c0_i32, %c0_i32_0 : i32, i32, i32
  }
}

</mosaic_0001>

<llo_original>
// kernel: lea_forward.1
$region0: #{lea_forward.1}
  #allocation0 [shape = 'u32[]', space=smem, size = 0x4, offset = 0x4, fixed_abs, tag = 'smem constant byte address 0x4 - core index']
  #allocation1 [shape = 'u32[144,128]{1,0:T(1,128)}', space=vmem, size = 0x12000, scoped, tag = 'internal scratch']
  #allocation2 [shape = 'f32[64,32]{1,0:T(8,128)}', space=vmem, size = 0x8000, scoped, tag = 'scratch operand']
  %s0 = inlined_call_operand.vmem [shape: bf16[2,480,32], index: 0, kind: input, shape index: {}]
  %s1 = inlined_call_operand.vmem [shape: bf16[32,32], index: 1, kind: input, shape index: {}]
  %s2 = inlined_call_operand.vmem [shape: f32[9,32], index: 2, kind: input, shape index: {}]
  %s3 = inlined_call_operand.vmem [shape: f32[1,32], index: 3, kind: input, shape index: {}]
  %s4 = inlined_call_operand.vmem [shape: f32[1,32], index: 4, kind: input, shape index: {}]
  %s5 = inlined_call_operand.vmem [shape: f32[9,32], index: 5, kind: input, shape index: {}]
  %s6 = inlined_call_operand.vmem [shape: f32[1,32], index: 6, kind: input, shape index: {}]
  %s7 = inlined_call_operand.vmem [shape: f32[1,32], index: 7, kind: input, shape index: {}]
  %s8 = inlined_call_operand.vmem [shape: bf16[64,256], index: 8, kind: input, shape index: {}]
  %s9 = inlined_call_operand.vmem [shape: bf16[256,64], index: 9, kind: input, shape index: {}]
  %s10 = inlined_call_operand.vmem [shape: bf16[432,64], index: 10, kind: input, shape index: {}]
  %s11 = inlined_call_operand.vmem [shape: f32[18,18,32], index: 11, kind: input, shape index: {}]
  %s12 = inlined_call_operand.vmem [shape: f32[9,32], index: 12, kind: input, shape index: {}]
  %s13 = inlined_call_operand.vmem [shape: f32[1,32], index: 13, kind: input, shape index: {}]
  %s14 = inlined_call_operand.vmem [shape: f32[1,32], index: 14, kind: input, shape index: {}]
  %s15 = inlined_call_operand.vmem [shape: bf16[32,32], index: 15, kind: input, shape index: {}]
  %s16 = inlined_call_operand.vmem [shape: f32[1,32], index: 16, kind: input, shape index: {}]
  %s17 = inlined_call_operand.vmem [shape: f32[2,256,32], index: 17, kind: output, shape index: {}]
  %s18 = sld [smem:[#allocation0]]
  $region101: #{lea_forward.1} parent=0
    _
  %s20 = ssub.s32 1, %s18
  %s21 = scalar_select 0, %s20, %s18
  loop: start=0, step=1, limit=4
  $region2: #{lea_forward.1} parent=0 // loop_pre_header
    _
  $region3: #{lea_forward.1} parent=0 // loop_header
    %s23 = sphi 0, %s27
    %p24 = scmp.ge.s32.totalorder %s23, 4
    %s33 = sphi 0, %s35
    %s36 = sphi 0, %s33
    %s37 = sphi 0, %s36
    %s53 = sphi 0, %s37
    %s57 = sphi 0, %s57
    %s59 = sphi 0, %s57
    %s60 = sphi 0, %s59
    %s74 = sphi 0, %s60
    %s78 = sphi 0, %s78
    %s80 = sphi 0, %s78
    %s81 = sphi 0, %s80
    %s95 = sphi 0, %s81
    %s99 = sphi 0, %s99
    %s101 = sphi 0, %s99
    %s102 = sphi 0, %s101
    %s116 = sphi 0, %s102
    %s120 = sphi 0, %s120
    %s122 = sphi 0, %s120
    %s123 = sphi 0, %s122
    %s137 = sphi 0, %s123
    %s141 = sphi 0, %s141
    %s143 = sphi 0, %s141
    %s144 = sphi 0, %s143
    %s158 = sphi 0, %s144
    %s162 = sphi 0, %s162
    %s164 = sphi 0, %s162
    %s165 = sphi 0, %s164
    %s179 = sphi 0, %s165
    %s183 = sphi 0, %s183
    %s185 = sphi 0, %s183
    %s186 = sphi 0, %s185
    %s200 = sphi 0, %s186
    %s204 = sphi 0, %s204
    %s206 = sphi 0, %s204
    %s207 = sphi 0, %s206
    %s221 = sphi 0, %s207
    %s225 = sphi 0, %s225
    %s227 = sphi 0, %s225
    %s228 = sphi 0, %s227
    %s242 = sphi 0, %s228
    %s246 = sphi 0, %s246
    %s248 = sphi 0, %s246
    %s249 = sphi 0, %s248
    %s263 = sphi 0, %s249
    %s267 = sphi 0, %s267
    %s269 = sphi 0, %s267
    %s270 = sphi 0, %s269
    %s284 = sphi 0, %s270
    %s288 = sphi 0, %s288
    %s290 = sphi 0, %s288
    %s291 = sphi 0, %s290
    %s305 = sphi 0, %s291
    %s309 = sphi 0, %s309
    %s311 = sphi 0, %s309
    %s312 = sphi 0, %s311
    %s326 = sphi 0, %s312
    %s330 = sphi 0, %s330
    %s332 = sphi 0, %s330
    %s333 = sphi 0, %s332
    %s347 = sphi 0, %s333
    %s351 = sphi 0, %s351
    %s353 = sphi 0, %s351
    %s354 = sphi 0, %s353
    %s368 = sphi 0, %s354
    %s372 = sphi 0, %s372
    %s374 = sphi 0, %s372
    %s375 = sphi 0, %s374
    %s389 = sphi 0, %s375
    %s395 = sphi 0, %s397
    %s398 = sphi 0, %s395
    %s399 = sphi 0, %s398
    %s415 = sphi 0, %s399
  $region4: #{lea_forward.1} parent=0 // loop_header_branch
    %26 = sbr.rel (%p24) target = $region8
  $region5: #{lea_forward.1} parent=0 // loop_body
    %s28 = ssub.s32 %s23, 1
    %s29 = ssub.s32 %s23, 2
    %s30 = sadd.s32 %s23, 1
    %s31 = ssub.s32 %s23, %s30
    %p32 = scmp.eq.s32.totalorder %s31, 0
    %s34 = sadd.s32 %s33, 1
    %s35 = scalar_select %p32, %s33, %s34
    %p38 = pneg %p32
    %p39 = scmp.eq.s32.totalorder %s23, 1
    %p40 = por %p38, %p39
    %p41 = scmp.ne.s32.totalorder %s33, %s36
    %p42 = scmp.eq.s32.totalorder %s23, 0
    %p43 = por %p41, %p42
    %p44 = scmp.ne.s32.totalorder %s33, %s36
    %p45 = scmp.eq.s32.totalorder %s28, 1
    %p46 = por %p44, %p45
    %p47 = scmp.ne.s32.totalorder %s36, %s37
    %p48 = scmp.eq.s32.totalorder %s28, 0
    %p49 = por %p47, %p48
    %p50 = scmp.ne.s32.totalorder %s36, %s37
    %p51 = scmp.eq.s32.totalorder %s29, 1
    %p52 = por %p50, %p51
    %p54 = scmp.ne.s32.totalorder %s37, %s53
    %p55 = scmp.eq.s32.totalorder %s29, 0
    %p56 = por %p54, %p55
    %s58 = sadd.s32 %s57, 1
    %p61 = scmp.eq.s32.totalorder %s23, 1
    %p62 = scmp.ne.s32.totalorder %s57, %s59
    %p63 = scmp.eq.s32.totalorder %s23, 0
    %p64 = por %p62, %p63
    %p65 = scmp.ne.s32.totalorder %s57, %s59
    %p66 = scmp.eq.s32.totalorder %s28, 1
    %p67 = por %p65, %p66
    %p68 = scmp.ne.s32.totalorder %s59, %s60
    %p69 = scmp.eq.s32.totalorder %s28, 0
    %p70 = por %p68, %p69
    %p71 = scmp.ne.s32.totalorder %s59, %s60
    %p72 = scmp.eq.s32.totalorder %s29, 1
    %p73 = por %p71, %p72
    %p75 = scmp.ne.s32.totalorder %s60, %s74
    %p76 = scmp.eq.s32.totalorder %s29, 0
    %p77 = por %p75, %p76
    %s79 = sadd.s32 %s78, 1
    %p82 = scmp.eq.s32.totalorder %s23, 1
    %p83 = scmp.ne.s32.totalorder %s78, %s80
    %p84 = scmp.eq.s32.totalorder %s23, 0
    %p85 = por %p83, %p84
    %p86 = scmp.ne.s32.totalorder %s78, %s80
    %p87 = scmp.eq.s32.totalorder %s28, 1
    %p88 = por %p86, %p87
    %p89 = scmp.ne.s32.totalorder %s80, %s81
    %p90 = scmp.eq.s32.totalorder %s28, 0
    %p91 = por %p89, %p90
    %p92 = scmp.ne.s32.totalorder %s80, %s81
    %p93 = scmp.eq.s32.totalorder %s29, 1
    %p94 = por %p92, %p93
    %p96 = scmp.ne.s32.totalorder %s81, %s95
    %p97 = scmp.eq.s32.totalorder %s29, 0
    %p98 = por %p96, %p97
    %s100 = sadd.s32 %s99, 1
    %p103 = scmp.eq.s32.totalorder %s23, 1
    %p104 = scmp.ne.s32.totalorder %s99, %s101
    %p105 = scmp.eq.s32.totalorder %s23, 0
    %p106 = por %p104, %p105
    %p107 = scmp.ne.s32.totalorder %s99, %s101
    %p108 = scmp.eq.s32.totalorder %s28, 1
    %p109 = por %p107, %p108
    %p110 = scmp.ne.s32.totalorder %s101, %s102
    %p111 = scmp.eq.s32.totalorder %s28, 0
    %p112 = por %p110, %p111
    %p113 = scmp.ne.s32.totalorder %s101, %s102
    %p114 = scmp.eq.s32.totalorder %s29, 1
    %p115 = por %p113, %p114
    %p117 = scmp.ne.s32.totalorder %s102, %s116
    %p118 = scmp.eq.s32.totalorder %s29, 0
    %p119 = por %p117, %p118
    %s121 = sadd.s32 %s120, 1
    %p124 = scmp.eq.s32.totalorder %s23, 1
    %p125 = scmp.ne.s32.totalorder %s120, %s122
    %p126 = scmp.eq.s32.totalorder %s23, 0
    %p127 = por %p125, %p126
    %p128 = scmp.ne.s32.totalorder %s120, %s122
    %p129 = scmp.eq.s32.totalorder %s28, 1
    %p130 = por %p128, %p129
    %p131 = scmp.ne.s32.totalorder %s122, %s123
    %p132 = scmp.eq.s32.totalorder %s28, 0
    %p133 = por %p131, %p132
    %p134 = scmp.ne.s32.totalorder %s122, %s123
    %p135 = scmp.eq.s32.totalorder %s29, 1
    %p136 = por %p134, %p135
    %p138 = scmp.ne.s32.totalorder %s123, %s137
    %p139 = scmp.eq.s32.totalorder %s29, 0
    %p140 = por %p138, %p139
    %s142 = sadd.s32 %s141, 1
    %p145 = scmp.eq.s32.totalorder %s23, 1
    %p146 = scmp.ne.s32.totalorder %s141, %s143
    %p147 = scmp.eq.s32.totalorder %s23, 0
    %p148 = por %p146, %p147
    %p149 = scmp.ne.s32.totalorder %s141, %s143
    %p150 = scmp.eq.s32.totalorder %s28, 1
    %p151 = por %p149, %p150
    %p152 = scmp.ne.s32.totalorder %s143, %s144
    %p153 = scmp.eq.s32.totalorder %s28, 0
    %p154 = por %p152, %p153
    %p155 = scmp.ne.s32.totalorder %s143, %s144
    %p156 = scmp.eq.s32.totalorder %s29, 1
    %p157 = por %p155, %p156
    %p159 = scmp.ne.s32.totalorder %s144, %s158
    %p160 = scmp.eq.s32.totalorder %s29, 0
    %p161 = por %p159, %p160
    %s163 = sadd.s32 %s162, 1
    %p166 = scmp.eq.s32.totalorder %s23, 1
    %p167 = scmp.ne.s32.totalorder %s162, %s164
    %p168 = scmp.eq.s32.totalorder %s23, 0
    %p169 = por %p167, %p168
    %p170 = scmp.ne.s32.totalorder %s162, %s164
    %p171 = scmp.eq.s32.totalorder %s28, 1
    %p172 = por %p170, %p171
    %p173 = scmp.ne.s32.totalorder %s164, %s165
    %p174 = scmp.eq.s32.totalorder %s28, 0
    %p175 = por %p173, %p174
    %p176 = scmp.ne.s32.totalorder %s164, %s165
    %p177 = scmp.eq.s32.totalorder %s29, 1
    %p178 = por %p176, %p177
    %p180 = scmp.ne.s32.totalorder %s165, %s179
    %p181 = scmp.eq.s32.totalorder %s29, 0
    %p182 = por %p180, %p181
    %s184 = sadd.s32 %s183, 1
    %p187 = scmp.eq.s32.totalorder %s23, 1
    %p188 = scmp.ne.s32.totalorder %s183, %s185
    %p189 = scmp.eq.s32.totalorder %s23, 0
    %p190 = por %p188, %p189
    %p191 = scmp.ne.s32.totalorder %s183, %s185
    %p192 = scmp.eq.s32.totalorder %s28, 1
    %p193 = por %p191, %p192
    %p194 = scmp.ne.s32.totalorder %s185, %s186
    %p195 = scmp.eq.s32.totalorder %s28, 0
    %p196 = por %p194, %p195
    %p197 = scmp.ne.s32.totalorder %s185, %s186
    %p198 = scmp.eq.s32.totalorder %s29, 1
    %p199 = por %p197, %p198
    %p201 = scmp.ne.s32.totalorder %s186, %s200
    %p202 = scmp.eq.s32.totalorder %s29, 0
    %p203 = por %p201, %p202
    %s205 = sadd.s32 %s204, 1
    %p208 = scmp.eq.s32.totalorder %s23, 1
    %p209 = scmp.ne.s32.totalorder %s204, %s206
    %p210 = scmp.eq.s32.totalorder %s23, 0
    %p211 = por %p209, %p210
    %p212 = scmp.ne.s32.totalorder %s204, %s206
    %p213 = scmp.eq.s32.totalorder %s28, 1
    %p214 = por %p212, %p213
    %p215 = scmp.ne.s32.totalorder %s206, %s207
    %p216 = scmp.eq.s32.totalorder %s28, 0
    %p217 = por %p215, %p216
    %p218 = scmp.ne.s32.totalorder %s206, %s207
    %p219 = scmp.eq.s32.totalorder %s29, 1
    %p220 = por %p218, %p219
    %p222 = scmp.ne.s32.totalorder %s207, %s221
    %p223 = scmp.eq.s32.totalorder %s29, 0
    %p224 = por %p222, %p223
    %s226 = sadd.s32 %s225, 1
    %p229 = scmp.eq.s32.totalorder %s23, 1
    %p230 = scmp.ne.s32.totalorder %s225, %s227
    %p231 = scmp.eq.s32.totalorder %s23, 0
    %p232 = por %p230, %p231
    %p233 = scmp.ne.s32.totalorder %s225, %s227
    %p234 = scmp.eq.s32.totalorder %s28, 1
    %p235 = por %p233, %p234
    %p236 = scmp.ne.s32.totalorder %s227, %s228
    %p237 = scmp.eq.s32.totalorder %s28, 0
    %p238 = por %p236, %p237
    %p239 = scmp.ne.s32.totalorder %s227, %s228
    %p240 = scmp.eq.s32.totalorder %s29, 1
    %p241 = por %p239, %p240
    %p243 = scmp.ne.s32.totalorder %s228, %s242
    %p244 = scmp.eq.s32.totalorder %s29, 0
    %p245 = por %p243, %p244
    %s247 = sadd.s32 %s246, 1
    %p250 = scmp.eq.s32.totalorder %s23, 1
    %p251 = scmp.ne.s32.totalorder %s246, %s248
    %p252 = scmp.eq.s32.totalorder %s23, 0
    %p253 = por %p251, %p252
    %p254 = scmp.ne.s32.totalorder %s246, %s248
    %p255 = scmp.eq.s32.totalorder %s28, 1
    %p256 = por %p254, %p255
    %p257 = scmp.ne.s32.totalorder %s248, %s249
    %p258 = scmp.eq.s32.totalorder %s28, 0
    %p259 = por %p257, %p258
    %p260 = scmp.ne.s32.totalorder %s248, %s249
    %p261 = scmp.eq.s32.totalorder %s29, 1
    %p262 = por %p260, %p261
    %p264 = scmp.ne.s32.totalorder %s249, %s263
    %p265 = scmp.eq.s32.totalorder %s29, 0
    %p266 = por %p264, %p265
    %s268 = sadd.s32 %s267, 1
    %p271 = scmp.eq.s32.totalorder %s23, 1
    %p272 = scmp.ne.s32.totalorder %s267, %s269
    %p273 = scmp.eq.s32.totalorder %s23, 0
    %p274 = por %p272, %p273
    %p275 = scmp.ne.s32.totalorder %s267, %s269
    %p276 = scmp.eq.s32.totalorder %s28, 1
    %p277 = por %p275, %p276
    %p278 = scmp.ne.s32.totalorder %s269, %s270
    %p279 = scmp.eq.s32.totalorder %s28, 0
    %p280 = por %p278, %p279
    %p281 = scmp.ne.s32.totalorder %s269, %s270
    %p282 = scmp.eq.s32.totalorder %s29, 1
    %p283 = por %p281, %p282
    %p285 = scmp.ne.s32.totalorder %s270, %s284
    %p286 = scmp.eq.s32.totalorder %s29, 0
    %p287 = por %p285, %p286
    %s289 = sadd.s32 %s288, 1
    %p292 = scmp.eq.s32.totalorder %s23, 1
    %p293 = scmp.ne.s32.totalorder %s288, %s290
    %p294 = scmp.eq.s32.totalorder %s23, 0
    %p295 = por %p293, %p294
    %p296 = scmp.ne.s32.totalorder %s288, %s290
    %p297 = scmp.eq.s32.totalorder %s28, 1
    %p298 = por %p296, %p297
    %p299 = scmp.ne.s32.totalorder %s290, %s291
    %p300 = scmp.eq.s32.totalorder %s28, 0
    %p301 = por %p299, %p300
    %p302 = scmp.ne.s32.totalorder %s290, %s291
    %p303 = scmp.eq.s32.totalorder %s29, 1
    %p304 = por %p302, %p303
    %p306 = scmp.ne.s32.totalorder %s291, %s305
    %p307 = scmp.eq.s32.totalorder %s29, 0
    %p308 = por %p306, %p307
    %s310 = sadd.s32 %s309, 1
    %p313 = scmp.eq.s32.totalorder %s23, 1
    %p314 = scmp.ne.s32.totalorder %s309, %s311
    %p315 = scmp.eq.s32.totalorder %s23, 0
    %p316 = por %p314, %p315
    %p317 = scmp.ne.s32.totalorder %s309, %s311
    %p318 = scmp.eq.s32.totalorder %s28, 1
    %p319 = por %p317, %p318
    %p320 = scmp.ne.s32.totalorder %s311, %s312
    %p321 = scmp.eq.s32.totalorder %s28, 0
    %p322 = por %p320, %p321
    %p323 = scmp.ne.s32.totalorder %s311, %s312
    %p324 = scmp.eq.s32.totalorder %s29, 1
    %p325 = por %p323, %p324
    %p327 = scmp.ne.s32.totalorder %s312, %s326
    %p328 = scmp.eq.s32.totalorder %s29, 0
    %p329 = por %p327, %p328
    %s331 = sadd.s32 %s330, 1
    %p334 = scmp.eq.s32.totalorder %s23, 1
    %p335 = scmp.ne.s32.totalorder %s330, %s332
    %p336 = scmp.eq.s32.totalorder %s23, 0
    %p337 = por %p335, %p336
    %p338 = scmp.ne.s32.totalorder %s330, %s332
    %p339 = scmp.eq.s32.totalorder %s28, 1
    %p340 = por %p338, %p339
    %p341 = scmp.ne.s32.totalorder %s332, %s333
    %p342 = scmp.eq.s32.totalorder %s28, 0
    %p343 = por %p341, %p342
    %p344 = scmp.ne.s32.totalorder %s332, %s333
    %p345 = scmp.eq.s32.totalorder %s29, 1
    %p346 = por %p344, %p345
    %p348 = scmp.ne.s32.totalorder %s333, %s347
    %p349 = scmp.eq.s32.totalorder %s29, 0
    %p350 = por %p348, %p349
    %s352 = sadd.s32 %s351, 1
    %p355 = scmp.eq.s32.totalorder %s23, 1
    %p356 = scmp.ne.s32.totalorder %s351, %s353
    %p357 = scmp.eq.s32.totalorder %s23, 0
    %p358 = por %p356, %p357
    %p359 = scmp.ne.s32.totalorder %s351, %s353
    %p360 = scmp.eq.s32.totalorder %s28, 1
    %p361 = por %p359, %p360
    %p362 = scmp.ne.s32.totalorder %s353, %s354
    %p363 = scmp.eq.s32.totalorder %s28, 0
    %p364 = por %p362, %p363
    %p365 = scmp.ne.s32.totalorder %s353, %s354
    %p366 = scmp.eq.s32.totalorder %s29, 1
    %p367 = por %p365, %p366
    %p369 = scmp.ne.s32.totalorder %s354, %s368
    %p370 = scmp.eq.s32.totalorder %s29, 0
    %p371 = por %p369, %p370
    %s373 = sadd.s32 %s372, 1
    %p376 = scmp.eq.s32.totalorder %s23, 1
    %p377 = scmp.ne.s32.totalorder %s372, %s374
    %p378 = scmp.eq.s32.totalorder %s23, 0
    %p379 = por %p377, %p378
    %p380 = scmp.ne.s32.totalorder %s372, %s374
    %p381 = scmp.eq.s32.totalorder %s28, 1
    %p382 = por %p380, %p381
    %p383 = scmp.ne.s32.totalorder %s374, %s375
    %p384 = scmp.eq.s32.totalorder %s28, 0
    %p385 = por %p383, %p384
    %p386 = scmp.ne.s32.totalorder %s374, %s375
    %p387 = scmp.eq.s32.totalorder %s29, 1
    %p388 = por %p386, %p387
    %p390 = scmp.ne.s32.totalorder %s375, %s389
    %p391 = scmp.eq.s32.totalorder %s29, 0
    %p392 = por %p390, %p391
    %s393 = ssub.s32 %s23, %s30
    %p394 = scmp.eq.s32.totalorder %s393, 0
    %s396 = sadd.s32 %s395, 1
    %s397 = scalar_select %p394, %s395, %s396
    %p400 = pneg %p394
    %p401 = scmp.eq.s32.totalorder %s23, 1
    %p402 = por %p400, %p401
    %p403 = scmp.ne.s32.totalorder %s395, %s398
    %p404 = scmp.eq.s32.totalorder %s23, 0
    %p405 = por %p403, %p404
    %p406 = scmp.ne.s32.totalorder %s395, %s398
    %p407 = scmp.eq.s32.totalorder %s28, 1
    %p408 = por %p406, %p407
    %p409 = scmp.ne.s32.totalorder %s398, %s399
    %p410 = scmp.eq.s32.totalorder %s28, 0
    %p411 = por %p409, %p410
    %p412 = scmp.ne.s32.totalorder %s398, %s399
    %p413 = scmp.eq.s32.totalorder %s29, 1
    %p414 = por %p412, %p413
    %p416 = scmp.ne.s32.totalorder %s399, %s415
    %p417 = scmp.eq.s32.totalorder %s29, 0
    %p418 = por %p416, %p417
    %p419 = scmp.le.s32.totalorder 1, %s23
    %p420 = scmp.lt.s32.totalorder %s23, 3
    %p421 = pnand %p419, %p420
    %p422 = pneg %p421
    // Predicated region
    $region9: #{lea_forward.1} parent=5 // pred_check
      _
    $region10: #{lea_forward.1} parent=5 // pred_check_branch
      %424 = sbr.rel (%p421) target = $region12
    $region11: #{lea_forward.1} parent=5 // pred_region
      %s425 = ssub.s32 %s23, 1
      // Predicated region
      $region13: #{lea_forward.1} parent=11 // pred_check
        %p426 = pneg %p70
      $region14: #{lea_forward.1} parent=11 // pred_check_branch
        %428 = sbr.rel (%p426) target = $region16
      $region15: #{lea_forward.1} parent=11 // pred_region
        _
      $region16: #{lea_forward.1} parent=11 // pred_fallthru
        _
      // Predicated region
      $region17: #{lea_forward.1} parent=11 // pred_check
        %p429 = pneg %p91
      $region18: #{lea_forward.1} parent=11 // pred_check_branch
        %431 = sbr.rel (%p429) target = $region20
      $region19: #{lea_forward.1} parent=11 // pred_region
        _
      $region20: #{lea_forward.1} parent=11 // pred_fallthru
        _
      // Predicated region
      $region21: #{lea_forward.1} parent=11 // pred_check
        %p432 = pneg %p112
      $region22: #{lea_forward.1} parent=11 // pred_check_branch
        %434 = sbr.rel (%p432) target = $region24
      $region23: #{lea_forward.1} parent=11 // pred_region
        _
      $region24: #{lea_forward.1} parent=11 // pred_fallthru
        _
      // Predicated region
      $region25: #{lea_forward.1} parent=11 // pred_check
        %p435 = pneg %p133
      $region26: #{lea_forward.1} parent=11 // pred_check_branch
        %437 = sbr.rel (%p435) target = $region28
      $region27: #{lea_forward.1} parent=11 // pred_region
        _
      $region28: #{lea_forward.1} parent=11 // pred_fallthru
        _
      // Predicated region
      $region29: #{lea_forward.1} parent=11 // pred_check
        %p438 = pneg %p154
      $region30: #{lea_forward.1} parent=11 // pred_check_branch
        %440 = sbr.rel (%p438) target = $region32
      $region31: #{lea_forward.1} parent=11 // pred_region
        _
      $region32: #{lea_forward.1} parent=11 // pred_fallthru
        _
      // Predicated region
      $region33: #{lea_forward.1} parent=11 // pred_check
        %p441 = pneg %p175
      $region34: #{lea_forward.1} parent=11 // pred_check_branch
        %443 = sbr.rel (%p441) target = $region36
      $region35: #{lea_forward.1} parent=11 // pred_region
        _
      $region36: #{lea_forward.1} parent=11 // pred_fallthru
        _
      // Predicated region
      $region37: #{lea_forward.1} parent=11 // pred_check
        %p444 = pneg %p196
      $region38: #{lea_forward.1} parent=11 // pred_check_branch
        %446 = sbr.rel (%p444) target = $region40
      $region39: #{lea_forward.1} parent=11 // pred_region
        _
      $region40: #{lea_forward.1} parent=11 // pred_fallthru
        _
      // Predicated region
      $region41: #{lea_forward.1} parent=11 // pred_check
        %p447 = pneg %p217
      $region42: #{lea_forward.1} parent=11 // pred_check_branch
        %449 = sbr.rel (%p447) target = $region44
      $region43: #{lea_forward.1} parent=11 // pred_region
        _
      $region44: #{lea_forward.1} parent=11 // pred_fallthru
        _
      // Predicated region
      $region45: #{lea_forward.1} parent=11 // pred_check
        %p450 = pneg %p238
      $region46: #{lea_forward.1} parent=11 // pred_check_branch
        %452 = sbr.rel (%p450) target = $region48
      $region47: #{lea_forward.1} parent=11 // pred_region
        _
      $region48: #{lea_forward.1} parent=11 // pred_fallthru
        _
      // Predicated region
      $region49: #{lea_forward.1} parent=11 // pred_check
        %p453 = pneg %p259
      $region50: #{lea_forward.1} parent=11 // pred_check_branch
        %455 = sbr.rel (%p453) target = $region52
      $region51: #{lea_forward.1} parent=11 // pred_region
        _
      $region52: #{lea_forward.1} parent=11 // pred_fallthru
        _
      // Predicated region
      $region53: #{lea_forward.1} parent=11 // pred_check
        %p456 = pneg %p280
      $region54: #{lea_forward.1} parent=11 // pred_check_branch
        %458 = sbr.rel (%p456) target = $region56
      $region55: #{lea_forward.1} parent=11 // pred_region
        _
      $region56: #{lea_forward.1} parent=11 // pred_fallthru
        _
      // Predicated region
      $region57: #{lea_forward.1} parent=11 // pred_check
        %p459 = pneg %p301
      $region58: #{lea_forward.1} parent=11 // pred_check_branch
        %461 = sbr.rel (%p459) target = $region60
      $region59: #{lea_forward.1} parent=11 // pred_region
        _
      $region60: #{lea_forward.1} parent=11 // pred_fallthru
        _
      // Predicated region
      $region61: #{lea_forward.1} parent=11 // pred_check
        %p462 = pneg %p322
      $region62: #{lea_forward.1} parent=11 // pred_check_branch
        %464 = sbr.rel (%p462) target = $region64
      $region63: #{lea_forward.1} parent=11 // pred_region
        _
      $region64: #{lea_forward.1} parent=11 // pred_fallthru
        _
      // Predicated region
      $region65: #{lea_forward.1} parent=11 // pred_check
        %p465 = pneg %p343
      $region66: #{lea_forward.1} parent=11 // pred_check_branch
        %467 = sbr.rel (%p465) target = $region68
      $region67: #{lea_forward.1} parent=11 // pred_region
        _
      $region68: #{lea_forward.1} parent=11 // pred_fallthru
        _
      // Predicated region
      $region69: #{lea_forward.1} parent=11 // pred_check
        %p468 = pneg %p364
      $region70: #{lea_forward.1} parent=11 // pred_check_branch
        %470 = sbr.rel (%p468) target = $region72
      $region71: #{lea_forward.1} parent=11 // pred_region
        _
      $region72: #{lea_forward.1} parent=11 // pred_fallthru
        _
      // Predicated region
      $region73: #{lea_forward.1} parent=11 // pred_check
        %p471 = pneg %p385
      $region74: #{lea_forward.1} parent=11 // pred_check_branch
        %473 = sbr.rel (%p471) target = $region76
      $region75: #{lea_forward.1} parent=11 // pred_region
        _
      $region76: #{lea_forward.1} parent=11 // pred_fallthru
        _
    $region12: #{lea_forward.1} parent=5 // pred_fallthru
      _
    %p474 = scmp.lt.s32.totalorder %s23, 2
    // Predicated region
    $region77: #{lea_forward.1} parent=5 // pred_check
      %p475 = pneg %p474
    $region78: #{lea_forward.1} parent=5 // pred_check_branch
      %477 = sbr.rel (%p475) target = $region80
    $region79: #{lea_forward.1} parent=5 // pred_region
      // Predicated region
      $region81: #{lea_forward.1} parent=79 // pred_check
        %p478 = pneg %p43
      $region82: #{lea_forward.1} parent=79 // pred_check_branch
        %480 = sbr.rel (%p478) target = $region84
      $region83: #{lea_forward.1} parent=79 // pred_region
        %p481 = scmp.lt.s32.totalorder %s23, 1
        %s482 = scalar_select %p481, %s23, 1
        %s483 = smul.addr %s482, 60
        %s484 = smul.addr %s483, 4
        %s485 = scalar_lea.vmem %s0, %s484
      $region84: #{lea_forward.1} parent=79 // pred_fallthru
        _
    $region80: #{lea_forward.1} parent=5 // pred_fallthru
      _
    %p486 = scmp.le.s32.totalorder 1, %s23
    %p487 = scmp.lt.s32.totalorder %s23, 3
    %p488 = pnand %p486, %p487
    %p489 = pneg %p488
    // Predicated region
    $region85: #{lea_forward.1} parent=5 // pred_check
      _
    $region86: #{lea_forward.1} parent=5 // pred_check_branch
      %491 = sbr.rel (%p488) target = $region88
    $region87: #{lea_forward.1} parent=5 // pred_region
      %s492 = ssub.s32 %s23, 1
      %p493 = scmp.lt.s32.totalorder %s28, 1
      %s494 = scalar_select %p493, %s28, 1
      %s495 = smul.addr %s494, 60
      %s496 = smul.addr %s495, 4
      %s497 = scalar_lea.vmem %s0, %s496
      %p498 = pneg %p49
      %p499 = pneg %p46
      %p500 = pneg %p70
      %p501 = pneg %p67
      %p502 = pneg %p91
      %p503 = pneg %p88
      %p504 = pneg %p112
      %p505 = pneg %p109
      %p506 = pneg %p133
      %p507 = pneg %p130
      %p508 = pneg %p154
      %p509 = pneg %p151
      %p510 = pneg %p175
      %p511 = pneg %p172
      %p512 = pneg %p196
      %p513 = pneg %p193
      %p514 = pneg %p217
      %p515 = pneg %p214
      %p516 = pneg %p238
      %p517 = pneg %p235
      %p518 = pneg %p259
      %p519 = pneg %p256
      %p520 = pneg %p280
      %p521 = pneg %p277
      %p522 = pneg %p301
      %p523 = pneg %p298
      %p524 = pneg %p322
      %p525 = pneg %p319
      %p526 = pneg %p343
      %p527 = pneg %p340
      %p528 = pneg %p364
      %p529 = pneg %p361
      %p530 = pneg %p385
      %p531 = pneg %p382
      %p532 = pneg %p411
      %p533 = pneg %p408
      %p534 = scmp.lt.s32.totalorder %s28, 1
      %s535 = scalar_select %p534, %s28, 1
      %s536 = smul.addr %s535, 32
      %s537 = smul.addr %s536, 8
      %s538 = scalar_lea.vmem %s17, %s537
      %p539 = scmp.lt.s32.totalorder %s28, 1
      %s540 = scalar_select %p539, %s28, 1
      %s541 = smul.addr %s540, 60
      %s542 = smul.addr %s541, 4
      %s543 = scalar_lea.vmem %s0, %s542
      %p544 = scmp.lt.s32.totalorder %s28, 1
      %s545 = scalar_select %p544, %s28, 1
      %s546 = smul.addr %s545, 32
      %s547 = smul.addr %s546, 8
      %s548 = scalar_lea.vmem %s17, %s547
      %v550 = vld [vmem:[%s543] sm:$0xf]
      %v551 = vld [vmem:[%s543 + $0x4] sm:$0xf]
      %v552 = vld [vmem:[%s543 + $0x8] sm:$0xf]
      %v553 = vld [vmem:[%s543 + $0xc] sm:$0xf]
      %v554 = vld [vmem:[%s543 + $0x10] sm:$0xf]
      %v555 = vld [vmem:[%s543 + $0x14] sm:$0xf]
      %v556 = vld [vmem:[%s543 + $0x18] sm:$0xf]
      %v557 = vld [vmem:[%s543 + $0x1c] sm:$0xf]
      %v558 = vld [vmem:[%s543 + $0x20] sm:$0xf]
      %v559 = vld [vmem:[%s543 + $0x24] sm:$0xf]
      %v560 = vld [vmem:[%s543 + $0x28] sm:$0xf]
      %v561 = vld [vmem:[%s543 + $0x2c] sm:$0xf]
      %v562 = vld [vmem:[%s543 + $0x30] sm:$0xf]
      %v563 = vld [vmem:[%s543 + $0x34] sm:$0xf]
      %v564 = vld [vmem:[%s543 + $0x38] sm:$0xf]
      %v565 = vld [vmem:[%s543 + $0x3c] sm:$0xf]
      %v566 = vld [vmem:[%s543 + $0x40] sm:$0xf]
      %v567 = vld [vmem:[%s543 + $0x44] sm:$0xf]
      %v568 = vld [vmem:[%s543 + $0x48] sm:$0xf]
      %v569 = vld [vmem:[%s543 + $0x4c] sm:$0xf]
      %v570 = vld [vmem:[%s543 + $0x50] sm:$0xf]
      %v571 = vld [vmem:[%s543 + $0x54] sm:$0xf]
      %v572 = vld [vmem:[%s543 + $0x58] sm:$0xf]
      %v573 = vld [vmem:[%s543 + $0x5c] sm:$0xf]
      %v574 = vld [vmem:[%s543 + $0x60] sm:$0xf]
      %v575 = vld [vmem:[%s543 + $0x64] sm:$0xf]
      %v576 = vld [vmem:[%s543 + $0x68] sm:$0xf]
      %v577 = vld [vmem:[%s543 + $0x6c] sm:$0xf]
      %v578 = vld [vmem:[%s543 + $0x70] sm:$0xf]
      %v579 = vld [vmem:[%s543 + $0x74] sm:$0xf]
      %v580 = vld [vmem:[%s543 + $0x78] sm:$0xf]
      %v581 = vld [vmem:[%s543 + $0x7c] sm:$0xf]
      %v582 = vld [vmem:[%s543 + $0x80] sm:$0xf]
      %v583 = vld [vmem:[%s543 + $0x84] sm:$0xf]
      %v584 = vld [vmem:[%s543 + $0x88] sm:$0xf]
      %v585 = vld [vmem:[%s543 + $0x8c] sm:$0xf]
      %v586 = vld [vmem:[%s543 + $0x90] sm:$0xf]
      %v587 = vld [vmem:[%s543 + $0x94] sm:$0xf]
      %v588 = vld [vmem:[%s543 + $0x98] sm:$0xf]
      %v589 = vld [vmem:[%s543 + $0x9c] sm:$0xf]
      %v590 = vld [vmem:[%s543 + $0xa0] sm:$0xf]
      %v591 = vld [vmem:[%s543 + $0xa4] sm:$0xf]
      %v592 = vld [vmem:[%s543 + $0xa8] sm:$0xf]
      %v593 = vld [vmem:[%s543 + $0xac] sm:$0xf]
      %v594 = vld [vmem:[%s543 + $0xb0] sm:$0xf]
      %v595 = vld [vmem:[%s543 + $0xb4] sm:$0xf]
      %v596 = vld [vmem:[%s543 + $0xb8] sm:$0xf]
      %v597 = vld [vmem:[%s543 + $0xbc] sm:$0xf]
      %v598 = vld [vmem:[%s543 + $0xc0] sm:$0xf]
      %v599 = vld [vmem:[%s543 + $0xc4] sm:$0xf]
      %v600 = vld [vmem:[%s543 + $0xc8] sm:$0xf]
      %v601 = vld [vmem:[%s543 + $0xcc] sm:$0xf]
      %v602 = vld [vmem:[%s543 + $0xd0] sm:$0xf]
      %v603 = vld [vmem:[%s543 + $0xd4] sm:$0xf]
      %v604 = vld [vmem:[%s543 + $0xd8] sm:$0xf]
      %v605 = vld [vmem:[%s543 + $0xdc] sm:$0xf]
      %v606 = vld [vmem:[%s543 + $0xe0] sm:$0xf]
      %v607 = vld [vmem:[%s543 + $0xe4] sm:$0xf]
      %v608 = vld [vmem:[%s543 + $0xe8] sm:$0xf]
      %v609 = vld [vmem:[%s543 + $0xec] sm:$0xf]
      %v610 = vld [vmem:[%s1] sm:$0xf]
      %v611 = vld [vmem:[%s1 + $0x4] sm:$0xf]
      %v612 = vld [vmem:[%s1 + $0x8] sm:$0xf]
      %v613 = vld [vmem:[%s1 + $0xc] sm:$0xf]
      %v674 = vunpack.c.l.b16 %v550
      %v675 = vunpack.c.l.b16 %v551
      %v676 = vunpack.c.l.b16 %v552
      %v677 = vunpack.c.l.b16 %v553
      %v678 = vunpack.c.l.b16 %v554
      %v679 = vunpack.c.l.b16 %v555
      %v680 = vunpack.c.l.b16 %v556
      %v681 = vunpack.c.l.b16 %v557
      %v682 = vunpack.c.l.b16 %v558
      %v683 = vunpack.c.l.b16 %v559
      %v684 = vunpack.c.l.b16 %v560
      %v685 = vunpack.c.l.b16 %v561
      %v686 = vunpack.c.l.b16 %v562
      %v687 = vunpack.c.l.b16 %v563
      %v688 = vunpack.c.l.b16 %v564
      %v689 = vunpack.c.l.b16 %v565
      %v690 = vunpack.c.l.b16 %v566
      %v691 = vunpack.c.l.b16 %v567
      %v692 = vunpack.c.l.b16 %v568
      %v693 = vunpack.c.l.b16 %v569
      %v694 = vunpack.c.l.b16 %v570
      %v695 = vunpack.c.l.b16 %v571
      %v696 = vunpack.c.l.b16 %v572
      %v697 = vunpack.c.l.b16 %v573
      %v698 = vunpack.c.l.b16 %v574
      %v699 = vunpack.c.l.b16 %v575
      %v700 = vunpack.c.l.b16 %v576
      %v701 = vunpack.c.l.b16 %v577
      %v702 = vunpack.c.l.b16 %v578
      %v703 = vunpack.c.l.b16 %v579
      %v704 = vunpack.c.l.b16 %v580
      %v705 = vunpack.c.l.b16 %v581
      %v706 = vunpack.c.l.b16 %v582
      %v707 = vunpack.c.l.b16 %v583
      %v708 = vunpack.c.l.b16 %v584
      %v709 = vunpack.c.l.b16 %v585
      %v710 = vunpack.c.l.b16 %v586
      %v711 = vunpack.c.l.b16 %v587
      %v712 = vunpack.c.l.b16 %v588
      %v713 = vunpack.c.l.b16 %v589
      %v714 = vunpack.c.l.b16 %v590
      %v715 = vunpack.c.l.b16 %v591
      %v716 = vunpack.c.l.b16 %v592
      %v717 = vunpack.c.l.b16 %v593
      %v718 = vunpack.c.l.b16 %v594
      %v719 = vunpack.c.l.b16 %v595
      %v720 = vunpack.c.l.b16 %v596
      %v721 = vunpack.c.l.b16 %v597
      %v722 = vunpack.c.l.b16 %v598
      %v723 = vunpack.c.l.b16 %v599
      %v724 = vunpack.c.l.b16 %v600
      %v725 = vunpack.c.l.b16 %v601
      %v726 = vunpack.c.l.b16 %v602
      %v727 = vunpack.c.l.b16 %v603
      %v728 = vunpack.c.l.b16 %v604
      %v729 = vunpack.c.l.b16 %v605
      %v730 = vunpack.c.l.b16 %v606
      %v731 = vunpack.c.l.b16 %v607
      %v732 = vunpack.c.l.b16 %v608
      %v733 = vunpack.c.l.b16 %v609
      %v734 = vpack.c.b16 %v675, %v674
      %v735 = vpack.c.b16 %v677, %v676
      %v736 = vpack.c.b16 %v679, %v678
      %v737 = vpack.c.b16 %v681, %v680
      %v738 = vpack.c.b16 %v683, %v682
      %v739 = vpack.c.b16 %v685, %v684
      %v740 = vpack.c.b16 %v687, %v686
      %v741 = vpack.c.b16 %v689, %v688
      %v742 = vpack.c.b16 %v691, %v690
      %v743 = vpack.c.b16 %v693, %v692
      %v744 = vpack.c.b16 %v695, %v694
      %v745 = vpack.c.b16 %v697, %v696
      %v746 = vpack.c.b16 %v699, %v698
      %v747 = vpack.c.b16 %v701, %v700
      %v748 = vpack.c.b16 %v703, %v702
      %v749 = vpack.c.b16 %v705, %v704
      %v750 = vpack.c.b16 %v707, %v706
      %v751 = vpack.c.b16 %v709, %v708
      %v752 = vpack.c.b16 %v711, %v710
      %v753 = vpack.c.b16 %v713, %v712
      %v754 = vpack.c.b16 %v715, %v714
      %v755 = vpack.c.b16 %v717, %v716
      %v756 = vpack.c.b16 %v719, %v718
      %v757 = vpack.c.b16 %v721, %v720
      %v758 = vpack.c.b16 %v723, %v722
      %v759 = vpack.c.b16 %v725, %v724
      %v760 = vpack.c.b16 %v727, %v726
      %v761 = vpack.c.b16 %v729, %v728
      %v762 = vpack.c.b16 %v731, %v730
      %v763 = vpack.c.b16 %v733, %v732
      %v768 = vunpack.c.l.b16 %v610
      %v769 = vunpack.c.l.b16 %v611
      %v770 = vunpack.c.l.b16 %v612
      %v771 = vunpack.c.l.b16 %v613
      %v772 = vpack.c.b16 %v769, %v768
      %v773 = vpack.c.b16 %v771, %v770
      %vm776 = vcmask 261120
      %v778 = vsel %vm776, %v734, 0
      %v781 = vsel %vm776, %v735, 0
      %v784 = vsel %vm776, %v736, 0
      %v787 = vsel %vm776, %v737, 0
      %v790 = vsel %vm776, %v738, 0
      %v793 = vsel %vm776, %v739, 0
      %v796 = vsel %vm776, %v740, 0
      %v799 = vsel %vm776, %v741, 0
      %v802 = vsel %vm776, %v742, 0
      %v805 = vsel %vm776, %v743, 0
      %v808 = vsel %vm776, %v744, 0
      %v811 = vsel %vm776, %v745, 0
      %v814 = vsel %vm776, %v746, 0
      %v817 = vsel %vm776, %v747, 0
      %v820 = vsel %vm776, %v748, 0
      %v823 = vsel %vm776, %v749, 0
      %v826 = vsel %vm776, %v750, 0
      %v829 = vsel %vm776, %v751, 0
      %v832 = vsel %vm776, %v752, 0
      %v835 = vsel %vm776, %v753, 0
      %v838 = vsel %vm776, %v754, 0
      %v841 = vsel %vm776, %v755, 0
      %v844 = vsel %vm776, %v756, 0
      %v847 = vsel %vm776, %v757, 0
      %v850 = vsel %vm776, %v758, 0
      %v853 = vsel %vm776, %v759, 0
      %v856 = vsel %vm776, %v760, 0
      %v859 = vsel %vm776, %v761, 0
      %v862 = vsel %vm776, %v762, 0
      %v865 = vsel %vm776, %v763, 0
      %867 = vmatprep.subr.bf16.mxu0 0
      %868 = vmatpush1.bf16.msra.mxu0 0
      %869 = vmatprep.subr.bf16.mxu0 0
      %870 = vmatpush1.bf16.msra.mxu0 0
      %871 = vmatprep.subr.bf16.mxu0 0
      %872 = vmatpush1.bf16.msra.mxu0 0
      %873 = vmatprep.subr.bf16.mxu0 0
      %874 = vmatpush1.bf16.msra.mxu0 0
      %875 = vmatprep.subr.bf16.mxu0 0
      %876 = vmatpush1.bf16.msra.mxu0 0
      %877 = vmatprep.subr.bf16.mxu0 0
      %878 = vmatpush1.bf16.msra.mxu0 0
      %879 = vmatprep.subr.bf16.mxu0 0
      %880 = vmatpush1.bf16.msra.mxu0 %v773
      %881 = vmatprep.subr.bf16.mxu0 0
      %882 = vmatpush1.bf16.msra.mxu0 %v772
      %883 = vmatprep.subr.bf16.mxu0 0
      %884 = vmatpush2.bf16.msra.mxu0 0
      %885 = vmatprep.subr.bf16.mxu0 0
      %886 = vmatpush2.bf16.msra.mxu0 0
      %887 = vmatprep.subr.bf16.mxu0 0
      %888 = vmatpush2.bf16.msra.mxu0 0
      %889 = vmatprep.subr.bf16.mxu0 0
      %890 = vmatpush2.bf16.msra.mxu0 0
      %891 = vmatprep.subr.bf16.mxu0 0
      %892 = vmatpush2.bf16.msra.mxu0 0
      %893 = vmatprep.subr.bf16.mxu0 0
      %894 = vmatpush2.bf16.msra.mxu0 0
      %895 = vmatprep.subr.bf16.mxu0 0
      %896 = vmatpush2.bf16.msra.mxu0 0
      %897 = vmatprep.subr.bf16.mxu0 0
      %898 = vmatpush2.bf16.msra.mxu0 0
      %899 = vmatprep.mubr.bf16.mxu0 0
      %900 = vmatmul.mubr.bf16.gmra.mxu0 %v778
      %v901 = vpop.f32.mrf.mxu0
      %v902 = vadd.f32 0.0, %v901
      %v903 = vpop.f32.mrf.mxu0
      %v904 = vpop.f32.mrf.mxu0
      %v905 = vadd.f32 0.0, %v904
      %v906 = vpop.f32.mrf.mxu0
      %907 = vmatprep.mubr.bf16.mxu0 0
      %908 = vmatmul.mubr.bf16.gmra.mxu0 %v781
      %v909 = vpop.f32.mrf.mxu0
      %v910 = vadd.f32 0.0, %v909
      %v911 = vpop.f32.mrf.mxu0
      %v912 = vpop.f32.mrf.mxu0
      %v913 = vadd.f32 0.0, %v912
      %v914 = vpop.f32.mrf.mxu0
      %915 = vmatprep.mubr.bf16.mxu0 0
      %916 = vmatmul.mubr.bf16.gmra.mxu0 %v784
      %v917 = vpop.f32.mrf.mxu0
      %v918 = vadd.f32 0.0, %v917
      %v919 = vpop.f32.mrf.mxu0
      %v920 = vpop.f32.mrf.mxu0
      %v921 = vadd.f32 0.0, %v920
      %v922 = vpop.f32.mrf.mxu0
      %923 = vmatprep.mubr.bf16.mxu0 0
      %924 = vmatmul.mubr.bf16.gmra.mxu0 %v787
      %v925 = vpop.f32.mrf.mxu0
      %v926 = vadd.f32 0.0, %v925
      %v927 = vpop.f32.mrf.mxu0
      %v928 = vpop.f32.mrf.mxu0
      %v929 = vadd.f32 0.0, %v928
      %v930 = vpop.f32.mrf.mxu0
      %931 = vmatprep.mubr.bf16.mxu0 0
      %932 = vmatmul.mubr.bf16.gmra.mxu0 %v790
      %v933 = vpop.f32.mrf.mxu0
      %v934 = vadd.f32 0.0, %v933
      %v935 = vpop.f32.mrf.mxu0
      %v936 = vpop.f32.mrf.mxu0
      %v937 = vadd.f32 0.0, %v936
      %v938 = vpop.f32.mrf.mxu0
      %939 = vmatprep.mubr.bf16.mxu0 0
      %940 = vmatmul.mubr.bf16.gmra.mxu0 %v793
      %v941 = vpop.f32.mrf.mxu0
      %v942 = vadd.f32 0.0, %v941
      %v943 = vpop.f32.mrf.mxu0
      %v944 = vpop.f32.mrf.mxu0
      %v945 = vadd.f32 0.0, %v944
      %v946 = vpop.f32.mrf.mxu0
      %947 = vmatprep.mubr.bf16.mxu0 0
      %948 = vmatmul.mubr.bf16.gmra.mxu0 %v796
      %v949 = vpop.f32.mrf.mxu0
      %v950 = vadd.f32 0.0, %v949
      %v951 = vpop.f32.mrf.mxu0
      %v952 = vpop.f32.mrf.mxu0
      %v953 = vadd.f32 0.0, %v952
      %v954 = vpop.f32.mrf.mxu0
      %955 = vmatprep.mubr.bf16.mxu0 0
      %956 = vmatmul.mubr.bf16.gmra.mxu0 %v799
      %v957 = vpop.f32.mrf.mxu0
      %v958 = vadd.f32 0.0, %v957
      %v959 = vpop.f32.mrf.mxu0
      %v960 = vpop.f32.mrf.mxu0
      %v961 = vadd.f32 0.0, %v960
      %v962 = vpop.f32.mrf.mxu0
      %963 = vmatprep.mubr.bf16.mxu0 0
      %964 = vmatmul.mubr.bf16.gmra.mxu0 %v802
      %v965 = vpop.f32.mrf.mxu0
      %v966 = vadd.f32 0.0, %v965
      %v967 = vpop.f32.mrf.mxu0
      %v968 = vpop.f32.mrf.mxu0
      %v969 = vadd.f32 0.0, %v968
      %v970 = vpop.f32.mrf.mxu0
      %971 = vmatprep.mubr.bf16.mxu0 0
      %972 = vmatmul.mubr.bf16.gmra.mxu0 %v805
      %v973 = vpop.f32.mrf.mxu0
      %v974 = vadd.f32 0.0, %v973
      %v975 = vpop.f32.mrf.mxu0
      %v976 = vpop.f32.mrf.mxu0
      %v977 = vadd.f32 0.0, %v976
      %v978 = vpop.f32.mrf.mxu0
      %979 = vmatprep.mubr.bf16.mxu0 0
      %980 = vmatmul.mubr.bf16.gmra.mxu0 %v808
      %v981 = vpop.f32.mrf.mxu0
      %v982 = vadd.f32 0.0, %v981
      %v983 = vpop.f32.mrf.mxu0
      %v984 = vpop.f32.mrf.mxu0
      %v985 = vadd.f32 0.0, %v984
      %v986 = vpop.f32.mrf.mxu0
      %987 = vmatprep.mubr.bf16.mxu0 0
      %988 = vmatmul.mubr.bf16.gmra.mxu0 %v811
      %v989 = vpop.f32.mrf.mxu0
      %v990 = vadd.f32 0.0, %v989
      %v991 = vpop.f32.mrf.mxu0
      %v992 = vpop.f32.mrf.mxu0
      %v993 = vadd.f32 0.0, %v992
      %v994 = vpop.f32.mrf.mxu0
      %995 = vmatprep.mubr.bf16.mxu0 0
      %996 = vmatmul.mubr.bf16.gmra.mxu0 %v814
      %v997 = vpop.f32.mrf.mxu0
      %v998 = vadd.f32 0.0, %v997
      %v999 = vpop.f32.mrf.mxu0
      %v1000 = vpop.f32.mrf.mxu0
      %v1001 = vadd.f32 0.0, %v1000
      %v1002 = vpop.f32.mrf.mxu0
      %1003 = vmatprep.mubr.bf16.mxu0 0
      %1004 = vmatmul.mubr.bf16.gmra.mxu0 %v817
      %v1005 = vpop.f32.mrf.mxu0
      %v1006 = vadd.f32 0.0, %v1005
      %v1007 = vpop.f32.mrf.mxu0
      %v1008 = vpop.f32.mrf.mxu0
      %v1009 = vadd.f32 0.0, %v1008
      %v1010 = vpop.f32.mrf.mxu0
      %1011 = vmatprep.mubr.bf16.mxu0 0
      %1012 = vmatmul.mubr.bf16.gmra.mxu0 %v820
      %v1013 = vpop.f32.mrf.mxu0
      %v1014 = vadd.f32 0.0, %v1013
      %v1015 = vpop.f32.mrf.mxu0
      %v1016 = vpop.f32.mrf.mxu0
      %v1017 = vadd.f32 0.0, %v1016
      %v1018 = vpop.f32.mrf.mxu0
      %1019 = vmatprep.mubr.bf16.mxu0 0
      %1020 = vmatmul.mubr.bf16.gmra.mxu0 %v823
      %v1021 = vpop.f32.mrf.mxu0
      %v1022 = vadd.f32 0.0, %v1021
      %v1023 = vpop.f32.mrf.mxu0
      %v1024 = vpop.f32.mrf.mxu0
      %v1025 = vadd.f32 0.0, %v1024
      %v1026 = vpop.f32.mrf.mxu0
      %1027 = vmatprep.mubr.bf16.mxu0 0
      %1028 = vmatmul.mubr.bf16.gmra.mxu0 %v826
      %v1029 = vpop.f32.mrf.mxu0
      %v1030 = vadd.f32 0.0, %v1029
      %v1031 = vpop.f32.mrf.mxu0
      %v1032 = vpop.f32.mrf.mxu0
      %v1033 = vadd.f32 0.0, %v1032
      %v1034 = vpop.f32.mrf.mxu0
      %1035 = vmatprep.mubr.bf16.mxu0 0
      %1036 = vmatmul.mubr.bf16.gmra.mxu0 %v829
      %v1037 = vpop.f32.mrf.mxu0
      %v1038 = vadd.f32 0.0, %v1037
      %v1039 = vpop.f32.mrf.mxu0
      %v1040 = vpop.f32.mrf.mxu0
      %v1041 = vadd.f32 0.0, %v1040
      %v1042 = vpop.f32.mrf.mxu0
      %1043 = vmatprep.mubr.bf16.mxu0 0
      %1044 = vmatmul.mubr.bf16.gmra.mxu0 %v832
      %v1045 = vpop.f32.mrf.mxu0
      %v1046 = vadd.f32 0.0, %v1045
      %v1047 = vpop.f32.mrf.mxu0
      %v1048 = vpop.f32.mrf.mxu0
      %v1049 = vadd.f32 0.0, %v1048
      %v1050 = vpop.f32.mrf.mxu0
      %1051 = vmatprep.mubr.bf16.mxu0 0
      %1052 = vmatmul.mubr.bf16.gmra.mxu0 %v835
      %v1053 = vpop.f32.mrf.mxu0
      %v1054 = vadd.f32 0.0, %v1053
      %v1055 = vpop.f32.mrf.mxu0
      %v1056 = vpop.f32.mrf.mxu0
      %v1057 = vadd.f32 0.0, %v1056
      %v1058 = vpop.f32.mrf.mxu0
      %1059 = vmatprep.mubr.bf16.mxu0 0
      %1060 = vmatmul.mubr.bf16.gmra.mxu0 %v838
      %v1061 = vpop.f32.mrf.mxu0
      %v1062 = vadd.f32 0.0, %v1061
      %v1063 = vpop.f32.mrf.mxu0
      %v1064 = vpop.f32.mrf.mxu0
      %v1065 = vadd.f32 0.0, %v1064
      %v1066 = vpop.f32.mrf.mxu0
      %1067 = vmatprep.mubr.bf16.mxu0 0
      %1068 = vmatmul.mubr.bf16.gmra.mxu0 %v841
      %v1069 = vpop.f32.mrf.mxu0
      %v1070 = vadd.f32 0.0, %v1069
      %v1071 = vpop.f32.mrf.mxu0
      %v1072 = vpop.f32.mrf.mxu0
      %v1073 = vadd.f32 0.0, %v1072
      %v1074 = vpop.f32.mrf.mxu0
      %1075 = vmatprep.mubr.bf16.mxu0 0
      %1076 = vmatmul.mubr.bf16.gmra.mxu0 %v844
      %v1077 = vpop.f32.mrf.mxu0
      %v1078 = vadd.f32 0.0, %v1077
      %v1079 = vpop.f32.mrf.mxu0
      %v1080 = vpop.f32.mrf.mxu0
      %v1081 = vadd.f32 0.0, %v1080
      %v1082 = vpop.f32.mrf.mxu0
      %1083 = vmatprep.mubr.bf16.mxu0 0
      %1084 = vmatmul.mubr.bf16.gmra.mxu0 %v847
      %v1085 = vpop.f32.mrf.mxu0
      %v1086 = vadd.f32 0.0, %v1085
      %v1087 = vpop.f32.mrf.mxu0
      %v1088 = vpop.f32.mrf.mxu0
      %v1089 = vadd.f32 0.0, %v1088
      %v1090 = vpop.f32.mrf.mxu0
      %1091 = vmatprep.mubr.bf16.mxu0 0
      %1092 = vmatmul.mubr.bf16.gmra.mxu0 %v850
      %v1093 = vpop.f32.mrf.mxu0
      %v1094 = vadd.f32 0.0, %v1093
      %v1095 = vpop.f32.mrf.mxu0
      %v1096 = vpop.f32.mrf.mxu0
      %v1097 = vadd.f32 0.0, %v1096
      %v1098 = vpop.f32.mrf.mxu0
      %1099 = vmatprep.mubr.bf16.mxu0 0
      %1100 = vmatmul.mubr.bf16.gmra.mxu0 %v853
      %v1101 = vpop.f32.mrf.mxu0
      %v1102 = vadd.f32 0.0, %v1101
      %v1103 = vpop.f32.mrf.mxu0
      %v1104 = vpop.f32.mrf.mxu0
      %v1105 = vadd.f32 0.0, %v1104
      %v1106 = vpop.f32.mrf.mxu0
      %1107 = vmatprep.mubr.bf16.mxu0 0
      %1108 = vmatmul.mubr.bf16.gmra.mxu0 %v856
      %v1109 = vpop.f32.mrf.mxu0
      %v1110 = vadd.f32 0.0, %v1109
      %v1111 = vpop.f32.mrf.mxu0
      %v1112 = vpop.f32.mrf.mxu0
      %v1113 = vadd.f32 0.0, %v1112
      %v1114 = vpop.f32.mrf.mxu0
      %1115 = vmatprep.mubr.bf16.mxu0 0
      %1116 = vmatmul.mubr.bf16.gmra.mxu0 %v859
      %v1117 = vpop.f32.mrf.mxu0
      %v1118 = vadd.f32 0.0, %v1117
      %v1119 = vpop.f32.mrf.mxu0
      %v1120 = vpop.f32.mrf.mxu0
      %v1121 = vadd.f32 0.0, %v1120
      %v1122 = vpop.f32.mrf.mxu0
      %1123 = vmatprep.mubr.bf16.mxu0 0
      %1124 = vmatmul.mubr.bf16.gmra.mxu0 %v862
      %v1125 = vpop.f32.mrf.mxu0
      %v1126 = vadd.f32 0.0, %v1125
      %v1127 = vpop.f32.mrf.mxu0
      %v1128 = vpop.f32.mrf.mxu0
      %v1129 = vadd.f32 0.0, %v1128
      %v1130 = vpop.f32.mrf.mxu0
      %1131 = vmatprep.mubr.bf16.mxu0 0
      %1132 = vmatmul.mubr.bf16.gmra.mxu0 %v865
      %v1133 = vpop.f32.mrf.mxu0
      %v1134 = vadd.f32 0.0, %v1133
      %v1135 = vpop.f32.mrf.mxu0
      %v1136 = vpop.f32.mrf.mxu0
      %v1137 = vadd.f32 0.0, %v1136
      %v1138 = vpop.f32.mrf.mxu0
      %1139 = vdwg.mxu0
      %vm1188 = vcmask 1045504
      %v1189 = vrot.slane %v926, 2
      %v1190 = vrot.slane %v929, 2
      %v1191 = vsel %vm1188, %v1189, %v1190
      %v1192 = vrot.slane %v934, 2
      %v1193 = vsel %vm1188, %v1190, %v1192
      %v1194 = vrot.slane %v937, 2
      %v1195 = vrot.slane %v942, 2
      %v1196 = vsel %vm1188, %v1194, %v1195
      %v1197 = vrot.slane %v945, 2
      %v1198 = vsel %vm1188, %v1195, %v1197
      %v1199 = vrot.slane %v950, 2
      %v1200 = vrot.slane %v953, 2
      %v1201 = vsel %vm1188, %v1199, %v1200
      %v1202 = vrot.slane %v958, 2
      %v1203 = vsel %vm1188, %v1200, %v1202
      %v1204 = vrot.slane %v961, 2
      %v1205 = vrot.slane %v966, 2
      %v1206 = vsel %vm1188, %v1204, %v1205
      %v1207 = vrot.slane %v969, 2
      %v1208 = vsel %vm1188, %v1205, %v1207
      %v1209 = vrot.slane %v974, 2
      %v1210 = vrot.slane %v977, 2
      %v1211 = vsel %vm1188, %v1209, %v1210
      %v1212 = vrot.slane %v982, 2
      %v1213 = vsel %vm1188, %v1210, %v1212
      %v1214 = vrot.slane %v985, 2
      %v1215 = vrot.slane %v990, 2
      %v1216 = vsel %vm1188, %v1214, %v1215
      %v1217 = vrot.slane %v993, 2
      %v1218 = vsel %vm1188, %v1215, %v1217
      %v1219 = vrot.slane %v998, 2
      %v1220 = vrot.slane %v1001, 2
      %v1221 = vsel %vm1188, %v1219, %v1220
      %v1222 = vrot.slane %v1006, 2
      %v1223 = vsel %vm1188, %v1220, %v1222
      %v1224 = vrot.slane %v1009, 2
      %v1225 = vrot.slane %v1014, 2
      %v1226 = vsel %vm1188, %v1224, %v1225
      %v1227 = vrot.slane %v1017, 2
      %v1228 = vsel %vm1188, %v1225, %v1227
      %v1229 = vrot.slane %v1022, 2
      %v1230 = vrot.slane %v1025, 2
      %v1231 = vsel %vm1188, %v1229, %v1230
      %v1232 = vrot.slane %v1030, 2
      %v1233 = vsel %vm1188, %v1230, %v1232
      %v1234 = vrot.slane %v1033, 2
      %v1235 = vrot.slane %v1038, 2
      %v1236 = vsel %vm1188, %v1234, %v1235
      %v1237 = vrot.slane %v1041, 2
      %v1238 = vsel %vm1188, %v1235, %v1237
      %v1239 = vrot.slane %v1046, 2
      %v1240 = vrot.slane %v1049, 2
      %v1241 = vsel %vm1188, %v1239, %v1240
      %v1242 = vrot.slane %v1054, 2
      %v1243 = vsel %vm1188, %v1240, %v1242
      %v1244 = vrot.slane %v1057, 2
      %v1245 = vrot.slane %v1062, 2
      %v1246 = vsel %vm1188, %v1244, %v1245
      %v1247 = vrot.slane %v1065, 2
      %v1248 = vsel %vm1188, %v1245, %v1247
      %v1249 = vrot.slane %v1070, 2
      %v1250 = vrot.slane %v1073, 2
      %v1251 = vsel %vm1188, %v1249, %v1250
      %v1252 = vrot.slane %v1078, 2
      %v1253 = vsel %vm1188, %v1250, %v1252
      %v1254 = vrot.slane %v1081, 2
      %v1255 = vrot.slane %v1086, 2
      %v1256 = vsel %vm1188, %v1254, %v1255
      %v1257 = vrot.slane %v1089, 2
      %v1258 = vsel %vm1188, %v1255, %v1257
      %v1259 = vrot.slane %v1094, 2
      %v1260 = vrot.slane %v1097, 2
      %v1261 = vsel %vm1188, %v1259, %v1260
      %v1262 = vrot.slane %v1102, 2
      %v1263 = vsel %vm1188, %v1260, %v1262
      %v1264 = vrot.slane %v1105, 2
      %v1265 = vrot.slane %v1110, 2
      %v1266 = vsel %vm1188, %v1264, %v1265
      %v1267 = vrot.slane %v1113, 2
      %v1268 = vsel %vm1188, %v1265, %v1267
      %v1301 = vpack.c.bf16 %v1193, %v1191
      %v1302 = vpack.c.bf16 %v1198, %v1196
      %v1303 = vpack.c.bf16 %v1203, %v1201
      %v1304 = vpack.c.bf16 %v1208, %v1206
      %v1305 = vpack.c.bf16 %v1213, %v1211
      %v1306 = vpack.c.bf16 %v1218, %v1216
      %v1307 = vpack.c.bf16 %v1223, %v1221
      %v1308 = vpack.c.bf16 %v1228, %v1226
      %v1309 = vpack.c.bf16 %v1233, %v1231
      %v1310 = vpack.c.bf16 %v1238, %v1236
      %v1311 = vpack.c.bf16 %v1243, %v1241
      %v1312 = vpack.c.bf16 %v1248, %v1246
      %v1313 = vpack.c.bf16 %v1253, %v1251
      %v1314 = vpack.c.bf16 %v1258, %v1256
      %v1315 = vpack.c.bf16 %v1263, %v1261
      %v1316 = vpack.c.bf16 %v1268, %v1266
      %v1317 = vld [vmem:[%s2] sm:$0xff]
      %v1318 = vld [vmem:[%s2 + $0x8] sm:$0x1]
      %v1319 = vlaneseq
      %v1320 = vshrl.u32 %v1319, 7
      %v1321 = vsub.s32 0, %v1320
      %v1322 = vrot.slane %v1317, %v1321
      %v1323 = vmul.f32 %v902, %v1322
      %v1324 = vmul.f32 %v905, %v1322
      %v1325 = vmul.f32 %v910, %v1322
      %v1326 = vmul.f32 %v913, %v1322
      %v1327 = vmul.f32 %v918, %v1322
      %v1328 = vmul.f32 %v921, %v1322
      %v1329 = vmul.f32 %v926, %v1322
      %v1330 = vmul.f32 %v929, %v1322
      %v1331 = vmul.f32 %v934, %v1322
      %v1332 = vmul.f32 %v937, %v1322
      %v1333 = vmul.f32 %v942, %v1322
      %v1334 = vmul.f32 %v945, %v1322
      %v1335 = vmul.f32 %v950, %v1322
      %v1336 = vmul.f32 %v953, %v1322
      %v1337 = vmul.f32 %v958, %v1322
      %v1338 = vmul.f32 %v961, %v1322
      %v1339 = vmul.f32 %v966, %v1322
      %v1340 = vmul.f32 %v969, %v1322
      %v1341 = vmul.f32 %v974, %v1322
      %v1342 = vmul.f32 %v977, %v1322
      %v1343 = vmul.f32 %v982, %v1322
      %v1344 = vmul.f32 %v985, %v1322
      %v1345 = vmul.f32 %v990, %v1322
      %v1346 = vmul.f32 %v993, %v1322
      %v1347 = vmul.f32 %v998, %v1322
      %v1348 = vmul.f32 %v1001, %v1322
      %v1349 = vmul.f32 %v1006, %v1322
      %v1350 = vmul.f32 %v1009, %v1322
      %v1351 = vmul.f32 %v1014, %v1322
      %v1352 = vmul.f32 %v1017, %v1322
      %v1353 = vmul.f32 %v1022, %v1322
      %v1354 = vmul.f32 %v1025, %v1322
      %v1355 = vmul.f32 %v1030, %v1322
      %v1356 = vmul.f32 %v1033, %v1322
      %v1357 = vmul.f32 %v1038, %v1322
      %v1358 = vmul.f32 %v1041, %v1322
      %v1359 = vmul.f32 %v1046, %v1322
      %v1360 = vmul.f32 %v1049, %v1322
      %v1361 = vmul.f32 %v1054, %v1322
      %v1362 = vmul.f32 %v1057, %v1322
      %v1363 = vmul.f32 %v1062, %v1322
      %v1364 = vmul.f32 %v1065, %v1322
      %v1365 = vmul.f32 %v1070, %v1322
      %v1366 = vmul.f32 %v1073, %v1322
      %v1367 = vmul.f32 %v1078, %v1322
      %v1368 = vmul.f32 %v1081, %v1322
      %v1369 = vmul.f32 %v1086, %v1322
      %v1370 = vmul.f32 %v1089, %v1322
      %v1371 = vmul.f32 %v1094, %v1322
      %v1372 = vmul.f32 %v1097, %v1322
      %v1373 = vmul.f32 %v1102, %v1322
      %v1374 = vmul.f32 %v1105, %v1322
      %v1375 = vmul.f32 %v1110, %v1322
      %v1376 = vmul.f32 %v1113, %v1322
      %v1377 = vlaneseq
      %v1378 = vshrl.u32 %v1377, 7
      %v1379 = vsub.s32 3, %v1378
      %v1380 = vrot.slane %v1317, %v1379
      %v1381 = vmul.f32 %v913, %v1380
      %v1382 = vmul.f32 %v918, %v1380
      %v1383 = vmul.f32 %v921, %v1380
      %v1384 = vmul.f32 %v926, %v1380
      %v1385 = vmul.f32 %v929, %v1380
      %v1386 = vmul.f32 %v934, %v1380
      %v1387 = vmul.f32 %v937, %v1380
      %v1388 = vmul.f32 %v942, %v1380
      %v1389 = vmul.f32 %v945, %v1380
      %v1390 = vmul.f32 %v950, %v1380
      %v1391 = vmul.f32 %v953, %v1380
      %v1392 = vmul.f32 %v958, %v1380
      %v1393 = vmul.f32 %v961, %v1380
      %v1394 = vmul.f32 %v966, %v1380
      %v1395 = vmul.f32 %v969, %v1380
      %v1396 = vmul.f32 %v974, %v1380
      %v1397 = vmul.f32 %v977, %v1380
      %v1398 = vmul.f32 %v982, %v1380
      %v1399 = vmul.f32 %v985, %v1380
      %v1400 = vmul.f32 %v990, %v1380
      %v1401 = vmul.f32 %v993, %v1380
      %v1402 = vmul.f32 %v998, %v1380
      %v1403 = vmul.f32 %v1001, %v1380
      %v1404 = vmul.f32 %v1006, %v1380
      %v1405 = vmul.f32 %v1009, %v1380
      %v1406 = vmul.f32 %v1014, %v1380
      %v1407 = vmul.f32 %v1017, %v1380
      %v1408 = vmul.f32 %v1022, %v1380
      %v1409 = vmul.f32 %v1025, %v1380
      %v1410 = vmul.f32 %v1030, %v1380
      %v1411 = vmul.f32 %v1033, %v1380
      %v1412 = vmul.f32 %v1038, %v1380
      %v1413 = vmul.f32 %v1041, %v1380
      %v1414 = vmul.f32 %v1046, %v1380
      %v1415 = vmul.f32 %v1049, %v1380
      %v1416 = vmul.f32 %v1054, %v1380
      %v1417 = vmul.f32 %v1057, %v1380
      %v1418 = vmul.f32 %v1062, %v1380
      %v1419 = vmul.f32 %v1065, %v1380
      %v1420 = vmul.f32 %v1070, %v1380
      %v1421 = vmul.f32 %v1073, %v1380
      %v1422 = vmul.f32 %v1078, %v1380
      %v1423 = vmul.f32 %v1081, %v1380
      %v1424 = vmul.f32 %v1086, %v1380
      %v1425 = vmul.f32 %v1089, %v1380
      %v1426 = vmul.f32 %v1094, %v1380
      %v1427 = vmul.f32 %v1097, %v1380
      %v1428 = vmul.f32 %v1102, %v1380
      %v1429 = vmul.f32 %v1105, %v1380
      %v1430 = vmul.f32 %v1110, %v1380
      %v1431 = vmul.f32 %v1113, %v1380
      %v1432 = vmul.f32 %v1118, %v1380
      %v1433 = vmul.f32 %v1121, %v1380
      %v1434 = vmul.f32 %v1126, %v1380
      %v1435 = vadd.f32 %v1323, %v1381
      %v1436 = vadd.f32 %v1324, %v1382
      %v1437 = vadd.f32 %v1325, %v1383
      %v1438 = vadd.f32 %v1326, %v1384
      %v1439 = vadd.f32 %v1327, %v1385
      %v1440 = vadd.f32 %v1328, %v1386
      %v1441 = vadd.f32 %v1329, %v1387
      %v1442 = vadd.f32 %v1330, %v1388
      %v1443 = vadd.f32 %v1331, %v1389
      %v1444 = vadd.f32 %v1332, %v1390
      %v1445 = vadd.f32 %v1333, %v1391
      %v1446 = vadd.f32 %v1334, %v1392
      %v1447 = vadd.f32 %v1335, %v1393
      %v1448 = vadd.f32 %v1336, %v1394
      %v1449 = vadd.f32 %v1337, %v1395
      %v1450 = vadd.f32 %v1338, %v1396
      %v1451 = vadd.f32 %v1339, %v1397
      %v1452 = vadd.f32 %v1340, %v1398
      %v1453 = vadd.f32 %v1341, %v1399
      %v1454 = vadd.f32 %v1342, %v1400
      %v1455 = vadd.f32 %v1343, %v1401
      %v1456 = vadd.f32 %v1344, %v1402
      %v1457 = vadd.f32 %v1345, %v1403
      %v1458 = vadd.f32 %v1346, %v1404
      %v1459 = vadd.f32 %v1347, %v1405
      %v1460 = vadd.f32 %v1348, %v1406
      %v1461 = vadd.f32 %v1349, %v1407
      %v1462 = vadd.f32 %v1350, %v1408
      %v1463 = vadd.f32 %v1351, %v1409
      %v1464 = vadd.f32 %v1352, %v1410
      %v1465 = vadd.f32 %v1353, %v1411
      %v1466 = vadd.f32 %v1354, %v1412
      %v1467 = vadd.f32 %v1355, %v1413
      %v1468 = vadd.f32 %v1356, %v1414
      %v1469 = vadd.f32 %v1357, %v1415
      %v1470 = vadd.f32 %v1358, %v1416
      %v1471 = vadd.f32 %v1359, %v1417
      %v1472 = vadd.f32 %v1360, %v1418
      %v1473 = vadd.f32 %v1361, %v1419
      %v1474 = vadd.f32 %v1362, %v1420
      %v1475 = vadd.f32 %v1363, %v1421
      %v1476 = vadd.f32 %v1364, %v1422
      %v1477 = vadd.f32 %v1365, %v1423
      %v1478 = vadd.f32 %v1366, %v1424
      %v1479 = vadd.f32 %v1367, %v1425
      %v1480 = vadd.f32 %v1368, %v1426
      %v1481 = vadd.f32 %v1369, %v1427
      %v1482 = vadd.f32 %v1370, %v1428
      %v1483 = vadd.f32 %v1371, %v1429
      %v1484 = vadd.f32 %v1372, %v1430
      %v1485 = vadd.f32 %v1373, %v1431
      %v1486 = vadd.f32 %v1374, %v1432
      %v1487 = vadd.f32 %v1375, %v1433
      %v1488 = vadd.f32 %v1376, %v1434
      %v1489 = vlaneseq
      %v1490 = vshrl.u32 %v1489, 7
      %v1491 = vsub.s32 6, %v1490
      %v1492 = vrot.slane %v1317, %v1491
      %v1493 = vmul.f32 %v926, %v1492
      %v1494 = vmul.f32 %v929, %v1492
      %v1495 = vmul.f32 %v934, %v1492
      %v1496 = vmul.f32 %v937, %v1492
      %v1497 = vmul.f32 %v942, %v1492
      %v1498 = vmul.f32 %v945, %v1492
      %v1499 = vmul.f32 %v950, %v1492
      %v1500 = vmul.f32 %v953, %v1492
      %v1501 = vmul.f32 %v958, %v1492
      %v1502 = vmul.f32 %v961, %v1492
      %v1503 = vmul.f32 %v966, %v1492
      %v1504 = vmul.f32 %v969, %v1492
      %v1505 = vmul.f32 %v974, %v1492
      %v1506 = vmul.f32 %v977, %v1492
      %v1507 = vmul.f32 %v982, %v1492
      %v1508 = vmul.f32 %v985, %v1492
      %v1509 = vmul.f32 %v990, %v1492
      %v1510 = vmul.f32 %v993, %v1492
      %v1511 = vmul.f32 %v998, %v1492
      %v1512 = vmul.f32 %v1001, %v1492
      %v1513 = vmul.f32 %v1006, %v1492
      %v1514 = vmul.f32 %v1009, %v1492
      %v1515 = vmul.f32 %v1014, %v1492
      %v1516 = vmul.f32 %v1017, %v1492
      %v1517 = vmul.f32 %v1022, %v1492
      %v1518 = vmul.f32 %v1025, %v1492
      %v1519 = vmul.f32 %v1030, %v1492
      %v1520 = vmul.f32 %v1033, %v1492
      %v1521 = vmul.f32 %v1038, %v1492
      %v1522 = vmul.f32 %v1041, %v1492
      %v1523 = vmul.f32 %v1046, %v1492
      %v1524 = vmul.f32 %v1049, %v1492
      %v1525 = vmul.f32 %v1054, %v1492
      %v1526 = vmul.f32 %v1057, %v1492
      %v1527 = vmul.f32 %v1062, %v1492
      %v1528 = vmul.f32 %v1065, %v1492
      %v1529 = vmul.f32 %v1070, %v1492
      %v1530 = vmul.f32 %v1073, %v1492
      %v1531 = vmul.f32 %v1078, %v1492
      %v1532 = vmul.f32 %v1081, %v1492
      %v1533 = vmul.f32 %v1086, %v1492
      %v1534 = vmul.f32 %v1089, %v1492
      %v1535 = vmul.f32 %v1094, %v1492
      %v1536 = vmul.f32 %v1097, %v1492
      %v1537 = vmul.f32 %v1102, %v1492
      %v1538 = vmul.f32 %v1105, %v1492
      %v1539 = vmul.f32 %v1110, %v1492
      %v1540 = vmul.f32 %v1113, %v1492
      %v1541 = vmul.f32 %v1118, %v1492
      %v1542 = vmul.f32 %v1121, %v1492
      %v1543 = vmul.f32 %v1126, %v1492
      %v1544 = vmul.f32 %v1129, %v1492
      %v1545 = vmul.f32 %v1134, %v1492
      %v1546 = vmul.f32 %v1137, %v1492
      %v1547 = vadd.f32 %v1435, %v1493
      %v1548 = vadd.f32 %v1436, %v1494
      %v1549 = vadd.f32 %v1437, %v1495
      %v1550 = vadd.f32 %v1438, %v1496
      %v1551 = vadd.f32 %v1439, %v1497
      %v1552 = vadd.f32 %v1440, %v1498
      %v1553 = vadd.f32 %v1441, %v1499
      %v1554 = vadd.f32 %v1442, %v1500
      %v1555 = vadd.f32 %v1443, %v1501
      %v1556 = vadd.f32 %v1444, %v1502
      %v1557 = vadd.f32 %v1445, %v1503
      %v1558 = vadd.f32 %v1446, %v1504
      %v1559 = vadd.f32 %v1447, %v1505
      %v1560 = vadd.f32 %v1448, %v1506
      %v1561 = vadd.f32 %v1449, %v1507
      %v1562 = vadd.f32 %v1450, %v1508
      %v1563 = vadd.f32 %v1451, %v1509
      %v1564 = vadd.f32 %v1452, %v1510
      %v1565 = vadd.f32 %v1453, %v1511
      %v1566 = vadd.f32 %v1454, %v1512
      %v1567 = vadd.f32 %v1455, %v1513
      %v1568 = vadd.f32 %v1456, %v1514
      %v1569 = vadd.f32 %v1457, %v1515
      %v1570 = vadd.f32 %v1458, %v1516
      %v1571 = vadd.f32 %v1459, %v1517
      %v1572 = vadd.f32 %v1460, %v1518
      %v1573 = vadd.f32 %v1461, %v1519
      %v1574 = vadd.f32 %v1462, %v1520
      %v1575 = vadd.f32 %v1463, %v1521
      %v1576 = vadd.f32 %v1464, %v1522
      %v1577 = vadd.f32 %v1465, %v1523
      %v1578 = vadd.f32 %v1466, %v1524
      %v1579 = vadd.f32 %v1467, %v1525
      %v1580 = vadd.f32 %v1468, %v1526
      %v1581 = vadd.f32 %v1469, %v1527
      %v1582 = vadd.f32 %v1470, %v1528
      %v1583 = vadd.f32 %v1471, %v1529
      %v1584 = vadd.f32 %v1472, %v1530
      %v1585 = vadd.f32 %v1473, %v1531
      %v1586 = vadd.f32 %v1474, %v1532
      %v1587 = vadd.f32 %v1475, %v1533
      %v1588 = vadd.f32 %v1476, %v1534
      %v1589 = vadd.f32 %v1477, %v1535
      %v1590 = vadd.f32 %v1478, %v1536
      %v1591 = vadd.f32 %v1479, %v1537
      %v1592 = vadd.f32 %v1480, %v1538
      %v1593 = vadd.f32 %v1481, %v1539
      %v1594 = vadd.f32 %v1482, %v1540
      %v1595 = vadd.f32 %v1483, %v1541
      %v1596 = vadd.f32 %v1484, %v1542
      %v1597 = vadd.f32 %v1485, %v1543
      %v1598 = vadd.f32 %v1486, %v1544
      %v1599 = vadd.f32 %v1487, %v1545
      %v1600 = vadd.f32 %v1488, %v1546
      %v1601 = vlaneseq
      %v1602 = vshrl.u32 %v1601, 7
      %v1603 = vsub.s32 1, %v1602
      %v1604 = vrot.slane %v1317, %v1603
      %v1605 = vmul.f32 %v902, %v1604
      %v1606 = vmul.f32 %v905, %v1604
      %v1607 = vmul.f32 %v910, %v1604
      %v1608 = vmul.f32 %v913, %v1604
      %v1609 = vmul.f32 %v918, %v1604
      %v1610 = vmul.f32 %v921, %v1604
      %v1611 = vmul.f32 %v926, %v1604
      %v1612 = vmul.f32 %v929, %v1604
      %v1613 = vmul.f32 %v934, %v1604
      %v1614 = vmul.f32 %v937, %v1604
      %v1615 = vmul.f32 %v942, %v1604
      %v1616 = vmul.f32 %v945, %v1604
      %v1617 = vmul.f32 %v950, %v1604
      %v1618 = vmul.f32 %v953, %v1604
      %v1619 = vmul.f32 %v958, %v1604
      %v1620 = vmul.f32 %v961, %v1604
      %v1621 = vmul.f32 %v966, %v1604
      %v1622 = vmul.f32 %v969, %v1604
      %v1623 = vmul.f32 %v974, %v1604
      %v1624 = vmul.f32 %v977, %v1604
      %v1625 = vmul.f32 %v982, %v1604
      %v1626 = vmul.f32 %v985, %v1604
      %v1627 = vmul.f32 %v990, %v1604
      %v1628 = vmul.f32 %v993, %v1604
      %v1629 = vmul.f32 %v998, %v1604
      %v1630 = vmul.f32 %v1001, %v1604
      %v1631 = vmul.f32 %v1006, %v1604
      %v1632 = vmul.f32 %v1009, %v1604
      %v1633 = vmul.f32 %v1014, %v1604
      %v1634 = vmul.f32 %v1017, %v1604
      %v1635 = vmul.f32 %v1022, %v1604
      %v1636 = vmul.f32 %v1025, %v1604
      %v1637 = vmul.f32 %v1030, %v1604
      %v1638 = vmul.f32 %v1033, %v1604
      %v1639 = vmul.f32 %v1038, %v1604
      %v1640 = vmul.f32 %v1041, %v1604
      %v1641 = vmul.f32 %v1046, %v1604
      %v1642 = vmul.f32 %v1049, %v1604
      %v1643 = vmul.f32 %v1054, %v1604
      %v1644 = vmul.f32 %v1057, %v1604
      %v1645 = vmul.f32 %v1062, %v1604
      %v1646 = vmul.f32 %v1065, %v1604
      %v1647 = vmul.f32 %v1070, %v1604
      %v1648 = vmul.f32 %v1073, %v1604
      %v1649 = vmul.f32 %v1078, %v1604
      %v1650 = vmul.f32 %v1081, %v1604
      %v1651 = vmul.f32 %v1086, %v1604
      %v1652 = vmul.f32 %v1089, %v1604
      %v1653 = vmul.f32 %v1094, %v1604
      %v1654 = vmul.f32 %v1097, %v1604
      %v1655 = vmul.f32 %v1102, %v1604
      %v1656 = vmul.f32 %v1105, %v1604
      %v1657 = vmul.f32 %v1110, %v1604
      %v1658 = vmul.f32 %v1113, %v1604
      %vm1713 = vcmask 1046528
      %v1714 = vrot.slane %v1605, 1
      %v1715 = vrot.slane %v1606, 1
      %v1716 = vsel %vm1713, %v1714, %v1715
      %v1717 = vrot.slane %v1607, 1
      %v1718 = vsel %vm1713, %v1715, %v1717
      %v1719 = vrot.slane %v1608, 1
      %v1720 = vrot.slane %v1609, 1
      %v1721 = vsel %vm1713, %v1719, %v1720
      %v1722 = vrot.slane %v1610, 1
      %v1723 = vsel %vm1713, %v1720, %v1722
      %v1724 = vrot.slane %v1611, 1
      %v1725 = vrot.slane %v1612, 1
      %v1726 = vsel %vm1713, %v1724, %v1725
      %v1727 = vrot.slane %v1613, 1
      %v1728 = vsel %vm1713, %v1725, %v1727
      %v1729 = vrot.slane %v1614, 1
      %v1730 = vrot.slane %v1615, 1
      %v1731 = vsel %vm1713, %v1729, %v1730
      %v1732 = vrot.slane %v1616, 1
      %v1733 = vsel %vm1713, %v1730, %v1732
      %v1734 = vrot.slane %v1617, 1
      %v1735 = vrot.slane %v1618, 1
      %v1736 = vsel %vm1713, %v1734, %v1735
      %v1737 = vrot.slane %v1619, 1
      %v1738 = vsel %vm1713, %v1735, %v1737
      %v1739 = vrot.slane %v1620, 1
      %v1740 = vrot.slane %v1621, 1
      %v1741 = vsel %vm1713, %v1739, %v1740
      %v1742 = vrot.slane %v1622, 1
      %v1743 = vsel %vm1713, %v1740, %v1742
      %v1744 = vrot.slane %v1623, 1
      %v1745 = vrot.slane %v1624, 1
      %v1746 = vsel %vm1713, %v1744, %v1745
      %v1747 = vrot.slane %v1625, 1
      %v1748 = vsel %vm1713, %v1745, %v1747
      %v1749 = vrot.slane %v1626, 1
      %v1750 = vrot.slane %v1627, 1
      %v1751 = vsel %vm1713, %v1749, %v1750
      %v1752 = vrot.slane %v1628, 1
      %v1753 = vsel %vm1713, %v1750, %v1752
      %v1754 = vrot.slane %v1629, 1
      %v1755 = vrot.slane %v1630, 1
      %v1756 = vsel %vm1713, %v1754, %v1755
      %v1757 = vrot.slane %v1631, 1
      %v1758 = vsel %vm1713, %v1755, %v1757
      %v1759 = vrot.slane %v1632, 1
      %v1760 = vrot.slane %v1633, 1
      %v1761 = vsel %vm1713, %v1759, %v1760
      %v1762 = vrot.slane %v1634, 1
      %v1763 = vsel %vm1713, %v1760, %v1762
      %v1764 = vrot.slane %v1635, 1
      %v1765 = vrot.slane %v1636, 1
      %v1766 = vsel %vm1713, %v1764, %v1765
      %v1767 = vrot.slane %v1637, 1
      %v1768 = vsel %vm1713, %v1765, %v1767
      %v1769 = vrot.slane %v1638, 1
      %v1770 = vrot.slane %v1639, 1
      %v1771 = vsel %vm1713, %v1769, %v1770
      %v1772 = vrot.slane %v1640, 1
      %v1773 = vsel %vm1713, %v1770, %v1772
      %v1774 = vrot.slane %v1641, 1
      %v1775 = vrot.slane %v1642, 1
      %v1776 = vsel %vm1713, %v1774, %v1775
      %v1777 = vrot.slane %v1643, 1
      %v1778 = vsel %vm1713, %v1775, %v1777
      %v1779 = vrot.slane %v1644, 1
      %v1780 = vrot.slane %v1645, 1
      %v1781 = vsel %vm1713, %v1779, %v1780
      %v1782 = vrot.slane %v1646, 1
      %v1783 = vsel %vm1713, %v1780, %v1782
      %v1784 = vrot.slane %v1647, 1
      %v1785 = vrot.slane %v1648, 1
      %v1786 = vsel %vm1713, %v1784, %v1785
      %v1787 = vrot.slane %v1649, 1
      %v1788 = vsel %vm1713, %v1785, %v1787
      %v1789 = vrot.slane %v1650, 1
      %v1790 = vrot.slane %v1651, 1
      %v1791 = vsel %vm1713, %v1789, %v1790
      %v1792 = vrot.slane %v1652, 1
      %v1793 = vsel %vm1713, %v1790, %v1792
      %v1794 = vrot.slane %v1653, 1
      %v1795 = vrot.slane %v1654, 1
      %v1796 = vsel %vm1713, %v1794, %v1795
      %v1797 = vrot.slane %v1655, 1
      %v1798 = vsel %vm1713, %v1795, %v1797
      %v1799 = vrot.slane %v1656, 1
      %v1800 = vrot.slane %v1657, 1
      %v1801 = vsel %vm1713, %v1799, %v1800
      %v1802 = vrot.slane %v1658, 1
      %v1803 = vsel %vm1713, %v1800, %v1802
      %v1858 = vadd.f32 %v1547, %v1716
      %v1859 = vadd.f32 %v1548, %v1718
      %v1860 = vadd.f32 %v1549, %v1717
      %v1861 = vadd.f32 %v1550, %v1721
      %v1862 = vadd.f32 %v1551, %v1723
      %v1863 = vadd.f32 %v1552, %v1722
      %v1864 = vadd.f32 %v1553, %v1726
      %v1865 = vadd.f32 %v1554, %v1728
      %v1866 = vadd.f32 %v1555, %v1727
      %v1867 = vadd.f32 %v1556, %v1731
      %v1868 = vadd.f32 %v1557, %v1733
      %v1869 = vadd.f32 %v1558, %v1732
      %v1870 = vadd.f32 %v1559, %v1736
      %v1871 = vadd.f32 %v1560, %v1738
      %v1872 = vadd.f32 %v1561, %v1737
      %v1873 = vadd.f32 %v1562, %v1741
      %v1874 = vadd.f32 %v1563, %v1743
      %v1875 = vadd.f32 %v1564, %v1742
      %v1876 = vadd.f32 %v1565, %v1746
      %v1877 = vadd.f32 %v1566, %v1748
      %v1878 = vadd.f32 %v1567, %v1747
      %v1879 = vadd.f32 %v1568, %v1751
      %v1880 = vadd.f32 %v1569, %v1753
      %v1881 = vadd.f32 %v1570, %v1752
      %v1882 = vadd.f32 %v1571, %v1756
      %v1883 = vadd.f32 %v1572, %v1758
      %v1884 = vadd.f32 %v1573, %v1757
      %v1885 = vadd.f32 %v1574, %v1761
      %v1886 = vadd.f32 %v1575, %v1763
      %v1887 = vadd.f32 %v1576, %v1762
      %v1888 = vadd.f32 %v1577, %v1766
      %v1889 = vadd.f32 %v1578, %v1768
      %v1890 = vadd.f32 %v1579, %v1767
      %v1891 = vadd.f32 %v1580, %v1771
      %v1892 = vadd.f32 %v1581, %v1773
      %v1893 = vadd.f32 %v1582, %v1772
      %v1894 = vadd.f32 %v1583, %v1776
      %v1895 = vadd.f32 %v1584, %v1778
      %v1896 = vadd.f32 %v1585, %v1777
      %v1897 = vadd.f32 %v1586, %v1781
      %v1898 = vadd.f32 %v1587, %v1783
      %v1899 = vadd.f32 %v1588, %v1782
      %v1900 = vadd.f32 %v1589, %v1786
      %v1901 = vadd.f32 %v1590, %v1788
      %v1902 = vadd.f32 %v1591, %v1787
      %v1903 = vadd.f32 %v1592, %v1791
      %v1904 = vadd.f32 %v1593, %v1793
      %v1905 = vadd.f32 %v1594, %v1792
      %v1906 = vadd.f32 %v1595, %v1796
      %v1907 = vadd.f32 %v1596, %v1798
      %v1908 = vadd.f32 %v1597, %v1797
      %v1909 = vadd.f32 %v1598, %v1801
      %v1910 = vadd.f32 %v1599, %v1803
      %v1911 = vadd.f32 %v1600, %v1802
      %v1912 = vlaneseq
      %v1913 = vshrl.u32 %v1912, 7
      %v1914 = vsub.s32 4, %v1913
      %v1915 = vrot.slane %v1317, %v1914
      %v1916 = vmul.f32 %v913, %v1915
      %v1917 = vmul.f32 %v918, %v1915
      %v1918 = vmul.f32 %v921, %v1915
      %v1919 = vmul.f32 %v926, %v1915
      %v1920 = vmul.f32 %v929, %v1915
      %v1921 = vmul.f32 %v934, %v1915
      %v1922 = vmul.f32 %v937, %v1915
      %v1923 = vmul.f32 %v942, %v1915
      %v1924 = vmul.f32 %v945, %v1915
      %v1925 = vmul.f32 %v950, %v1915
      %v1926 = vmul.f32 %v953, %v1915
      %v1927 = vmul.f32 %v958, %v1915
      %v1928 = vmul.f32 %v961, %v1915
      %v1929 = vmul.f32 %v966, %v1915
      %v1930 = vmul.f32 %v969, %v1915
      %v1931 = vmul.f32 %v974, %v1915
      %v1932 = vmul.f32 %v977, %v1915
      %v1933 = vmul.f32 %v982, %v1915
      %v1934 = vmul.f32 %v985, %v1915
      %v1935 = vmul.f32 %v990, %v1915
      %v1936 = vmul.f32 %v993, %v1915
      %v1937 = vmul.f32 %v998, %v1915
      %v1938 = vmul.f32 %v1001, %v1915
      %v1939 = vmul.f32 %v1006, %v1915
      %v1940 = vmul.f32 %v1009, %v1915
      %v1941 = vmul.f32 %v1014, %v1915
      %v1942 = vmul.f32 %v1017, %v1915
      %v1943 = vmul.f32 %v1022, %v1915
      %v1944 = vmul.f32 %v1025, %v1915
      %v1945 = vmul.f32 %v1030, %v1915
      %v1946 = vmul.f32 %v1033, %v1915
      %v1947 = vmul.f32 %v1038, %v1915
      %v1948 = vmul.f32 %v1041, %v1915
      %v1949 = vmul.f32 %v1046, %v1915
      %v1950 = vmul.f32 %v1049, %v1915
      %v1951 = vmul.f32 %v1054, %v1915
      %v1952 = vmul.f32 %v1057, %v1915
      %v1953 = vmul.f32 %v1062, %v1915
      %v1954 = vmul.f32 %v1065, %v1915
      %v1955 = vmul.f32 %v1070, %v1915
      %v1956 = vmul.f32 %v1073, %v1915
      %v1957 = vmul.f32 %v1078, %v1915
      %v1958 = vmul.f32 %v1081, %v1915
      %v1959 = vmul.f32 %v1086, %v1915
      %v1960 = vmul.f32 %v1089, %v1915
      %v1961 = vmul.f32 %v1094, %v1915
      %v1962 = vmul.f32 %v1097, %v1915
      %v1963 = vmul.f32 %v1102, %v1915
      %v1964 = vmul.f32 %v1105, %v1915
      %v1965 = vmul.f32 %v1110, %v1915
      %v1966 = vmul.f32 %v1113, %v1915
      %v1967 = vmul.f32 %v1118, %v1915
      %v1968 = vmul.f32 %v1121, %v1915
      %v1969 = vmul.f32 %v1126, %v1915
      %v2024 = vrot.slane %v1916, 1
      %v2025 = vrot.slane %v1917, 1
      %v2026 = vsel %vm1713, %v2024, %v2025
      %v2027 = vrot.slane %v1918, 1
      %v2028 = vsel %vm1713, %v2025, %v2027
      %v2029 = vrot.slane %v1919, 1
      %v2030 = vrot.slane %v1920, 1
      %v2031 = vsel %vm1713, %v2029, %v2030
      %v2032 = vrot.slane %v1921, 1
      %v2033 = vsel %vm1713, %v2030, %v2032
      %v2034 = vrot.slane %v1922, 1
      %v2035 = vrot.slane %v1923, 1
      %v2036 = vsel %vm1713, %v2034, %v2035
      %v2037 = vrot.slane %v1924, 1
      %v2038 = vsel %vm1713, %v2035, %v2037
      %v2039 = vrot.slane %v1925, 1
      %v2040 = vrot.slane %v1926, 1
      %v2041 = vsel %vm1713, %v2039, %v2040
      %v2042 = vrot.slane %v1927, 1
      %v2043 = vsel %vm1713, %v2040, %v2042
      %v2044 = vrot.slane %v1928, 1
      %v2045 = vrot.slane %v1929, 1
      %v2046 = vsel %vm1713, %v2044, %v2045
      %v2047 = vrot.slane %v1930, 1
      %v2048 = vsel %vm1713, %v2045, %v2047
      %v2049 = vrot.slane %v1931, 1
      %v2050 = vrot.slane %v1932, 1
      %v2051 = vsel %vm1713, %v2049, %v2050
      %v2052 = vrot.slane %v1933, 1
      %v2053 = vsel %vm1713, %v2050, %v2052
      %v2054 = vrot.slane %v1934, 1
      %v2055 = vrot.slane %v1935, 1
      %v2056 = vsel %vm1713, %v2054, %v2055
      %v2057 = vrot.slane %v1936, 1
      %v2058 = vsel %vm1713, %v2055, %v2057
      %v2059 = vrot.slane %v1937, 1
      %v2060 = vrot.slane %v1938, 1
      %v2061 = vsel %vm1713, %v2059, %v2060
      %v2062 = vrot.slane %v1939, 1
      %v2063 = vsel %vm1713, %v2060, %v2062
      %v2064 = vrot.slane %v1940, 1
      %v2065 = vrot.slane %v1941, 1
      %v2066 = vsel %vm1713, %v2064, %v2065
      %v2067 = vrot.slane %v1942, 1
      %v2068 = vsel %vm1713, %v2065, %v2067
      %v2069 = vrot.slane %v1943, 1
      %v2070 = vrot.slane %v1944, 1
      %v2071 = vsel %vm1713, %v2069, %v2070
      %v2072 = vrot.slane %v1945, 1
      %v2073 = vsel %vm1713, %v2070, %v2072
      %v2074 = vrot.slane %v1946, 1
      %v2075 = vrot.slane %v1947, 1
      %v2076 = vsel %vm1713, %v2074, %v2075
      %v2077 = vrot.slane %v1948, 1
      %v2078 = vsel %vm1713, %v2075, %v2077
      %v2079 = vrot.slane %v1949, 1
      %v2080 = vrot.slane %v1950, 1
      %v2081 = vsel %vm1713, %v2079, %v2080
      %v2082 = vrot.slane %v1951, 1
      %v2083 = vsel %vm1713, %v2080, %v2082
      %v2084 = vrot.slane %v1952, 1
      %v2085 = vrot.slane %v1953, 1
      %v2086 = vsel %vm1713, %v2084, %v2085
      %v2087 = vrot.slane %v1954, 1
      %v2088 = vsel %vm1713, %v2085, %v2087
      %v2089 = vrot.slane %v1955, 1
      %v2090 = vrot.slane %v1956, 1
      %v2091 = vsel %vm1713, %v2089, %v2090
      %v2092 = vrot.slane %v1957, 1
      %v2093 = vsel %vm1713, %v2090, %v2092
      %v2094 = vrot.slane %v1958, 1
      %v2095 = vrot.slane %v1959, 1
      %v2096 = vsel %vm1713, %v2094, %v2095
      %v2097 = vrot.slane %v1960, 1
      %v2098 = vsel %vm1713, %v2095, %v2097
      %v2099 = vrot.slane %v1961, 1
      %v2100 = vrot.slane %v1962, 1
      %v2101 = vsel %vm1713, %v2099, %v2100
      %v2102 = vrot.slane %v1963, 1
      %v2103 = vsel %vm1713, %v2100, %v2102
      %v2104 = vrot.slane %v1964, 1
      %v2105 = vrot.slane %v1965, 1
      %v2106 = vsel %vm1713, %v2104, %v2105
      %v2107 = vrot.slane %v1966, 1
      %v2108 = vsel %vm1713, %v2105, %v2107
      %v2109 = vrot.slane %v1967, 1
      %v2110 = vrot.slane %v1968, 1
      %v2111 = vsel %vm1713, %v2109, %v2110
      %v2112 = vrot.slane %v1969, 1
      %v2113 = vsel %vm1713, %v2110, %v2112
      %v2168 = vadd.f32 %v1858, %v2026
      %v2169 = vadd.f32 %v1859, %v2028
      %v2170 = vadd.f32 %v1860, %v2027
      %v2171 = vadd.f32 %v1861, %v2031
      %v2172 = vadd.f32 %v1862, %v2033
      %v2173 = vadd.f32 %v1863, %v2032
      %v2174 = vadd.f32 %v1864, %v2036
      %v2175 = vadd.f32 %v1865, %v2038
      %v2176 = vadd.f32 %v1866, %v2037
      %v2177 = vadd.f32 %v1867, %v2041
      %v2178 = vadd.f32 %v1868, %v2043
      %v2179 = vadd.f32 %v1869, %v2042
      %v2180 = vadd.f32 %v1870, %v2046
      %v2181 = vadd.f32 %v1871, %v2048
      %v2182 = vadd.f32 %v1872, %v2047
      %v2183 = vadd.f32 %v1873, %v2051
      %v2184 = vadd.f32 %v1874, %v2053
      %v2185 = vadd.f32 %v1875, %v2052
      %v2186 = vadd.f32 %v1876, %v2056
      %v2187 = vadd.f32 %v1877, %v2058
      %v2188 = vadd.f32 %v1878, %v2057
      %v2189 = vadd.f32 %v1879, %v2061
      %v2190 = vadd.f32 %v1880, %v2063
      %v2191 = vadd.f32 %v1881, %v2062
      %v2192 = vadd.f32 %v1882, %v2066
      %v2193 = vadd.f32 %v1883, %v2068
      %v2194 = vadd.f32 %v1884, %v2067
      %v2195 = vadd.f32 %v1885, %v2071
      %v2196 = vadd.f32 %v1886, %v2073
      %v2197 = vadd.f32 %v1887, %v2072
      %v2198 = vadd.f32 %v1888, %v2076
      %v2199 = vadd.f32 %v1889, %v2078
      %v2200 = vadd.f32 %v1890, %v2077
      %v2201 = vadd.f32 %v1891, %v2081
      %v2202 = vadd.f32 %v1892, %v2083
      %v2203 = vadd.f32 %v1893, %v2082
      %v2204 = vadd.f32 %v1894, %v2086
      %v2205 = vadd.f32 %v1895, %v2088
      %v2206 = vadd.f32 %v1896, %v2087
      %v2207 = vadd.f32 %v1897, %v2091
      %v2208 = vadd.f32 %v1898, %v2093
      %v2209 = vadd.f32 %v1899, %v2092
      %v2210 = vadd.f32 %v1900, %v2096
      %v2211 = vadd.f32 %v1901, %v2098
      %v2212 = vadd.f32 %v1902, %v2097
      %v2213 = vadd.f32 %v1903, %v2101
      %v2214 = vadd.f32 %v1904, %v2103
      %v2215 = vadd.f32 %v1905, %v2102
      %v2216 = vadd.f32 %v1906, %v2106
      %v2217 = vadd.f32 %v1907, %v2108
      %v2218 = vadd.f32 %v1908, %v2107
      %v2219 = vadd.f32 %v1909, %v2111
      %v2220 = vadd.f32 %v1910, %v2113
      %v2221 = vadd.f32 %v1911, %v2112
      %v2222 = vlaneseq
      %v2223 = vshrl.u32 %v2222, 7
      %v2224 = vsub.s32 7, %v2223
      %v2225 = vrot.slane %v1317, %v2224
      %v2226 = vmul.f32 %v926, %v2225
      %v2227 = vmul.f32 %v929, %v2225
      %v2228 = vmul.f32 %v934, %v2225
      %v2229 = vmul.f32 %v937, %v2225
      %v2230 = vmul.f32 %v942, %v2225
      %v2231 = vmul.f32 %v945, %v2225
      %v2232 = vmul.f32 %v950, %v2225
      %v2233 = vmul.f32 %v953, %v2225
      %v2234 = vmul.f32 %v958, %v2225
      %v2235 = vmul.f32 %v961, %v2225
      %v2236 = vmul.f32 %v966, %v2225
      %v2237 = vmul.f32 %v969, %v2225
      %v2238 = vmul.f32 %v974, %v2225
      %v2239 = vmul.f32 %v977, %v2225
      %v2240 = vmul.f32 %v982, %v2225
      %v2241 = vmul.f32 %v985, %v2225
      %v2242 = vmul.f32 %v990, %v2225
      %v2243 = vmul.f32 %v993, %v2225
      %v2244 = vmul.f32 %v998, %v2225
      %v2245 = vmul.f32 %v1001, %v2225
      %v2246 = vmul.f32 %v1006, %v2225
      %v2247 = vmul.f32 %v1009, %v2225
      %v2248 = vmul.f32 %v1014, %v2225
      %v2249 = vmul.f32 %v1017, %v2225
      %v2250 = vmul.f32 %v1022, %v2225
      %v2251 = vmul.f32 %v1025, %v2225
      %v2252 = vmul.f32 %v1030, %v2225
      %v2253 = vmul.f32 %v1033, %v2225
      %v2254 = vmul.f32 %v1038, %v2225
      %v2255 = vmul.f32 %v1041, %v2225
      %v2256 = vmul.f32 %v1046, %v2225
      %v2257 = vmul.f32 %v1049, %v2225
      %v2258 = vmul.f32 %v1054, %v2225
      %v2259 = vmul.f32 %v1057, %v2225
      %v2260 = vmul.f32 %v1062, %v2225
      %v2261 = vmul.f32 %v1065, %v2225
      %v2262 = vmul.f32 %v1070, %v2225
      %v2263 = vmul.f32 %v1073, %v2225
      %v2264 = vmul.f32 %v1078, %v2225
      %v2265 = vmul.f32 %v1081, %v2225
      %v2266 = vmul.f32 %v1086, %v2225
      %v2267 = vmul.f32 %v1089, %v2225
      %v2268 = vmul.f32 %v1094, %v2225
      %v2269 = vmul.f32 %v1097, %v2225
      %v2270 = vmul.f32 %v1102, %v2225
      %v2271 = vmul.f32 %v1105, %v2225
      %v2272 = vmul.f32 %v1110, %v2225
      %v2273 = vmul.f32 %v1113, %v2225
      %v2274 = vmul.f32 %v1118, %v2225
      %v2275 = vmul.f32 %v1121, %v2225
      %v2276 = vmul.f32 %v1126, %v2225
      %v2277 = vmul.f32 %v1129, %v2225
      %v2278 = vmul.f32 %v1134, %v2225
      %v2279 = vmul.f32 %v1137, %v2225
      %v2334 = vrot.slane %v2226, 1
      %v2335 = vrot.slane %v2227, 1
      %v2336 = vsel %vm1713, %v2334, %v2335
      %v2337 = vrot.slane %v2228, 1
      %v2338 = vsel %vm1713, %v2335, %v2337
      %v2339 = vrot.slane %v2229, 1
      %v2340 = vrot.slane %v2230, 1
      %v2341 = vsel %vm1713, %v2339, %v2340
      %v2342 = vrot.slane %v2231, 1
      %v2343 = vsel %vm1713, %v2340, %v2342
      %v2344 = vrot.slane %v2232, 1
      %v2345 = vrot.slane %v2233, 1
      %v2346 = vsel %vm1713, %v2344, %v2345
      %v2347 = vrot.slane %v2234, 1
      %v2348 = vsel %vm1713, %v2345, %v2347
      %v2349 = vrot.slane %v2235, 1
      %v2350 = vrot.slane %v2236, 1
      %v2351 = vsel %vm1713, %v2349, %v2350
      %v2352 = vrot.slane %v2237, 1
      %v2353 = vsel %vm1713, %v2350, %v2352
      %v2354 = vrot.slane %v2238, 1
      %v2355 = vrot.slane %v2239, 1
      %v2356 = vsel %vm1713, %v2354, %v2355
      %v2357 = vrot.slane %v2240, 1
      %v2358 = vsel %vm1713, %v2355, %v2357
      %v2359 = vrot.slane %v2241, 1
      %v2360 = vrot.slane %v2242, 1
      %v2361 = vsel %vm1713, %v2359, %v2360
      %v2362 = vrot.slane %v2243, 1
      %v2363 = vsel %vm1713, %v2360, %v2362
      %v2364 = vrot.slane %v2244, 1
      %v2365 = vrot.slane %v2245, 1
      %v2366 = vsel %vm1713, %v2364, %v2365
      %v2367 = vrot.slane %v2246, 1
      %v2368 = vsel %vm1713, %v2365, %v2367
      %v2369 = vrot.slane %v2247, 1
      %v2370 = vrot.slane %v2248, 1
      %v2371 = vsel %vm1713, %v2369, %v2370
      %v2372 = vrot.slane %v2249, 1
      %v2373 = vsel %vm1713, %v2370, %v2372
      %v2374 = vrot.slane %v2250, 1
      %v2375 = vrot.slane %v2251, 1
      %v2376 = vsel %vm1713, %v2374, %v2375
      %v2377 = vrot.slane %v2252, 1
      %v2378 = vsel %vm1713, %v2375, %v2377
      %v2379 = vrot.slane %v2253, 1
      %v2380 = vrot.slane %v2254, 1
      %v2381 = vsel %vm1713, %v2379, %v2380
      %v2382 = vrot.slane %v2255, 1
      %v2383 = vsel %vm1713, %v2380, %v2382
      %v2384 = vrot.slane %v2256, 1
      %v2385 = vrot.slane %v2257, 1
      %v2386 = vsel %vm1713, %v2384, %v2385
      %v2387 = vrot.slane %v2258, 1
      %v2388 = vsel %vm1713, %v2385, %v2387
      %v2389 = vrot.slane %v2259, 1
      %v2390 = vrot.slane %v2260, 1
      %v2391 = vsel %vm1713, %v2389, %v2390
      %v2392 = vrot.slane %v2261, 1
      %v2393 = vsel %vm1713, %v2390, %v2392
      %v2394 = vrot.slane %v2262, 1
      %v2395 = vrot.slane %v2263, 1
      %v2396 = vsel %vm1713, %v2394, %v2395
      %v2397 = vrot.slane %v2264, 1
      %v2398 = vsel %vm1713, %v2395, %v2397
      %v2399 = vrot.slane %v2265, 1
      %v2400 = vrot.slane %v2266, 1
      %v2401 = vsel %vm1713, %v2399, %v2400
      %v2402 = vrot.slane %v2267, 1
      %v2403 = vsel %vm1713, %v2400, %v2402
      %v2404 = vrot.slane %v2268, 1
      %v2405 = vrot.slane %v2269, 1
      %v2406 = vsel %vm1713, %v2404, %v2405
      %v2407 = vrot.slane %v2270, 1
      %v2408 = vsel %vm1713, %v2405, %v2407
      %v2409 = vrot.slane %v2271, 1
      %v2410 = vrot.slane %v2272, 1
      %v2411 = vsel %vm1713, %v2409, %v2410
      %v2412 = vrot.slane %v2273, 1
      %v2413 = vsel %vm1713, %v2410, %v2412
      %v2414 = vrot.slane %v2274, 1
      %v2415 = vrot.slane %v2275, 1
      %v2416 = vsel %vm1713, %v2414, %v2415
      %v2417 = vrot.slane %v2276, 1
      %v2418 = vsel %vm1713, %v2415, %v2417
      %v2419 = vrot.slane %v2277, 1
      %v2420 = vrot.slane %v2278, 1
      %v2421 = vsel %vm1713, %v2419, %v2420
      %v2422 = vrot.slane %v2279, 1
      %v2423 = vsel %vm1713, %v2420, %v2422
      %v2478 = vadd.f32 %v2168, %v2336
      %v2479 = vadd.f32 %v2169, %v2338
      %v2480 = vadd.f32 %v2170, %v2337
      %v2481 = vadd.f32 %v2171, %v2341
      %v2482 = vadd.f32 %v2172, %v2343
      %v2483 = vadd.f32 %v2173, %v2342
      %v2484 = vadd.f32 %v2174, %v2346
      %v2485 = vadd.f32 %v2175, %v2348
      %v2486 = vadd.f32 %v2176, %v2347
      %v2487 = vadd.f32 %v2177, %v2351
      %v2488 = vadd.f32 %v2178, %v2353
      %v2489 = vadd.f32 %v2179, %v2352
      %v2490 = vadd.f32 %v2180, %v2356
      %v2491 = vadd.f32 %v2181, %v2358
      %v2492 = vadd.f32 %v2182, %v2357
      %v2493 = vadd.f32 %v2183, %v2361
      %v2494 = vadd.f32 %v2184, %v2363
      %v2495 = vadd.f32 %v2185, %v2362
      %v2496 = vadd.f32 %v2186, %v2366
      %v2497 = vadd.f32 %v2187, %v2368
      %v2498 = vadd.f32 %v2188, %v2367
      %v2499 = vadd.f32 %v2189, %v2371
      %v2500 = vadd.f32 %v2190, %v2373
      %v2501 = vadd.f32 %v2191, %v2372
      %v2502 = vadd.f32 %v2192, %v2376
      %v2503 = vadd.f32 %v2193, %v2378
      %v2504 = vadd.f32 %v2194, %v2377
      %v2505 = vadd.f32 %v2195, %v2381
      %v2506 = vadd.f32 %v2196, %v2383
      %v2507 = vadd.f32 %v2197, %v2382
      %v2508 = vadd.f32 %v2198, %v2386
      %v2509 = vadd.f32 %v2199, %v2388
      %v2510 = vadd.f32 %v2200, %v2387
      %v2511 = vadd.f32 %v2201, %v2391
      %v2512 = vadd.f32 %v2202, %v2393
      %v2513 = vadd.f32 %v2203, %v2392
      %v2514 = vadd.f32 %v2204, %v2396
      %v2515 = vadd.f32 %v2205, %v2398
      %v2516 = vadd.f32 %v2206, %v2397
      %v2517 = vadd.f32 %v2207, %v2401
      %v2518 = vadd.f32 %v2208, %v2403
      %v2519 = vadd.f32 %v2209, %v2402
      %v2520 = vadd.f32 %v2210, %v2406
      %v2521 = vadd.f32 %v2211, %v2408
      %v2522 = vadd.f32 %v2212, %v2407
      %v2523 = vadd.f32 %v2213, %v2411
      %v2524 = vadd.f32 %v2214, %v2413
      %v2525 = vadd.f32 %v2215, %v2412
      %v2526 = vadd.f32 %v2216, %v2416
      %v2527 = vadd.f32 %v2217, %v2418
      %v2528 = vadd.f32 %v2218, %v2417
      %v2529 = vadd.f32 %v2219, %v2421
      %v2530 = vadd.f32 %v2220, %v2423
      %v2531 = vadd.f32 %v2221, %v2422
      %v2532 = vlaneseq
      %v2533 = vshrl.u32 %v2532, 7
      %v2534 = vsub.s32 2, %v2533
      %v2535 = vrot.slane %v1317, %v2534
      %v2536 = vmul.f32 %v902, %v2535
      %v2537 = vmul.f32 %v905, %v2535
      %v2538 = vmul.f32 %v910, %v2535
      %v2539 = vmul.f32 %v913, %v2535
      %v2540 = vmul.f32 %v918, %v2535
      %v2541 = vmul.f32 %v921, %v2535
      %v2542 = vmul.f32 %v926, %v2535
      %v2543 = vmul.f32 %v929, %v2535
      %v2544 = vmul.f32 %v934, %v2535
      %v2545 = vmul.f32 %v937, %v2535
      %v2546 = vmul.f32 %v942, %v2535
      %v2547 = vmul.f32 %v945, %v2535
      %v2548 = vmul.f32 %v950, %v2535
      %v2549 = vmul.f32 %v953, %v2535
      %v2550 = vmul.f32 %v958, %v2535
      %v2551 = vmul.f32 %v961, %v2535
      %v2552 = vmul.f32 %v966, %v2535
      %v2553 = vmul.f32 %v969, %v2535
      %v2554 = vmul.f32 %v974, %v2535
      %v2555 = vmul.f32 %v977, %v2535
      %v2556 = vmul.f32 %v982, %v2535
      %v2557 = vmul.f32 %v985, %v2535
      %v2558 = vmul.f32 %v990, %v2535
      %v2559 = vmul.f32 %v993, %v2535
      %v2560 = vmul.f32 %v998, %v2535
      %v2561 = vmul.f32 %v1001, %v2535
      %v2562 = vmul.f32 %v1006, %v2535
      %v2563 = vmul.f32 %v1009, %v2535
      %v2564 = vmul.f32 %v1014, %v2535
      %v2565 = vmul.f32 %v1017, %v2535
      %v2566 = vmul.f32 %v1022, %v2535
      %v2567 = vmul.f32 %v1025, %v2535
      %v2568 = vmul.f32 %v1030, %v2535
      %v2569 = vmul.f32 %v1033, %v2535
      %v2570 = vmul.f32 %v1038, %v2535
      %v2571 = vmul.f32 %v1041, %v2535
      %v2572 = vmul.f32 %v1046, %v2535
      %v2573 = vmul.f32 %v1049, %v2535
      %v2574 = vmul.f32 %v1054, %v2535
      %v2575 = vmul.f32 %v1057, %v2535
      %v2576 = vmul.f32 %v1062, %v2535
      %v2577 = vmul.f32 %v1065, %v2535
      %v2578 = vmul.f32 %v1070, %v2535
      %v2579 = vmul.f32 %v1073, %v2535
      %v2580 = vmul.f32 %v1078, %v2535
      %v2581 = vmul.f32 %v1081, %v2535
      %v2582 = vmul.f32 %v1086, %v2535
      %v2583 = vmul.f32 %v1089, %v2535
      %v2584 = vmul.f32 %v1094, %v2535
      %v2585 = vmul.f32 %v1097, %v2535
      %v2586 = vmul.f32 %v1102, %v2535
      %v2587 = vmul.f32 %v1105, %v2535
      %v2588 = vmul.f32 %v1110, %v2535
      %v2589 = vmul.f32 %v1113, %v2535
      %v2644 = vrot.slane %v2536, 2
      %v2645 = vrot.slane %v2537, 2
      %v2646 = vsel %vm1188, %v2644, %v2645
      %v2647 = vrot.slane %v2538, 2
      %v2648 = vsel %vm1188, %v2645, %v2647
      %v2649 = vrot.slane %v2539, 2
      %v2650 = vrot.slane %v2540, 2
      %v2651 = vsel %vm1188, %v2649, %v2650
      %v2652 = vrot.slane %v2541, 2
      %v2653 = vsel %vm1188, %v2650, %v2652
      %v2654 = vrot.slane %v2542, 2
      %v2655 = vrot.slane %v2543, 2
      %v2656 = vsel %vm1188, %v2654, %v2655
      %v2657 = vrot.slane %v2544, 2
      %v2658 = vsel %vm1188, %v2655, %v2657
      %v2659 = vrot.slane %v2545, 2
      %v2660 = vrot.slane %v2546, 2
      %v2661 = vsel %vm1188, %v2659, %v2660
      %v2662 = vrot.slane %v2547, 2
      %v2663 = vsel %vm1188, %v2660, %v2662
      %v2664 = vrot.slane %v2548, 2
      %v2665 = vrot.slane %v2549, 2
      %v2666 = vsel %vm1188, %v2664, %v2665
      %v2667 = vrot.slane %v2550, 2
      %v2668 = vsel %vm1188, %v2665, %v2667
      %v2669 = vrot.slane %v2551, 2
      %v2670 = vrot.slane %v2552, 2
      %v2671 = vsel %vm1188, %v2669, %v2670
      %v2672 = vrot.slane %v2553, 2
      %v2673 = vsel %vm1188, %v2670, %v2672
      %v2674 = vrot.slane %v2554, 2
      %v2675 = vrot.slane %v2555, 2
      %v2676 = vsel %vm1188, %v2674, %v2675
      %v2677 = vrot.slane %v2556, 2
      %v2678 = vsel %vm1188, %v2675, %v2677
      %v2679 = vrot.slane %v2557, 2
      %v2680 = vrot.slane %v2558, 2
      %v2681 = vsel %vm1188, %v2679, %v2680
      %v2682 = vrot.slane %v2559, 2
      %v2683 = vsel %vm1188, %v2680, %v2682
      %v2684 = vrot.slane %v2560, 2
      %v2685 = vrot.slane %v2561, 2
      %v2686 = vsel %vm1188, %v2684, %v2685
      %v2687 = vrot.slane %v2562, 2
      %v2688 = vsel %vm1188, %v2685, %v2687
      %v2689 = vrot.slane %v2563, 2
      %v2690 = vrot.slane %v2564, 2
      %v2691 = vsel %vm1188, %v2689, %v2690
      %v2692 = vrot.slane %v2565, 2
      %v2693 = vsel %vm1188, %v2690, %v2692
      %v2694 = vrot.slane %v2566, 2
      %v2695 = vrot.slane %v2567, 2
      %v2696 = vsel %vm1188, %v2694, %v2695
      %v2697 = vrot.slane %v2568, 2
      %v2698 = vsel %vm1188, %v2695, %v2697
      %v2699 = vrot.slane %v2569, 2
      %v2700 = vrot.slane %v2570, 2
      %v2701 = vsel %vm1188, %v2699, %v2700
      %v2702 = vrot.slane %v2571, 2
      %v2703 = vsel %vm1188, %v2700, %v2702
      %v2704 = vrot.slane %v2572, 2
      %v2705 = vrot.slane %v2573, 2
      %v2706 = vsel %vm1188, %v2704, %v2705
      %v2707 = vrot.slane %v2574, 2
      %v2708 = vsel %vm1188, %v2705, %v2707
      %v2709 = vrot.slane %v2575, 2
      %v2710 = vrot.slane %v2576, 2
      %v2711 = vsel %vm1188, %v2709, %v2710
      %v2712 = vrot.slane %v2577, 2
      %v2713 = vsel %vm1188, %v2710, %v2712
      %v2714 = vrot.slane %v2578, 2
      %v2715 = vrot.slane %v2579, 2
      %v2716 = vsel %vm1188, %v2714, %v2715
      %v2717 = vrot.slane %v2580, 2
      %v2718 = vsel %vm1188, %v2715, %v2717
      %v2719 = vrot.slane %v2581, 2
      %v2720 = vrot.slane %v2582, 2
      %v2721 = vsel %vm1188, %v2719, %v2720
      %v2722 = vrot.slane %v2583, 2
      %v2723 = vsel %vm1188, %v2720, %v2722
      %v2724 = vrot.slane %v2584, 2
      %v2725 = vrot.slane %v2585, 2
      %v2726 = vsel %vm1188, %v2724, %v2725
      %v2727 = vrot.slane %v2586, 2
      %v2728 = vsel %vm1188, %v2725, %v2727
      %v2729 = vrot.slane %v2587, 2
      %v2730 = vrot.slane %v2588, 2
      %v2731 = vsel %vm1188, %v2729, %v2730
      %v2732 = vrot.slane %v2589, 2
      %v2733 = vsel %vm1188, %v2730, %v2732
      %v2788 = vadd.f32 %v2478, %v2646
      %v2789 = vadd.f32 %v2479, %v2648
      %v2790 = vadd.f32 %v2480, %v2647
      %v2791 = vadd.f32 %v2481, %v2651
      %v2792 = vadd.f32 %v2482, %v2653
      %v2793 = vadd.f32 %v2483, %v2652
      %v2794 = vadd.f32 %v2484, %v2656
      %v2795 = vadd.f32 %v2485, %v2658
      %v2796 = vadd.f32 %v2486, %v2657
      %v2797 = vadd.f32 %v2487, %v2661
      %v2798 = vadd.f32 %v2488, %v2663
      %v2799 = vadd.f32 %v2489, %v2662
      %v2800 = vadd.f32 %v2490, %v2666
      %v2801 = vadd.f32 %v2491, %v2668
      %v2802 = vadd.f32 %v2492, %v2667
      %v2803 = vadd.f32 %v2493, %v2671
      %v2804 = vadd.f32 %v2494, %v2673
      %v2805 = vadd.f32 %v2495, %v2672
      %v2806 = vadd.f32 %v2496, %v2676
      %v2807 = vadd.f32 %v2497, %v2678
      %v2808 = vadd.f32 %v2498, %v2677
      %v2809 = vadd.f32 %v2499, %v2681
      %v2810 = vadd.f32 %v2500, %v2683
      %v2811 = vadd.f32 %v2501, %v2682
      %v2812 = vadd.f32 %v2502, %v2686
      %v2813 = vadd.f32 %v2503, %v2688
      %v2814 = vadd.f32 %v2504, %v2687
      %v2815 = vadd.f32 %v2505, %v2691
      %v2816 = vadd.f32 %v2506, %v2693
      %v2817 = vadd.f32 %v2507, %v2692
      %v2818 = vadd.f32 %v2508, %v2696
      %v2819 = vadd.f32 %v2509, %v2698
      %v2820 = vadd.f32 %v2510, %v2697
      %v2821 = vadd.f32 %v2511, %v2701
      %v2822 = vadd.f32 %v2512, %v2703
      %v2823 = vadd.f32 %v2513, %v2702
      %v2824 = vadd.f32 %v2514, %v2706
      %v2825 = vadd.f32 %v2515, %v2708
      %v2826 = vadd.f32 %v2516, %v2707
      %v2827 = vadd.f32 %v2517, %v2711
      %v2828 = vadd.f32 %v2518, %v2713
      %v2829 = vadd.f32 %v2519, %v2712
      %v2830 = vadd.f32 %v2520, %v2716
      %v2831 = vadd.f32 %v2521, %v2718
      %v2832 = vadd.f32 %v2522, %v2717
      %v2833 = vadd.f32 %v2523, %v2721
      %v2834 = vadd.f32 %v2524, %v2723
      %v2835 = vadd.f32 %v2525, %v2722
      %v2836 = vadd.f32 %v2526, %v2726
      %v2837 = vadd.f32 %v2527, %v2728
      %v2838 = vadd.f32 %v2528, %v2727
      %v2839 = vadd.f32 %v2529, %v2731
      %v2840 = vadd.f32 %v2530, %v2733
      %v2841 = vadd.f32 %v2531, %v2732
      %v2842 = vlaneseq
      %v2843 = vshrl.u32 %v2842, 7
      %v2844 = vsub.s32 5, %v2843
      %v2845 = vrot.slane %v1317, %v2844
      %v2846 = vmul.f32 %v913, %v2845
      %v2847 = vmul.f32 %v918, %v2845
      %v2848 = vmul.f32 %v921, %v2845
      %v2849 = vmul.f32 %v926, %v2845
      %v2850 = vmul.f32 %v929, %v2845
      %v2851 = vmul.f32 %v934, %v2845
      %v2852 = vmul.f32 %v937, %v2845
      %v2853 = vmul.f32 %v942, %v2845
      %v2854 = vmul.f32 %v945, %v2845
      %v2855 = vmul.f32 %v950, %v2845
      %v2856 = vmul.f32 %v953, %v2845
      %v2857 = vmul.f32 %v958, %v2845
      %v2858 = vmul.f32 %v961, %v2845
      %v2859 = vmul.f32 %v966, %v2845
      %v2860 = vmul.f32 %v969, %v2845
      %v2861 = vmul.f32 %v974, %v2845
      %v2862 = vmul.f32 %v977, %v2845
      %v2863 = vmul.f32 %v982, %v2845
      %v2864 = vmul.f32 %v985, %v2845
      %v2865 = vmul.f32 %v990, %v2845
      %v2866 = vmul.f32 %v993, %v2845
      %v2867 = vmul.f32 %v998, %v2845
      %v2868 = vmul.f32 %v1001, %v2845
      %v2869 = vmul.f32 %v1006, %v2845
      %v2870 = vmul.f32 %v1009, %v2845
      %v2871 = vmul.f32 %v1014, %v2845
      %v2872 = vmul.f32 %v1017, %v2845
      %v2873 = vmul.f32 %v1022, %v2845
      %v2874 = vmul.f32 %v1025, %v2845
      %v2875 = vmul.f32 %v1030, %v2845
      %v2876 = vmul.f32 %v1033, %v2845
      %v2877 = vmul.f32 %v1038, %v2845
      %v2878 = vmul.f32 %v1041, %v2845
      %v2879 = vmul.f32 %v1046, %v2845
      %v2880 = vmul.f32 %v1049, %v2845
      %v2881 = vmul.f32 %v1054, %v2845
      %v2882 = vmul.f32 %v1057, %v2845
      %v2883 = vmul.f32 %v1062, %v2845
      %v2884 = vmul.f32 %v1065, %v2845
      %v2885 = vmul.f32 %v1070, %v2845
      %v2886 = vmul.f32 %v1073, %v2845
      %v2887 = vmul.f32 %v1078, %v2845
      %v2888 = vmul.f32 %v1081, %v2845
      %v2889 = vmul.f32 %v1086, %v2845
      %v2890 = vmul.f32 %v1089, %v2845
      %v2891 = vmul.f32 %v1094, %v2845
      %v2892 = vmul.f32 %v1097, %v2845
      %v2893 = vmul.f32 %v1102, %v2845
      %v2894 = vmul.f32 %v1105, %v2845
      %v2895 = vmul.f32 %v1110, %v2845
      %v2896 = vmul.f32 %v1113, %v2845
      %v2897 = vmul.f32 %v1118, %v2845
      %v2898 = vmul.f32 %v1121, %v2845
      %v2899 = vmul.f32 %v1126, %v2845
      %v2954 = vrot.slane %v2846, 2
      %v2955 = vrot.slane %v2847, 2
      %v2956 = vsel %vm1188, %v2954, %v2955
      %v2957 = vrot.slane %v2848, 2
      %v2958 = vsel %vm1188, %v2955, %v2957
      %v2959 = vrot.slane %v2849, 2
      %v2960 = vrot.slane %v2850, 2
      %v2961 = vsel %vm1188, %v2959, %v2960
      %v2962 = vrot.slane %v2851, 2
      %v2963 = vsel %vm1188, %v2960, %v2962
      %v2964 = vrot.slane %v2852, 2
      %v2965 = vrot.slane %v2853, 2
      %v2966 = vsel %vm1188, %v2964, %v2965
      %v2967 = vrot.slane %v2854, 2
      %v2968 = vsel %vm1188, %v2965, %v2967
      %v2969 = vrot.slane %v2855, 2
      %v2970 = vrot.slane %v2856, 2
      %v2971 = vsel %vm1188, %v2969, %v2970
      %v2972 = vrot.slane %v2857, 2
      %v2973 = vsel %vm1188, %v2970, %v2972
      %v2974 = vrot.slane %v2858, 2
      %v2975 = vrot.slane %v2859, 2
      %v2976 = vsel %vm1188, %v2974, %v2975
      %v2977 = vrot.slane %v2860, 2
      %v2978 = vsel %vm1188, %v2975, %v2977
      %v2979 = vrot.slane %v2861, 2
      %v2980 = vrot.slane %v2862, 2
      %v2981 = vsel %vm1188, %v2979, %v2980
      %v2982 = vrot.slane %v2863, 2
      %v2983 = vsel %vm1188, %v2980, %v2982
      %v2984 = vrot.slane %v2864, 2
      %v2985 = vrot.slane %v2865, 2
      %v2986 = vsel %vm1188, %v2984, %v2985
      %v2987 = vrot.slane %v2866, 2
      %v2988 = vsel %vm1188, %v2985, %v2987
      %v2989 = vrot.slane %v2867, 2
      %v2990 = vrot.slane %v2868, 2
      %v2991 = vsel %vm1188, %v2989, %v2990
      %v2992 = vrot.slane %v2869, 2
      %v2993 = vsel %vm1188, %v2990, %v2992
      %v2994 = vrot.slane %v2870, 2
      %v2995 = vrot.slane %v2871, 2
      %v2996 = vsel %vm1188, %v2994, %v2995
      %v2997 = vrot.slane %v2872, 2
      %v2998 = vsel %vm1188, %v2995, %v2997
      %v2999 = vrot.slane %v2873, 2
      %v3000 = vrot.slane %v2874, 2
      %v3001 = vsel %vm1188, %v2999, %v3000
      %v3002 = vrot.slane %v2875, 2
      %v3003 = vsel %vm1188, %v3000, %v3002
      %v3004 = vrot.slane %v2876, 2
      %v3005 = vrot.slane %v2877, 2
      %v3006 = vsel %vm1188, %v3004, %v3005
      %v3007 = vrot.slane %v2878, 2
      %v3008 = vsel %vm1188, %v3005, %v3007
      %v3009 = vrot.slane %v2879, 2
      %v3010 = vrot.slane %v2880, 2
      %v3011 = vsel %vm1188, %v3009, %v3010
      %v3012 = vrot.slane %v2881, 2
      %v3013 = vsel %vm1188, %v3010, %v3012
      %v3014 = vrot.slane %v2882, 2
      %v3015 = vrot.slane %v2883, 2
      %v3016 = vsel %vm1188, %v3014, %v3015
      %v3017 = vrot.slane %v2884, 2
      %v3018 = vsel %vm1188, %v3015, %v3017
      %v3019 = vrot.slane %v2885, 2
      %v3020 = vrot.slane %v2886, 2
      %v3021 = vsel %vm1188, %v3019, %v3020
      %v3022 = vrot.slane %v2887, 2
      %v3023 = vsel %vm1188, %v3020, %v3022
      %v3024 = vrot.slane %v2888, 2
      %v3025 = vrot.slane %v2889, 2
      %v3026 = vsel %vm1188, %v3024, %v3025
      %v3027 = vrot.slane %v2890, 2
      %v3028 = vsel %vm1188, %v3025, %v3027
      %v3029 = vrot.slane %v2891, 2
      %v3030 = vrot.slane %v2892, 2
      %v3031 = vsel %vm1188, %v3029, %v3030
      %v3032 = vrot.slane %v2893, 2
      %v3033 = vsel %vm1188, %v3030, %v3032
      %v3034 = vrot.slane %v2894, 2
      %v3035 = vrot.slane %v2895, 2
      %v3036 = vsel %vm1188, %v3034, %v3035
      %v3037 = vrot.slane %v2896, 2
      %v3038 = vsel %vm1188, %v3035, %v3037
      %v3039 = vrot.slane %v2897, 2
      %v3040 = vrot.slane %v2898, 2
      %v3041 = vsel %vm1188, %v3039, %v3040
      %v3042 = vrot.slane %v2899, 2
      %v3043 = vsel %vm1188, %v3040, %v3042
      %v3098 = vadd.f32 %v2788, %v2956
      %v3099 = vadd.f32 %v2789, %v2958
      %v3100 = vadd.f32 %v2790, %v2957
      %v3101 = vadd.f32 %v2791, %v2961
      %v3102 = vadd.f32 %v2792, %v2963
      %v3103 = vadd.f32 %v2793, %v2962
      %v3104 = vadd.f32 %v2794, %v2966
      %v3105 = vadd.f32 %v2795, %v2968
      %v3106 = vadd.f32 %v2796, %v2967
      %v3107 = vadd.f32 %v2797, %v2971
      %v3108 = vadd.f32 %v2798, %v2973
      %v3109 = vadd.f32 %v2799, %v2972
      %v3110 = vadd.f32 %v2800, %v2976
      %v3111 = vadd.f32 %v2801, %v2978
      %v3112 = vadd.f32 %v2802, %v2977
      %v3113 = vadd.f32 %v2803, %v2981
      %v3114 = vadd.f32 %v2804, %v2983
      %v3115 = vadd.f32 %v2805, %v2982
      %v3116 = vadd.f32 %v2806, %v2986
      %v3117 = vadd.f32 %v2807, %v2988
      %v3118 = vadd.f32 %v2808, %v2987
      %v3119 = vadd.f32 %v2809, %v2991
      %v3120 = vadd.f32 %v2810, %v2993
      %v3121 = vadd.f32 %v2811, %v2992
      %v3122 = vadd.f32 %v2812, %v2996
      %v3123 = vadd.f32 %v2813, %v2998
      %v3124 = vadd.f32 %v2814, %v2997
      %v3125 = vadd.f32 %v2815, %v3001
      %v3126 = vadd.f32 %v2816, %v3003
      %v3127 = vadd.f32 %v2817, %v3002
      %v3128 = vadd.f32 %v2818, %v3006
      %v3129 = vadd.f32 %v2819, %v3008
      %v3130 = vadd.f32 %v2820, %v3007
      %v3131 = vadd.f32 %v2821, %v3011
      %v3132 = vadd.f32 %v2822, %v3013
      %v3133 = vadd.f32 %v2823, %v3012
      %v3134 = vadd.f32 %v2824, %v3016
      %v3135 = vadd.f32 %v2825, %v3018
      %v3136 = vadd.f32 %v2826, %v3017
      %v3137 = vadd.f32 %v2827, %v3021
      %v3138 = vadd.f32 %v2828, %v3023
      %v3139 = vadd.f32 %v2829, %v3022
      %v3140 = vadd.f32 %v2830, %v3026
      %v3141 = vadd.f32 %v2831, %v3028
      %v3142 = vadd.f32 %v2832, %v3027
      %v3143 = vadd.f32 %v2833, %v3031
      %v3144 = vadd.f32 %v2834, %v3033
      %v3145 = vadd.f32 %v2835, %v3032
      %v3146 = vadd.f32 %v2836, %v3036
      %v3147 = vadd.f32 %v2837, %v3038
      %v3148 = vadd.f32 %v2838, %v3037
      %v3149 = vadd.f32 %v2839, %v3041
      %v3150 = vadd.f32 %v2840, %v3043
      %v3151 = vadd.f32 %v2841, %v3042
      %v3152 = vlaneseq
      %v3153 = vshrl.u32 %v3152, 7
      %v3154 = vsub.s32 0, %v3153
      %v3155 = vrot.slane %v1318, %v3154
      %v3156 = vmul.f32 %v926, %v3155
      %v3157 = vmul.f32 %v929, %v3155
      %v3158 = vmul.f32 %v934, %v3155
      %v3159 = vmul.f32 %v937, %v3155
      %v3160 = vmul.f32 %v942, %v3155
      %v3161 = vmul.f32 %v945, %v3155
      %v3162 = vmul.f32 %v950, %v3155
      %v3163 = vmul.f32 %v953, %v3155
      %v3164 = vmul.f32 %v958, %v3155
      %v3165 = vmul.f32 %v961, %v3155
      %v3166 = vmul.f32 %v966, %v3155
      %v3167 = vmul.f32 %v969, %v3155
      %v3168 = vmul.f32 %v974, %v3155
      %v3169 = vmul.f32 %v977, %v3155
      %v3170 = vmul.f32 %v982, %v3155
      %v3171 = vmul.f32 %v985, %v3155
      %v3172 = vmul.f32 %v990, %v3155
      %v3173 = vmul.f32 %v993, %v3155
      %v3174 = vmul.f32 %v998, %v3155
      %v3175 = vmul.f32 %v1001, %v3155
      %v3176 = vmul.f32 %v1006, %v3155
      %v3177 = vmul.f32 %v1009, %v3155
      %v3178 = vmul.f32 %v1014, %v3155
      %v3179 = vmul.f32 %v1017, %v3155
      %v3180 = vmul.f32 %v1022, %v3155
      %v3181 = vmul.f32 %v1025, %v3155
      %v3182 = vmul.f32 %v1030, %v3155
      %v3183 = vmul.f32 %v1033, %v3155
      %v3184 = vmul.f32 %v1038, %v3155
      %v3185 = vmul.f32 %v1041, %v3155
      %v3186 = vmul.f32 %v1046, %v3155
      %v3187 = vmul.f32 %v1049, %v3155
      %v3188 = vmul.f32 %v1054, %v3155
      %v3189 = vmul.f32 %v1057, %v3155
      %v3190 = vmul.f32 %v1062, %v3155
      %v3191 = vmul.f32 %v1065, %v3155
      %v3192 = vmul.f32 %v1070, %v3155
      %v3193 = vmul.f32 %v1073, %v3155
      %v3194 = vmul.f32 %v1078, %v3155
      %v3195 = vmul.f32 %v1081, %v3155
      %v3196 = vmul.f32 %v1086, %v3155
      %v3197 = vmul.f32 %v1089, %v3155
      %v3198 = vmul.f32 %v1094, %v3155
      %v3199 = vmul.f32 %v1097, %v3155
      %v3200 = vmul.f32 %v1102, %v3155
      %v3201 = vmul.f32 %v1105, %v3155
      %v3202 = vmul.f32 %v1110, %v3155
      %v3203 = vmul.f32 %v1113, %v3155
      %v3204 = vmul.f32 %v1118, %v3155
      %v3205 = vmul.f32 %v1121, %v3155
      %v3206 = vmul.f32 %v1126, %v3155
      %v3207 = vmul.f32 %v1129, %v3155
      %v3208 = vmul.f32 %v1134, %v3155
      %v3209 = vmul.f32 %v1137, %v3155
      %v3264 = vrot.slane %v3156, 2
      %v3265 = vrot.slane %v3157, 2
      %v3266 = vsel %vm1188, %v3264, %v3265
      %v3267 = vrot.slane %v3158, 2
      %v3268 = vsel %vm1188, %v3265, %v3267
      %v3269 = vrot.slane %v3159, 2
      %v3270 = vrot.slane %v3160, 2
      %v3271 = vsel %vm1188, %v3269, %v3270
      %v3272 = vrot.slane %v3161, 2
      %v3273 = vsel %vm1188, %v3270, %v3272
      %v3274 = vrot.slane %v3162, 2
      %v3275 = vrot.slane %v3163, 2
      %v3276 = vsel %vm1188, %v3274, %v3275
      %v3277 = vrot.slane %v3164, 2
      %v3278 = vsel %vm1188, %v3275, %v3277
      %v3279 = vrot.slane %v3165, 2
      %v3280 = vrot.slane %v3166, 2
      %v3281 = vsel %vm1188, %v3279, %v3280
      %v3282 = vrot.slane %v3167, 2
      %v3283 = vsel %vm1188, %v3280, %v3282
      %v3284 = vrot.slane %v3168, 2
      %v3285 = vrot.slane %v3169, 2
      %v3286 = vsel %vm1188, %v3284, %v3285
      %v3287 = vrot.slane %v3170, 2
      %v3288 = vsel %vm1188, %v3285, %v3287
      %v3289 = vrot.slane %v3171, 2
      %v3290 = vrot.slane %v3172, 2
      %v3291 = vsel %vm1188, %v3289, %v3290
      %v3292 = vrot.slane %v3173, 2
      %v3293 = vsel %vm1188, %v3290, %v3292
      %v3294 = vrot.slane %v3174, 2
      %v3295 = vrot.slane %v3175, 2
      %v3296 = vsel %vm1188, %v3294, %v3295
      %v3297 = vrot.slane %v3176, 2
      %v3298 = vsel %vm1188, %v3295, %v3297
      %v3299 = vrot.slane %v3177, 2
      %v3300 = vrot.slane %v3178, 2
      %v3301 = vsel %vm1188, %v3299, %v3300
      %v3302 = vrot.slane %v3179, 2
      %v3303 = vsel %vm1188, %v3300, %v3302
      %v3304 = vrot.slane %v3180, 2
      %v3305 = vrot.slane %v3181, 2
      %v3306 = vsel %vm1188, %v3304, %v3305
      %v3307 = vrot.slane %v3182, 2
      %v3308 = vsel %vm1188, %v3305, %v3307
      %v3309 = vrot.slane %v3183, 2
      %v3310 = vrot.slane %v3184, 2
      %v3311 = vsel %vm1188, %v3309, %v3310
      %v3312 = vrot.slane %v3185, 2
      %v3313 = vsel %vm1188, %v3310, %v3312
      %v3314 = vrot.slane %v3186, 2
      %v3315 = vrot.slane %v3187, 2
      %v3316 = vsel %vm1188, %v3314, %v3315
      %v3317 = vrot.slane %v3188, 2
      %v3318 = vsel %vm1188, %v3315, %v3317
      %v3319 = vrot.slane %v3189, 2
      %v3320 = vrot.slane %v3190, 2
      %v3321 = vsel %vm1188, %v3319, %v3320
      %v3322 = vrot.slane %v3191, 2
      %v3323 = vsel %vm1188, %v3320, %v3322
      %v3324 = vrot.slane %v3192, 2
      %v3325 = vrot.slane %v3193, 2
      %v3326 = vsel %vm1188, %v3324, %v3325
      %v3327 = vrot.slane %v3194, 2
      %v3328 = vsel %vm1188, %v3325, %v3327
      %v3329 = vrot.slane %v3195, 2
      %v3330 = vrot.slane %v3196, 2
      %v3331 = vsel %vm1188, %v3329, %v3330
      %v3332 = vrot.slane %v3197, 2
      %v3333 = vsel %vm1188, %v3330, %v3332
      %v3334 = vrot.slane %v3198, 2
      %v3335 = vrot.slane %v3199, 2
      %v3336 = vsel %vm1188, %v3334, %v3335
      %v3337 = vrot.slane %v3200, 2
      %v3338 = vsel %vm1188, %v3335, %v3337
      %v3339 = vrot.slane %v3201, 2
      %v3340 = vrot.slane %v3202, 2
      %v3341 = vsel %vm1188, %v3339, %v3340
      %v3342 = vrot.slane %v3203, 2
      %v3343 = vsel %vm1188, %v3340, %v3342
      %v3344 = vrot.slane %v3204, 2
      %v3345 = vrot.slane %v3205, 2
      %v3346 = vsel %vm1188, %v3344, %v3345
      %v3347 = vrot.slane %v3206, 2
      %v3348 = vsel %vm1188, %v3345, %v3347
      %v3349 = vrot.slane %v3207, 2
      %v3350 = vrot.slane %v3208, 2
      %v3351 = vsel %vm1188, %v3349, %v3350
      %v3352 = vrot.slane %v3209, 2
      %v3353 = vsel %vm1188, %v3350, %v3352
      %v3408 = vadd.f32 %v3098, %v3266
      %v3409 = vadd.f32 %v3099, %v3268
      %v3410 = vadd.f32 %v3100, %v3267
      %v3411 = vadd.f32 %v3101, %v3271
      %v3412 = vadd.f32 %v3102, %v3273
      %v3413 = vadd.f32 %v3103, %v3272
      %v3414 = vadd.f32 %v3104, %v3276
      %v3415 = vadd.f32 %v3105, %v3278
      %v3416 = vadd.f32 %v3106, %v3277
      %v3417 = vadd.f32 %v3107, %v3281
      %v3418 = vadd.f32 %v3108, %v3283
      %v3419 = vadd.f32 %v3109, %v3282
      %v3420 = vadd.f32 %v3110, %v3286
      %v3421 = vadd.f32 %v3111, %v3288
      %v3422 = vadd.f32 %v3112, %v3287
      %v3423 = vadd.f32 %v3113, %v3291
      %v3424 = vadd.f32 %v3114, %v3293
      %v3425 = vadd.f32 %v3115, %v3292
      %v3426 = vadd.f32 %v3116, %v3296
      %v3427 = vadd.f32 %v3117, %v3298
      %v3428 = vadd.f32 %v3118, %v3297
      %v3429 = vadd.f32 %v3119, %v3301
      %v3430 = vadd.f32 %v3120, %v3303
      %v3431 = vadd.f32 %v3121, %v3302
      %v3432 = vadd.f32 %v3122, %v3306
      %v3433 = vadd.f32 %v3123, %v3308
      %v3434 = vadd.f32 %v3124, %v3307
      %v3435 = vadd.f32 %v3125, %v3311
      %v3436 = vadd.f32 %v3126, %v3313
      %v3437 = vadd.f32 %v3127, %v3312
      %v3438 = vadd.f32 %v3128, %v3316
      %v3439 = vadd.f32 %v3129, %v3318
      %v3440 = vadd.f32 %v3130, %v3317
      %v3441 = vadd.f32 %v3131, %v3321
      %v3442 = vadd.f32 %v3132, %v3323
      %v3443 = vadd.f32 %v3133, %v3322
      %v3444 = vadd.f32 %v3134, %v3326
      %v3445 = vadd.f32 %v3135, %v3328
      %v3446 = vadd.f32 %v3136, %v3327
      %v3447 = vadd.f32 %v3137, %v3331
      %v3448 = vadd.f32 %v3138, %v3333
      %v3449 = vadd.f32 %v3139, %v3332
      %v3450 = vadd.f32 %v3140, %v3336
      %v3451 = vadd.f32 %v3141, %v3338
      %v3452 = vadd.f32 %v3142, %v3337
      %v3453 = vadd.f32 %v3143, %v3341
      %v3454 = vadd.f32 %v3144, %v3343
      %v3455 = vadd.f32 %v3145, %v3342
      %v3456 = vadd.f32 %v3146, %v3346
      %v3457 = vadd.f32 %v3147, %v3348
      %v3458 = vadd.f32 %v3148, %v3347
      %v3459 = vadd.f32 %v3149, %v3351
      %v3460 = vadd.f32 %v3150, %v3353
      %v3461 = vadd.f32 %v3151, %v3352
      %v3462 = vld [vmem:[%s3] sm:$0x1]
      %v3464 = vlaneseq
      %v3465 = vshrl.u32 %v3464, 7
      %v3466 = vsub.s32 0, %v3465
      %v3467 = vrot.slane %v3462, %v3466
      %v3469 = vmul.f32 %v3408, %v3467
      %v3470 = vmul.f32 %v3409, %v3467
      %v3471 = vmul.f32 %v3410, %v3467
      %v3472 = vmul.f32 %v3411, %v3467
      %v3473 = vmul.f32 %v3412, %v3467
      %v3474 = vmul.f32 %v3413, %v3467
      %v3475 = vmul.f32 %v3414, %v3467
      %v3476 = vmul.f32 %v3415, %v3467
      %v3477 = vmul.f32 %v3416, %v3467
      %v3478 = vmul.f32 %v3417, %v3467
      %v3479 = vmul.f32 %v3418, %v3467
      %v3480 = vmul.f32 %v3419, %v3467
      %v3481 = vmul.f32 %v3420, %v3467
      %v3482 = vmul.f32 %v3421, %v3467
      %v3483 = vmul.f32 %v3422, %v3467
      %v3484 = vmul.f32 %v3423, %v3467
      %v3485 = vmul.f32 %v3424, %v3467
      %v3486 = vmul.f32 %v3425, %v3467
      %v3487 = vmul.f32 %v3426, %v3467
      %v3488 = vmul.f32 %v3427, %v3467
      %v3489 = vmul.f32 %v3428, %v3467
      %v3490 = vmul.f32 %v3429, %v3467
      %v3491 = vmul.f32 %v3430, %v3467
      %v3492 = vmul.f32 %v3431, %v3467
      %v3493 = vmul.f32 %v3432, %v3467
      %v3494 = vmul.f32 %v3433, %v3467
      %v3495 = vmul.f32 %v3434, %v3467
      %v3496 = vmul.f32 %v3435, %v3467
      %v3497 = vmul.f32 %v3436, %v3467
      %v3498 = vmul.f32 %v3437, %v3467
      %v3499 = vmul.f32 %v3438, %v3467
      %v3500 = vmul.f32 %v3439, %v3467
      %v3501 = vmul.f32 %v3440, %v3467
      %v3502 = vmul.f32 %v3441, %v3467
      %v3503 = vmul.f32 %v3442, %v3467
      %v3504 = vmul.f32 %v3443, %v3467
      %v3505 = vmul.f32 %v3444, %v3467
      %v3506 = vmul.f32 %v3445, %v3467
      %v3507 = vmul.f32 %v3446, %v3467
      %v3508 = vmul.f32 %v3447, %v3467
      %v3509 = vmul.f32 %v3448, %v3467
      %v3510 = vmul.f32 %v3449, %v3467
      %v3511 = vmul.f32 %v3450, %v3467
      %v3512 = vmul.f32 %v3451, %v3467
      %v3513 = vmul.f32 %v3452, %v3467
      %v3514 = vmul.f32 %v3453, %v3467
      %v3515 = vmul.f32 %v3454, %v3467
      %v3516 = vmul.f32 %v3455, %v3467
      %v3517 = vmul.f32 %v3456, %v3467
      %v3518 = vmul.f32 %v3457, %v3467
      %v3519 = vmul.f32 %v3458, %v3467
      %v3520 = vmul.f32 %v3459, %v3467
      %v3521 = vmul.f32 %v3460, %v3467
      %v3522 = vmul.f32 %v3461, %v3467
      %v3523 = vld [vmem:[%s4] sm:$0x1]
      %v3525 = vlaneseq
      %v3526 = vshrl.u32 %v3525, 7
      %v3527 = vsub.s32 0, %v3526
      %v3528 = vrot.slane %v3523, %v3527
      %v3530 = vadd.f32 %v3469, %v3528
      %v3531 = vadd.f32 %v3470, %v3528
      %v3532 = vadd.f32 %v3471, %v3528
      %v3533 = vadd.f32 %v3472, %v3528
      %v3534 = vadd.f32 %v3473, %v3528
      %v3535 = vadd.f32 %v3474, %v3528
      %v3536 = vadd.f32 %v3475, %v3528
      %v3537 = vadd.f32 %v3476, %v3528
      %v3538 = vadd.f32 %v3477, %v3528
      %v3539 = vadd.f32 %v3478, %v3528
      %v3540 = vadd.f32 %v3479, %v3528
      %v3541 = vadd.f32 %v3480, %v3528
      %v3542 = vadd.f32 %v3481, %v3528
      %v3543 = vadd.f32 %v3482, %v3528
      %v3544 = vadd.f32 %v3483, %v3528
      %v3545 = vadd.f32 %v3484, %v3528
      %v3546 = vadd.f32 %v3485, %v3528
      %v3547 = vadd.f32 %v3486, %v3528
      %v3548 = vadd.f32 %v3487, %v3528
      %v3549 = vadd.f32 %v3488, %v3528
      %v3550 = vadd.f32 %v3489, %v3528
      %v3551 = vadd.f32 %v3490, %v3528
      %v3552 = vadd.f32 %v3491, %v3528
      %v3553 = vadd.f32 %v3492, %v3528
      %v3554 = vadd.f32 %v3493, %v3528
      %v3555 = vadd.f32 %v3494, %v3528
      %v3556 = vadd.f32 %v3495, %v3528
      %v3557 = vadd.f32 %v3496, %v3528
      %v3558 = vadd.f32 %v3497, %v3528
      %v3559 = vadd.f32 %v3498, %v3528
      %v3560 = vadd.f32 %v3499, %v3528
      %v3561 = vadd.f32 %v3500, %v3528
      %v3562 = vadd.f32 %v3501, %v3528
      %v3563 = vadd.f32 %v3502, %v3528
      %v3564 = vadd.f32 %v3503, %v3528
      %v3565 = vadd.f32 %v3504, %v3528
      %v3566 = vadd.f32 %v3505, %v3528
      %v3567 = vadd.f32 %v3506, %v3528
      %v3568 = vadd.f32 %v3507, %v3528
      %v3569 = vadd.f32 %v3508, %v3528
      %v3570 = vadd.f32 %v3509, %v3528
      %v3571 = vadd.f32 %v3510, %v3528
      %v3572 = vadd.f32 %v3511, %v3528
      %v3573 = vadd.f32 %v3512, %v3528
      %v3574 = vadd.f32 %v3513, %v3528
      %v3575 = vadd.f32 %v3514, %v3528
      %v3576 = vadd.f32 %v3515, %v3528
      %v3577 = vadd.f32 %v3516, %v3528
      %v3578 = vadd.f32 %v3517, %v3528
      %v3579 = vadd.f32 %v3518, %v3528
      %v3580 = vadd.f32 %v3519, %v3528
      %v3581 = vadd.f32 %v3520, %v3528
      %v3582 = vadd.f32 %v3521, %v3528
      %v3583 = vadd.f32 %v3522, %v3528
      %v3632 = vrot.slane %v3533, 1
      %v3633 = vrot.slane %v3534, 1
      %v3634 = vsel %vm1713, %v3632, %v3633
      %v3635 = vrot.slane %v3535, 1
      %v3636 = vsel %vm1713, %v3633, %v3635
      %v3637 = vrot.slane %v3536, 1
      %v3638 = vrot.slane %v3537, 1
      %v3639 = vsel %vm1713, %v3637, %v3638
      %v3640 = vrot.slane %v3538, 1
      %v3641 = vsel %vm1713, %v3638, %v3640
      %v3642 = vrot.slane %v3539, 1
      %v3643 = vrot.slane %v3540, 1
      %v3644 = vsel %vm1713, %v3642, %v3643
      %v3645 = vrot.slane %v3541, 1
      %v3646 = vsel %vm1713, %v3643, %v3645
      %v3647 = vrot.slane %v3542, 1
      %v3648 = vrot.slane %v3543, 1
      %v3649 = vsel %vm1713, %v3647, %v3648
      %v3650 = vrot.slane %v3544, 1
      %v3651 = vsel %vm1713, %v3648, %v3650
      %v3652 = vrot.slane %v3545, 1
      %v3653 = vrot.slane %v3546, 1
      %v3654 = vsel %vm1713, %v3652, %v3653
      %v3655 = vrot.slane %v3547, 1
      %v3656 = vsel %vm1713, %v3653, %v3655
      %v3657 = vrot.slane %v3548, 1
      %v3658 = vrot.slane %v3549, 1
      %v3659 = vsel %vm1713, %v3657, %v3658
      %v3660 = vrot.slane %v3550, 1
      %v3661 = vsel %vm1713, %v3658, %v3660
      %v3662 = vrot.slane %v3551, 1
      %v3663 = vrot.slane %v3552, 1
      %v3664 = vsel %vm1713, %v3662, %v3663
      %v3665 = vrot.slane %v3553, 1
      %v3666 = vsel %vm1713, %v3663, %v3665
      %v3667 = vrot.slane %v3554, 1
      %v3668 = vrot.slane %v3555, 1
      %v3669 = vsel %vm1713, %v3667, %v3668
      %v3670 = vrot.slane %v3556, 1
      %v3671 = vsel %vm1713, %v3668, %v3670
      %v3672 = vrot.slane %v3557, 1
      %v3673 = vrot.slane %v3558, 1
      %v3674 = vsel %vm1713, %v3672, %v3673
      %v3675 = vrot.slane %v3559, 1
      %v3676 = vsel %vm1713, %v3673, %v3675
      %v3677 = vrot.slane %v3560, 1
      %v3678 = vrot.slane %v3561, 1
      %v3679 = vsel %vm1713, %v3677, %v3678
      %v3680 = vrot.slane %v3562, 1
      %v3681 = vsel %vm1713, %v3678, %v3680
      %v3682 = vrot.slane %v3563, 1
      %v3683 = vrot.slane %v3564, 1
      %v3684 = vsel %vm1713, %v3682, %v3683
      %v3685 = vrot.slane %v3565, 1
      %v3686 = vsel %vm1713, %v3683, %v3685
      %v3687 = vrot.slane %v3566, 1
      %v3688 = vrot.slane %v3567, 1
      %v3689 = vsel %vm1713, %v3687, %v3688
      %v3690 = vrot.slane %v3568, 1
      %v3691 = vsel %vm1713, %v3688, %v3690
      %v3692 = vrot.slane %v3569, 1
      %v3693 = vrot.slane %v3570, 1
      %v3694 = vsel %vm1713, %v3692, %v3693
      %v3695 = vrot.slane %v3571, 1
      %v3696 = vsel %vm1713, %v3693, %v3695
      %v3697 = vrot.slane %v3572, 1
      %v3698 = vrot.slane %v3573, 1
      %v3699 = vsel %vm1713, %v3697, %v3698
      %v3700 = vrot.slane %v3574, 1
      %v3701 = vsel %vm1713, %v3698, %v3700
      %v3702 = vrot.slane %v3575, 1
      %v3703 = vrot.slane %v3576, 1
      %v3704 = vsel %vm1713, %v3702, %v3703
      %v3705 = vrot.slane %v3577, 1
      %v3706 = vsel %vm1713, %v3703, %v3705
      %v3707 = vrot.slane %v3578, 1
      %v3708 = vrot.slane %v3579, 1
      %v3709 = vsel %vm1713, %v3707, %v3708
      %v3710 = vrot.slane %v3580, 1
      %v3711 = vsel %vm1713, %v3708, %v3710
      %v3744 = vld [vmem:[%s8] sm:$0xff]
      %v3745 = vld [vmem:[%s8 + $0x8] sm:$0xff]
      %v3746 = vld [vmem:[%s8 + $0x10] sm:$0xff]
      %v3747 = vld [vmem:[%s8 + $0x18] sm:$0xff]
      %v3748 = vld [vmem:[%s8 + $0x20] sm:$0xff]
      %v3749 = vld [vmem:[%s8 + $0x28] sm:$0xff]
      %v3750 = vld [vmem:[%s8 + $0x30] sm:$0xff]
      %v3751 = vld [vmem:[%s8 + $0x38] sm:$0xff]
      %v3752 = vpack.c.bf16 %v3636, %v3634
      %v3753 = vpack.c.bf16 %v3641, %v3639
      %v3754 = vpack.c.bf16 %v3646, %v3644
      %v3755 = vpack.c.bf16 %v3651, %v3649
      %v3756 = vpack.c.bf16 %v3656, %v3654
      %v3757 = vpack.c.bf16 %v3661, %v3659
      %v3758 = vpack.c.bf16 %v3666, %v3664
      %v3759 = vpack.c.bf16 %v3671, %v3669
      %v3760 = vpack.c.bf16 %v3676, %v3674
      %v3761 = vpack.c.bf16 %v3681, %v3679
      %v3762 = vpack.c.bf16 %v3686, %v3684
      %v3763 = vpack.c.bf16 %v3691, %v3689
      %v3764 = vpack.c.bf16 %v3696, %v3694
      %v3765 = vpack.c.bf16 %v3701, %v3699
      %v3766 = vpack.c.bf16 %v3706, %v3704
      %v3767 = vpack.c.bf16 %v3711, %v3709
      %v3776 = vunpack.c.l.b16 %v3744
      %v3777 = vunpack.c.h.b16 %v3744
      %v3778 = vunpack.c.l.b16 %v3745
      %v3779 = vunpack.c.h.b16 %v3745
      %v3780 = vunpack.c.l.b16 %v3746
      %v3781 = vunpack.c.h.b16 %v3746
      %v3782 = vunpack.c.l.b16 %v3747
      %v3783 = vunpack.c.h.b16 %v3747
      %v3784 = vunpack.c.l.b16 %v3748
      %v3785 = vunpack.c.h.b16 %v3748
      %v3786 = vunpack.c.l.b16 %v3749
      %v3787 = vunpack.c.h.b16 %v3749
      %v3788 = vunpack.c.l.b16 %v3750
      %v3789 = vunpack.c.h.b16 %v3750
      %v3790 = vunpack.c.l.b16 %v3751
      %v3791 = vunpack.c.h.b16 %v3751
      %v3792 = vpack.c.b16 %v3778, %v3776
      %v3793 = vpack.c.b16 %v3779, %v3777
      %v3794 = vpack.c.b16 %v3782, %v3780
      %v3795 = vpack.c.b16 %v3783, %v3781
      %v3796 = vpack.c.b16 %v3786, %v3784
      %v3797 = vpack.c.b16 %v3787, %v3785
      %v3798 = vpack.c.b16 %v3790, %v3788
      %v3799 = vpack.c.b16 %v3791, %v3789
      %3808 = vmatprep.subr.bf16.mxu0 0
      %3809 = vmatpush1.bf16.msra.mxu0 %v3759
      %3810 = vmatprep.subr.bf16.mxu0 0
      %3811 = vmatpush1.bf16.msra.mxu0 %v3758
      %3812 = vmatprep.subr.bf16.mxu0 0
      %3813 = vmatpush1.bf16.msra.mxu0 %v3757
      %3814 = vmatprep.subr.bf16.mxu0 0
      %3815 = vmatpush1.bf16.msra.mxu0 %v3756
      %3816 = vmatprep.subr.bf16.mxu0 0
      %3817 = vmatpush1.bf16.msra.mxu0 %v3755
      %3818 = vmatprep.subr.bf16.mxu0 0
      %3819 = vmatpush1.bf16.msra.mxu0 %v3754
      %3820 = vmatprep.subr.bf16.mxu0 0
      %3821 = vmatpush1.bf16.msra.mxu0 %v3753
      %3822 = vmatprep.subr.bf16.mxu0 0
      %3823 = vmatpush1.bf16.msra.mxu0 %v3752
      %3824 = vmatprep.subr.bf16.mxu0 0
      %3825 = vmatpush2.bf16.msra.mxu0 %v3767
      %3826 = vmatprep.subr.bf16.mxu0 0
      %3827 = vmatpush2.bf16.msra.mxu0 %v3766
      %3828 = vmatprep.subr.bf16.mxu0 0
      %3829 = vmatpush2.bf16.msra.mxu0 %v3765
      %3830 = vmatprep.subr.bf16.mxu0 0
      %3831 = vmatpush2.bf16.msra.mxu0 %v3764
      %3832 = vmatprep.subr.bf16.mxu0 0
      %3833 = vmatpush2.bf16.msra.mxu0 %v3763
      %3834 = vmatprep.subr.bf16.mxu0 0
      %3835 = vmatpush2.bf16.msra.mxu0 %v3762
      %3836 = vmatprep.subr.bf16.mxu0 0
      %3837 = vmatpush2.bf16.msra.mxu0 %v3761
      %3838 = vmatprep.subr.bf16.mxu0 0
      %3839 = vmatpush2.bf16.msra.mxu0 %v3760
      %3840 = vmatprep.mubr.bf16.mxu0 %v3793
      %3841 = vmatmul.mubr.bf16.gmra.mxu0 %v3792
      %v3842 = vpop.f32.mrf.mxu0
      %v3843 = vadd.f32 0.0, %v3842
      %v3844 = vpop.f32.mrf.mxu0
      %v3845 = vpop.f32.mrf.mxu0
      %v3846 = vadd.f32 0.0, %v3845
      %v3847 = vpop.f32.mrf.mxu0
      %3848 = vmatprep.mubr.bf16.mxu0 %v3795
      %3849 = vmatmul.mubr.bf16.gmra.mxu0 %v3794
      %v3850 = vpop.f32.mrf.mxu0
      %v3851 = vadd.f32 0.0, %v3850
      %v3852 = vpop.f32.mrf.mxu0
      %v3853 = vpop.f32.mrf.mxu0
      %v3854 = vadd.f32 0.0, %v3853
      %v3855 = vpop.f32.mrf.mxu0
      %3856 = vmatprep.mubr.bf16.mxu0 %v3797
      %3857 = vmatmul.mubr.bf16.gmra.mxu0 %v3796
      %v3858 = vpop.f32.mrf.mxu0
      %v3859 = vadd.f32 0.0, %v3858
      %v3860 = vpop.f32.mrf.mxu0
      %v3861 = vpop.f32.mrf.mxu0
      %v3862 = vadd.f32 0.0, %v3861
      %v3863 = vpop.f32.mrf.mxu0
      %3864 = vmatprep.mubr.bf16.mxu0 %v3799
      %3865 = vmatmul.mubr.bf16.gmra.mxu0 %v3798
      %v3866 = vpop.f32.mrf.mxu0
      %v3867 = vadd.f32 0.0, %v3866
      %v3868 = vpop.f32.mrf.mxu0
      %v3869 = vpop.f32.mrf.mxu0
      %v3870 = vadd.f32 0.0, %v3869
      %v3871 = vpop.f32.mrf.mxu0
      %3872 = vdwg.mxu0
      %v3873 = vmul.f32 %v3843, 0.17677669
      %v3874 = vmul.f32 %v3846, 0.17677669
      %v3875 = vmul.f32 %v3851, 0.17677669
      %v3876 = vmul.f32 %v3854, 0.17677669
      %v3877 = vmul.f32 %v3859, 0.17677669
      %v3878 = vmul.f32 %v3862, 0.17677669
      %v3879 = vmul.f32 %v3867, 0.17677669
      %v3880 = vmul.f32 %v3870, 0.17677669
      %v3881 = vmul.f32 %v3530, 0.5
      %v3882 = vmul.f32 %v3531, 0.5
      %v3883 = vmul.f32 %v3532, 0.5
      %v3884 = vmul.f32 %v3533, 0.5
      %v3885 = vmul.f32 %v3534, 0.5
      %v3886 = vmul.f32 %v3535, 0.5
      %v3887 = vmul.f32 %v3536, 0.5
      %v3888 = vmul.f32 %v3537, 0.5
      %v3889 = vmul.f32 %v3538, 0.5
      %v3890 = vmul.f32 %v3539, 0.5
      %v3891 = vmul.f32 %v3540, 0.5
      %v3892 = vmul.f32 %v3541, 0.5
      %v3893 = vmul.f32 %v3542, 0.5
      %v3894 = vmul.f32 %v3543, 0.5
      %v3895 = vmul.f32 %v3544, 0.5
      %v3896 = vmul.f32 %v3545, 0.5
      %v3897 = vmul.f32 %v3546, 0.5
      %v3898 = vmul.f32 %v3547, 0.5
      %v3899 = vmul.f32 %v3548, 0.5
      %v3900 = vmul.f32 %v3549, 0.5
      %v3901 = vmul.f32 %v3550, 0.5
      %v3902 = vmul.f32 %v3551, 0.5
      %v3903 = vmul.f32 %v3552, 0.5
      %v3904 = vmul.f32 %v3553, 0.5
      %v3905 = vmul.f32 %v3554, 0.5
      %v3906 = vmul.f32 %v3555, 0.5
      %v3907 = vmul.f32 %v3556, 0.5
      %v3908 = vmul.f32 %v3557, 0.5
      %v3909 = vmul.f32 %v3558, 0.5
      %v3910 = vmul.f32 %v3559, 0.5
      %v3911 = vmul.f32 %v3560, 0.5
      %v3912 = vmul.f32 %v3561, 0.5
      %v3913 = vmul.f32 %v3562, 0.5
      %v3914 = vmul.f32 %v3563, 0.5
      %v3915 = vmul.f32 %v3564, 0.5
      %v3916 = vmul.f32 %v3565, 0.5
      %v3917 = vmul.f32 %v3566, 0.5
      %v3918 = vmul.f32 %v3567, 0.5
      %v3919 = vmul.f32 %v3568, 0.5
      %v3920 = vmul.f32 %v3569, 0.5
      %v3921 = vmul.f32 %v3570, 0.5
      %v3922 = vmul.f32 %v3571, 0.5
      %v3923 = vmul.f32 %v3572, 0.5
      %v3924 = vmul.f32 %v3573, 0.5
      %v3925 = vmul.f32 %v3574, 0.5
      %v3926 = vmul.f32 %v3575, 0.5
      %v3927 = vmul.f32 %v3576, 0.5
      %v3928 = vmul.f32 %v3577, 0.5
      %v3929 = vmul.f32 %v3578, 0.5
      %v3930 = vmul.f32 %v3579, 0.5
      %v3931 = vmul.f32 %v3580, 0.5
      %v3932 = vmul.f32 %v3581, 0.5
      %v3933 = vmul.f32 %v3582, 0.5
      %v3934 = vmul.f32 %v3583, 0.5
      %v3935 = vmul.f32 %v3530, 0.70710677
      %v3936 = vmul.f32 %v3531, 0.70710677
      %v3937 = vmul.f32 %v3532, 0.70710677
      %v3938 = vmul.f32 %v3533, 0.70710677
      %v3939 = vmul.f32 %v3534, 0.70710677
      %v3940 = vmul.f32 %v3535, 0.70710677
      %v3941 = vmul.f32 %v3536, 0.70710677
      %v3942 = vmul.f32 %v3537, 0.70710677
      %v3943 = vmul.f32 %v3538, 0.70710677
      %v3944 = vmul.f32 %v3539, 0.70710677
      %v3945 = vmul.f32 %v3540, 0.70710677
      %v3946 = vmul.f32 %v3541, 0.70710677
      %v3947 = vmul.f32 %v3542, 0.70710677
      %v3948 = vmul.f32 %v3543, 0.70710677
      %v3949 = vmul.f32 %v3544, 0.70710677
      %v3950 = vmul.f32 %v3545, 0.70710677
      %v3951 = vmul.f32 %v3546, 0.70710677
      %v3952 = vmul.f32 %v3547, 0.70710677
      %v3953 = vmul.f32 %v3548, 0.70710677
      %v3954 = vmul.f32 %v3549, 0.70710677
      %v3955 = vmul.f32 %v3550, 0.70710677
      %v3956 = vmul.f32 %v3551, 0.70710677
      %v3957 = vmul.f32 %v3552, 0.70710677
      %v3958 = vmul.f32 %v3553, 0.70710677
      %v3959 = vmul.f32 %v3554, 0.70710677
      %v3960 = vmul.f32 %v3555, 0.70710677
      %v3961 = vmul.f32 %v3556, 0.70710677
      %v3962 = vmul.f32 %v3557, 0.70710677
      %v3963 = vmul.f32 %v3558, 0.70710677
      %v3964 = vmul.f32 %v3559, 0.70710677
      %v3965 = vmul.f32 %v3560, 0.70710677
      %v3966 = vmul.f32 %v3561, 0.70710677
      %v3967 = vmul.f32 %v3562, 0.70710677
      %v3968 = vmul.f32 %v3563, 0.70710677
      %v3969 = vmul.f32 %v3564, 0.70710677
      %v3970 = vmul.f32 %v3565, 0.70710677
      %v3971 = vmul.f32 %v3566, 0.70710677
      %v3972 = vmul.f32 %v3567, 0.70710677
      %v3973 = vmul.f32 %v3568, 0.70710677
      %v3974 = vmul.f32 %v3569, 0.70710677
      %v3975 = vmul.f32 %v3570, 0.70710677
      %v3976 = vmul.f32 %v3571, 0.70710677
      %v3977 = vmul.f32 %v3572, 0.70710677
      %v3978 = vmul.f32 %v3573, 0.70710677
      %v3979 = vmul.f32 %v3574, 0.70710677
      %v3980 = vmul.f32 %v3575, 0.70710677
      %v3981 = vmul.f32 %v3576, 0.70710677
      %v3982 = vmul.f32 %v3577, 0.70710677
      %v3983 = vmul.f32 %v3578, 0.70710677
      %v3984 = vmul.f32 %v3579, 0.70710677
      %v3985 = vmul.f32 %v3580, 0.70710677
      %v3986 = vmul.f32 %v3581, 0.70710677
      %v3987 = vmul.f32 %v3582, 0.70710677
      %v3988 = vmul.f32 %v3583, 0.70710677
      %v3989 = vand.u32 2147483647, %v3935
      %v3990 = vand.u32 2147483647, %v3936
      %v3991 = vand.u32 2147483647, %v3937
      %v3992 = vand.u32 2147483647, %v3938
      %v3993 = vand.u32 2147483647, %v3939
      %v3994 = vand.u32 2147483647, %v3940
      %v3995 = vand.u32 2147483647, %v3941
      %v3996 = vand.u32 2147483647, %v3942
      %v3997 = vand.u32 2147483647, %v3943
      %v3998 = vand.u32 2147483647, %v3944
      %v3999 = vand.u32 2147483647, %v3945
      %v4000 = vand.u32 2147483647, %v3946
      %v4001 = vand.u32 2147483647, %v3947
      %v4002 = vand.u32 2147483647, %v3948
      %v4003 = vand.u32 2147483647, %v3949
      %v4004 = vand.u32 2147483647, %v3950
      %v4005 = vand.u32 2147483647, %v3951
      %v4006 = vand.u32 2147483647, %v3952
      %v4007 = vand.u32 2147483647, %v3953
      %v4008 = vand.u32 2147483647, %v3954
      %v4009 = vand.u32 2147483647, %v3955
      %v4010 = vand.u32 2147483647, %v3956
      %v4011 = vand.u32 2147483647, %v3957
      %v4012 = vand.u32 2147483647, %v3958
      %v4013 = vand.u32 2147483647, %v3959
      %v4014 = vand.u32 2147483647, %v3960
      %v4015 = vand.u32 2147483647, %v3961
      %v4016 = vand.u32 2147483647, %v3962
      %v4017 = vand.u32 2147483647, %v3963
      %v4018 = vand.u32 2147483647, %v3964
      %v4019 = vand.u32 2147483647, %v3965
      %v4020 = vand.u32 2147483647, %v3966
      %v4021 = vand.u32 2147483647, %v3967
      %v4022 = vand.u32 2147483647, %v3968
      %v4023 = vand.u32 2147483647, %v3969
      %v4024 = vand.u32 2147483647, %v3970
      %v4025 = vand.u32 2147483647, %v3971
      %v4026 = vand.u32 2147483647, %v3972
      %v4027 = vand.u32 2147483647, %v3973
      %v4028 = vand.u32 2147483647, %v3974
      %v4029 = vand.u32 2147483647, %v3975
      %v4030 = vand.u32 2147483647, %v3976
      %v4031 = vand.u32 2147483647, %v3977
      %v4032 = vand.u32 2147483647, %v3978
      %v4033 = vand.u32 2147483647, %v3979
      %v4034 = vand.u32 2147483647, %v3980
      %v4035 = vand.u32 2147483647, %v3981
      %v4036 = vand.u32 2147483647, %v3982
      %v4037 = vand.u32 2147483647, %v3983
      %v4038 = vand.u32 2147483647, %v3984
      %v4039 = vand.u32 2147483647, %v3985
      %v4040 = vand.u32 2147483647, %v3986
      %v4041 = vand.u32 2147483647, %v3987
      %v4042 = vand.u32 2147483647, %v3988
      %v4043 = vmul.f32 %v3989, 0.3275911
      %v4044 = vmul.f32 %v3990, 0.3275911
      %v4045 = vmul.f32 %v3991, 0.3275911
      %v4046 = vmul.f32 %v3992, 0.3275911
      %v4047 = vmul.f32 %v3993, 0.3275911
      %v4048 = vmul.f32 %v3994, 0.3275911
      %v4049 = vmul.f32 %v3995, 0.3275911
      %v4050 = vmul.f32 %v3996, 0.3275911
      %v4051 = vmul.f32 %v3997, 0.3275911
      %v4052 = vmul.f32 %v3998, 0.3275911
      %v4053 = vmul.f32 %v3999, 0.3275911
      %v4054 = vmul.f32 %v4000, 0.3275911
      %v4055 = vmul.f32 %v4001, 0.3275911
      %v4056 = vmul.f32 %v4002, 0.3275911
      %v4057 = vmul.f32 %v4003, 0.3275911
      %v4058 = vmul.f32 %v4004, 0.3275911
      %v4059 = vmul.f32 %v4005, 0.3275911
      %v4060 = vmul.f32 %v4006, 0.3275911
      %v4061 = vmul.f32 %v4007, 0.3275911
      %v4062 = vmul.f32 %v4008, 0.3275911
      %v4063 = vmul.f32 %v4009, 0.3275911
      %v4064 = vmul.f32 %v4010, 0.3275911
      %v4065 = vmul.f32 %v4011, 0.3275911
      %v4066 = vmul.f32 %v4012, 0.3275911
      %v4067 = vmul.f32 %v4013, 0.3275911
      %v4068 = vmul.f32 %v4014, 0.3275911
      %v4069 = vmul.f32 %v4015, 0.3275911
      %v4070 = vmul.f32 %v4016, 0.3275911
      %v4071 = vmul.f32 %v4017, 0.3275911
      %v4072 = vmul.f32 %v4018, 0.3275911
      %v4073 = vmul.f32 %v4019, 0.3275911
      %v4074 = vmul.f32 %v4020, 0.3275911
      %v4075 = vmul.f32 %v4021, 0.3275911
      %v4076 = vmul.f32 %v4022, 0.3275911
      %v4077 = vmul.f32 %v4023, 0.3275911
      %v4078 = vmul.f32 %v4024, 0.3275911
      %v4079 = vmul.f32 %v4025, 0.3275911
      %v4080 = vmul.f32 %v4026, 0.3275911
      %v4081 = vmul.f32 %v4027, 0.3275911
      %v4082 = vmul.f32 %v4028, 0.3275911
      %v4083 = vmul.f32 %v4029, 0.3275911
      %v4084 = vmul.f32 %v4030, 0.3275911
      %v4085 = vmul.f32 %v4031, 0.3275911
      %v4086 = vmul.f32 %v4032, 0.3275911
      %v4087 = vmul.f32 %v4033, 0.3275911
      %v4088 = vmul.f32 %v4034, 0.3275911
      %v4089 = vmul.f32 %v4035, 0.3275911
      %v4090 = vmul.f32 %v4036, 0.3275911
      %v4091 = vmul.f32 %v4037, 0.3275911
      %v4092 = vmul.f32 %v4038, 0.3275911
      %v4093 = vmul.f32 %v4039, 0.3275911
      %v4094 = vmul.f32 %v4040, 0.3275911
      %v4095 = vmul.f32 %v4041, 0.3275911
      %v4096 = vmul.f32 %v4042, 0.3275911
      %v4097 = vadd.f32 %v4043, 1.0
      %v4098 = vadd.f32 %v4044, 1.0
      %v4099 = vadd.f32 %v4045, 1.0
      %v4100 = vadd.f32 %v4046, 1.0
      %v4101 = vadd.f32 %v4047, 1.0
      %v4102 = vadd.f32 %v4048, 1.0
      %v4103 = vadd.f32 %v4049, 1.0
      %v4104 = vadd.f32 %v4050, 1.0
      %v4105 = vadd.f32 %v4051, 1.0
      %v4106 = vadd.f32 %v4052, 1.0
      %v4107 = vadd.f32 %v4053, 1.0
      %v4108 = vadd.f32 %v4054, 1.0
      %v4109 = vadd.f32 %v4055, 1.0
      %v4110 = vadd.f32 %v4056, 1.0
      %v4111 = vadd.f32 %v4057, 1.0
      %v4112 = vadd.f32 %v4058, 1.0
      %v4113 = vadd.f32 %v4059, 1.0
      %v4114 = vadd.f32 %v4060, 1.0
      %v4115 = vadd.f32 %v4061, 1.0
      %v4116 = vadd.f32 %v4062, 1.0
      %v4117 = vadd.f32 %v4063, 1.0
      %v4118 = vadd.f32 %v4064, 1.0
      %v4119 = vadd.f32 %v4065, 1.0
      %v4120 = vadd.f32 %v4066, 1.0
      %v4121 = vadd.f32 %v4067, 1.0
      %v4122 = vadd.f32 %v4068, 1.0
      %v4123 = vadd.f32 %v4069, 1.0
      %v4124 = vadd.f32 %v4070, 1.0
      %v4125 = vadd.f32 %v4071, 1.0
      %v4126 = vadd.f32 %v4072, 1.0
      %v4127 = vadd.f32 %v4073, 1.0
      %v4128 = vadd.f32 %v4074, 1.0
      %v4129 = vadd.f32 %v4075, 1.0
      %v4130 = vadd.f32 %v4076, 1.0
      %v4131 = vadd.f32 %v4077, 1.0
      %v4132 = vadd.f32 %v4078, 1.0
      %v4133 = vadd.f32 %v4079, 1.0
      %v4134 = vadd.f32 %v4080, 1.0
      %v4135 = vadd.f32 %v4081, 1.0
      %v4136 = vadd.f32 %v4082, 1.0
      %v4137 = vadd.f32 %v4083, 1.0
      %v4138 = vadd.f32 %v4084, 1.0
      %v4139 = vadd.f32 %v4085, 1.0
      %v4140 = vadd.f32 %v4086, 1.0
      %v4141 = vadd.f32 %v4087, 1.0
      %v4142 = vadd.f32 %v4088, 1.0
      %v4143 = vadd.f32 %v4089, 1.0
      %v4144 = vadd.f32 %v4090, 1.0
      %v4145 = vadd.f32 %v4091, 1.0
      %v4146 = vadd.f32 %v4092, 1.0
      %v4147 = vadd.f32 %v4093, 1.0
      %v4148 = vadd.f32 %v4094, 1.0
      %v4149 = vadd.f32 %v4095, 1.0
      %v4150 = vadd.f32 %v4096, 1.0
      %v4151 = vrcp.pop %v4097
      %v4152 = vmul.f32 1.0, %v4151
      %v4153 = vrcp.pop %v4098
      %v4154 = vmul.f32 1.0, %v4153
      %v4155 = vrcp.pop %v4099
      %v4156 = vmul.f32 1.0, %v4155
      %v4157 = vrcp.pop %v4100
      %v4158 = vmul.f32 1.0, %v4157
      %v4159 = vrcp.pop %v4101
      %v4160 = vmul.f32 1.0, %v4159
      %v4161 = vrcp.pop %v4102
      %v4162 = vmul.f32 1.0, %v4161
      %v4163 = vrcp.pop %v4103
      %v4164 = vmul.f32 1.0, %v4163
      %v4165 = vrcp.pop %v4104
      %v4166 = vmul.f32 1.0, %v4165
      %v4167 = vrcp.pop %v4105
      %v4168 = vmul.f32 1.0, %v4167
      %v4169 = vrcp.pop %v4106
      %v4170 = vmul.f32 1.0, %v4169
      %v4171 = vrcp.pop %v4107
      %v4172 = vmul.f32 1.0, %v4171
      %v4173 = vrcp.pop %v4108
      %v4174 = vmul.f32 1.0, %v4173
      %v4175 = vrcp.pop %v4109
      %v4176 = vmul.f32 1.0, %v4175
      %v4177 = vrcp.pop %v4110
      %v4178 = vmul.f32 1.0, %v4177
      %v4179 = vrcp.pop %v4111
      %v4180 = vmul.f32 1.0, %v4179
      %v4181 = vrcp.pop %v4112
      %v4182 = vmul.f32 1.0, %v4181
      %v4183 = vrcp.pop %v4113
      %v4184 = vmul.f32 1.0, %v4183
      %v4185 = vrcp.pop %v4114
      %v4186 = vmul.f32 1.0, %v4185
      %v4187 = vrcp.pop %v4115
      %v4188 = vmul.f32 1.0, %v4187
      %v4189 = vrcp.pop %v4116
      %v4190 = vmul.f32 1.0, %v4189
      %v4191 = vrcp.pop %v4117
      %v4192 = vmul.f32 1.0, %v4191
      %v4193 = vrcp.pop %v4118
      %v4194 = vmul.f32 1.0, %v4193
      %v4195 = vrcp.pop %v4119
      %v4196 = vmul.f32 1.0, %v4195
      %v4197 = vrcp.pop %v4120
      %v4198 = vmul.f32 1.0, %v4197
      %v4199 = vrcp.pop %v4121
      %v4200 = vmul.f32 1.0, %v4199
      %v4201 = vrcp.pop %v4122
      %v4202 = vmul.f32 1.0, %v4201
      %v4203 = vrcp.pop %v4123
      %v4204 = vmul.f32 1.0, %v4203
      %v4205 = vrcp.pop %v4124
      %v4206 = vmul.f32 1.0, %v4205
      %v4207 = vrcp.pop %v4125
      %v4208 = vmul.f32 1.0, %v4207
      %v4209 = vrcp.pop %v4126
      %v4210 = vmul.f32 1.0, %v4209
      %v4211 = vrcp.pop %v4127
      %v4212 = vmul.f32 1.0, %v4211
      %v4213 = vrcp.pop %v4128
      %v4214 = vmul.f32 1.0, %v4213
      %v4215 = vrcp.pop %v4129
      %v4216 = vmul.f32 1.0, %v4215
      %v4217 = vrcp.pop %v4130
      %v4218 = vmul.f32 1.0, %v4217
      %v4219 = vrcp.pop %v4131
      %v4220 = vmul.f32 1.0, %v4219
      %v4221 = vrcp.pop %v4132
      %v4222 = vmul.f32 1.0, %v4221
      %v4223 = vrcp.pop %v4133
      %v4224 = vmul.f32 1.0, %v4223
      %v4225 = vrcp.pop %v4134
      %v4226 = vmul.f32 1.0, %v4225
      %v4227 = vrcp.pop %v4135
      %v4228 = vmul.f32 1.0, %v4227
      %v4229 = vrcp.pop %v4136
      %v4230 = vmul.f32 1.0, %v4229
      %v4231 = vrcp.pop %v4137
      %v4232 = vmul.f32 1.0, %v4231
      %v4233 = vrcp.pop %v4138
      %v4234 = vmul.f32 1.0, %v4233
      %v4235 = vrcp.pop %v4139
      %v4236 = vmul.f32 1.0, %v4235
      %v4237 = vrcp.pop %v4140
      %v4238 = vmul.f32 1.0, %v4237
      %v4239 = vrcp.pop %v4141
      %v4240 = vmul.f32 1.0, %v4239
      %v4241 = vrcp.pop %v4142
      %v4242 = vmul.f32 1.0, %v4241
      %v4243 = vrcp.pop %v4143
      %v4244 = vmul.f32 1.0, %v4243
      %v4245 = vrcp.pop %v4144
      %v4246 = vmul.f32 1.0, %v4245
      %v4247 = vrcp.pop %v4145
      %v4248 = vmul.f32 1.0, %v4247
      %v4249 = vrcp.pop %v4146
      %v4250 = vmul.f32 1.0, %v4249
      %v4251 = vrcp.pop %v4147
      %v4252 = vmul.f32 1.0, %v4251
      %v4253 = vrcp.pop %v4148
      %v4254 = vmul.f32 1.0, %v4253
      %v4255 = vrcp.pop %v4149
      %v4256 = vmul.f32 1.0, %v4255
      %v4257 = vrcp.pop %v4150
      %v4258 = vmul.f32 1.0, %v4257
      %v4259 = vmul.f32 %v4152, 1.0614054
      %v4260 = vmul.f32 %v4154, 1.0614054
      %v4261 = vmul.f32 %v4156, 1.0614054
      %v4262 = vmul.f32 %v4158, 1.0614054
      %v4263 = vmul.f32 %v4160, 1.0614054
      %v4264 = vmul.f32 %v4162, 1.0614054
      %v4265 = vmul.f32 %v4164, 1.0614054
      %v4266 = vmul.f32 %v4166, 1.0614054
      %v4267 = vmul.f32 %v4168, 1.0614054
      %v4268 = vmul.f32 %v4170, 1.0614054
      %v4269 = vmul.f32 %v4172, 1.0614054
      %v4270 = vmul.f32 %v4174, 1.0614054
      %v4271 = vmul.f32 %v4176, 1.0614054
      %v4272 = vmul.f32 %v4178, 1.0614054
      %v4273 = vmul.f32 %v4180, 1.0614054
      %v4274 = vmul.f32 %v4182, 1.0614054
      %v4275 = vmul.f32 %v4184, 1.0614054
      %v4276 = vmul.f32 %v4186, 1.0614054
      %v4277 = vmul.f32 %v4188, 1.0614054
      %v4278 = vmul.f32 %v4190, 1.0614054
      %v4279 = vmul.f32 %v4192, 1.0614054
      %v4280 = vmul.f32 %v4194, 1.0614054
      %v4281 = vmul.f32 %v4196, 1.0614054
      %v4282 = vmul.f32 %v4198, 1.0614054
      %v4283 = vmul.f32 %v4200, 1.0614054
      %v4284 = vmul.f32 %v4202, 1.0614054
      %v4285 = vmul.f32 %v4204, 1.0614054
      %v4286 = vmul.f32 %v4206, 1.0614054
      %v4287 = vmul.f32 %v4208, 1.0614054
      %v4288 = vmul.f32 %v4210, 1.0614054
      %v4289 = vmul.f32 %v4212, 1.0614054
      %v4290 = vmul.f32 %v4214, 1.0614054
      %v4291 = vmul.f32 %v4216, 1.0614054
      %v4292 = vmul.f32 %v4218, 1.0614054
      %v4293 = vmul.f32 %v4220, 1.0614054
      %v4294 = vmul.f32 %v4222, 1.0614054
      %v4295 = vmul.f32 %v4224, 1.0614054
      %v4296 = vmul.f32 %v4226, 1.0614054
      %v4297 = vmul.f32 %v4228, 1.0614054
      %v4298 = vmul.f32 %v4230, 1.0614054
      %v4299 = vmul.f32 %v4232, 1.0614054
      %v4300 = vmul.f32 %v4234, 1.0614054
      %v4301 = vmul.f32 %v4236, 1.0614054
      %v4302 = vmul.f32 %v4238, 1.0614054
      %v4303 = vmul.f32 %v4240, 1.0614054
      %v4304 = vmul.f32 %v4242, 1.0614054
      %v4305 = vmul.f32 %v4244, 1.0614054
      %v4306 = vmul.f32 %v4246, 1.0614054
      %v4307 = vmul.f32 %v4248, 1.0614054
      %v4308 = vmul.f32 %v4250, 1.0614054
      %v4309 = vmul.f32 %v4252, 1.0614054
      %v4310 = vmul.f32 %v4254, 1.0614054
      %v4311 = vmul.f32 %v4256, 1.0614054
      %v4312 = vmul.f32 %v4258, 1.0614054
      %v4313 = vadd.f32 %v4259, -1.4531521
      %v4314 = vadd.f32 %v4260, -1.4531521
      %v4315 = vadd.f32 %v4261, -1.4531521
      %v4316 = vadd.f32 %v4262, -1.4531521
      %v4317 = vadd.f32 %v4263, -1.4531521
      %v4318 = vadd.f32 %v4264, -1.4531521
      %v4319 = vadd.f32 %v4265, -1.4531521
      %v4320 = vadd.f32 %v4266, -1.4531521
      %v4321 = vadd.f32 %v4267, -1.4531521
      %v4322 = vadd.f32 %v4268, -1.4531521
      %v4323 = vadd.f32 %v4269, -1.4531521
      %v4324 = vadd.f32 %v4270, -1.4531521
      %v4325 = vadd.f32 %v4271, -1.4531521
      %v4326 = vadd.f32 %v4272, -1.4531521
      %v4327 = vadd.f32 %v4273, -1.4531521
      %v4328 = vadd.f32 %v4274, -1.4531521
      %v4329 = vadd.f32 %v4275, -1.4531521
      %v4330 = vadd.f32 %v4276, -1.4531521
      %v4331 = vadd.f32 %v4277, -1.4531521
      %v4332 = vadd.f32 %v4278, -1.4531521
      %v4333 = vadd.f32 %v4279, -1.4531521
      %v4334 = vadd.f32 %v4280, -1.4531521
      %v4335 = vadd.f32 %v4281, -1.4531521
      %v4336 = vadd.f32 %v4282, -1.4531521
      %v4337 = vadd.f32 %v4283, -1.4531521
      %v4338 = vadd.f32 %v4284, -1.4531521
      %v4339 = vadd.f32 %v4285, -1.4531521
      %v4340 = vadd.f32 %v4286, -1.4531521
      %v4341 = vadd.f32 %v4287, -1.4531521
      %v4342 = vadd.f32 %v4288, -1.4531521
      %v4343 = vadd.f32 %v4289, -1.4531521
      %v4344 = vadd.f32 %v4290, -1.4531521
      %v4345 = vadd.f32 %v4291, -1.4531521
      %v4346 = vadd.f32 %v4292, -1.4531521
      %v4347 = vadd.f32 %v4293, -1.4531521
      %v4348 = vadd.f32 %v4294, -1.4531521
      %v4349 = vadd.f32 %v4295, -1.4531521
      %v4350 = vadd.f32 %v4296, -1.4531521
      %v4351 = vadd.f32 %v4297, -1.4531521
      %v4352 = vadd.f32 %v4298, -1.4531521
      %v4353 = vadd.f32 %v4299, -1.4531521
      %v4354 = vadd.f32 %v4300, -1.4531521
      %v4355 = vadd.f32 %v4301, -1.4531521
      %v4356 = vadd.f32 %v4302, -1.4531521
      %v4357 = vadd.f32 %v4303, -1.4531521
      %v4358 = vadd.f32 %v4304, -1.4531521
      %v4359 = vadd.f32 %v4305, -1.4531521
      %v4360 = vadd.f32 %v4306, -1.4531521
      %v4361 = vadd.f32 %v4307, -1.4531521
      %v4362 = vadd.f32 %v4308, -1.4531521
      %v4363 = vadd.f32 %v4309, -1.4531521
      %v4364 = vadd.f32 %v4310, -1.4531521
      %v4365 = vadd.f32 %v4311, -1.4531521
      %v4366 = vadd.f32 %v4312, -1.4531521
      %v4367 = vmul.f32 %v4313, %v4152
      %v4368 = vmul.f32 %v4314, %v4154
      %v4369 = vmul.f32 %v4315, %v4156
      %v4370 = vmul.f32 %v4316, %v4158
      %v4371 = vmul.f32 %v4317, %v4160
      %v4372 = vmul.f32 %v4318, %v4162
      %v4373 = vmul.f32 %v4319, %v4164
      %v4374 = vmul.f32 %v4320, %v4166
      %v4375 = vmul.f32 %v4321, %v4168
      %v4376 = vmul.f32 %v4322, %v4170
      %v4377 = vmul.f32 %v4323, %v4172
      %v4378 = vmul.f32 %v4324, %v4174
      %v4379 = vmul.f32 %v4325, %v4176
      %v4380 = vmul.f32 %v4326, %v4178
      %v4381 = vmul.f32 %v4327, %v4180
      %v4382 = vmul.f32 %v4328, %v4182
      %v4383 = vmul.f32 %v4329, %v4184
      %v4384 = vmul.f32 %v4330, %v4186
      %v4385 = vmul.f32 %v4331, %v4188
      %v4386 = vmul.f32 %v4332, %v4190
      %v4387 = vmul.f32 %v4333, %v4192
      %v4388 = vmul.f32 %v4334, %v4194
      %v4389 = vmul.f32 %v4335, %v4196
      %v4390 = vmul.f32 %v4336, %v4198
      %v4391 = vmul.f32 %v4337, %v4200
      %v4392 = vmul.f32 %v4338, %v4202
      %v4393 = vmul.f32 %v4339, %v4204
      %v4394 = vmul.f32 %v4340, %v4206
      %v4395 = vmul.f32 %v4341, %v4208
      %v4396 = vmul.f32 %v4342, %v4210
      %v4397 = vmul.f32 %v4343, %v4212
      %v4398 = vmul.f32 %v4344, %v4214
      %v4399 = vmul.f32 %v4345, %v4216
      %v4400 = vmul.f32 %v4346, %v4218
      %v4401 = vmul.f32 %v4347, %v4220
      %v4402 = vmul.f32 %v4348, %v4222
      %v4403 = vmul.f32 %v4349, %v4224
      %v4404 = vmul.f32 %v4350, %v4226
      %v4405 = vmul.f32 %v4351, %v4228
      %v4406 = vmul.f32 %v4352, %v4230
      %v4407 = vmul.f32 %v4353, %v4232
      %v4408 = vmul.f32 %v4354, %v4234
      %v4409 = vmul.f32 %v4355, %v4236
      %v4410 = vmul.f32 %v4356, %v4238
      %v4411 = vmul.f32 %v4357, %v4240
      %v4412 = vmul.f32 %v4358, %v4242
      %v4413 = vmul.f32 %v4359, %v4244
      %v4414 = vmul.f32 %v4360, %v4246
      %v4415 = vmul.f32 %v4361, %v4248
      %v4416 = vmul.f32 %v4362, %v4250
      %v4417 = vmul.f32 %v4363, %v4252
      %v4418 = vmul.f32 %v4364, %v4254
      %v4419 = vmul.f32 %v4365, %v4256
      %v4420 = vmul.f32 %v4366, %v4258
      %v4421 = vadd.f32 %v4367, 1.4214138
      %v4422 = vadd.f32 %v4368, 1.4214138
      %v4423 = vadd.f32 %v4369, 1.4214138
      %v4424 = vadd.f32 %v4370, 1.4214138
      %v4425 = vadd.f32 %v4371, 1.4214138
      %v4426 = vadd.f32 %v4372, 1.4214138
      %v4427 = vadd.f32 %v4373, 1.4214138
      %v4428 = vadd.f32 %v4374, 1.4214138
      %v4429 = vadd.f32 %v4375, 1.4214138
      %v4430 = vadd.f32 %v4376, 1.4214138
      %v4431 = vadd.f32 %v4377, 1.4214138
      %v4432 = vadd.f32 %v4378, 1.4214138
      %v4433 = vadd.f32 %v4379, 1.4214138
      %v4434 = vadd.f32 %v4380, 1.4214138
      %v4435 = vadd.f32 %v4381, 1.4214138
      %v4436 = vadd.f32 %v4382, 1.4214138
      %v4437 = vadd.f32 %v4383, 1.4214138
      %v4438 = vadd.f32 %v4384, 1.4214138
      %v4439 = vadd.f32 %v4385, 1.4214138
      %v4440 = vadd.f32 %v4386, 1.4214138
      %v4441 = vadd.f32 %v4387, 1.4214138
      %v4442 = vadd.f32 %v4388, 1.4214138
      %v4443 = vadd.f32 %v4389, 1.4214138
      %v4444 = vadd.f32 %v4390, 1.4214138
      %v4445 = vadd.f32 %v4391, 1.4214138
      %v4446 = vadd.f32 %v4392, 1.4214138
      %v4447 = vadd.f32 %v4393, 1.4214138
      %v4448 = vadd.f32 %v4394, 1.4214138
      %v4449 = vadd.f32 %v4395, 1.4214138
      %v4450 = vadd.f32 %v4396, 1.4214138
      %v4451 = vadd.f32 %v4397, 1.4214138
      %v4452 = vadd.f32 %v4398, 1.4214138
      %v4453 = vadd.f32 %v4399, 1.4214138
      %v4454 = vadd.f32 %v4400, 1.4214138
      %v4455 = vadd.f32 %v4401, 1.4214138
      %v4456 = vadd.f32 %v4402, 1.4214138
      %v4457 = vadd.f32 %v4403, 1.4214138
      %v4458 = vadd.f32 %v4404, 1.4214138
      %v4459 = vadd.f32 %v4405, 1.4214138
      %v4460 = vadd.f32 %v4406, 1.4214138
      %v4461 = vadd.f32 %v4407, 1.4214138
      %v4462 = vadd.f32 %v4408, 1.4214138
      %v4463 = vadd.f32 %v4409, 1.4214138
      %v4464 = vadd.f32 %v4410, 1.4214138
      %v4465 = vadd.f32 %v4411, 1.4214138
      %v4466 = vadd.f32 %v4412, 1.4214138
      %v4467 = vadd.f32 %v4413, 1.4214138
      %v4468 = vadd.f32 %v4414, 1.4214138
      %v4469 = vadd.f32 %v4415, 1.4214138
      %v4470 = vadd.f32 %v4416, 1.4214138
      %v4471 = vadd.f32 %v4417, 1.4214138
      %v4472 = vadd.f32 %v4418, 1.4214138
      %v4473 = vadd.f32 %v4419, 1.4214138
      %v4474 = vadd.f32 %v4420, 1.4214138
      %v4475 = vmul.f32 %v4421, %v4152
      %v4476 = vmul.f32 %v4422, %v4154
      %v4477 = vmul.f32 %v4423, %v4156
      %v4478 = vmul.f32 %v4424, %v4158
      %v4479 = vmul.f32 %v4425, %v4160
      %v4480 = vmul.f32 %v4426, %v4162
      %v4481 = vmul.f32 %v4427, %v4164
      %v4482 = vmul.f32 %v4428, %v4166
      %v4483 = vmul.f32 %v4429, %v4168
      %v4484 = vmul.f32 %v4430, %v4170
      %v4485 = vmul.f32 %v4431, %v4172
      %v4486 = vmul.f32 %v4432, %v4174
      %v4487 = vmul.f32 %v4433, %v4176
      %v4488 = vmul.f32 %v4434, %v4178
      %v4489 = vmul.f32 %v4435, %v4180
      %v4490 = vmul.f32 %v4436, %v4182
      %v4491 = vmul.f32 %v4437, %v4184
      %v4492 = vmul.f32 %v4438, %v4186
      %v4493 = vmul.f32 %v4439, %v4188
      %v4494 = vmul.f32 %v4440, %v4190
      %v4495 = vmul.f32 %v4441, %v4192
      %v4496 = vmul.f32 %v4442, %v4194
      %v4497 = vmul.f32 %v4443, %v4196
      %v4498 = vmul.f32 %v4444, %v4198
      %v4499 = vmul.f32 %v4445, %v4200
      %v4500 = vmul.f32 %v4446, %v4202
      %v4501 = vmul.f32 %v4447, %v4204
      %v4502 = vmul.f32 %v4448, %v4206
      %v4503 = vmul.f32 %v4449, %v4208
      %v4504 = vmul.f32 %v4450, %v4210
      %v4505 = vmul.f32 %v4451, %v4212
      %v4506 = vmul.f32 %v4452, %v4214
      %v4507 = vmul.f32 %v4453, %v4216
      %v4508 = vmul.f32 %v4454, %v4218
      %v4509 = vmul.f32 %v4455, %v4220
      %v4510 = vmul.f32 %v4456, %v4222
      %v4511 = vmul.f32 %v4457, %v4224
      %v4512 = vmul.f32 %v4458, %v4226
      %v4513 = vmul.f32 %v4459, %v4228
      %v4514 = vmul.f32 %v4460, %v4230
      %v4515 = vmul.f32 %v4461, %v4232
      %v4516 = vmul.f32 %v4462, %v4234
      %v4517 = vmul.f32 %v4463, %v4236
      %v4518 = vmul.f32 %v4464, %v4238
      %v4519 = vmul.f32 %v4465, %v4240
      %v4520 = vmul.f32 %v4466, %v4242
      %v4521 = vmul.f32 %v4467, %v4244
      %v4522 = vmul.f32 %v4468, %v4246
      %v4523 = vmul.f32 %v4469, %v4248
      %v4524 = vmul.f32 %v4470, %v4250
      %v4525 = vmul.f32 %v4471, %v4252
      %v4526 = vmul.f32 %v4472, %v4254
      %v4527 = vmul.f32 %v4473, %v4256
      %v4528 = vmul.f32 %v4474, %v4258
      %v4529 = vadd.f32 %v4475, -0.28449672
      %v4530 = vadd.f32 %v4476, -0.28449672
      %v4531 = vadd.f32 %v4477, -0.28449672
      %v4532 = vadd.f32 %v4478, -0.28449672
      %v4533 = vadd.f32 %v4479, -0.28449672
      %v4534 = vadd.f32 %v4480, -0.28449672
      %v4535 = vadd.f32 %v4481, -0.28449672
      %v4536 = vadd.f32 %v4482, -0.28449672
      %v4537 = vadd.f32 %v4483, -0.28449672
      %v4538 = vadd.f32 %v4484, -0.28449672
      %v4539 = vadd.f32 %v4485, -0.28449672
      %v4540 = vadd.f32 %v4486, -0.28449672
      %v4541 = vadd.f32 %v4487, -0.28449672
      %v4542 = vadd.f32 %v4488, -0.28449672
      %v4543 = vadd.f32 %v4489, -0.28449672
      %v4544 = vadd.f32 %v4490, -0.28449672
      %v4545 = vadd.f32 %v4491, -0.28449672
      %v4546 = vadd.f32 %v4492, -0.28449672
      %v4547 = vadd.f32 %v4493, -0.28449672
      %v4548 = vadd.f32 %v4494, -0.28449672
      %v4549 = vadd.f32 %v4495, -0.28449672
      %v4550 = vadd.f32 %v4496, -0.28449672
      %v4551 = vadd.f32 %v4497, -0.28449672
      %v4552 = vadd.f32 %v4498, -0.28449672
      %v4553 = vadd.f32 %v4499, -0.28449672
      %v4554 = vadd.f32 %v4500, -0.28449672
      %v4555 = vadd.f32 %v4501, -0.28449672
      %v4556 = vadd.f32 %v4502, -0.28449672
      %v4557 = vadd.f32 %v4503, -0.28449672
      %v4558 = vadd.f32 %v4504, -0.28449672
      %v4559 = vadd.f32 %v4505, -0.28449672
      %v4560 = vadd.f32 %v4506, -0.28449672
      %v4561 = vadd.f32 %v4507, -0.28449672
      %v4562 = vadd.f32 %v4508, -0.28449672
      %v4563 = vadd.f32 %v4509, -0.28449672
      %v4564 = vadd.f32 %v4510, -0.28449672
      %v4565 = vadd.f32 %v4511, -0.28449672
      %v4566 = vadd.f32 %v4512, -0.28449672
      %v4567 = vadd.f32 %v4513, -0.28449672
      %v4568 = vadd.f32 %v4514, -0.28449672
      %v4569 = vadd.f32 %v4515, -0.28449672
      %v4570 = vadd.f32 %v4516, -0.28449672
      %v4571 = vadd.f32 %v4517, -0.28449672
      %v4572 = vadd.f32 %v4518, -0.28449672
      %v4573 = vadd.f32 %v4519, -0.28449672
      %v4574 = vadd.f32 %v4520, -0.28449672
      %v4575 = vadd.f32 %v4521, -0.28449672
      %v4576 = vadd.f32 %v4522, -0.28449672
      %v4577 = vadd.f32 %v4523, -0.28449672
      %v4578 = vadd.f32 %v4524, -0.28449672
      %v4579 = vadd.f32 %v4525, -0.28449672
      %v4580 = vadd.f32 %v4526, -0.28449672
      %v4581 = vadd.f32 %v4527, -0.28449672
      %v4582 = vadd.f32 %v4528, -0.28449672
      %v4583 = vmul.f32 %v4529, %v4152
      %v4584 = vmul.f32 %v4530, %v4154
      %v4585 = vmul.f32 %v4531, %v4156
      %v4586 = vmul.f32 %v4532, %v4158
      %v4587 = vmul.f32 %v4533, %v4160
      %v4588 = vmul.f32 %v4534, %v4162
      %v4589 = vmul.f32 %v4535, %v4164
      %v4590 = vmul.f32 %v4536, %v4166
      %v4591 = vmul.f32 %v4537, %v4168
      %v4592 = vmul.f32 %v4538, %v4170
      %v4593 = vmul.f32 %v4539, %v4172
      %v4594 = vmul.f32 %v4540, %v4174
      %v4595 = vmul.f32 %v4541, %v4176
      %v4596 = vmul.f32 %v4542, %v4178
      %v4597 = vmul.f32 %v4543, %v4180
      %v4598 = vmul.f32 %v4544, %v4182
      %v4599 = vmul.f32 %v4545, %v4184
      %v4600 = vmul.f32 %v4546, %v4186
      %v4601 = vmul.f32 %v4547, %v4188
      %v4602 = vmul.f32 %v4548, %v4190
      %v4603 = vmul.f32 %v4549, %v4192
      %v4604 = vmul.f32 %v4550, %v4194
      %v4605 = vmul.f32 %v4551, %v4196
      %v4606 = vmul.f32 %v4552, %v4198
      %v4607 = vmul.f32 %v4553, %v4200
      %v4608 = vmul.f32 %v4554, %v4202
      %v4609 = vmul.f32 %v4555, %v4204
      %v4610 = vmul.f32 %v4556, %v4206
      %v4611 = vmul.f32 %v4557, %v4208
      %v4612 = vmul.f32 %v4558, %v4210
      %v4613 = vmul.f32 %v4559, %v4212
      %v4614 = vmul.f32 %v4560, %v4214
      %v4615 = vmul.f32 %v4561, %v4216
      %v4616 = vmul.f32 %v4562, %v4218
      %v4617 = vmul.f32 %v4563, %v4220
      %v4618 = vmul.f32 %v4564, %v4222
      %v4619 = vmul.f32 %v4565, %v4224
      %v4620 = vmul.f32 %v4566, %v4226
      %v4621 = vmul.f32 %v4567, %v4228
      %v4622 = vmul.f32 %v4568, %v4230
      %v4623 = vmul.f32 %v4569, %v4232
      %v4624 = vmul.f32 %v4570, %v4234
      %v4625 = vmul.f32 %v4571, %v4236
      %v4626 = vmul.f32 %v4572, %v4238
      %v4627 = vmul.f32 %v4573, %v4240
      %v4628 = vmul.f32 %v4574, %v4242
      %v4629 = vmul.f32 %v4575, %v4244
      %v4630 = vmul.f32 %v4576, %v4246
      %v4631 = vmul.f32 %v4577, %v4248
      %v4632 = vmul.f32 %v4578, %v4250
      %v4633 = vmul.f32 %v4579, %v4252
      %v4634 = vmul.f32 %v4580, %v4254
      %v4635 = vmul.f32 %v4581, %v4256
      %v4636 = vmul.f32 %v4582, %v4258
      %v4637 = vadd.f32 %v4583, 0.2548296
      %v4638 = vadd.f32 %v4584, 0.2548296
      %v4639 = vadd.f32 %v4585, 0.2548296
      %v4640 = vadd.f32 %v4586, 0.2548296
      %v4641 = vadd.f32 %v4587, 0.2548296
      %v4642 = vadd.f32 %v4588, 0.2548296
      %v4643 = vadd.f32 %v4589, 0.2548296
      %v4644 = vadd.f32 %v4590, 0.2548296
      %v4645 = vadd.f32 %v4591, 0.2548296
      %v4646 = vadd.f32 %v4592, 0.2548296
      %v4647 = vadd.f32 %v4593, 0.2548296
      %v4648 = vadd.f32 %v4594, 0.2548296
      %v4649 = vadd.f32 %v4595, 0.2548296
      %v4650 = vadd.f32 %v4596, 0.2548296
      %v4651 = vadd.f32 %v4597, 0.2548296
      %v4652 = vadd.f32 %v4598, 0.2548296
      %v4653 = vadd.f32 %v4599, 0.2548296
      %v4654 = vadd.f32 %v4600, 0.2548296
      %v4655 = vadd.f32 %v4601, 0.2548296
      %v4656 = vadd.f32 %v4602, 0.2548296
      %v4657 = vadd.f32 %v4603, 0.2548296
      %v4658 = vadd.f32 %v4604, 0.2548296
      %v4659 = vadd.f32 %v4605, 0.2548296
      %v4660 = vadd.f32 %v4606, 0.2548296
      %v4661 = vadd.f32 %v4607, 0.2548296
      %v4662 = vadd.f32 %v4608, 0.2548296
      %v4663 = vadd.f32 %v4609, 0.2548296
      %v4664 = vadd.f32 %v4610, 0.2548296
      %v4665 = vadd.f32 %v4611, 0.2548296
      %v4666 = vadd.f32 %v4612, 0.2548296
      %v4667 = vadd.f32 %v4613, 0.2548296
      %v4668 = vadd.f32 %v4614, 0.2548296
      %v4669 = vadd.f32 %v4615, 0.2548296
      %v4670 = vadd.f32 %v4616, 0.2548296
      %v4671 = vadd.f32 %v4617, 0.2548296
      %v4672 = vadd.f32 %v4618, 0.2548296
      %v4673 = vadd.f32 %v4619, 0.2548296
      %v4674 = vadd.f32 %v4620, 0.2548296
      %v4675 = vadd.f32 %v4621, 0.2548296
      %v4676 = vadd.f32 %v4622, 0.2548296
      %v4677 = vadd.f32 %v4623, 0.2548296
      %v4678 = vadd.f32 %v4624, 0.2548296
      %v4679 = vadd.f32 %v4625, 0.2548296
      %v4680 = vadd.f32 %v4626, 0.2548296
      %v4681 = vadd.f32 %v4627, 0.2548296
      %v4682 = vadd.f32 %v4628, 0.2548296
      %v4683 = vadd.f32 %v4629, 0.2548296
      %v4684 = vadd.f32 %v4630, 0.2548296
      %v4685 = vadd.f32 %v4631, 0.2548296
      %v4686 = vadd.f32 %v4632, 0.2548296
      %v4687 = vadd.f32 %v4633, 0.2548296
      %v4688 = vadd.f32 %v4634, 0.2548296
      %v4689 = vadd.f32 %v4635, 0.2548296
      %v4690 = vadd.f32 %v4636, 0.2548296
      %v4691 = vmul.f32 %v4637, %v4152
      %v4692 = vmul.f32 %v4638, %v4154
      %v4693 = vmul.f32 %v4639, %v4156
      %v4694 = vmul.f32 %v4640, %v4158
      %v4695 = vmul.f32 %v4641, %v4160
      %v4696 = vmul.f32 %v4642, %v4162
      %v4697 = vmul.f32 %v4643, %v4164
      %v4698 = vmul.f32 %v4644, %v4166
      %v4699 = vmul.f32 %v4645, %v4168
      %v4700 = vmul.f32 %v4646, %v4170
      %v4701 = vmul.f32 %v4647, %v4172
      %v4702 = vmul.f32 %v4648, %v4174
      %v4703 = vmul.f32 %v4649, %v4176
      %v4704 = vmul.f32 %v4650, %v4178
      %v4705 = vmul.f32 %v4651, %v4180
      %v4706 = vmul.f32 %v4652, %v4182
      %v4707 = vmul.f32 %v4653, %v4184
      %v4708 = vmul.f32 %v4654, %v4186
      %v4709 = vmul.f32 %v4655, %v4188
      %v4710 = vmul.f32 %v4656, %v4190
      %v4711 = vmul.f32 %v4657, %v4192
      %v4712 = vmul.f32 %v4658, %v4194
      %v4713 = vmul.f32 %v4659, %v4196
      %v4714 = vmul.f32 %v4660, %v4198
      %v4715 = vmul.f32 %v4661, %v4200
      %v4716 = vmul.f32 %v4662, %v4202
      %v4717 = vmul.f32 %v4663, %v4204
      %v4718 = vmul.f32 %v4664, %v4206
      %v4719 = vmul.f32 %v4665, %v4208
      %v4720 = vmul.f32 %v4666, %v4210
      %v4721 = vmul.f32 %v4667, %v4212
      %v4722 = vmul.f32 %v4668, %v4214
      %v4723 = vmul.f32 %v4669, %v4216
      %v4724 = vmul.f32 %v4670, %v4218
      %v4725 = vmul.f32 %v4671, %v4220
      %v4726 = vmul.f32 %v4672, %v4222
      %v4727 = vmul.f32 %v4673, %v4224
      %v4728 = vmul.f32 %v4674, %v4226
      %v4729 = vmul.f32 %v4675, %v4228
      %v4730 = vmul.f32 %v4676, %v4230
      %v4731 = vmul.f32 %v4677, %v4232
      %v4732 = vmul.f32 %v4678, %v4234
      %v4733 = vmul.f32 %v4679, %v4236
      %v4734 = vmul.f32 %v4680, %v4238
      %v4735 = vmul.f32 %v4681, %v4240
      %v4736 = vmul.f32 %v4682, %v4242
      %v4737 = vmul.f32 %v4683, %v4244
      %v4738 = vmul.f32 %v4684, %v4246
      %v4739 = vmul.f32 %v4685, %v4248
      %v4740 = vmul.f32 %v4686, %v4250
      %v4741 = vmul.f32 %v4687, %v4252
      %v4742 = vmul.f32 %v4688, %v4254
      %v4743 = vmul.f32 %v4689, %v4256
      %v4744 = vmul.f32 %v4690, %v4258
      %v4745 = vsub.f32 0.0, %v3989
      %v4746 = vsub.f32 0.0, %v3990
      %v4747 = vsub.f32 0.0, %v3991
      %v4748 = vsub.f32 0.0, %v3992
      %v4749 = vsub.f32 0.0, %v3993
      %v4750 = vsub.f32 0.0, %v3994
      %v4751 = vsub.f32 0.0, %v3995
      %v4752 = vsub.f32 0.0, %v3996
      %v4753 = vsub.f32 0.0, %v3997
      %v4754 = vsub.f32 0.0, %v3998
      %v4755 = vsub.f32 0.0, %v3999
      %v4756 = vsub.f32 0.0, %v4000
      %v4757 = vsub.f32 0.0, %v4001
      %v4758 = vsub.f32 0.0, %v4002
      %v4759 = vsub.f32 0.0, %v4003
      %v4760 = vsub.f32 0.0, %v4004
      %v4761 = vsub.f32 0.0, %v4005
      %v4762 = vsub.f32 0.0, %v4006
      %v4763 = vsub.f32 0.0, %v4007
      %v4764 = vsub.f32 0.0, %v4008
      %v4765 = vsub.f32 0.0, %v4009
      %v4766 = vsub.f32 0.0, %v4010
      %v4767 = vsub.f32 0.0, %v4011
      %v4768 = vsub.f32 0.0, %v4012
      %v4769 = vsub.f32 0.0, %v4013
      %v4770 = vsub.f32 0.0, %v4014
      %v4771 = vsub.f32 0.0, %v4015
      %v4772 = vsub.f32 0.0, %v4016
      %v4773 = vsub.f32 0.0, %v4017
      %v4774 = vsub.f32 0.0, %v4018
      %v4775 = vsub.f32 0.0, %v4019
      %v4776 = vsub.f32 0.0, %v4020
      %v4777 = vsub.f32 0.0, %v4021
      %v4778 = vsub.f32 0.0, %v4022
      %v4779 = vsub.f32 0.0, %v4023
      %v4780 = vsub.f32 0.0, %v4024
      %v4781 = vsub.f32 0.0, %v4025
      %v4782 = vsub.f32 0.0, %v4026
      %v4783 = vsub.f32 0.0, %v4027
      %v4784 = vsub.f32 0.0, %v4028
      %v4785 = vsub.f32 0.0, %v4029
      %v4786 = vsub.f32 0.0, %v4030
      %v4787 = vsub.f32 0.0, %v4031
      %v4788 = vsub.f32 0.0, %v4032
      %v4789 = vsub.f32 0.0, %v4033
      %v4790 = vsub.f32 0.0, %v4034
      %v4791 = vsub.f32 0.0, %v4035
      %v4792 = vsub.f32 0.0, %v4036
      %v4793 = vsub.f32 0.0, %v4037
      %v4794 = vsub.f32 0.0, %v4038
      %v4795 = vsub.f32 0.0, %v4039
      %v4796 = vsub.f32 0.0, %v4040
      %v4797 = vsub.f32 0.0, %v4041
      %v4798 = vsub.f32 0.0, %v4042
      %v4799 = vmul.f32 %v4745, %v3989
      %v4800 = vmul.f32 %v4746, %v3990
      %v4801 = vmul.f32 %v4747, %v3991
      %v4802 = vmul.f32 %v4748, %v3992
      %v4803 = vmul.f32 %v4749, %v3993
      %v4804 = vmul.f32 %v4750, %v3994
      %v4805 = vmul.f32 %v4751, %v3995
      %v4806 = vmul.f32 %v4752, %v3996
      %v4807 = vmul.f32 %v4753, %v3997
      %v4808 = vmul.f32 %v4754, %v3998
      %v4809 = vmul.f32 %v4755, %v3999
      %v4810 = vmul.f32 %v4756, %v4000
      %v4811 = vmul.f32 %v4757, %v4001
      %v4812 = vmul.f32 %v4758, %v4002
      %v4813 = vmul.f32 %v4759, %v4003
      %v4814 = vmul.f32 %v4760, %v4004
      %v4815 = vmul.f32 %v4761, %v4005
      %v4816 = vmul.f32 %v4762, %v4006
      %v4817 = vmul.f32 %v4763, %v4007
      %v4818 = vmul.f32 %v4764, %v4008
      %v4819 = vmul.f32 %v4765, %v4009
      %v4820 = vmul.f32 %v4766, %v4010
      %v4821 = vmul.f32 %v4767, %v4011
      %v4822 = vmul.f32 %v4768, %v4012
      %v4823 = vmul.f32 %v4769, %v4013
      %v4824 = vmul.f32 %v4770, %v4014
      %v4825 = vmul.f32 %v4771, %v4015
      %v4826 = vmul.f32 %v4772, %v4016
      %v4827 = vmul.f32 %v4773, %v4017
      %v4828 = vmul.f32 %v4774, %v4018
      %v4829 = vmul.f32 %v4775, %v4019
      %v4830 = vmul.f32 %v4776, %v4020
      %v4831 = vmul.f32 %v4777, %v4021
      %v4832 = vmul.f32 %v4778, %v4022
      %v4833 = vmul.f32 %v4779, %v4023
      %v4834 = vmul.f32 %v4780, %v4024
      %v4835 = vmul.f32 %v4781, %v4025
      %v4836 = vmul.f32 %v4782, %v4026
      %v4837 = vmul.f32 %v4783, %v4027
      %v4838 = vmul.f32 %v4784, %v4028
      %v4839 = vmul.f32 %v4785, %v4029
      %v4840 = vmul.f32 %v4786, %v4030
      %v4841 = vmul.f32 %v4787, %v4031
      %v4842 = vmul.f32 %v4788, %v4032
      %v4843 = vmul.f32 %v4789, %v4033
      %v4844 = vmul.f32 %v4790, %v4034
      %v4845 = vmul.f32 %v4791, %v4035
      %v4846 = vmul.f32 %v4792, %v4036
      %v4847 = vmul.f32 %v4793, %v4037
      %v4848 = vmul.f32 %v4794, %v4038
      %v4849 = vmul.f32 %v4795, %v4039
      %v4850 = vmul.f32 %v4796, %v4040
      %v4851 = vmul.f32 %v4797, %v4041
      %v4852 = vmul.f32 %v4798, %v4042
      %v4853 = vmul.f32 %v4799, 1.442695
      %v4854 = vpow.pop %v4853
      %v4855 = vmul.f32 %v4800, 1.442695
      %v4856 = vpow.pop %v4855
      %v4857 = vmul.f32 %v4801, 1.442695
      %v4858 = vpow.pop %v4857
      %v4859 = vmul.f32 %v4802, 1.442695
      %v4860 = vpow.pop %v4859
      %v4861 = vmul.f32 %v4803, 1.442695
      %v4862 = vpow.pop %v4861
      %v4863 = vmul.f32 %v4804, 1.442695
      %v4864 = vpow.pop %v4863
      %v4865 = vmul.f32 %v4805, 1.442695
      %v4866 = vpow.pop %v4865
      %v4867 = vmul.f32 %v4806, 1.442695
      %v4868 = vpow.pop %v4867
      %v4869 = vmul.f32 %v4807, 1.442695
      %v4870 = vpow.pop %v4869
      %v4871 = vmul.f32 %v4808, 1.442695
      %v4872 = vpow.pop %v4871
      %v4873 = vmul.f32 %v4809, 1.442695
      %v4874 = vpow.pop %v4873
      %v4875 = vmul.f32 %v4810, 1.442695
      %v4876 = vpow.pop %v4875
      %v4877 = vmul.f32 %v4811, 1.442695
      %v4878 = vpow.pop %v4877
      %v4879 = vmul.f32 %v4812, 1.442695
      %v4880 = vpow.pop %v4879
      %v4881 = vmul.f32 %v4813, 1.442695
      %v4882 = vpow.pop %v4881
      %v4883 = vmul.f32 %v4814, 1.442695
      %v4884 = vpow.pop %v4883
      %v4885 = vmul.f32 %v4815, 1.442695
      %v4886 = vpow.pop %v4885
      %v4887 = vmul.f32 %v4816, 1.442695
      %v4888 = vpow.pop %v4887
      %v4889 = vmul.f32 %v4817, 1.442695
      %v4890 = vpow.pop %v4889
      %v4891 = vmul.f32 %v4818, 1.442695
      %v4892 = vpow.pop %v4891
      %v4893 = vmul.f32 %v4819, 1.442695
      %v4894 = vpow.pop %v4893
      %v4895 = vmul.f32 %v4820, 1.442695
      %v4896 = vpow.pop %v4895
      %v4897 = vmul.f32 %v4821, 1.442695
      %v4898 = vpow.pop %v4897
      %v4899 = vmul.f32 %v4822, 1.442695
      %v4900 = vpow.pop %v4899
      %v4901 = vmul.f32 %v4823, 1.442695
      %v4902 = vpow.pop %v4901
      %v4903 = vmul.f32 %v4824, 1.442695
      %v4904 = vpow.pop %v4903
      %v4905 = vmul.f32 %v4825, 1.442695
      %v4906 = vpow.pop %v4905
      %v4907 = vmul.f32 %v4826, 1.442695
      %v4908 = vpow.pop %v4907
      %v4909 = vmul.f32 %v4827, 1.442695
      %v4910 = vpow.pop %v4909
      %v4911 = vmul.f32 %v4828, 1.442695
      %v4912 = vpow.pop %v4911
      %v4913 = vmul.f32 %v4829, 1.442695
      %v4914 = vpow.pop %v4913
      %v4915 = vmul.f32 %v4830, 1.442695
      %v4916 = vpow.pop %v4915
      %v4917 = vmul.f32 %v4831, 1.442695
      %v4918 = vpow.pop %v4917
      %v4919 = vmul.f32 %v4832, 1.442695
      %v4920 = vpow.pop %v4919
      %v4921 = vmul.f32 %v4833, 1.442695
      %v4922 = vpow.pop %v4921
      %v4923 = vmul.f32 %v4834, 1.442695
      %v4924 = vpow.pop %v4923
      %v4925 = vmul.f32 %v4835, 1.442695
      %v4926 = vpow.pop %v4925
      %v4927 = vmul.f32 %v4836, 1.442695
      %v4928 = vpow.pop %v4927
      %v4929 = vmul.f32 %v4837, 1.442695
      %v4930 = vpow.pop %v4929
      %v4931 = vmul.f32 %v4838, 1.442695
      %v4932 = vpow.pop %v4931
      %v4933 = vmul.f32 %v4839, 1.442695
      %v4934 = vpow.pop %v4933
      %v4935 = vmul.f32 %v4840, 1.442695
      %v4936 = vpow.pop %v4935
      %v4937 = vmul.f32 %v4841, 1.442695
      %v4938 = vpow.pop %v4937
      %v4939 = vmul.f32 %v4842, 1.442695
      %v4940 = vpow.pop %v4939
      %v4941 = vmul.f32 %v4843, 1.442695
      %v4942 = vpow.pop %v4941
      %v4943 = vmul.f32 %v4844, 1.442695
      %v4944 = vpow.pop %v4943
      %v4945 = vmul.f32 %v4845, 1.442695
      %v4946 = vpow.pop %v4945
      %v4947 = vmul.f32 %v4846, 1.442695
      %v4948 = vpow.pop %v4947
      %v4949 = vmul.f32 %v4847, 1.442695
      %v4950 = vpow.pop %v4949
      %v4951 = vmul.f32 %v4848, 1.442695
      %v4952 = vpow.pop %v4951
      %v4953 = vmul.f32 %v4849, 1.442695
      %v4954 = vpow.pop %v4953
      %v4955 = vmul.f32 %v4850, 1.442695
      %v4956 = vpow.pop %v4955
      %v4957 = vmul.f32 %v4851, 1.442695
      %v4958 = vpow.pop %v4957
      %v4959 = vmul.f32 %v4852, 1.442695
      %v4960 = vpow.pop %v4959
      %v4961 = vmul.f32 %v4691, %v4854
      %v4962 = vmul.f32 %v4692, %v4856
      %v4963 = vmul.f32 %v4693, %v4858
      %v4964 = vmul.f32 %v4694, %v4860
      %v4965 = vmul.f32 %v4695, %v4862
      %v4966 = vmul.f32 %v4696, %v4864
      %v4967 = vmul.f32 %v4697, %v4866
      %v4968 = vmul.f32 %v4698, %v4868
      %v4969 = vmul.f32 %v4699, %v4870
      %v4970 = vmul.f32 %v4700, %v4872
      %v4971 = vmul.f32 %v4701, %v4874
      %v4972 = vmul.f32 %v4702, %v4876
      %v4973 = vmul.f32 %v4703, %v4878
      %v4974 = vmul.f32 %v4704, %v4880
      %v4975 = vmul.f32 %v4705, %v4882
      %v4976 = vmul.f32 %v4706, %v4884
      %v4977 = vmul.f32 %v4707, %v4886
      %v4978 = vmul.f32 %v4708, %v4888
      %v4979 = vmul.f32 %v4709, %v4890
      %v4980 = vmul.f32 %v4710, %v4892
      %v4981 = vmul.f32 %v4711, %v4894
      %v4982 = vmul.f32 %v4712, %v4896
      %v4983 = vmul.f32 %v4713, %v4898
      %v4984 = vmul.f32 %v4714, %v4900
      %v4985 = vmul.f32 %v4715, %v4902
      %v4986 = vmul.f32 %v4716, %v4904
      %v4987 = vmul.f32 %v4717, %v4906
      %v4988 = vmul.f32 %v4718, %v4908
      %v4989 = vmul.f32 %v4719, %v4910
      %v4990 = vmul.f32 %v4720, %v4912
      %v4991 = vmul.f32 %v4721, %v4914
      %v4992 = vmul.f32 %v4722, %v4916
      %v4993 = vmul.f32 %v4723, %v4918
      %v4994 = vmul.f32 %v4724, %v4920
      %v4995 = vmul.f32 %v4725, %v4922
      %v4996 = vmul.f32 %v4726, %v4924
      %v4997 = vmul.f32 %v4727, %v4926
      %v4998 = vmul.f32 %v4728, %v4928
      %v4999 = vmul.f32 %v4729, %v4930
      %v5000 = vmul.f32 %v4730, %v4932
      %v5001 = vmul.f32 %v4731, %v4934
      %v5002 = vmul.f32 %v4732, %v4936
      %v5003 = vmul.f32 %v4733, %v4938
      %v5004 = vmul.f32 %v4734, %v4940
      %v5005 = vmul.f32 %v4735, %v4942
      %v5006 = vmul.f32 %v4736, %v4944
      %v5007 = vmul.f32 %v4737, %v4946
      %v5008 = vmul.f32 %v4738, %v4948
      %v5009 = vmul.f32 %v4739, %v4950
      %v5010 = vmul.f32 %v4740, %v4952
      %v5011 = vmul.f32 %v4741, %v4954
      %v5012 = vmul.f32 %v4742, %v4956
      %v5013 = vmul.f32 %v4743, %v4958
      %v5014 = vmul.f32 %v4744, %v4960
      %v5015 = vsub.f32 1.0, %v4961
      %v5016 = vsub.f32 1.0, %v4962
      %v5017 = vsub.f32 1.0, %v4963
      %v5018 = vsub.f32 1.0, %v4964
      %v5019 = vsub.f32 1.0, %v4965
      %v5020 = vsub.f32 1.0, %v4966
      %v5021 = vsub.f32 1.0, %v4967
      %v5022 = vsub.f32 1.0, %v4968
      %v5023 = vsub.f32 1.0, %v4969
      %v5024 = vsub.f32 1.0, %v4970
      %v5025 = vsub.f32 1.0, %v4971
      %v5026 = vsub.f32 1.0, %v4972
      %v5027 = vsub.f32 1.0, %v4973
      %v5028 = vsub.f32 1.0, %v4974
      %v5029 = vsub.f32 1.0, %v4975
      %v5030 = vsub.f32 1.0, %v4976
      %v5031 = vsub.f32 1.0, %v4977
      %v5032 = vsub.f32 1.0, %v4978
      %v5033 = vsub.f32 1.0, %v4979
      %v5034 = vsub.f32 1.0, %v4980
      %v5035 = vsub.f32 1.0, %v4981
      %v5036 = vsub.f32 1.0, %v4982
      %v5037 = vsub.f32 1.0, %v4983
      %v5038 = vsub.f32 1.0, %v4984
      %v5039 = vsub.f32 1.0, %v4985
      %v5040 = vsub.f32 1.0, %v4986
      %v5041 = vsub.f32 1.0, %v4987
      %v5042 = vsub.f32 1.0, %v4988
      %v5043 = vsub.f32 1.0, %v4989
      %v5044 = vsub.f32 1.0, %v4990
      %v5045 = vsub.f32 1.0, %v4991
      %v5046 = vsub.f32 1.0, %v4992
      %v5047 = vsub.f32 1.0, %v4993
      %v5048 = vsub.f32 1.0, %v4994
      %v5049 = vsub.f32 1.0, %v4995
      %v5050 = vsub.f32 1.0, %v4996
      %v5051 = vsub.f32 1.0, %v4997
      %v5052 = vsub.f32 1.0, %v4998
      %v5053 = vsub.f32 1.0, %v4999
      %v5054 = vsub.f32 1.0, %v5000
      %v5055 = vsub.f32 1.0, %v5001
      %v5056 = vsub.f32 1.0, %v5002
      %v5057 = vsub.f32 1.0, %v5003
      %v5058 = vsub.f32 1.0, %v5004
      %v5059 = vsub.f32 1.0, %v5005
      %v5060 = vsub.f32 1.0, %v5006
      %v5061 = vsub.f32 1.0, %v5007
      %v5062 = vsub.f32 1.0, %v5008
      %v5063 = vsub.f32 1.0, %v5009
      %v5064 = vsub.f32 1.0, %v5010
      %v5065 = vsub.f32 1.0, %v5011
      %v5066 = vsub.f32 1.0, %v5012
      %v5067 = vsub.f32 1.0, %v5013
      %v5068 = vsub.f32 1.0, %v5014
      %vm5069 = vcmp.lt.f32.partialorder %v3935, 0.0
      %vm5070 = vcmp.lt.f32.partialorder %v3936, 0.0
      %vm5071 = vcmp.lt.f32.partialorder %v3937, 0.0
      %vm5072 = vcmp.lt.f32.partialorder %v3938, 0.0
      %vm5073 = vcmp.lt.f32.partialorder %v3939, 0.0
      %vm5074 = vcmp.lt.f32.partialorder %v3940, 0.0
      %vm5075 = vcmp.lt.f32.partialorder %v3941, 0.0
      %vm5076 = vcmp.lt.f32.partialorder %v3942, 0.0
      %vm5077 = vcmp.lt.f32.partialorder %v3943, 0.0
      %vm5078 = vcmp.lt.f32.partialorder %v3944, 0.0
      %vm5079 = vcmp.lt.f32.partialorder %v3945, 0.0
      %vm5080 = vcmp.lt.f32.partialorder %v3946, 0.0
      %vm5081 = vcmp.lt.f32.partialorder %v3947, 0.0
      %vm5082 = vcmp.lt.f32.partialorder %v3948, 0.0
      %vm5083 = vcmp.lt.f32.partialorder %v3949, 0.0
      %vm5084 = vcmp.lt.f32.partialorder %v3950, 0.0
      %vm5085 = vcmp.lt.f32.partialorder %v3951, 0.0
      %vm5086 = vcmp.lt.f32.partialorder %v3952, 0.0
      %vm5087 = vcmp.lt.f32.partialorder %v3953, 0.0
      %vm5088 = vcmp.lt.f32.partialorder %v3954, 0.0
      %vm5089 = vcmp.lt.f32.partialorder %v3955, 0.0
      %vm5090 = vcmp.lt.f32.partialorder %v3956, 0.0
      %vm5091 = vcmp.lt.f32.partialorder %v3957, 0.0
      %vm5092 = vcmp.lt.f32.partialorder %v3958, 0.0
      %vm5093 = vcmp.lt.f32.partialorder %v3959, 0.0
      %vm5094 = vcmp.lt.f32.partialorder %v3960, 0.0
      %vm5095 = vcmp.lt.f32.partialorder %v3961, 0.0
      %vm5096 = vcmp.lt.f32.partialorder %v3962, 0.0
      %vm5097 = vcmp.lt.f32.partialorder %v3963, 0.0
      %vm5098 = vcmp.lt.f32.partialorder %v3964, 0.0
      %vm5099 = vcmp.lt.f32.partialorder %v3965, 0.0
      %vm5100 = vcmp.lt.f32.partialorder %v3966, 0.0
      %vm5101 = vcmp.lt.f32.partialorder %v3967, 0.0
      %vm5102 = vcmp.lt.f32.partialorder %v3968, 0.0
      %vm5103 = vcmp.lt.f32.partialorder %v3969, 0.0
      %vm5104 = vcmp.lt.f32.partialorder %v3970, 0.0
      %vm5105 = vcmp.lt.f32.partialorder %v3971, 0.0
      %vm5106 = vcmp.lt.f32.partialorder %v3972, 0.0
      %vm5107 = vcmp.lt.f32.partialorder %v3973, 0.0
      %vm5108 = vcmp.lt.f32.partialorder %v3974, 0.0
      %vm5109 = vcmp.lt.f32.partialorder %v3975, 0.0
      %vm5110 = vcmp.lt.f32.partialorder %v3976, 0.0
      %vm5111 = vcmp.lt.f32.partialorder %v3977, 0.0
      %vm5112 = vcmp.lt.f32.partialorder %v3978, 0.0
      %vm5113 = vcmp.lt.f32.partialorder %v3979, 0.0
      %vm5114 = vcmp.lt.f32.partialorder %v3980, 0.0
      %vm5115 = vcmp.lt.f32.partialorder %v3981, 0.0
      %vm5116 = vcmp.lt.f32.partialorder %v3982, 0.0
      %vm5117 = vcmp.lt.f32.partialorder %v3983, 0.0
      %vm5118 = vcmp.lt.f32.partialorder %v3984, 0.0
      %vm5119 = vcmp.lt.f32.partialorder %v3985, 0.0
      %vm5120 = vcmp.lt.f32.partialorder %v3986, 0.0
      %vm5121 = vcmp.lt.f32.partialorder %v3987, 0.0
      %vm5122 = vcmp.lt.f32.partialorder %v3988, 0.0
      %v5123 = vsub.f32 0.0, %v5015
      %v5124 = vsub.f32 0.0, %v5016
      %v5125 = vsub.f32 0.0, %v5017
      %v5126 = vsub.f32 0.0, %v5018
      %v5127 = vsub.f32 0.0, %v5019
      %v5128 = vsub.f32 0.0, %v5020
      %v5129 = vsub.f32 0.0, %v5021
      %v5130 = vsub.f32 0.0, %v5022
      %v5131 = vsub.f32 0.0, %v5023
      %v5132 = vsub.f32 0.0, %v5024
      %v5133 = vsub.f32 0.0, %v5025
      %v5134 = vsub.f32 0.0, %v5026
      %v5135 = vsub.f32 0.0, %v5027
      %v5136 = vsub.f32 0.0, %v5028
      %v5137 = vsub.f32 0.0, %v5029
      %v5138 = vsub.f32 0.0, %v5030
      %v5139 = vsub.f32 0.0, %v5031
      %v5140 = vsub.f32 0.0, %v5032
      %v5141 = vsub.f32 0.0, %v5033
      %v5142 = vsub.f32 0.0, %v5034
      %v5143 = vsub.f32 0.0, %v5035
      %v5144 = vsub.f32 0.0, %v5036
      %v5145 = vsub.f32 0.0, %v5037
      %v5146 = vsub.f32 0.0, %v5038
      %v5147 = vsub.f32 0.0, %v5039
      %v5148 = vsub.f32 0.0, %v5040
      %v5149 = vsub.f32 0.0, %v5041
      %v5150 = vsub.f32 0.0, %v5042
      %v5151 = vsub.f32 0.0, %v5043
      %v5152 = vsub.f32 0.0, %v5044
      %v5153 = vsub.f32 0.0, %v5045
      %v5154 = vsub.f32 0.0, %v5046
      %v5155 = vsub.f32 0.0, %v5047
      %v5156 = vsub.f32 0.0, %v5048
      %v5157 = vsub.f32 0.0, %v5049
      %v5158 = vsub.f32 0.0, %v5050
      %v5159 = vsub.f32 0.0, %v5051
      %v5160 = vsub.f32 0.0, %v5052
      %v5161 = vsub.f32 0.0, %v5053
      %v5162 = vsub.f32 0.0, %v5054
      %v5163 = vsub.f32 0.0, %v5055
      %v5164 = vsub.f32 0.0, %v5056
      %v5165 = vsub.f32 0.0, %v5057
      %v5166 = vsub.f32 0.0, %v5058
      %v5167 = vsub.f32 0.0, %v5059
      %v5168 = vsub.f32 0.0, %v5060
      %v5169 = vsub.f32 0.0, %v5061
      %v5170 = vsub.f32 0.0, %v5062
      %v5171 = vsub.f32 0.0, %v5063
      %v5172 = vsub.f32 0.0, %v5064
      %v5173 = vsub.f32 0.0, %v5065
      %v5174 = vsub.f32 0.0, %v5066
      %v5175 = vsub.f32 0.0, %v5067
      %v5176 = vsub.f32 0.0, %v5068
      %v5177 = vsel %vm5069, %v5123, %v5015
      %v5178 = vsel %vm5070, %v5124, %v5016
      %v5179 = vsel %vm5071, %v5125, %v5017
      %v5180 = vsel %vm5072, %v5126, %v5018
      %v5181 = vsel %vm5073, %v5127, %v5019
      %v5182 = vsel %vm5074, %v5128, %v5020
      %v5183 = vsel %vm5075, %v5129, %v5021
      %v5184 = vsel %vm5076, %v5130, %v5022
      %v5185 = vsel %vm5077, %v5131, %v5023
      %v5186 = vsel %vm5078, %v5132, %v5024
      %v5187 = vsel %vm5079, %v5133, %v5025
      %v5188 = vsel %vm5080, %v5134, %v5026
      %v5189 = vsel %vm5081, %v5135, %v5027
      %v5190 = vsel %vm5082, %v5136, %v5028
      %v5191 = vsel %vm5083, %v5137, %v5029
      %v5192 = vsel %vm5084, %v5138, %v5030
      %v5193 = vsel %vm5085, %v5139, %v5031
      %v5194 = vsel %vm5086, %v5140, %v5032
      %v5195 = vsel %vm5087, %v5141, %v5033
      %v5196 = vsel %vm5088, %v5142, %v5034
      %v5197 = vsel %vm5089, %v5143, %v5035
      %v5198 = vsel %vm5090, %v5144, %v5036
      %v5199 = vsel %vm5091, %v5145, %v5037
      %v5200 = vsel %vm5092, %v5146, %v5038
      %v5201 = vsel %vm5093, %v5147, %v5039
      %v5202 = vsel %vm5094, %v5148, %v5040
      %v5203 = vsel %vm5095, %v5149, %v5041
      %v5204 = vsel %vm5096, %v5150, %v5042
      %v5205 = vsel %vm5097, %v5151, %v5043
      %v5206 = vsel %vm5098, %v5152, %v5044
      %v5207 = vsel %vm5099, %v5153, %v5045
      %v5208 = vsel %vm5100, %v5154, %v5046
      %v5209 = vsel %vm5101, %v5155, %v5047
      %v5210 = vsel %vm5102, %v5156, %v5048
      %v5211 = vsel %vm5103, %v5157, %v5049
      %v5212 = vsel %vm5104, %v5158, %v5050
      %v5213 = vsel %vm5105, %v5159, %v5051
      %v5214 = vsel %vm5106, %v5160, %v5052
      %v5215 = vsel %vm5107, %v5161, %v5053
      %v5216 = vsel %vm5108, %v5162, %v5054
      %v5217 = vsel %vm5109, %v5163, %v5055
      %v5218 = vsel %vm5110, %v5164, %v5056
      %v5219 = vsel %vm5111, %v5165, %v5057
      %v5220 = vsel %vm5112, %v5166, %v5058
      %v5221 = vsel %vm5113, %v5167, %v5059
      %v5222 = vsel %vm5114, %v5168, %v5060
      %v5223 = vsel %vm5115, %v5169, %v5061
      %v5224 = vsel %vm5116, %v5170, %v5062
      %v5225 = vsel %vm5117, %v5171, %v5063
      %v5226 = vsel %vm5118, %v5172, %v5064
      %v5227 = vsel %vm5119, %v5173, %v5065
      %v5228 = vsel %vm5120, %v5174, %v5066
      %v5229 = vsel %vm5121, %v5175, %v5067
      %v5230 = vsel %vm5122, %v5176, %v5068
      %v5231 = vadd.f32 %v5177, 1.0
      %v5232 = vadd.f32 %v5178, 1.0
      %v5233 = vadd.f32 %v5179, 1.0
      %v5234 = vadd.f32 %v5180, 1.0
      %v5235 = vadd.f32 %v5181, 1.0
      %v5236 = vadd.f32 %v5182, 1.0
      %v5237 = vadd.f32 %v5183, 1.0
      %v5238 = vadd.f32 %v5184, 1.0
      %v5239 = vadd.f32 %v5185, 1.0
      %v5240 = vadd.f32 %v5186, 1.0
      %v5241 = vadd.f32 %v5187, 1.0
      %v5242 = vadd.f32 %v5188, 1.0
      %v5243 = vadd.f32 %v5189, 1.0
      %v5244 = vadd.f32 %v5190, 1.0
      %v5245 = vadd.f32 %v5191, 1.0
      %v5246 = vadd.f32 %v5192, 1.0
      %v5247 = vadd.f32 %v5193, 1.0
      %v5248 = vadd.f32 %v5194, 1.0
      %v5249 = vadd.f32 %v5195, 1.0
      %v5250 = vadd.f32 %v5196, 1.0
      %v5251 = vadd.f32 %v5197, 1.0
      %v5252 = vadd.f32 %v5198, 1.0
      %v5253 = vadd.f32 %v5199, 1.0
      %v5254 = vadd.f32 %v5200, 1.0
      %v5255 = vadd.f32 %v5201, 1.0
      %v5256 = vadd.f32 %v5202, 1.0
      %v5257 = vadd.f32 %v5203, 1.0
      %v5258 = vadd.f32 %v5204, 1.0
      %v5259 = vadd.f32 %v5205, 1.0
      %v5260 = vadd.f32 %v5206, 1.0
      %v5261 = vadd.f32 %v5207, 1.0
      %v5262 = vadd.f32 %v5208, 1.0
      %v5263 = vadd.f32 %v5209, 1.0
      %v5264 = vadd.f32 %v5210, 1.0
      %v5265 = vadd.f32 %v5211, 1.0
      %v5266 = vadd.f32 %v5212, 1.0
      %v5267 = vadd.f32 %v5213, 1.0
      %v5268 = vadd.f32 %v5214, 1.0
      %v5269 = vadd.f32 %v5215, 1.0
      %v5270 = vadd.f32 %v5216, 1.0
      %v5271 = vadd.f32 %v5217, 1.0
      %v5272 = vadd.f32 %v5218, 1.0
      %v5273 = vadd.f32 %v5219, 1.0
      %v5274 = vadd.f32 %v5220, 1.0
      %v5275 = vadd.f32 %v5221, 1.0
      %v5276 = vadd.f32 %v5222, 1.0
      %v5277 = vadd.f32 %v5223, 1.0
      %v5278 = vadd.f32 %v5224, 1.0
      %v5279 = vadd.f32 %v5225, 1.0
      %v5280 = vadd.f32 %v5226, 1.0
      %v5281 = vadd.f32 %v5227, 1.0
      %v5282 = vadd.f32 %v5228, 1.0
      %v5283 = vadd.f32 %v5229, 1.0
      %v5284 = vadd.f32 %v5230, 1.0
      %v5285 = vmul.f32 %v3881, %v5231
      %v5286 = vmul.f32 %v3882, %v5232
      %v5287 = vmul.f32 %v3883, %v5233
      %v5288 = vmul.f32 %v3884, %v5234
      %v5289 = vmul.f32 %v3885, %v5235
      %v5290 = vmul.f32 %v3886, %v5236
      %v5291 = vmul.f32 %v3887, %v5237
      %v5292 = vmul.f32 %v3888, %v5238
      %v5293 = vmul.f32 %v3889, %v5239
      %v5294 = vmul.f32 %v3890, %v5240
      %v5295 = vmul.f32 %v3891, %v5241
      %v5296 = vmul.f32 %v3892, %v5242
      %v5297 = vmul.f32 %v3893, %v5243
      %v5298 = vmul.f32 %v3894, %v5244
      %v5299 = vmul.f32 %v3895, %v5245
      %v5300 = vmul.f32 %v3896, %v5246
      %v5301 = vmul.f32 %v3897, %v5247
      %v5302 = vmul.f32 %v3898, %v5248
      %v5303 = vmul.f32 %v3899, %v5249
      %v5304 = vmul.f32 %v3900, %v5250
      %v5305 = vmul.f32 %v3901, %v5251
      %v5306 = vmul.f32 %v3902, %v5252
      %v5307 = vmul.f32 %v3903, %v5253
      %v5308 = vmul.f32 %v3904, %v5254
      %v5309 = vmul.f32 %v3905, %v5255
      %v5310 = vmul.f32 %v3906, %v5256
      %v5311 = vmul.f32 %v3907, %v5257
      %v5312 = vmul.f32 %v3908, %v5258
      %v5313 = vmul.f32 %v3909, %v5259
      %v5314 = vmul.f32 %v3910, %v5260
      %v5315 = vmul.f32 %v3911, %v5261
      %v5316 = vmul.f32 %v3912, %v5262
      %v5317 = vmul.f32 %v3913, %v5263
      %v5318 = vmul.f32 %v3914, %v5264
      %v5319 = vmul.f32 %v3915, %v5265
      %v5320 = vmul.f32 %v3916, %v5266
      %v5321 = vmul.f32 %v3917, %v5267
      %v5322 = vmul.f32 %v3918, %v5268
      %v5323 = vmul.f32 %v3919, %v5269
      %v5324 = vmul.f32 %v3920, %v5270
      %v5325 = vmul.f32 %v3921, %v5271
      %v5326 = vmul.f32 %v3922, %v5272
      %v5327 = vmul.f32 %v3923, %v5273
      %v5328 = vmul.f32 %v3924, %v5274
      %v5329 = vmul.f32 %v3925, %v5275
      %v5330 = vmul.f32 %v3926, %v5276
      %v5331 = vmul.f32 %v3927, %v5277
      %v5332 = vmul.f32 %v3928, %v5278
      %v5333 = vmul.f32 %v3929, %v5279
      %v5334 = vmul.f32 %v3930, %v5280
      %v5335 = vmul.f32 %v3931, %v5281
      %v5336 = vmul.f32 %v3932, %v5282
      %v5337 = vmul.f32 %v3933, %v5283
      %v5338 = vmul.f32 %v3934, %v5284
      %v5339 = vld [vmem:[%s11] sm:$0xff]
      %v5340 = vld [vmem:[%s11 + $0x8] sm:$0xff]
      %v5341 = vld [vmem:[%s11 + $0x10] sm:$0x3]
      %v5342 = vld [vmem:[%s11 + $0x18] sm:$0xff]
      %v5343 = vld [vmem:[%s11 + $0x20] sm:$0xff]
      %v5344 = vld [vmem:[%s11 + $0x28] sm:$0x3]
      %v5345 = vld [vmem:[%s11 + $0x30] sm:$0xff]
      %v5346 = vld [vmem:[%s11 + $0x38] sm:$0xff]
      %v5347 = vld [vmem:[%s11 + $0x40] sm:$0x3]
      %v5348 = vld [vmem:[%s11 + $0x48] sm:$0xff]
      %v5349 = vld [vmem:[%s11 + $0x50] sm:$0xff]
      %v5350 = vld [vmem:[%s11 + $0x58] sm:$0x3]
      %v5351 = vld [vmem:[%s11 + $0x60] sm:$0xff]
      %v5352 = vld [vmem:[%s11 + $0x68] sm:$0xff]
      %v5353 = vld [vmem:[%s11 + $0x70] sm:$0x3]
      %v5354 = vld [vmem:[%s11 + $0x78] sm:$0xff]
      %v5355 = vld [vmem:[%s11 + $0x80] sm:$0xff]
      %v5356 = vld [vmem:[%s11 + $0x88] sm:$0x3]
      %v5357 = vld [vmem:[%s11 + $0x90] sm:$0xff]
      %v5358 = vld [vmem:[%s11 + $0x98] sm:$0xff]
      %v5359 = vld [vmem:[%s11 + $0xa0] sm:$0x3]
      %v5360 = vld [vmem:[%s11 + $0xa8] sm:$0xff]
      %v5361 = vld [vmem:[%s11 + $0xb0] sm:$0xff]
      %v5362 = vld [vmem:[%s11 + $0xb8] sm:$0x3]
      %v5363 = vld [vmem:[%s11 + $0xc0] sm:$0xff]
      %v5364 = vld [vmem:[%s11 + $0xc8] sm:$0xff]
      %v5365 = vld [vmem:[%s11 + $0xd0] sm:$0x3]
      %v5366 = vld [vmem:[%s11 + $0xd8] sm:$0xff]
      %v5367 = vld [vmem:[%s11 + $0xe0] sm:$0xff]
      %v5368 = vld [vmem:[%s11 + $0xe8] sm:$0x3]
      %v5369 = vld [vmem:[%s11 + $0xf0] sm:$0xff]
      %v5370 = vld [vmem:[%s11 + $0xf8] sm:$0xff]
      %v5371 = vld [vmem:[%s11 + $0x100] sm:$0x3]
      %v5372 = vld [vmem:[%s11 + $0x108] sm:$0xff]
      %v5373 = vld [vmem:[%s11 + $0x110] sm:$0xff]
      %v5374 = vld [vmem:[%s11 + $0x118] sm:$0x3]
      %v5375 = vld [vmem:[%s11 + $0x120] sm:$0xff]
      %v5376 = vld [vmem:[%s11 + $0x128] sm:$0xff]
      %v5377 = vld [vmem:[%s11 + $0x130] sm:$0x3]
      %v5378 = vld [vmem:[%s11 + $0x138] sm:$0xff]
      %v5379 = vld [vmem:[%s11 + $0x140] sm:$0xff]
      %v5380 = vld [vmem:[%s11 + $0x148] sm:$0x3]
      %v5381 = vld [vmem:[%s11 + $0x150] sm:$0xff]
      %v5382 = vld [vmem:[%s11 + $0x158] sm:$0xff]
      %v5383 = vld [vmem:[%s11 + $0x160] sm:$0x3]
      %v5384 = vld [vmem:[%s11 + $0x168] sm:$0xff]
      %v5385 = vld [vmem:[%s11 + $0x170] sm:$0xff]
      %v5386 = vld [vmem:[%s11 + $0x178] sm:$0x3]
      %v5387 = vld [vmem:[%s11 + $0x180] sm:$0xff]
      %v5388 = vld [vmem:[%s11 + $0x188] sm:$0xff]
      %v5389 = vld [vmem:[%s11 + $0x190] sm:$0x3]
      %v5390 = vld [vmem:[%s11 + $0x198] sm:$0xff]
      %v5391 = vld [vmem:[%s11 + $0x1a0] sm:$0xff]
      %v5392 = vld [vmem:[%s11 + $0x1a8] sm:$0x3]
      %v5393 = vmul.f32 %v5285, %v5339
      %v5394 = vmul.f32 %v5286, %v5340
      %v5395 = vmul.f32 %v5287, %v5341
      %v5396 = vmul.f32 %v5288, %v5342
      %v5397 = vmul.f32 %v5289, %v5343
      %v5398 = vmul.f32 %v5290, %v5344
      %v5399 = vmul.f32 %v5291, %v5345
      %v5400 = vmul.f32 %v5292, %v5346
      %v5401 = vmul.f32 %v5293, %v5347
      %v5402 = vmul.f32 %v5294, %v5348
      %v5403 = vmul.f32 %v5295, %v5349
      %v5404 = vmul.f32 %v5296, %v5350
      %v5405 = vmul.f32 %v5297, %v5351
      %v5406 = vmul.f32 %v5298, %v5352
      %v5407 = vmul.f32 %v5299, %v5353
      %v5408 = vmul.f32 %v5300, %v5354
      %v5409 = vmul.f32 %v5301, %v5355
      %v5410 = vmul.f32 %v5302, %v5356
      %v5411 = vmul.f32 %v5303, %v5357
      %v5412 = vmul.f32 %v5304, %v5358
      %v5413 = vmul.f32 %v5305, %v5359
      %v5414 = vmul.f32 %v5306, %v5360
      %v5415 = vmul.f32 %v5307, %v5361
      %v5416 = vmul.f32 %v5308, %v5362
      %v5417 = vmul.f32 %v5309, %v5363
      %v5418 = vmul.f32 %v5310, %v5364
      %v5419 = vmul.f32 %v5311, %v5365
      %v5420 = vmul.f32 %v5312, %v5366
      %v5421 = vmul.f32 %v5313, %v5367
      %v5422 = vmul.f32 %v5314, %v5368
      %v5423 = vmul.f32 %v5315, %v5369
      %v5424 = vmul.f32 %v5316, %v5370
      %v5425 = vmul.f32 %v5317, %v5371
      %v5426 = vmul.f32 %v5318, %v5372
      %v5427 = vmul.f32 %v5319, %v5373
      %v5428 = vmul.f32 %v5320, %v5374
      %v5429 = vmul.f32 %v5321, %v5375
      %v5430 = vmul.f32 %v5322, %v5376
      %v5431 = vmul.f32 %v5323, %v5377
      %v5432 = vmul.f32 %v5324, %v5378
      %v5433 = vmul.f32 %v5325, %v5379
      %v5434 = vmul.f32 %v5326, %v5380
      %v5435 = vmul.f32 %v5327, %v5381
      %v5436 = vmul.f32 %v5328, %v5382
      %v5437 = vmul.f32 %v5329, %v5383
      %v5438 = vmul.f32 %v5330, %v5384
      %v5439 = vmul.f32 %v5331, %v5385
      %v5440 = vmul.f32 %v5332, %v5386
      %v5441 = vmul.f32 %v5333, %v5387
      %v5442 = vmul.f32 %v5334, %v5388
      %v5443 = vmul.f32 %v5335, %v5389
      %v5444 = vmul.f32 %v5336, %v5390
      %v5445 = vmul.f32 %v5337, %v5391
      %v5446 = vmul.f32 %v5338, %v5392
      %v5447 = vld [vmem:[%s5] sm:$0xff]
      %v5448 = vld [vmem:[%s5 + $0x8] sm:$0x1]
      %v5449 = vlaneseq
      %v5450 = vshrl.u32 %v5449, 7
      %v5451 = vsub.s32 0, %v5450
      %v5452 = vrot.slane %v5447, %v5451
      %v5453 = vmul.f32 %v5393, %v5452
      %v5454 = vmul.f32 %v5394, %v5452
      %v5455 = vmul.f32 %v5396, %v5452
      %v5456 = vmul.f32 %v5397, %v5452
      %v5457 = vmul.f32 %v5399, %v5452
      %v5458 = vmul.f32 %v5400, %v5452
      %v5459 = vmul.f32 %v5402, %v5452
      %v5460 = vmul.f32 %v5403, %v5452
      %v5461 = vmul.f32 %v5405, %v5452
      %v5462 = vmul.f32 %v5406, %v5452
      %v5463 = vmul.f32 %v5408, %v5452
      %v5464 = vmul.f32 %v5409, %v5452
      %v5465 = vmul.f32 %v5411, %v5452
      %v5466 = vmul.f32 %v5412, %v5452
      %v5467 = vmul.f32 %v5414, %v5452
      %v5468 = vmul.f32 %v5415, %v5452
      %v5469 = vmul.f32 %v5417, %v5452
      %v5470 = vmul.f32 %v5418, %v5452
      %v5471 = vmul.f32 %v5420, %v5452
      %v5472 = vmul.f32 %v5421, %v5452
      %v5473 = vmul.f32 %v5423, %v5452
      %v5474 = vmul.f32 %v5424, %v5452
      %v5475 = vmul.f32 %v5426, %v5452
      %v5476 = vmul.f32 %v5427, %v5452
      %v5477 = vmul.f32 %v5429, %v5452
      %v5478 = vmul.f32 %v5430, %v5452
      %v5479 = vmul.f32 %v5432, %v5452
      %v5480 = vmul.f32 %v5433, %v5452
      %v5481 = vmul.f32 %v5435, %v5452
      %v5482 = vmul.f32 %v5436, %v5452
      %v5483 = vmul.f32 %v5438, %v5452
      %v5484 = vmul.f32 %v5439, %v5452
      %v5485 = vlaneseq
      %v5486 = vshrl.u32 %v5485, 7
      %v5487 = vsub.s32 3, %v5486
      %v5488 = vrot.slane %v5447, %v5487
      %v5489 = vmul.f32 %v5396, %v5488
      %v5490 = vmul.f32 %v5397, %v5488
      %v5491 = vmul.f32 %v5399, %v5488
      %v5492 = vmul.f32 %v5400, %v5488
      %v5493 = vmul.f32 %v5402, %v5488
      %v5494 = vmul.f32 %v5403, %v5488
      %v5495 = vmul.f32 %v5405, %v5488
      %v5496 = vmul.f32 %v5406, %v5488
      %v5497 = vmul.f32 %v5408, %v5488
      %v5498 = vmul.f32 %v5409, %v5488
      %v5499 = vmul.f32 %v5411, %v5488
      %v5500 = vmul.f32 %v5412, %v5488
      %v5501 = vmul.f32 %v5414, %v5488
      %v5502 = vmul.f32 %v5415, %v5488
      %v5503 = vmul.f32 %v5417, %v5488
      %v5504 = vmul.f32 %v5418, %v5488
      %v5505 = vmul.f32 %v5420, %v5488
      %v5506 = vmul.f32 %v5421, %v5488
      %v5507 = vmul.f32 %v5423, %v5488
      %v5508 = vmul.f32 %v5424, %v5488
      %v5509 = vmul.f32 %v5426, %v5488
      %v5510 = vmul.f32 %v5427, %v5488
      %v5511 = vmul.f32 %v5429, %v5488
      %v5512 = vmul.f32 %v5430, %v5488
      %v5513 = vmul.f32 %v5432, %v5488
      %v5514 = vmul.f32 %v5433, %v5488
      %v5515 = vmul.f32 %v5435, %v5488
      %v5516 = vmul.f32 %v5436, %v5488
      %v5517 = vmul.f32 %v5438, %v5488
      %v5518 = vmul.f32 %v5439, %v5488
      %v5519 = vmul.f32 %v5441, %v5488
      %v5520 = vmul.f32 %v5442, %v5488
      %v5521 = vadd.f32 %v5453, %v5489
      %v5522 = vadd.f32 %v5454, %v5490
      %v5523 = vadd.f32 %v5455, %v5491
      %v5524 = vadd.f32 %v5456, %v5492
      %v5525 = vadd.f32 %v5457, %v5493
      %v5526 = vadd.f32 %v5458, %v5494
      %v5527 = vadd.f32 %v5459, %v5495
      %v5528 = vadd.f32 %v5460, %v5496
      %v5529 = vadd.f32 %v5461, %v5497
      %v5530 = vadd.f32 %v5462, %v5498
      %v5531 = vadd.f32 %v5463, %v5499
      %v5532 = vadd.f32 %v5464, %v5500
      %v5533 = vadd.f32 %v5465, %v5501
      %v5534 = vadd.f32 %v5466, %v5502
      %v5535 = vadd.f32 %v5467, %v5503
      %v5536 = vadd.f32 %v5468, %v5504
      %v5537 = vadd.f32 %v5469, %v5505
      %v5538 = vadd.f32 %v5470, %v5506
      %v5539 = vadd.f32 %v5471, %v5507
      %v5540 = vadd.f32 %v5472, %v5508
      %v5541 = vadd.f32 %v5473, %v5509
      %v5542 = vadd.f32 %v5474, %v5510
      %v5543 = vadd.f32 %v5475, %v5511
      %v5544 = vadd.f32 %v5476, %v5512
      %v5545 = vadd.f32 %v5477, %v5513
      %v5546 = vadd.f32 %v5478, %v5514
      %v5547 = vadd.f32 %v5479, %v5515
      %v5548 = vadd.f32 %v5480, %v5516
      %v5549 = vadd.f32 %v5481, %v5517
      %v5550 = vadd.f32 %v5482, %v5518
      %v5551 = vadd.f32 %v5483, %v5519
      %v5552 = vadd.f32 %v5484, %v5520
      %v5553 = vlaneseq
      %v5554 = vshrl.u32 %v5553, 7
      %v5555 = vsub.s32 6, %v5554
      %v5556 = vrot.slane %v5447, %v5555
      %v5557 = vmul.f32 %v5399, %v5556
      %v5558 = vmul.f32 %v5400, %v5556
      %v5559 = vmul.f32 %v5402, %v5556
      %v5560 = vmul.f32 %v5403, %v5556
      %v5561 = vmul.f32 %v5405, %v5556
      %v5562 = vmul.f32 %v5406, %v5556
      %v5563 = vmul.f32 %v5408, %v5556
      %v5564 = vmul.f32 %v5409, %v5556
      %v5565 = vmul.f32 %v5411, %v5556
      %v5566 = vmul.f32 %v5412, %v5556
      %v5567 = vmul.f32 %v5414, %v5556
      %v5568 = vmul.f32 %v5415, %v5556
      %v5569 = vmul.f32 %v5417, %v5556
      %v5570 = vmul.f32 %v5418, %v5556
      %v5571 = vmul.f32 %v5420, %v5556
      %v5572 = vmul.f32 %v5421, %v5556
      %v5573 = vmul.f32 %v5423, %v5556
      %v5574 = vmul.f32 %v5424, %v5556
      %v5575 = vmul.f32 %v5426, %v5556
      %v5576 = vmul.f32 %v5427, %v5556
      %v5577 = vmul.f32 %v5429, %v5556
      %v5578 = vmul.f32 %v5430, %v5556
      %v5579 = vmul.f32 %v5432, %v5556
      %v5580 = vmul.f32 %v5433, %v5556
      %v5581 = vmul.f32 %v5435, %v5556
      %v5582 = vmul.f32 %v5436, %v5556
      %v5583 = vmul.f32 %v5438, %v5556
      %v5584 = vmul.f32 %v5439, %v5556
      %v5585 = vmul.f32 %v5441, %v5556
      %v5586 = vmul.f32 %v5442, %v5556
      %v5587 = vmul.f32 %v5444, %v5556
      %v5588 = vmul.f32 %v5445, %v5556
      %v5589 = vadd.f32 %v5521, %v5557
      %v5590 = vadd.f32 %v5522, %v5558
      %v5591 = vadd.f32 %v5523, %v5559
      %v5592 = vadd.f32 %v5524, %v5560
      %v5593 = vadd.f32 %v5525, %v5561
      %v5594 = vadd.f32 %v5526, %v5562
      %v5595 = vadd.f32 %v5527, %v5563
      %v5596 = vadd.f32 %v5528, %v5564
      %v5597 = vadd.f32 %v5529, %v5565
      %v5598 = vadd.f32 %v5530, %v5566
      %v5599 = vadd.f32 %v5531, %v5567
      %v5600 = vadd.f32 %v5532, %v5568
      %v5601 = vadd.f32 %v5533, %v5569
      %v5602 = vadd.f32 %v5534, %v5570
      %v5603 = vadd.f32 %v5535, %v5571
      %v5604 = vadd.f32 %v5536, %v5572
      %v5605 = vadd.f32 %v5537, %v5573
      %v5606 = vadd.f32 %v5538, %v5574
      %v5607 = vadd.f32 %v5539, %v5575
      %v5608 = vadd.f32 %v5540, %v5576
      %v5609 = vadd.f32 %v5541, %v5577
      %v5610 = vadd.f32 %v5542, %v5578
      %v5611 = vadd.f32 %v5543, %v5579
      %v5612 = vadd.f32 %v5544, %v5580
      %v5613 = vadd.f32 %v5545, %v5581
      %v5614 = vadd.f32 %v5546, %v5582
      %v5615 = vadd.f32 %v5547, %v5583
      %v5616 = vadd.f32 %v5548, %v5584
      %v5617 = vadd.f32 %v5549, %v5585
      %v5618 = vadd.f32 %v5550, %v5586
      %v5619 = vadd.f32 %v5551, %v5587
      %v5620 = vadd.f32 %v5552, %v5588
      %v5621 = vlaneseq
      %v5622 = vshrl.u32 %v5621, 7
      %v5623 = vsub.s32 1, %v5622
      %v5624 = vrot.slane %v5447, %v5623
      %v5625 = vmul.f32 %v5393, %v5624
      %v5626 = vmul.f32 %v5394, %v5624
      %v5627 = vmul.f32 %v5395, %v5624
      %v5628 = vmul.f32 %v5396, %v5624
      %v5629 = vmul.f32 %v5397, %v5624
      %v5630 = vmul.f32 %v5398, %v5624
      %v5631 = vmul.f32 %v5399, %v5624
      %v5632 = vmul.f32 %v5400, %v5624
      %v5633 = vmul.f32 %v5401, %v5624
      %v5634 = vmul.f32 %v5402, %v5624
      %v5635 = vmul.f32 %v5403, %v5624
      %v5636 = vmul.f32 %v5404, %v5624
      %v5637 = vmul.f32 %v5405, %v5624
      %v5638 = vmul.f32 %v5406, %v5624
      %v5639 = vmul.f32 %v5407, %v5624
      %v5640 = vmul.f32 %v5408, %v5624
      %v5641 = vmul.f32 %v5409, %v5624
      %v5642 = vmul.f32 %v5410, %v5624
      %v5643 = vmul.f32 %v5411, %v5624
      %v5644 = vmul.f32 %v5412, %v5624
      %v5645 = vmul.f32 %v5413, %v5624
      %v5646 = vmul.f32 %v5414, %v5624
      %v5647 = vmul.f32 %v5415, %v5624
      %v5648 = vmul.f32 %v5416, %v5624
      %v5649 = vmul.f32 %v5417, %v5624
      %v5650 = vmul.f32 %v5418, %v5624
      %v5651 = vmul.f32 %v5419, %v5624
      %v5652 = vmul.f32 %v5420, %v5624
      %v5653 = vmul.f32 %v5421, %v5624
      %v5654 = vmul.f32 %v5422, %v5624
      %v5655 = vmul.f32 %v5423, %v5624
      %v5656 = vmul.f32 %v5424, %v5624
      %v5657 = vmul.f32 %v5425, %v5624
      %v5658 = vmul.f32 %v5426, %v5624
      %v5659 = vmul.f32 %v5427, %v5624
      %v5660 = vmul.f32 %v5428, %v5624
      %v5661 = vmul.f32 %v5429, %v5624
      %v5662 = vmul.f32 %v5430, %v5624
      %v5663 = vmul.f32 %v5431, %v5624
      %v5664 = vmul.f32 %v5432, %v5624
      %v5665 = vmul.f32 %v5433, %v5624
      %v5666 = vmul.f32 %v5434, %v5624
      %v5667 = vmul.f32 %v5435, %v5624
      %v5668 = vmul.f32 %v5436, %v5624
      %v5669 = vmul.f32 %v5437, %v5624
      %v5670 = vmul.f32 %v5438, %v5624
      %v5671 = vmul.f32 %v5439, %v5624
      %v5672 = vmul.f32 %v5440, %v5624
      %v5721 = vrot.slane %v5625, 1
      %v5722 = vrot.slane %v5626, 1
      %v5723 = vsel %vm1713, %v5721, %v5722
      %v5724 = vrot.slane %v5627, 1
      %v5725 = vsel %vm1713, %v5722, %v5724
      %v5726 = vrot.slane %v5628, 1
      %v5727 = vrot.slane %v5629, 1
      %v5728 = vsel %vm1713, %v5726, %v5727
      %v5729 = vrot.slane %v5630, 1
      %v5730 = vsel %vm1713, %v5727, %v5729
      %v5731 = vrot.slane %v5631, 1
      %v5732 = vrot.slane %v5632, 1
      %v5733 = vsel %vm1713, %v5731, %v5732
      %v5734 = vrot.slane %v5633, 1
      %v5735 = vsel %vm1713, %v5732, %v5734
      %v5736 = vrot.slane %v5634, 1
      %v5737 = vrot.slane %v5635, 1
      %v5738 = vsel %vm1713, %v5736, %v5737
      %v5739 = vrot.slane %v5636, 1
      %v5740 = vsel %vm1713, %v5737, %v5739
      %v5741 = vrot.slane %v5637, 1
      %v5742 = vrot.slane %v5638, 1
      %v5743 = vsel %vm1713, %v5741, %v5742
      %v5744 = vrot.slane %v5639, 1
      %v5745 = vsel %vm1713, %v5742, %v5744
      %v5746 = vrot.slane %v5640, 1
      %v5747 = vrot.slane %v5641, 1
      %v5748 = vsel %vm1713, %v5746, %v5747
      %v5749 = vrot.slane %v5642, 1
      %v5750 = vsel %vm1713, %v5747, %v5749
      %v5751 = vrot.slane %v5643, 1
      %v5752 = vrot.slane %v5644, 1
      %v5753 = vsel %vm1713, %v5751, %v5752
      %v5754 = vrot.slane %v5645, 1
      %v5755 = vsel %vm1713, %v5752, %v5754
      %v5756 = vrot.slane %v5646, 1
      %v5757 = vrot.slane %v5647, 1
      %v5758 = vsel %vm1713, %v5756, %v5757
      %v5759 = vrot.slane %v5648, 1
      %v5760 = vsel %vm1713, %v5757, %v5759
      %v5761 = vrot.slane %v5649, 1
      %v5762 = vrot.slane %v5650, 1
      %v5763 = vsel %vm1713, %v5761, %v5762
      %v5764 = vrot.slane %v5651, 1
      %v5765 = vsel %vm1713, %v5762, %v5764
      %v5766 = vrot.slane %v5652, 1
      %v5767 = vrot.slane %v5653, 1
      %v5768 = vsel %vm1713, %v5766, %v5767
      %v5769 = vrot.slane %v5654, 1
      %v5770 = vsel %vm1713, %v5767, %v5769
      %v5771 = vrot.slane %v5655, 1
      %v5772 = vrot.slane %v5656, 1
      %v5773 = vsel %vm1713, %v5771, %v5772
      %v5774 = vrot.slane %v5657, 1
      %v5775 = vsel %vm1713, %v5772, %v5774
      %v5776 = vrot.slane %v5658, 1
      %v5777 = vrot.slane %v5659, 1
      %v5778 = vsel %vm1713, %v5776, %v5777
      %v5779 = vrot.slane %v5660, 1
      %v5780 = vsel %vm1713, %v5777, %v5779
      %v5781 = vrot.slane %v5661, 1
      %v5782 = vrot.slane %v5662, 1
      %v5783 = vsel %vm1713, %v5781, %v5782
      %v5784 = vrot.slane %v5663, 1
      %v5785 = vsel %vm1713, %v5782, %v5784
      %v5786 = vrot.slane %v5664, 1
      %v5787 = vrot.slane %v5665, 1
      %v5788 = vsel %vm1713, %v5786, %v5787
      %v5789 = vrot.slane %v5666, 1
      %v5790 = vsel %vm1713, %v5787, %v5789
      %v5791 = vrot.slane %v5667, 1
      %v5792 = vrot.slane %v5668, 1
      %v5793 = vsel %vm1713, %v5791, %v5792
      %v5794 = vrot.slane %v5669, 1
      %v5795 = vsel %vm1713, %v5792, %v5794
      %v5796 = vrot.slane %v5670, 1
      %v5797 = vrot.slane %v5671, 1
      %v5798 = vsel %vm1713, %v5796, %v5797
      %v5799 = vrot.slane %v5672, 1
      %v5800 = vsel %vm1713, %v5797, %v5799
      %v5833 = vadd.f32 %v5589, %v5723
      %v5834 = vadd.f32 %v5590, %v5725
      %v5835 = vadd.f32 %v5591, %v5728
      %v5836 = vadd.f32 %v5592, %v5730
      %v5837 = vadd.f32 %v5593, %v5733
      %v5838 = vadd.f32 %v5594, %v5735
      %v5839 = vadd.f32 %v5595, %v5738
      %v5840 = vadd.f32 %v5596, %v5740
      %v5841 = vadd.f32 %v5597, %v5743
      %v5842 = vadd.f32 %v5598, %v5745
      %v5843 = vadd.f32 %v5599, %v5748
      %v5844 = vadd.f32 %v5600, %v5750
      %v5845 = vadd.f32 %v5601, %v5753
      %v5846 = vadd.f32 %v5602, %v5755
      %v5847 = vadd.f32 %v5603, %v5758
      %v5848 = vadd.f32 %v5604, %v5760
      %v5849 = vadd.f32 %v5605, %v5763
      %v5850 = vadd.f32 %v5606, %v5765
      %v5851 = vadd.f32 %v5607, %v5768
      %v5852 = vadd.f32 %v5608, %v5770
      %v5853 = vadd.f32 %v5609, %v5773
      %v5854 = vadd.f32 %v5610, %v5775
      %v5855 = vadd.f32 %v5611, %v5778
      %v5856 = vadd.f32 %v5612, %v5780
      %v5857 = vadd.f32 %v5613, %v5783
      %v5858 = vadd.f32 %v5614, %v5785
      %v5859 = vadd.f32 %v5615, %v5788
      %v5860 = vadd.f32 %v5616, %v5790
      %v5861 = vadd.f32 %v5617, %v5793
      %v5862 = vadd.f32 %v5618, %v5795
      %v5863 = vadd.f32 %v5619, %v5798
      %v5864 = vadd.f32 %v5620, %v5800
      %v5865 = vlaneseq
      %v5866 = vshrl.u32 %v5865, 7
      %v5867 = vsub.s32 4, %v5866
      %v5868 = vrot.slane %v5447, %v5867
      %v5869 = vmul.f32 %v5396, %v5868
      %v5870 = vmul.f32 %v5397, %v5868
      %v5871 = vmul.f32 %v5398, %v5868
      %v5872 = vmul.f32 %v5399, %v5868
      %v5873 = vmul.f32 %v5400, %v5868
      %v5874 = vmul.f32 %v5401, %v5868
      %v5875 = vmul.f32 %v5402, %v5868
      %v5876 = vmul.f32 %v5403, %v5868
      %v5877 = vmul.f32 %v5404, %v5868
      %v5878 = vmul.f32 %v5405, %v5868
      %v5879 = vmul.f32 %v5406, %v5868
      %v5880 = vmul.f32 %v5407, %v5868
      %v5881 = vmul.f32 %v5408, %v5868
      %v5882 = vmul.f32 %v5409, %v5868
      %v5883 = vmul.f32 %v5410, %v5868
      %v5884 = vmul.f32 %v5411, %v5868
      %v5885 = vmul.f32 %v5412, %v5868
      %v5886 = vmul.f32 %v5413, %v5868
      %v5887 = vmul.f32 %v5414, %v5868
      %v5888 = vmul.f32 %v5415, %v5868
      %v5889 = vmul.f32 %v5416, %v5868
      %v5890 = vmul.f32 %v5417, %v5868
      %v5891 = vmul.f32 %v5418, %v5868
      %v5892 = vmul.f32 %v5419, %v5868
      %v5893 = vmul.f32 %v5420, %v5868
      %v5894 = vmul.f32 %v5421, %v5868
      %v5895 = vmul.f32 %v5422, %v5868
      %v5896 = vmul.f32 %v5423, %v5868
      %v5897 = vmul.f32 %v5424, %v5868
      %v5898 = vmul.f32 %v5425, %v5868
      %v5899 = vmul.f32 %v5426, %v5868
      %v5900 = vmul.f32 %v5427, %v5868
      %v5901 = vmul.f32 %v5428, %v5868
      %v5902 = vmul.f32 %v5429, %v5868
      %v5903 = vmul.f32 %v5430, %v5868
      %v5904 = vmul.f32 %v5431, %v5868
      %v5905 = vmul.f32 %v5432, %v5868
      %v5906 = vmul.f32 %v5433, %v5868
      %v5907 = vmul.f32 %v5434, %v5868
      %v5908 = vmul.f32 %v5435, %v5868
      %v5909 = vmul.f32 %v5436, %v5868
      %v5910 = vmul.f32 %v5437, %v5868
      %v5911 = vmul.f32 %v5438, %v5868
      %v5912 = vmul.f32 %v5439, %v5868
      %v5913 = vmul.f32 %v5440, %v5868
      %v5914 = vmul.f32 %v5441, %v5868
      %v5915 = vmul.f32 %v5442, %v5868
      %v5916 = vmul.f32 %v5443, %v5868
      %v5965 = vrot.slane %v5869, 1
      %v5966 = vrot.slane %v5870, 1
      %v5967 = vsel %vm1713, %v5965, %v5966
      %v5968 = vrot.slane %v5871, 1
      %v5969 = vsel %vm1713, %v5966, %v5968
      %v5970 = vrot.slane %v5872, 1
      %v5971 = vrot.slane %v5873, 1
      %v5972 = vsel %vm1713, %v5970, %v5971
      %v5973 = vrot.slane %v5874, 1
      %v5974 = vsel %vm1713, %v5971, %v5973
      %v5975 = vrot.slane %v5875, 1
      %v5976 = vrot.slane %v5876, 1
      %v5977 = vsel %vm1713, %v5975, %v5976
      %v5978 = vrot.slane %v5877, 1
      %v5979 = vsel %vm1713, %v5976, %v5978
      %v5980 = vrot.slane %v5878, 1
      %v5981 = vrot.slane %v5879, 1
      %v5982 = vsel %vm1713, %v5980, %v5981
      %v5983 = vrot.slane %v5880, 1
      %v5984 = vsel %vm1713, %v5981, %v5983
      %v5985 = vrot.slane %v5881, 1
      %v5986 = vrot.slane %v5882, 1
      %v5987 = vsel %vm1713, %v5985, %v5986
      %v5988 = vrot.slane %v5883, 1
      %v5989 = vsel %vm1713, %v5986, %v5988
      %v5990 = vrot.slane %v5884, 1
      %v5991 = vrot.slane %v5885, 1
      %v5992 = vsel %vm1713, %v5990, %v5991
      %v5993 = vrot.slane %v5886, 1
      %v5994 = vsel %vm1713, %v5991, %v5993
      %v5995 = vrot.slane %v5887, 1
      %v5996 = vrot.slane %v5888, 1
      %v5997 = vsel %vm1713, %v5995, %v5996
      %v5998 = vrot.slane %v5889, 1
      %v5999 = vsel %vm1713, %v5996, %v5998
      %v6000 = vrot.slane %v5890, 1
      %v6001 = vrot.slane %v5891, 1
      %v6002 = vsel %vm1713, %v6000, %v6001
      %v6003 = vrot.slane %v5892, 1
      %v6004 = vsel %vm1713, %v6001, %v6003
      %v6005 = vrot.slane %v5893, 1
      %v6006 = vrot.slane %v5894, 1
      %v6007 = vsel %vm1713, %v6005, %v6006
      %v6008 = vrot.slane %v5895, 1
      %v6009 = vsel %vm1713, %v6006, %v6008
      %v6010 = vrot.slane %v5896, 1
      %v6011 = vrot.slane %v5897, 1
      %v6012 = vsel %vm1713, %v6010, %v6011
      %v6013 = vrot.slane %v5898, 1
      %v6014 = vsel %vm1713, %v6011, %v6013
      %v6015 = vrot.slane %v5899, 1
      %v6016 = vrot.slane %v5900, 1
      %v6017 = vsel %vm1713, %v6015, %v6016
      %v6018 = vrot.slane %v5901, 1
      %v6019 = vsel %vm1713, %v6016, %v6018
      %v6020 = vrot.slane %v5902, 1
      %v6021 = vrot.slane %v5903, 1
      %v6022 = vsel %vm1713, %v6020, %v6021
      %v6023 = vrot.slane %v5904, 1
      %v6024 = vsel %vm1713, %v6021, %v6023
      %v6025 = vrot.slane %v5905, 1
      %v6026 = vrot.slane %v5906, 1
      %v6027 = vsel %vm1713, %v6025, %v6026
      %v6028 = vrot.slane %v5907, 1
      %v6029 = vsel %vm1713, %v6026, %v6028
      %v6030 = vrot.slane %v5908, 1
      %v6031 = vrot.slane %v5909, 1
      %v6032 = vsel %vm1713, %v6030, %v6031
      %v6033 = vrot.slane %v5910, 1
      %v6034 = vsel %vm1713, %v6031, %v6033
      %v6035 = vrot.slane %v5911, 1
      %v6036 = vrot.slane %v5912, 1
      %v6037 = vsel %vm1713, %v6035, %v6036
      %v6038 = vrot.slane %v5913, 1
      %v6039 = vsel %vm1713, %v6036, %v6038
      %v6040 = vrot.slane %v5914, 1
      %v6041 = vrot.slane %v5915, 1
      %v6042 = vsel %vm1713, %v6040, %v6041
      %v6043 = vrot.slane %v5916, 1
      %v6044 = vsel %vm1713, %v6041, %v6043
      %v6077 = vadd.f32 %v5833, %v5967
      %v6078 = vadd.f32 %v5834, %v5969
      %v6079 = vadd.f32 %v5835, %v5972
      %v6080 = vadd.f32 %v5836, %v5974
      %v6081 = vadd.f32 %v5837, %v5977
      %v6082 = vadd.f32 %v5838, %v5979
      %v6083 = vadd.f32 %v5839, %v5982
      %v6084 = vadd.f32 %v5840, %v5984
      %v6085 = vadd.f32 %v5841, %v5987
      %v6086 = vadd.f32 %v5842, %v5989
      %v6087 = vadd.f32 %v5843, %v5992
      %v6088 = vadd.f32 %v5844, %v5994
      %v6089 = vadd.f32 %v5845, %v5997
      %v6090 = vadd.f32 %v5846, %v5999
      %v6091 = vadd.f32 %v5847, %v6002
      %v6092 = vadd.f32 %v5848, %v6004
      %v6093 = vadd.f32 %v5849, %v6007
      %v6094 = vadd.f32 %v5850, %v6009
      %v6095 = vadd.f32 %v5851, %v6012
      %v6096 = vadd.f32 %v5852, %v6014
      %v6097 = vadd.f32 %v5853, %v6017
      %v6098 = vadd.f32 %v5854, %v6019
      %v6099 = vadd.f32 %v5855, %v6022
      %v6100 = vadd.f32 %v5856, %v6024
      %v6101 = vadd.f32 %v5857, %v6027
      %v6102 = vadd.f32 %v5858, %v6029
      %v6103 = vadd.f32 %v5859, %v6032
      %v6104 = vadd.f32 %v5860, %v6034
      %v6105 = vadd.f32 %v5861, %v6037
      %v6106 = vadd.f32 %v5862, %v6039
      %v6107 = vadd.f32 %v5863, %v6042
      %v6108 = vadd.f32 %v5864, %v6044
      %v6109 = vlaneseq
      %v6110 = vshrl.u32 %v6109, 7
      %v6111 = vsub.s32 7, %v6110
      %v6112 = vrot.slane %v5447, %v6111
      %v6113 = vmul.f32 %v5399, %v6112
      %v6114 = vmul.f32 %v5400, %v6112
      %v6115 = vmul.f32 %v5401, %v6112
      %v6116 = vmul.f32 %v5402, %v6112
      %v6117 = vmul.f32 %v5403, %v6112
      %v6118 = vmul.f32 %v5404, %v6112
      %v6119 = vmul.f32 %v5405, %v6112
      %v6120 = vmul.f32 %v5406, %v6112
      %v6121 = vmul.f32 %v5407, %v6112
      %v6122 = vmul.f32 %v5408, %v6112
      %v6123 = vmul.f32 %v5409, %v6112
      %v6124 = vmul.f32 %v5410, %v6112
      %v6125 = vmul.f32 %v5411, %v6112
      %v6126 = vmul.f32 %v5412, %v6112
      %v6127 = vmul.f32 %v5413, %v6112
      %v6128 = vmul.f32 %v5414, %v6112
      %v6129 = vmul.f32 %v5415, %v6112
      %v6130 = vmul.f32 %v5416, %v6112
      %v6131 = vmul.f32 %v5417, %v6112
      %v6132 = vmul.f32 %v5418, %v6112
      %v6133 = vmul.f32 %v5419, %v6112
      %v6134 = vmul.f32 %v5420, %v6112
      %v6135 = vmul.f32 %v5421, %v6112
      %v6136 = vmul.f32 %v5422, %v6112
      %v6137 = vmul.f32 %v5423, %v6112
      %v6138 = vmul.f32 %v5424, %v6112
      %v6139 = vmul.f32 %v5425, %v6112
      %v6140 = vmul.f32 %v5426, %v6112
      %v6141 = vmul.f32 %v5427, %v6112
      %v6142 = vmul.f32 %v5428, %v6112
      %v6143 = vmul.f32 %v5429, %v6112
      %v6144 = vmul.f32 %v5430, %v6112
      %v6145 = vmul.f32 %v5431, %v6112
      %v6146 = vmul.f32 %v5432, %v6112
      %v6147 = vmul.f32 %v5433, %v6112
      %v6148 = vmul.f32 %v5434, %v6112
      %v6149 = vmul.f32 %v5435, %v6112
      %v6150 = vmul.f32 %v5436, %v6112
      %v6151 = vmul.f32 %v5437, %v6112
      %v6152 = vmul.f32 %v5438, %v6112
      %v6153 = vmul.f32 %v5439, %v6112
      %v6154 = vmul.f32 %v5440, %v6112
      %v6155 = vmul.f32 %v5441, %v6112
      %v6156 = vmul.f32 %v5442, %v6112
      %v6157 = vmul.f32 %v5443, %v6112
      %v6158 = vmul.f32 %v5444, %v6112
      %v6159 = vmul.f32 %v5445, %v6112
      %v6160 = vmul.f32 %v5446, %v6112
      %v6209 = vrot.slane %v6113, 1
      %v6210 = vrot.slane %v6114, 1
      %v6211 = vsel %vm1713, %v6209, %v6210
      %v6212 = vrot.slane %v6115, 1
      %v6213 = vsel %vm1713, %v6210, %v6212
      %v6214 = vrot.slane %v6116, 1
      %v6215 = vrot.slane %v6117, 1
      %v6216 = vsel %vm1713, %v6214, %v6215
      %v6217 = vrot.slane %v6118, 1
      %v6218 = vsel %vm1713, %v6215, %v6217
      %v6219 = vrot.slane %v6119, 1
      %v6220 = vrot.slane %v6120, 1
      %v6221 = vsel %vm1713, %v6219, %v6220
      %v6222 = vrot.slane %v6121, 1
      %v6223 = vsel %vm1713, %v6220, %v6222
      %v6224 = vrot.slane %v6122, 1
      %v6225 = vrot.slane %v6123, 1
      %v6226 = vsel %vm1713, %v6224, %v6225
      %v6227 = vrot.slane %v6124, 1
      %v6228 = vsel %vm1713, %v6225, %v6227
      %v6229 = vrot.slane %v6125, 1
      %v6230 = vrot.slane %v6126, 1
      %v6231 = vsel %vm1713, %v6229, %v6230
      %v6232 = vrot.slane %v6127, 1
      %v6233 = vsel %vm1713, %v6230, %v6232
      %v6234 = vrot.slane %v6128, 1
      %v6235 = vrot.slane %v6129, 1
      %v6236 = vsel %vm1713, %v6234, %v6235
      %v6237 = vrot.slane %v6130, 1
      %v6238 = vsel %vm1713, %v6235, %v6237
      %v6239 = vrot.slane %v6131, 1
      %v6240 = vrot.slane %v6132, 1
      %v6241 = vsel %vm1713, %v6239, %v6240
      %v6242 = vrot.slane %v6133, 1
      %v6243 = vsel %vm1713, %v6240, %v6242
      %v6244 = vrot.slane %v6134, 1
      %v6245 = vrot.slane %v6135, 1
      %v6246 = vsel %vm1713, %v6244, %v6245
      %v6247 = vrot.slane %v6136, 1
      %v6248 = vsel %vm1713, %v6245, %v6247
      %v6249 = vrot.slane %v6137, 1
      %v6250 = vrot.slane %v6138, 1
      %v6251 = vsel %vm1713, %v6249, %v6250
      %v6252 = vrot.slane %v6139, 1
      %v6253 = vsel %vm1713, %v6250, %v6252
      %v6254 = vrot.slane %v6140, 1
      %v6255 = vrot.slane %v6141, 1
      %v6256 = vsel %vm1713, %v6254, %v6255
      %v6257 = vrot.slane %v6142, 1
      %v6258 = vsel %vm1713, %v6255, %v6257
      %v6259 = vrot.slane %v6143, 1
      %v6260 = vrot.slane %v6144, 1
      %v6261 = vsel %vm1713, %v6259, %v6260
      %v6262 = vrot.slane %v6145, 1
      %v6263 = vsel %vm1713, %v6260, %v6262
      %v6264 = vrot.slane %v6146, 1
      %v6265 = vrot.slane %v6147, 1
      %v6266 = vsel %vm1713, %v6264, %v6265
      %v6267 = vrot.slane %v6148, 1
      %v6268 = vsel %vm1713, %v6265, %v6267
      %v6269 = vrot.slane %v6149, 1
      %v6270 = vrot.slane %v6150, 1
      %v6271 = vsel %vm1713, %v6269, %v6270
      %v6272 = vrot.slane %v6151, 1
      %v6273 = vsel %vm1713, %v6270, %v6272
      %v6274 = vrot.slane %v6152, 1
      %v6275 = vrot.slane %v6153, 1
      %v6276 = vsel %vm1713, %v6274, %v6275
      %v6277 = vrot.slane %v6154, 1
      %v6278 = vsel %vm1713, %v6275, %v6277
      %v6279 = vrot.slane %v6155, 1
      %v6280 = vrot.slane %v6156, 1
      %v6281 = vsel %vm1713, %v6279, %v6280
      %v6282 = vrot.slane %v6157, 1
      %v6283 = vsel %vm1713, %v6280, %v6282
      %v6284 = vrot.slane %v6158, 1
      %v6285 = vrot.slane %v6159, 1
      %v6286 = vsel %vm1713, %v6284, %v6285
      %v6287 = vrot.slane %v6160, 1
      %v6288 = vsel %vm1713, %v6285, %v6287
      %v6321 = vadd.f32 %v6077, %v6211
      %v6322 = vadd.f32 %v6078, %v6213
      %v6323 = vadd.f32 %v6079, %v6216
      %v6324 = vadd.f32 %v6080, %v6218
      %v6325 = vadd.f32 %v6081, %v6221
      %v6326 = vadd.f32 %v6082, %v6223
      %v6327 = vadd.f32 %v6083, %v6226
      %v6328 = vadd.f32 %v6084, %v6228
      %v6329 = vadd.f32 %v6085, %v6231
      %v6330 = vadd.f32 %v6086, %v6233
      %v6331 = vadd.f32 %v6087, %v6236
      %v6332 = vadd.f32 %v6088, %v6238
      %v6333 = vadd.f32 %v6089, %v6241
      %v6334 = vadd.f32 %v6090, %v6243
      %v6335 = vadd.f32 %v6091, %v6246
      %v6336 = vadd.f32 %v6092, %v6248
      %v6337 = vadd.f32 %v6093, %v6251
      %v6338 = vadd.f32 %v6094, %v6253
      %v6339 = vadd.f32 %v6095, %v6256
      %v6340 = vadd.f32 %v6096, %v6258
      %v6341 = vadd.f32 %v6097, %v6261
      %v6342 = vadd.f32 %v6098, %v6263
      %v6343 = vadd.f32 %v6099, %v6266
      %v6344 = vadd.f32 %v6100, %v6268
      %v6345 = vadd.f32 %v6101, %v6271
      %v6346 = vadd.f32 %v6102, %v6273
      %v6347 = vadd.f32 %v6103, %v6276
      %v6348 = vadd.f32 %v6104, %v6278
      %v6349 = vadd.f32 %v6105, %v6281
      %v6350 = vadd.f32 %v6106, %v6283
      %v6351 = vadd.f32 %v6107, %v6286
      %v6352 = vadd.f32 %v6108, %v6288
      %v6353 = vlaneseq
      %v6354 = vshrl.u32 %v6353, 7
      %v6355 = vsub.s32 2, %v6354
      %v6356 = vrot.slane %v5447, %v6355
      %v6357 = vmul.f32 %v5393, %v6356
      %v6358 = vmul.f32 %v5394, %v6356
      %v6359 = vmul.f32 %v5395, %v6356
      %v6360 = vmul.f32 %v5396, %v6356
      %v6361 = vmul.f32 %v5397, %v6356
      %v6362 = vmul.f32 %v5398, %v6356
      %v6363 = vmul.f32 %v5399, %v6356
      %v6364 = vmul.f32 %v5400, %v6356
      %v6365 = vmul.f32 %v5401, %v6356
      %v6366 = vmul.f32 %v5402, %v6356
      %v6367 = vmul.f32 %v5403, %v6356
      %v6368 = vmul.f32 %v5404, %v6356
      %v6369 = vmul.f32 %v5405, %v6356
      %v6370 = vmul.f32 %v5406, %v6356
      %v6371 = vmul.f32 %v5407, %v6356
      %v6372 = vmul.f32 %v5408, %v6356
      %v6373 = vmul.f32 %v5409, %v6356
      %v6374 = vmul.f32 %v5410, %v6356
      %v6375 = vmul.f32 %v5411, %v6356
      %v6376 = vmul.f32 %v5412, %v6356
      %v6377 = vmul.f32 %v5413, %v6356
      %v6378 = vmul.f32 %v5414, %v6356
      %v6379 = vmul.f32 %v5415, %v6356
      %v6380 = vmul.f32 %v5416, %v6356
      %v6381 = vmul.f32 %v5417, %v6356
      %v6382 = vmul.f32 %v5418, %v6356
      %v6383 = vmul.f32 %v5419, %v6356
      %v6384 = vmul.f32 %v5420, %v6356
      %v6385 = vmul.f32 %v5421, %v6356
      %v6386 = vmul.f32 %v5422, %v6356
      %v6387 = vmul.f32 %v5423, %v6356
      %v6388 = vmul.f32 %v5424, %v6356
      %v6389 = vmul.f32 %v5425, %v6356
      %v6390 = vmul.f32 %v5426, %v6356
      %v6391 = vmul.f32 %v5427, %v6356
      %v6392 = vmul.f32 %v5428, %v6356
      %v6393 = vmul.f32 %v5429, %v6356
      %v6394 = vmul.f32 %v5430, %v6356
      %v6395 = vmul.f32 %v5431, %v6356
      %v6396 = vmul.f32 %v5432, %v6356
      %v6397 = vmul.f32 %v5433, %v6356
      %v6398 = vmul.f32 %v5434, %v6356
      %v6399 = vmul.f32 %v5435, %v6356
      %v6400 = vmul.f32 %v5436, %v6356
      %v6401 = vmul.f32 %v5437, %v6356
      %v6402 = vmul.f32 %v5438, %v6356
      %v6403 = vmul.f32 %v5439, %v6356
      %v6404 = vmul.f32 %v5440, %v6356
      %v6453 = vrot.slane %v6357, 2
      %v6454 = vrot.slane %v6358, 2
      %v6455 = vsel %vm1188, %v6453, %v6454
      %v6456 = vrot.slane %v6359, 2
      %v6457 = vsel %vm1188, %v6454, %v6456
      %v6458 = vrot.slane %v6360, 2
      %v6459 = vrot.slane %v6361, 2
      %v6460 = vsel %vm1188, %v6458, %v6459
      %v6461 = vrot.slane %v6362, 2
      %v6462 = vsel %vm1188, %v6459, %v6461
      %v6463 = vrot.slane %v6363, 2
      %v6464 = vrot.slane %v6364, 2
      %v6465 = vsel %vm1188, %v6463, %v6464
      %v6466 = vrot.slane %v6365, 2
      %v6467 = vsel %vm1188, %v6464, %v6466
      %v6468 = vrot.slane %v6366, 2
      %v6469 = vrot.slane %v6367, 2
      %v6470 = vsel %vm1188, %v6468, %v6469
      %v6471 = vrot.slane %v6368, 2
      %v6472 = vsel %vm1188, %v6469, %v6471
      %v6473 = vrot.slane %v6369, 2
      %v6474 = vrot.slane %v6370, 2
      %v6475 = vsel %vm1188, %v6473, %v6474
      %v6476 = vrot.slane %v6371, 2
      %v6477 = vsel %vm1188, %v6474, %v6476
      %v6478 = vrot.slane %v6372, 2
      %v6479 = vrot.slane %v6373, 2
      %v6480 = vsel %vm1188, %v6478, %v6479
      %v6481 = vrot.slane %v6374, 2
      %v6482 = vsel %vm1188, %v6479, %v6481
      %v6483 = vrot.slane %v6375, 2
      %v6484 = vrot.slane %v6376, 2
      %v6485 = vsel %vm1188, %v6483, %v6484
      %v6486 = vrot.slane %v6377, 2
      %v6487 = vsel %vm1188, %v6484, %v6486
      %v6488 = vrot.slane %v6378, 2
      %v6489 = vrot.slane %v6379, 2
      %v6490 = vsel %vm1188, %v6488, %v6489
      %v6491 = vrot.slane %v6380, 2
      %v6492 = vsel %vm1188, %v6489, %v6491
      %v6493 = vrot.slane %v6381, 2
      %v6494 = vrot.slane %v6382, 2
      %v6495 = vsel %vm1188, %v6493, %v6494
      %v6496 = vrot.slane %v6383, 2
      %v6497 = vsel %vm1188, %v6494, %v6496
      %v6498 = vrot.slane %v6384, 2
      %v6499 = vrot.slane %v6385, 2
      %v6500 = vsel %vm1188, %v6498, %v6499
      %v6501 = vrot.slane %v6386, 2
      %v6502 = vsel %vm1188, %v6499, %v6501
      %v6503 = vrot.slane %v6387, 2
      %v6504 = vrot.slane %v6388, 2
      %v6505 = vsel %vm1188, %v6503, %v6504
      %v6506 = vrot.slane %v6389, 2
      %v6507 = vsel %vm1188, %v6504, %v6506
      %v6508 = vrot.slane %v6390, 2
      %v6509 = vrot.slane %v6391, 2
      %v6510 = vsel %vm1188, %v6508, %v6509
      %v6511 = vrot.slane %v6392, 2
      %v6512 = vsel %vm1188, %v6509, %v6511
      %v6513 = vrot.slane %v6393, 2
      %v6514 = vrot.slane %v6394, 2
      %v6515 = vsel %vm1188, %v6513, %v6514
      %v6516 = vrot.slane %v6395, 2
      %v6517 = vsel %vm1188, %v6514, %v6516
      %v6518 = vrot.slane %v6396, 2
      %v6519 = vrot.slane %v6397, 2
      %v6520 = vsel %vm1188, %v6518, %v6519
      %v6521 = vrot.slane %v6398, 2
      %v6522 = vsel %vm1188, %v6519, %v6521
      %v6523 = vrot.slane %v6399, 2
      %v6524 = vrot.slane %v6400, 2
      %v6525 = vsel %vm1188, %v6523, %v6524
      %v6526 = vrot.slane %v6401, 2
      %v6527 = vsel %vm1188, %v6524, %v6526
      %v6528 = vrot.slane %v6402, 2
      %v6529 = vrot.slane %v6403, 2
      %v6530 = vsel %vm1188, %v6528, %v6529
      %v6531 = vrot.slane %v6404, 2
      %v6532 = vsel %vm1188, %v6529, %v6531
      %v6565 = vadd.f32 %v6321, %v6455
      %v6566 = vadd.f32 %v6322, %v6457
      %v6567 = vadd.f32 %v6323, %v6460
      %v6568 = vadd.f32 %v6324, %v6462
      %v6569 = vadd.f32 %v6325, %v6465
      %v6570 = vadd.f32 %v6326, %v6467
      %v6571 = vadd.f32 %v6327, %v6470
      %v6572 = vadd.f32 %v6328, %v6472
      %v6573 = vadd.f32 %v6329, %v6475
      %v6574 = vadd.f32 %v6330, %v6477
      %v6575 = vadd.f32 %v6331, %v6480
      %v6576 = vadd.f32 %v6332, %v6482
      %v6577 = vadd.f32 %v6333, %v6485
      %v6578 = vadd.f32 %v6334, %v6487
      %v6579 = vadd.f32 %v6335, %v6490
      %v6580 = vadd.f32 %v6336, %v6492
      %v6581 = vadd.f32 %v6337, %v6495
      %v6582 = vadd.f32 %v6338, %v6497
      %v6583 = vadd.f32 %v6339, %v6500
      %v6584 = vadd.f32 %v6340, %v6502
      %v6585 = vadd.f32 %v6341, %v6505
      %v6586 = vadd.f32 %v6342, %v6507
      %v6587 = vadd.f32 %v6343, %v6510
      %v6588 = vadd.f32 %v6344, %v6512
      %v6589 = vadd.f32 %v6345, %v6515
      %v6590 = vadd.f32 %v6346, %v6517
      %v6591 = vadd.f32 %v6347, %v6520
      %v6592 = vadd.f32 %v6348, %v6522
      %v6593 = vadd.f32 %v6349, %v6525
      %v6594 = vadd.f32 %v6350, %v6527
      %v6595 = vadd.f32 %v6351, %v6530
      %v6596 = vadd.f32 %v6352, %v6532
      %v6597 = vlaneseq
      %v6598 = vshrl.u32 %v6597, 7
      %v6599 = vsub.s32 5, %v6598
      %v6600 = vrot.slane %v5447, %v6599
      %v6601 = vmul.f32 %v5396, %v6600
      %v6602 = vmul.f32 %v5397, %v6600
      %v6603 = vmul.f32 %v5398, %v6600
      %v6604 = vmul.f32 %v5399, %v6600
      %v6605 = vmul.f32 %v5400, %v6600
      %v6606 = vmul.f32 %v5401, %v6600
      %v6607 = vmul.f32 %v5402, %v6600
      %v6608 = vmul.f32 %v5403, %v6600
      %v6609 = vmul.f32 %v5404, %v6600
      %v6610 = vmul.f32 %v5405, %v6600
      %v6611 = vmul.f32 %v5406, %v6600
      %v6612 = vmul.f32 %v5407, %v6600
      %v6613 = vmul.f32 %v5408, %v6600
      %v6614 = vmul.f32 %v5409, %v6600
      %v6615 = vmul.f32 %v5410, %v6600
      %v6616 = vmul.f32 %v5411, %v6600
      %v6617 = vmul.f32 %v5412, %v6600
      %v6618 = vmul.f32 %v5413, %v6600
      %v6619 = vmul.f32 %v5414, %v6600
      %v6620 = vmul.f32 %v5415, %v6600
      %v6621 = vmul.f32 %v5416, %v6600
      %v6622 = vmul.f32 %v5417, %v6600
      %v6623 = vmul.f32 %v5418, %v6600
      %v6624 = vmul.f32 %v5419, %v6600
      %v6625 = vmul.f32 %v5420, %v6600
      %v6626 = vmul.f32 %v5421, %v6600
      %v6627 = vmul.f32 %v5422, %v6600
      %v6628 = vmul.f32 %v5423, %v6600
      %v6629 = vmul.f32 %v5424, %v6600
      %v6630 = vmul.f32 %v5425, %v6600
      %v6631 = vmul.f32 %v5426, %v6600
      %v6632 = vmul.f32 %v5427, %v6600
      %v6633 = vmul.f32 %v5428, %v6600
      %v6634 = vmul.f32 %v5429, %v6600
      %v6635 = vmul.f32 %v5430, %v6600
      %v6636 = vmul.f32 %v5431, %v6600
      %v6637 = vmul.f32 %v5432, %v6600
      %v6638 = vmul.f32 %v5433, %v6600
      %v6639 = vmul.f32 %v5434, %v6600
      %v6640 = vmul.f32 %v5435, %v6600
      %v6641 = vmul.f32 %v5436, %v6600
      %v6642 = vmul.f32 %v5437, %v6600
      %v6643 = vmul.f32 %v5438, %v6600
      %v6644 = vmul.f32 %v5439, %v6600
      %v6645 = vmul.f32 %v5440, %v6600
      %v6646 = vmul.f32 %v5441, %v6600
      %v6647 = vmul.f32 %v5442, %v6600
      %v6648 = vmul.f32 %v5443, %v6600
      %v6697 = vrot.slane %v6601, 2
      %v6698 = vrot.slane %v6602, 2
      %v6699 = vsel %vm1188, %v6697, %v6698
      %v6700 = vrot.slane %v6603, 2
      %v6701 = vsel %vm1188, %v6698, %v6700
      %v6702 = vrot.slane %v6604, 2
      %v6703 = vrot.slane %v6605, 2
      %v6704 = vsel %vm1188, %v6702, %v6703
      %v6705 = vrot.slane %v6606, 2
      %v6706 = vsel %vm1188, %v6703, %v6705
      %v6707 = vrot.slane %v6607, 2
      %v6708 = vrot.slane %v6608, 2
      %v6709 = vsel %vm1188, %v6707, %v6708
      %v6710 = vrot.slane %v6609, 2
      %v6711 = vsel %vm1188, %v6708, %v6710
      %v6712 = vrot.slane %v6610, 2
      %v6713 = vrot.slane %v6611, 2
      %v6714 = vsel %vm1188, %v6712, %v6713
      %v6715 = vrot.slane %v6612, 2
      %v6716 = vsel %vm1188, %v6713, %v6715
      %v6717 = vrot.slane %v6613, 2
      %v6718 = vrot.slane %v6614, 2
      %v6719 = vsel %vm1188, %v6717, %v6718
      %v6720 = vrot.slane %v6615, 2
      %v6721 = vsel %vm1188, %v6718, %v6720
      %v6722 = vrot.slane %v6616, 2
      %v6723 = vrot.slane %v6617, 2
      %v6724 = vsel %vm1188, %v6722, %v6723
      %v6725 = vrot.slane %v6618, 2
      %v6726 = vsel %vm1188, %v6723, %v6725
      %v6727 = vrot.slane %v6619, 2
      %v6728 = vrot.slane %v6620, 2
      %v6729 = vsel %vm1188, %v6727, %v6728
      %v6730 = vrot.slane %v6621, 2
      %v6731 = vsel %vm1188, %v6728, %v6730
      %v6732 = vrot.slane %v6622, 2
      %v6733 = vrot.slane %v6623, 2
      %v6734 = vsel %vm1188, %v6732, %v6733
      %v6735 = vrot.slane %v6624, 2
      %v6736 = vsel %vm1188, %v6733, %v6735
      %v6737 = vrot.slane %v6625, 2
      %v6738 = vrot.slane %v6626, 2
      %v6739 = vsel %vm1188, %v6737, %v6738
      %v6740 = vrot.slane %v6627, 2
      %v6741 = vsel %vm1188, %v6738, %v6740
      %v6742 = vrot.slane %v6628, 2
      %v6743 = vrot.slane %v6629, 2
      %v6744 = vsel %vm1188, %v6742, %v6743
      %v6745 = vrot.slane %v6630, 2
      %v6746 = vsel %vm1188, %v6743, %v6745
      %v6747 = vrot.slane %v6631, 2
      %v6748 = vrot.slane %v6632, 2
      %v6749 = vsel %vm1188, %v6747, %v6748
      %v6750 = vrot.slane %v6633, 2
      %v6751 = vsel %vm1188, %v6748, %v6750
      %v6752 = vrot.slane %v6634, 2
      %v6753 = vrot.slane %v6635, 2
      %v6754 = vsel %vm1188, %v6752, %v6753
      %v6755 = vrot.slane %v6636, 2
      %v6756 = vsel %vm1188, %v6753, %v6755
      %v6757 = vrot.slane %v6637, 2
      %v6758 = vrot.slane %v6638, 2
      %v6759 = vsel %vm1188, %v6757, %v6758
      %v6760 = vrot.slane %v6639, 2
      %v6761 = vsel %vm1188, %v6758, %v6760
      %v6762 = vrot.slane %v6640, 2
      %v6763 = vrot.slane %v6641, 2
      %v6764 = vsel %vm1188, %v6762, %v6763
      %v6765 = vrot.slane %v6642, 2
      %v6766 = vsel %vm1188, %v6763, %v6765
      %v6767 = vrot.slane %v6643, 2
      %v6768 = vrot.slane %v6644, 2
      %v6769 = vsel %vm1188, %v6767, %v6768
      %v6770 = vrot.slane %v6645, 2
      %v6771 = vsel %vm1188, %v6768, %v6770
      %v6772 = vrot.slane %v6646, 2
      %v6773 = vrot.slane %v6647, 2
      %v6774 = vsel %vm1188, %v6772, %v6773
      %v6775 = vrot.slane %v6648, 2
      %v6776 = vsel %vm1188, %v6773, %v6775
      %v6809 = vadd.f32 %v6565, %v6699
      %v6810 = vadd.f32 %v6566, %v6701
      %v6811 = vadd.f32 %v6567, %v6704
      %v6812 = vadd.f32 %v6568, %v6706
      %v6813 = vadd.f32 %v6569, %v6709
      %v6814 = vadd.f32 %v6570, %v6711
      %v6815 = vadd.f32 %v6571, %v6714
      %v6816 = vadd.f32 %v6572, %v6716
      %v6817 = vadd.f32 %v6573, %v6719
      %v6818 = vadd.f32 %v6574, %v6721
      %v6819 = vadd.f32 %v6575, %v6724
      %v6820 = vadd.f32 %v6576, %v6726
      %v6821 = vadd.f32 %v6577, %v6729
      %v6822 = vadd.f32 %v6578, %v6731
      %v6823 = vadd.f32 %v6579, %v6734
      %v6824 = vadd.f32 %v6580, %v6736
      %v6825 = vadd.f32 %v6581, %v6739
      %v6826 = vadd.f32 %v6582, %v6741
      %v6827 = vadd.f32 %v6583, %v6744
      %v6828 = vadd.f32 %v6584, %v6746
      %v6829 = vadd.f32 %v6585, %v6749
      %v6830 = vadd.f32 %v6586, %v6751
      %v6831 = vadd.f32 %v6587, %v6754
      %v6832 = vadd.f32 %v6588, %v6756
      %v6833 = vadd.f32 %v6589, %v6759
      %v6834 = vadd.f32 %v6590, %v6761
      %v6835 = vadd.f32 %v6591, %v6764
      %v6836 = vadd.f32 %v6592, %v6766
      %v6837 = vadd.f32 %v6593, %v6769
      %v6838 = vadd.f32 %v6594, %v6771
      %v6839 = vadd.f32 %v6595, %v6774
      %v6840 = vadd.f32 %v6596, %v6776
      %v6841 = vlaneseq
      %v6842 = vshrl.u32 %v6841, 7
      %v6843 = vsub.s32 0, %v6842
      %v6844 = vrot.slane %v5448, %v6843
      %v6845 = vmul.f32 %v5399, %v6844
      %v6846 = vmul.f32 %v5400, %v6844
      %v6847 = vmul.f32 %v5401, %v6844
      %v6848 = vmul.f32 %v5402, %v6844
      %v6849 = vmul.f32 %v5403, %v6844
      %v6850 = vmul.f32 %v5404, %v6844
      %v6851 = vmul.f32 %v5405, %v6844
      %v6852 = vmul.f32 %v5406, %v6844
      %v6853 = vmul.f32 %v5407, %v6844
      %v6854 = vmul.f32 %v5408, %v6844
      %v6855 = vmul.f32 %v5409, %v6844
      %v6856 = vmul.f32 %v5410, %v6844
      %v6857 = vmul.f32 %v5411, %v6844
      %v6858 = vmul.f32 %v5412, %v6844
      %v6859 = vmul.f32 %v5413, %v6844
      %v6860 = vmul.f32 %v5414, %v6844
      %v6861 = vmul.f32 %v5415, %v6844
      %v6862 = vmul.f32 %v5416, %v6844
      %v6863 = vmul.f32 %v5417, %v6844
      %v6864 = vmul.f32 %v5418, %v6844
      %v6865 = vmul.f32 %v5419, %v6844
      %v6866 = vmul.f32 %v5420, %v6844
      %v6867 = vmul.f32 %v5421, %v6844
      %v6868 = vmul.f32 %v5422, %v6844
      %v6869 = vmul.f32 %v5423, %v6844
      %v6870 = vmul.f32 %v5424, %v6844
      %v6871 = vmul.f32 %v5425, %v6844
      %v6872 = vmul.f32 %v5426, %v6844
      %v6873 = vmul.f32 %v5427, %v6844
      %v6874 = vmul.f32 %v5428, %v6844
      %v6875 = vmul.f32 %v5429, %v6844
      %v6876 = vmul.f32 %v5430, %v6844
      %v6877 = vmul.f32 %v5431, %v6844
      %v6878 = vmul.f32 %v5432, %v6844
      %v6879 = vmul.f32 %v5433, %v6844
      %v6880 = vmul.f32 %v5434, %v6844
      %v6881 = vmul.f32 %v5435, %v6844
      %v6882 = vmul.f32 %v5436, %v6844
      %v6883 = vmul.f32 %v5437, %v6844
      %v6884 = vmul.f32 %v5438, %v6844
      %v6885 = vmul.f32 %v5439, %v6844
      %v6886 = vmul.f32 %v5440, %v6844
      %v6887 = vmul.f32 %v5441, %v6844
      %v6888 = vmul.f32 %v5442, %v6844
      %v6889 = vmul.f32 %v5443, %v6844
      %v6890 = vmul.f32 %v5444, %v6844
      %v6891 = vmul.f32 %v5445, %v6844
      %v6892 = vmul.f32 %v5446, %v6844
      %v6941 = vrot.slane %v6845, 2
      %v6942 = vrot.slane %v6846, 2
      %v6943 = vsel %vm1188, %v6941, %v6942
      %v6944 = vrot.slane %v6847, 2
      %v6945 = vsel %vm1188, %v6942, %v6944
      %v6946 = vrot.slane %v6848, 2
      %v6947 = vrot.slane %v6849, 2
      %v6948 = vsel %vm1188, %v6946, %v6947
      %v6949 = vrot.slane %v6850, 2
      %v6950 = vsel %vm1188, %v6947, %v6949
      %v6951 = vrot.slane %v6851, 2
      %v6952 = vrot.slane %v6852, 2
      %v6953 = vsel %vm1188, %v6951, %v6952
      %v6954 = vrot.slane %v6853, 2
      %v6955 = vsel %vm1188, %v6952, %v6954
      %v6956 = vrot.slane %v6854, 2
      %v6957 = vrot.slane %v6855, 2
      %v6958 = vsel %vm1188, %v6956, %v6957
      %v6959 = vrot.slane %v6856, 2
      %v6960 = vsel %vm1188, %v6957, %v6959
      %v6961 = vrot.slane %v6857, 2
      %v6962 = vrot.slane %v6858, 2
      %v6963 = vsel %vm1188, %v6961, %v6962
      %v6964 = vrot.slane %v6859, 2
      %v6965 = vsel %vm1188, %v6962, %v6964
      %v6966 = vrot.slane %v6860, 2
      %v6967 = vrot.slane %v6861, 2
      %v6968 = vsel %vm1188, %v6966, %v6967
      %v6969 = vrot.slane %v6862, 2
      %v6970 = vsel %vm1188, %v6967, %v6969
      %v6971 = vrot.slane %v6863, 2
      %v6972 = vrot.slane %v6864, 2
      %v6973 = vsel %vm1188, %v6971, %v6972
      %v6974 = vrot.slane %v6865, 2
      %v6975 = vsel %vm1188, %v6972, %v6974
      %v6976 = vrot.slane %v6866, 2
      %v6977 = vrot.slane %v6867, 2
      %v6978 = vsel %vm1188, %v6976, %v6977
      %v6979 = vrot.slane %v6868, 2
      %v6980 = vsel %vm1188, %v6977, %v6979
      %v6981 = vrot.slane %v6869, 2
      %v6982 = vrot.slane %v6870, 2
      %v6983 = vsel %vm1188, %v6981, %v6982
      %v6984 = vrot.slane %v6871, 2
      %v6985 = vsel %vm1188, %v6982, %v6984
      %v6986 = vrot.slane %v6872, 2
      %v6987 = vrot.slane %v6873, 2
      %v6988 = vsel %vm1188, %v6986, %v6987
      %v6989 = vrot.slane %v6874, 2
      %v6990 = vsel %vm1188, %v6987, %v6989
      %v6991 = vrot.slane %v6875, 2
      %v6992 = vrot.slane %v6876, 2
      %v6993 = vsel %vm1188, %v6991, %v6992
      %v6994 = vrot.slane %v6877, 2
      %v6995 = vsel %vm1188, %v6992, %v6994
      %v6996 = vrot.slane %v6878, 2
      %v6997 = vrot.slane %v6879, 2
      %v6998 = vsel %vm1188, %v6996, %v6997
      %v6999 = vrot.slane %v6880, 2
      %v7000 = vsel %vm1188, %v6997, %v6999
      %v7001 = vrot.slane %v6881, 2
      %v7002 = vrot.slane %v6882, 2
      %v7003 = vsel %vm1188, %v7001, %v7002
      %v7004 = vrot.slane %v6883, 2
      %v7005 = vsel %vm1188, %v7002, %v7004
      %v7006 = vrot.slane %v6884, 2
      %v7007 = vrot.slane %v6885, 2
      %v7008 = vsel %vm1188, %v7006, %v7007
      %v7009 = vrot.slane %v6886, 2
      %v7010 = vsel %vm1188, %v7007, %v7009
      %v7011 = vrot.slane %v6887, 2
      %v7012 = vrot.slane %v6888, 2
      %v7013 = vsel %vm1188, %v7011, %v7012
      %v7014 = vrot.slane %v6889, 2
      %v7015 = vsel %vm1188, %v7012, %v7014
      %v7016 = vrot.slane %v6890, 2
      %v7017 = vrot.slane %v6891, 2
      %v7018 = vsel %vm1188, %v7016, %v7017
      %v7019 = vrot.slane %v6892, 2
      %v7020 = vsel %vm1188, %v7017, %v7019
      %v7053 = vadd.f32 %v6809, %v6943
      %v7054 = vadd.f32 %v6810, %v6945
      %v7055 = vadd.f32 %v6811, %v6948
      %v7056 = vadd.f32 %v6812, %v6950
      %v7057 = vadd.f32 %v6813, %v6953
      %v7058 = vadd.f32 %v6814, %v6955
      %v7059 = vadd.f32 %v6815, %v6958
      %v7060 = vadd.f32 %v6816, %v6960
      %v7061 = vadd.f32 %v6817, %v6963
      %v7062 = vadd.f32 %v6818, %v6965
      %v7063 = vadd.f32 %v6819, %v6968
      %v7064 = vadd.f32 %v6820, %v6970
      %v7065 = vadd.f32 %v6821, %v6973
      %v7066 = vadd.f32 %v6822, %v6975
      %v7067 = vadd.f32 %v6823, %v6978
      %v7068 = vadd.f32 %v6824, %v6980
      %v7069 = vadd.f32 %v6825, %v6983
      %v7070 = vadd.f32 %v6826, %v6985
      %v7071 = vadd.f32 %v6827, %v6988
      %v7072 = vadd.f32 %v6828, %v6990
      %v7073 = vadd.f32 %v6829, %v6993
      %v7074 = vadd.f32 %v6830, %v6995
      %v7075 = vadd.f32 %v6831, %v6998
      %v7076 = vadd.f32 %v6832, %v7000
      %v7077 = vadd.f32 %v6833, %v7003
      %v7078 = vadd.f32 %v6834, %v7005
      %v7079 = vadd.f32 %v6835, %v7008
      %v7080 = vadd.f32 %v6836, %v7010
      %v7081 = vadd.f32 %v6837, %v7013
      %v7082 = vadd.f32 %v6838, %v7015
      %v7083 = vadd.f32 %v6839, %v7018
      %v7084 = vadd.f32 %v6840, %v7020
      %v7085 = vld [vmem:[%s6] sm:$0x1]
      %v7087 = vlaneseq
      %v7088 = vshrl.u32 %v7087, 7
      %v7089 = vsub.s32 0, %v7088
      %v7090 = vrot.slane %v7085, %v7089
      %v7092 = vmul.f32 %v7053, %v7090
      %v7093 = vmul.f32 %v7054, %v7090
      %v7094 = vmul.f32 %v7055, %v7090
      %v7095 = vmul.f32 %v7056, %v7090
      %v7096 = vmul.f32 %v7057, %v7090
      %v7097 = vmul.f32 %v7058, %v7090
      %v7098 = vmul.f32 %v7059, %v7090
      %v7099 = vmul.f32 %v7060, %v7090
      %v7100 = vmul.f32 %v7061, %v7090
      %v7101 = vmul.f32 %v7062, %v7090
      %v7102 = vmul.f32 %v7063, %v7090
      %v7103 = vmul.f32 %v7064, %v7090
      %v7104 = vmul.f32 %v7065, %v7090
      %v7105 = vmul.f32 %v7066, %v7090
      %v7106 = vmul.f32 %v7067, %v7090
      %v7107 = vmul.f32 %v7068, %v7090
      %v7108 = vmul.f32 %v7069, %v7090
      %v7109 = vmul.f32 %v7070, %v7090
      %v7110 = vmul.f32 %v7071, %v7090
      %v7111 = vmul.f32 %v7072, %v7090
      %v7112 = vmul.f32 %v7073, %v7090
      %v7113 = vmul.f32 %v7074, %v7090
      %v7114 = vmul.f32 %v7075, %v7090
      %v7115 = vmul.f32 %v7076, %v7090
      %v7116 = vmul.f32 %v7077, %v7090
      %v7117 = vmul.f32 %v7078, %v7090
      %v7118 = vmul.f32 %v7079, %v7090
      %v7119 = vmul.f32 %v7080, %v7090
      %v7120 = vmul.f32 %v7081, %v7090
      %v7121 = vmul.f32 %v7082, %v7090
      %v7122 = vmul.f32 %v7083, %v7090
      %v7123 = vmul.f32 %v7084, %v7090
      %v7124 = vld [vmem:[%s7] sm:$0x1]
      %v7126 = vlaneseq
      %v7127 = vshrl.u32 %v7126, 7
      %v7128 = vsub.s32 0, %v7127
      %v7129 = vrot.slane %v7124, %v7128
      %v7131 = vadd.f32 %v7092, %v7129
      %v7132 = vadd.f32 %v7093, %v7129
      %v7133 = vadd.f32 %v7094, %v7129
      %v7134 = vadd.f32 %v7095, %v7129
      %v7135 = vadd.f32 %v7096, %v7129
      %v7136 = vadd.f32 %v7097, %v7129
      %v7137 = vadd.f32 %v7098, %v7129
      %v7138 = vadd.f32 %v7099, %v7129
      %v7139 = vadd.f32 %v7100, %v7129
      %v7140 = vadd.f32 %v7101, %v7129
      %v7141 = vadd.f32 %v7102, %v7129
      %v7142 = vadd.f32 %v7103, %v7129
      %v7143 = vadd.f32 %v7104, %v7129
      %v7144 = vadd.f32 %v7105, %v7129
      %v7145 = vadd.f32 %v7106, %v7129
      %v7146 = vadd.f32 %v7107, %v7129
      %v7147 = vadd.f32 %v7108, %v7129
      %v7148 = vadd.f32 %v7109, %v7129
      %v7149 = vadd.f32 %v7110, %v7129
      %v7150 = vadd.f32 %v7111, %v7129
      %v7151 = vadd.f32 %v7112, %v7129
      %v7152 = vadd.f32 %v7113, %v7129
      %v7153 = vadd.f32 %v7114, %v7129
      %v7154 = vadd.f32 %v7115, %v7129
      %v7155 = vadd.f32 %v7116, %v7129
      %v7156 = vadd.f32 %v7117, %v7129
      %v7157 = vadd.f32 %v7118, %v7129
      %v7158 = vadd.f32 %v7119, %v7129
      %v7159 = vadd.f32 %v7120, %v7129
      %v7160 = vadd.f32 %v7121, %v7129
      %v7161 = vadd.f32 %v7122, %v7129
      %v7162 = vadd.f32 %v7123, %v7129
      %v7163 = vpack.c.bf16 %v7132, %v7131
      %v7164 = vpack.c.bf16 %v7134, %v7133
      %v7165 = vpack.c.bf16 %v7136, %v7135
      %v7166 = vpack.c.bf16 %v7138, %v7137
      %v7167 = vpack.c.bf16 %v7140, %v7139
      %v7168 = vpack.c.bf16 %v7142, %v7141
      %v7169 = vpack.c.bf16 %v7144, %v7143
      %v7170 = vpack.c.bf16 %v7146, %v7145
      %v7171 = vpack.c.bf16 %v7148, %v7147
      %v7172 = vpack.c.bf16 %v7150, %v7149
      %v7173 = vpack.c.bf16 %v7152, %v7151
      %v7174 = vpack.c.bf16 %v7154, %v7153
      %v7175 = vpack.c.bf16 %v7156, %v7155
      %v7176 = vpack.c.bf16 %v7158, %v7157
      %v7177 = vpack.c.bf16 %v7160, %v7159
      %v7178 = vpack.c.bf16 %v7162, %v7161
      %7179 = vmatprep.subr.bf16.mxu0 0
      %7180 = vmatpush1.bf16.msra.mxu0 %v7170
      %7181 = vmatprep.subr.bf16.mxu0 0
      %7182 = vmatpush1.bf16.msra.mxu0 %v7169
      %7183 = vmatprep.subr.bf16.mxu0 0
      %7184 = vmatpush1.bf16.msra.mxu0 %v7168
      %7185 = vmatprep.subr.bf16.mxu0 0
      %7186 = vmatpush1.bf16.msra.mxu0 %v7167
      %7187 = vmatprep.subr.bf16.mxu0 0
      %7188 = vmatpush1.bf16.msra.mxu0 %v7166
      %7189 = vmatprep.subr.bf16.mxu0 0
      %7190 = vmatpush1.bf16.msra.mxu0 %v7165
      %7191 = vmatprep.subr.bf16.mxu0 0
      %7192 = vmatpush1.bf16.msra.mxu0 %v7164
      %7193 = vmatprep.subr.bf16.mxu0 0
      %7194 = vmatpush1.bf16.msra.mxu0 %v7163
      %7195 = vmatprep.subr.bf16.mxu0 0
      %7196 = vmatpush2.bf16.msra.mxu0 %v7178
      %7197 = vmatprep.subr.bf16.mxu0 0
      %7198 = vmatpush2.bf16.msra.mxu0 %v7177
      %7199 = vmatprep.subr.bf16.mxu0 0
      %7200 = vmatpush2.bf16.msra.mxu0 %v7176
      %7201 = vmatprep.subr.bf16.mxu0 0
      %7202 = vmatpush2.bf16.msra.mxu0 %v7175
      %7203 = vmatprep.subr.bf16.mxu0 0
      %7204 = vmatpush2.bf16.msra.mxu0 %v7174
      %7205 = vmatprep.subr.bf16.mxu0 0
      %7206 = vmatpush2.bf16.msra.mxu0 %v7173
      %7207 = vmatprep.subr.bf16.mxu0 0
      %7208 = vmatpush2.bf16.msra.mxu0 %v7172
      %7209 = vmatprep.subr.bf16.mxu0 0
      %7210 = vmatpush2.bf16.msra.mxu0 %v7171
      %7211 = vmatprep.mubr.bf16.mxu0 %v3793
      %7212 = vmatmul.mubr.bf16.gmra.mxu0 %v3792
      %v7213 = vpop.f32.mrf.mxu0
      %v7214 = vadd.f32 0.0, %v7213
      %v7215 = vpop.f32.mrf.mxu0
      %v7216 = vpop.f32.mrf.mxu0
      %v7217 = vadd.f32 0.0, %v7216
      %v7218 = vpop.f32.mrf.mxu0
      %7219 = vmatprep.mubr.bf16.mxu0 %v3795
      %7220 = vmatmul.mubr.bf16.gmra.mxu0 %v3794
      %v7221 = vpop.f32.mrf.mxu0
      %v7222 = vadd.f32 0.0, %v7221
      %v7223 = vpop.f32.mrf.mxu0
      %v7224 = vpop.f32.mrf.mxu0
      %v7225 = vadd.f32 0.0, %v7224
      %v7226 = vpop.f32.mrf.mxu0
      %7227 = vmatprep.mubr.bf16.mxu0 %v3797
      %7228 = vmatmul.mubr.bf16.gmra.mxu0 %v3796
      %v7229 = vpop.f32.mrf.mxu0
      %v7230 = vadd.f32 0.0, %v7229
      %v7231 = vpop.f32.mrf.mxu0
      %v7232 = vpop.f32.mrf.mxu0
      %v7233 = vadd.f32 0.0, %v7232
      %v7234 = vpop.f32.mrf.mxu0
      %7235 = vmatprep.mubr.bf16.mxu0 %v3799
      %7236 = vmatmul.mubr.bf16.gmra.mxu0 %v3798
      %v7237 = vpop.f32.mrf.mxu0
      %v7238 = vadd.f32 0.0, %v7237
      %v7239 = vpop.f32.mrf.mxu0
      %v7240 = vpop.f32.mrf.mxu0
      %v7241 = vadd.f32 0.0, %v7240
      %v7242 = vpop.f32.mrf.mxu0
      %7243 = vdwg.mxu0
      %v7244 = vmul.f32 %v7131, 0.5
      %v7245 = vmul.f32 %v7132, 0.5
      %v7246 = vmul.f32 %v7133, 0.5
      %v7247 = vmul.f32 %v7134, 0.5
      %v7248 = vmul.f32 %v7135, 0.5
      %v7249 = vmul.f32 %v7136, 0.5
      %v7250 = vmul.f32 %v7137, 0.5
      %v7251 = vmul.f32 %v7138, 0.5
      %v7252 = vmul.f32 %v7139, 0.5
      %v7253 = vmul.f32 %v7140, 0.5
      %v7254 = vmul.f32 %v7141, 0.5
      %v7255 = vmul.f32 %v7142, 0.5
      %v7256 = vmul.f32 %v7143, 0.5
      %v7257 = vmul.f32 %v7144, 0.5
      %v7258 = vmul.f32 %v7145, 0.5
      %v7259 = vmul.f32 %v7146, 0.5
      %v7260 = vmul.f32 %v7147, 0.5
      %v7261 = vmul.f32 %v7148, 0.5
      %v7262 = vmul.f32 %v7149, 0.5
      %v7263 = vmul.f32 %v7150, 0.5
      %v7264 = vmul.f32 %v7151, 0.5
      %v7265 = vmul.f32 %v7152, 0.5
      %v7266 = vmul.f32 %v7153, 0.5
      %v7267 = vmul.f32 %v7154, 0.5
      %v7268 = vmul.f32 %v7155, 0.5
      %v7269 = vmul.f32 %v7156, 0.5
      %v7270 = vmul.f32 %v7157, 0.5
      %v7271 = vmul.f32 %v7158, 0.5
      %v7272 = vmul.f32 %v7159, 0.5
      %v7273 = vmul.f32 %v7160, 0.5
      %v7274 = vmul.f32 %v7161, 0.5
      %v7275 = vmul.f32 %v7162, 0.5
      %v7276 = vmul.f32 %v7131, 0.70710677
      %v7277 = vmul.f32 %v7132, 0.70710677
      %v7278 = vmul.f32 %v7133, 0.70710677
      %v7279 = vmul.f32 %v7134, 0.70710677
      %v7280 = vmul.f32 %v7135, 0.70710677
      %v7281 = vmul.f32 %v7136, 0.70710677
      %v7282 = vmul.f32 %v7137, 0.70710677
      %v7283 = vmul.f32 %v7138, 0.70710677
      %v7284 = vmul.f32 %v7139, 0.70710677
      %v7285 = vmul.f32 %v7140, 0.70710677
      %v7286 = vmul.f32 %v7141, 0.70710677
      %v7287 = vmul.f32 %v7142, 0.70710677
      %v7288 = vmul.f32 %v7143, 0.70710677
      %v7289 = vmul.f32 %v7144, 0.70710677
      %v7290 = vmul.f32 %v7145, 0.70710677
      %v7291 = vmul.f32 %v7146, 0.70710677
      %v7292 = vmul.f32 %v7147, 0.70710677
      %v7293 = vmul.f32 %v7148, 0.70710677
      %v7294 = vmul.f32 %v7149, 0.70710677
      %v7295 = vmul.f32 %v7150, 0.70710677
      %v7296 = vmul.f32 %v7151, 0.70710677
      %v7297 = vmul.f32 %v7152, 0.70710677
      %v7298 = vmul.f32 %v7153, 0.70710677
      %v7299 = vmul.f32 %v7154, 0.70710677
      %v7300 = vmul.f32 %v7155, 0.70710677
      %v7301 = vmul.f32 %v7156, 0.70710677
      %v7302 = vmul.f32 %v7157, 0.70710677
      %v7303 = vmul.f32 %v7158, 0.70710677
      %v7304 = vmul.f32 %v7159, 0.70710677
      %v7305 = vmul.f32 %v7160, 0.70710677
      %v7306 = vmul.f32 %v7161, 0.70710677
      %v7307 = vmul.f32 %v7162, 0.70710677
      %v7308 = vand.u32 2147483647, %v7276
      %v7309 = vand.u32 2147483647, %v7277
      %v7310 = vand.u32 2147483647, %v7278
      %v7311 = vand.u32 2147483647, %v7279
      %v7312 = vand.u32 2147483647, %v7280
      %v7313 = vand.u32 2147483647, %v7281
      %v7314 = vand.u32 2147483647, %v7282
      %v7315 = vand.u32 2147483647, %v7283
      %v7316 = vand.u32 2147483647, %v7284
      %v7317 = vand.u32 2147483647, %v7285
      %v7318 = vand.u32 2147483647, %v7286
      %v7319 = vand.u32 2147483647, %v7287
      %v7320 = vand.u32 2147483647, %v7288
      %v7321 = vand.u32 2147483647, %v7289
      %v7322 = vand.u32 2147483647, %v7290
      %v7323 = vand.u32 2147483647, %v7291
      %v7324 = vand.u32 2147483647, %v7292
      %v7325 = vand.u32 2147483647, %v7293
      %v7326 = vand.u32 2147483647, %v7294
      %v7327 = vand.u32 2147483647, %v7295
      %v7328 = vand.u32 2147483647, %v7296
      %v7329 = vand.u32 2147483647, %v7297
      %v7330 = vand.u32 2147483647, %v7298
      %v7331 = vand.u32 2147483647, %v7299
      %v7332 = vand.u32 2147483647, %v7300
      %v7333 = vand.u32 2147483647, %v7301
      %v7334 = vand.u32 2147483647, %v7302
      %v7335 = vand.u32 2147483647, %v7303
      %v7336 = vand.u32 2147483647, %v7304
      %v7337 = vand.u32 2147483647, %v7305
      %v7338 = vand.u32 2147483647, %v7306
      %v7339 = vand.u32 2147483647, %v7307
      %v7340 = vmul.f32 %v7308, 0.3275911
      %v7341 = vmul.f32 %v7309, 0.3275911
      %v7342 = vmul.f32 %v7310, 0.3275911
      %v7343 = vmul.f32 %v7311, 0.3275911
      %v7344 = vmul.f32 %v7312, 0.3275911
      %v7345 = vmul.f32 %v7313, 0.3275911
      %v7346 = vmul.f32 %v7314, 0.3275911
      %v7347 = vmul.f32 %v7315, 0.3275911
      %v7348 = vmul.f32 %v7316, 0.3275911
      %v7349 = vmul.f32 %v7317, 0.3275911
      %v7350 = vmul.f32 %v7318, 0.3275911
      %v7351 = vmul.f32 %v7319, 0.3275911
      %v7352 = vmul.f32 %v7320, 0.3275911
      %v7353 = vmul.f32 %v7321, 0.3275911
      %v7354 = vmul.f32 %v7322, 0.3275911
      %v7355 = vmul.f32 %v7323, 0.3275911
      %v7356 = vmul.f32 %v7324, 0.3275911
      %v7357 = vmul.f32 %v7325, 0.3275911
      %v7358 = vmul.f32 %v7326, 0.3275911
      %v7359 = vmul.f32 %v7327, 0.3275911
      %v7360 = vmul.f32 %v7328, 0.3275911
      %v7361 = vmul.f32 %v7329, 0.3275911
      %v7362 = vmul.f32 %v7330, 0.3275911
      %v7363 = vmul.f32 %v7331, 0.3275911
      %v7364 = vmul.f32 %v7332, 0.3275911
      %v7365 = vmul.f32 %v7333, 0.3275911
      %v7366 = vmul.f32 %v7334, 0.3275911
      %v7367 = vmul.f32 %v7335, 0.3275911
      %v7368 = vmul.f32 %v7336, 0.3275911
      %v7369 = vmul.f32 %v7337, 0.3275911
      %v7370 = vmul.f32 %v7338, 0.3275911
      %v7371 = vmul.f32 %v7339, 0.3275911
      %v7372 = vadd.f32 %v7340, 1.0
      %v7373 = vadd.f32 %v7341, 1.0
      %v7374 = vadd.f32 %v7342, 1.0
      %v7375 = vadd.f32 %v7343, 1.0
      %v7376 = vadd.f32 %v7344, 1.0
      %v7377 = vadd.f32 %v7345, 1.0
      %v7378 = vadd.f32 %v7346, 1.0
      %v7379 = vadd.f32 %v7347, 1.0
      %v7380 = vadd.f32 %v7348, 1.0
      %v7381 = vadd.f32 %v7349, 1.0
      %v7382 = vadd.f32 %v7350, 1.0
      %v7383 = vadd.f32 %v7351, 1.0
      %v7384 = vadd.f32 %v7352, 1.0
      %v7385 = vadd.f32 %v7353, 1.0
      %v7386 = vadd.f32 %v7354, 1.0
      %v7387 = vadd.f32 %v7355, 1.0
      %v7388 = vadd.f32 %v7356, 1.0
      %v7389 = vadd.f32 %v7357, 1.0
      %v7390 = vadd.f32 %v7358, 1.0
      %v7391 = vadd.f32 %v7359, 1.0
      %v7392 = vadd.f32 %v7360, 1.0
      %v7393 = vadd.f32 %v7361, 1.0
      %v7394 = vadd.f32 %v7362, 1.0
      %v7395 = vadd.f32 %v7363, 1.0
      %v7396 = vadd.f32 %v7364, 1.0
      %v7397 = vadd.f32 %v7365, 1.0
      %v7398 = vadd.f32 %v7366, 1.0
      %v7399 = vadd.f32 %v7367, 1.0
      %v7400 = vadd.f32 %v7368, 1.0
      %v7401 = vadd.f32 %v7369, 1.0
      %v7402 = vadd.f32 %v7370, 1.0
      %v7403 = vadd.f32 %v7371, 1.0
      %v7404 = vrcp.pop %v7372
      %v7405 = vmul.f32 1.0, %v7404
      %v7406 = vrcp.pop %v7373
      %v7407 = vmul.f32 1.0, %v7406
      %v7408 = vrcp.pop %v7374
      %v7409 = vmul.f32 1.0, %v7408
      %v7410 = vrcp.pop %v7375
      %v7411 = vmul.f32 1.0, %v7410
      %v7412 = vrcp.pop %v7376
      %v7413 = vmul.f32 1.0, %v7412
      %v7414 = vrcp.pop %v7377
      %v7415 = vmul.f32 1.0, %v7414
      %v7416 = vrcp.pop %v7378
      %v7417 = vmul.f32 1.0, %v7416
      %v7418 = vrcp.pop %v7379
      %v7419 = vmul.f32 1.0, %v7418
      %v7420 = vrcp.pop %v7380
      %v7421 = vmul.f32 1.0, %v7420
      %v7422 = vrcp.pop %v7381
      %v7423 = vmul.f32 1.0, %v7422
      %v7424 = vrcp.pop %v7382
      %v7425 = vmul.f32 1.0, %v7424
      %v7426 = vrcp.pop %v7383
      %v7427 = vmul.f32 1.0, %v7426
      %v7428 = vrcp.pop %v7384
      %v7429 = vmul.f32 1.0, %v7428
      %v7430 = vrcp.pop %v7385
      %v7431 = vmul.f32 1.0, %v7430
      %v7432 = vrcp.pop %v7386
      %v7433 = vmul.f32 1.0, %v7432
      %v7434 = vrcp.pop %v7387
      %v7435 = vmul.f32 1.0, %v7434
      %v7436 = vrcp.pop %v7388
      %v7437 = vmul.f32 1.0, %v7436
      %v7438 = vrcp.pop %v7389
      %v7439 = vmul.f32 1.0, %v7438
      %v7440 = vrcp.pop %v7390
      %v7441 = vmul.f32 1.0, %v7440
      %v7442 = vrcp.pop %v7391
      %v7443 = vmul.f32 1.0, %v7442
      %v7444 = vrcp.pop %v7392
      %v7445 = vmul.f32 1.0, %v7444
      %v7446 = vrcp.pop %v7393
      %v7447 = vmul.f32 1.0, %v7446
      %v7448 = vrcp.pop %v7394
      %v7449 = vmul.f32 1.0, %v7448
      %v7450 = vrcp.pop %v7395
      %v7451 = vmul.f32 1.0, %v7450
      %v7452 = vrcp.pop %v7396
      %v7453 = vmul.f32 1.0, %v7452
      %v7454 = vrcp.pop %v7397
      %v7455 = vmul.f32 1.0, %v7454
      %v7456 = vrcp.pop %v7398
      %v7457 = vmul.f32 1.0, %v7456
      %v7458 = vrcp.pop %v7399
      %v7459 = vmul.f32 1.0, %v7458
      %v7460 = vrcp.pop %v7400
      %v7461 = vmul.f32 1.0, %v7460
      %v7462 = vrcp.pop %v7401
      %v7463 = vmul.f32 1.0, %v7462
      %v7464 = vrcp.pop %v7402
      %v7465 = vmul.f32 1.0, %v7464
      %v7466 = vrcp.pop %v7403
      %v7467 = vmul.f32 1.0, %v7466
      %v7468 = vmul.f32 %v7405, 1.0614054
      %v7469 = vmul.f32 %v7407, 1.0614054
      %v7470 = vmul.f32 %v7409, 1.0614054
      %v7471 = vmul.f32 %v7411, 1.0614054
      %v7472 = vmul.f32 %v7413, 1.0614054
      %v7473 = vmul.f32 %v7415, 1.0614054
      %v7474 = vmul.f32 %v7417, 1.0614054
      %v7475 = vmul.f32 %v7419, 1.0614054
      %v7476 = vmul.f32 %v7421, 1.0614054
      %v7477 = vmul.f32 %v7423, 1.0614054
      %v7478 = vmul.f32 %v7425, 1.0614054
      %v7479 = vmul.f32 %v7427, 1.0614054
      %v7480 = vmul.f32 %v7429, 1.0614054
      %v7481 = vmul.f32 %v7431, 1.0614054
      %v7482 = vmul.f32 %v7433, 1.0614054
      %v7483 = vmul.f32 %v7435, 1.0614054
      %v7484 = vmul.f32 %v7437, 1.0614054
      %v7485 = vmul.f32 %v7439, 1.0614054
      %v7486 = vmul.f32 %v7441, 1.0614054
      %v7487 = vmul.f32 %v7443, 1.0614054
      %v7488 = vmul.f32 %v7445, 1.0614054
      %v7489 = vmul.f32 %v7447, 1.0614054
      %v7490 = vmul.f32 %v7449, 1.0614054
      %v7491 = vmul.f32 %v7451, 1.0614054
      %v7492 = vmul.f32 %v7453, 1.0614054
      %v7493 = vmul.f32 %v7455, 1.0614054
      %v7494 = vmul.f32 %v7457, 1.0614054
      %v7495 = vmul.f32 %v7459, 1.0614054
      %v7496 = vmul.f32 %v7461, 1.0614054
      %v7497 = vmul.f32 %v7463, 1.0614054
      %v7498 = vmul.f32 %v7465, 1.0614054
      %v7499 = vmul.f32 %v7467, 1.0614054
      %v7500 = vadd.f32 %v7468, -1.4531521
      %v7501 = vadd.f32 %v7469, -1.4531521
      %v7502 = vadd.f32 %v7470, -1.4531521
      %v7503 = vadd.f32 %v7471, -1.4531521
      %v7504 = vadd.f32 %v7472, -1.4531521
      %v7505 = vadd.f32 %v7473, -1.4531521
      %v7506 = vadd.f32 %v7474, -1.4531521
      %v7507 = vadd.f32 %v7475, -1.4531521
      %v7508 = vadd.f32 %v7476, -1.4531521
      %v7509 = vadd.f32 %v7477, -1.4531521
      %v7510 = vadd.f32 %v7478, -1.4531521
      %v7511 = vadd.f32 %v7479, -1.4531521
      %v7512 = vadd.f32 %v7480, -1.4531521
      %v7513 = vadd.f32 %v7481, -1.4531521
      %v7514 = vadd.f32 %v7482, -1.4531521
      %v7515 = vadd.f32 %v7483, -1.4531521
      %v7516 = vadd.f32 %v7484, -1.4531521
      %v7517 = vadd.f32 %v7485, -1.4531521
      %v7518 = vadd.f32 %v7486, -1.4531521
      %v7519 = vadd.f32 %v7487, -1.4531521
      %v7520 = vadd.f32 %v7488, -1.4531521
      %v7521 = vadd.f32 %v7489, -1.4531521
      %v7522 = vadd.f32 %v7490, -1.4531521
      %v7523 = vadd.f32 %v7491, -1.4531521
      %v7524 = vadd.f32 %v7492, -1.4531521
      %v7525 = vadd.f32 %v7493, -1.4531521
      %v7526 = vadd.f32 %v7494, -1.4531521
      %v7527 = vadd.f32 %v7495, -1.4531521
      %v7528 = vadd.f32 %v7496, -1.4531521
      %v7529 = vadd.f32 %v7497, -1.4531521
      %v7530 = vadd.f32 %v7498, -1.4531521
      %v7531 = vadd.f32 %v7499, -1.4531521
      %v7532 = vmul.f32 %v7500, %v7405
      %v7533 = vmul.f32 %v7501, %v7407
      %v7534 = vmul.f32 %v7502, %v7409
      %v7535 = vmul.f32 %v7503, %v7411
      %v7536 = vmul.f32 %v7504, %v7413
      %v7537 = vmul.f32 %v7505, %v7415
      %v7538 = vmul.f32 %v7506, %v7417
      %v7539 = vmul.f32 %v7507, %v7419
      %v7540 = vmul.f32 %v7508, %v7421
      %v7541 = vmul.f32 %v7509, %v7423
      %v7542 = vmul.f32 %v7510, %v7425
      %v7543 = vmul.f32 %v7511, %v7427
      %v7544 = vmul.f32 %v7512, %v7429
      %v7545 = vmul.f32 %v7513, %v7431
      %v7546 = vmul.f32 %v7514, %v7433
      %v7547 = vmul.f32 %v7515, %v7435
      %v7548 = vmul.f32 %v7516, %v7437
      %v7549 = vmul.f32 %v7517, %v7439
      %v7550 = vmul.f32 %v7518, %v7441
      %v7551 = vmul.f32 %v7519, %v7443
      %v7552 = vmul.f32 %v7520, %v7445
      %v7553 = vmul.f32 %v7521, %v7447
      %v7554 = vmul.f32 %v7522, %v7449
      %v7555 = vmul.f32 %v7523, %v7451
      %v7556 = vmul.f32 %v7524, %v7453
      %v7557 = vmul.f32 %v7525, %v7455
      %v7558 = vmul.f32 %v7526, %v7457
      %v7559 = vmul.f32 %v7527, %v7459
      %v7560 = vmul.f32 %v7528, %v7461
      %v7561 = vmul.f32 %v7529, %v7463
      %v7562 = vmul.f32 %v7530, %v7465
      %v7563 = vmul.f32 %v7531, %v7467
      %v7564 = vadd.f32 %v7532, 1.4214138
      %v7565 = vadd.f32 %v7533, 1.4214138
      %v7566 = vadd.f32 %v7534, 1.4214138
      %v7567 = vadd.f32 %v7535, 1.4214138
      %v7568 = vadd.f32 %v7536, 1.4214138
      %v7569 = vadd.f32 %v7537, 1.4214138
      %v7570 = vadd.f32 %v7538, 1.4214138
      %v7571 = vadd.f32 %v7539, 1.4214138
      %v7572 = vadd.f32 %v7540, 1.4214138
      %v7573 = vadd.f32 %v7541, 1.4214138
      %v7574 = vadd.f32 %v7542, 1.4214138
      %v7575 = vadd.f32 %v7543, 1.4214138
      %v7576 = vadd.f32 %v7544, 1.4214138
      %v7577 = vadd.f32 %v7545, 1.4214138
      %v7578 = vadd.f32 %v7546, 1.4214138
      %v7579 = vadd.f32 %v7547, 1.4214138
      %v7580 = vadd.f32 %v7548, 1.4214138
      %v7581 = vadd.f32 %v7549, 1.4214138
      %v7582 = vadd.f32 %v7550, 1.4214138
      %v7583 = vadd.f32 %v7551, 1.4214138
      %v7584 = vadd.f32 %v7552, 1.4214138
      %v7585 = vadd.f32 %v7553, 1.4214138
      %v7586 = vadd.f32 %v7554, 1.4214138
      %v7587 = vadd.f32 %v7555, 1.4214138
      %v7588 = vadd.f32 %v7556, 1.4214138
      %v7589 = vadd.f32 %v7557, 1.4214138
      %v7590 = vadd.f32 %v7558, 1.4214138
      %v7591 = vadd.f32 %v7559, 1.4214138
      %v7592 = vadd.f32 %v7560, 1.4214138
      %v7593 = vadd.f32 %v7561, 1.4214138
      %v7594 = vadd.f32 %v7562, 1.4214138
      %v7595 = vadd.f32 %v7563, 1.4214138
      %v7596 = vmul.f32 %v7564, %v7405
      %v7597 = vmul.f32 %v7565, %v7407
      %v7598 = vmul.f32 %v7566, %v7409
      %v7599 = vmul.f32 %v7567, %v7411
      %v7600 = vmul.f32 %v7568, %v7413
      %v7601 = vmul.f32 %v7569, %v7415
      %v7602 = vmul.f32 %v7570, %v7417
      %v7603 = vmul.f32 %v7571, %v7419
      %v7604 = vmul.f32 %v7572, %v7421
      %v7605 = vmul.f32 %v7573, %v7423
      %v7606 = vmul.f32 %v7574, %v7425
      %v7607 = vmul.f32 %v7575, %v7427
      %v7608 = vmul.f32 %v7576, %v7429
      %v7609 = vmul.f32 %v7577, %v7431
      %v7610 = vmul.f32 %v7578, %v7433
      %v7611 = vmul.f32 %v7579, %v7435
      %v7612 = vmul.f32 %v7580, %v7437
      %v7613 = vmul.f32 %v7581, %v7439
      %v7614 = vmul.f32 %v7582, %v7441
      %v7615 = vmul.f32 %v7583, %v7443
      %v7616 = vmul.f32 %v7584, %v7445
      %v7617 = vmul.f32 %v7585, %v7447
      %v7618 = vmul.f32 %v7586, %v7449
      %v7619 = vmul.f32 %v7587, %v7451
      %v7620 = vmul.f32 %v7588, %v7453
      %v7621 = vmul.f32 %v7589, %v7455
      %v7622 = vmul.f32 %v7590, %v7457
      %v7623 = vmul.f32 %v7591, %v7459
      %v7624 = vmul.f32 %v7592, %v7461
      %v7625 = vmul.f32 %v7593, %v7463
      %v7626 = vmul.f32 %v7594, %v7465
      %v7627 = vmul.f32 %v7595, %v7467
      %v7628 = vadd.f32 %v7596, -0.28449672
      %v7629 = vadd.f32 %v7597, -0.28449672
      %v7630 = vadd.f32 %v7598, -0.28449672
      %v7631 = vadd.f32 %v7599, -0.28449672
      %v7632 = vadd.f32 %v7600, -0.28449672
      %v7633 = vadd.f32 %v7601, -0.28449672
      %v7634 = vadd.f32 %v7602, -0.28449672
      %v7635 = vadd.f32 %v7603, -0.28449672
      %v7636 = vadd.f32 %v7604, -0.28449672
      %v7637 = vadd.f32 %v7605, -0.28449672
      %v7638 = vadd.f32 %v7606, -0.28449672
      %v7639 = vadd.f32 %v7607, -0.28449672
      %v7640 = vadd.f32 %v7608, -0.28449672
      %v7641 = vadd.f32 %v7609, -0.28449672
      %v7642 = vadd.f32 %v7610, -0.28449672
      %v7643 = vadd.f32 %v7611, -0.28449672
      %v7644 = vadd.f32 %v7612, -0.28449672
      %v7645 = vadd.f32 %v7613, -0.28449672
      %v7646 = vadd.f32 %v7614, -0.28449672
      %v7647 = vadd.f32 %v7615, -0.28449672
      %v7648 = vadd.f32 %v7616, -0.28449672
      %v7649 = vadd.f32 %v7617, -0.28449672
      %v7650 = vadd.f32 %v7618, -0.28449672
      %v7651 = vadd.f32 %v7619, -0.28449672
      %v7652 = vadd.f32 %v7620, -0.28449672
      %v7653 = vadd.f32 %v7621, -0.28449672
      %v7654 = vadd.f32 %v7622, -0.28449672
      %v7655 = vadd.f32 %v7623, -0.28449672
      %v7656 = vadd.f32 %v7624, -0.28449672
      %v7657 = vadd.f32 %v7625, -0.28449672
      %v7658 = vadd.f32 %v7626, -0.28449672
      %v7659 = vadd.f32 %v7627, -0.28449672
      %v7660 = vmul.f32 %v7628, %v7405
      %v7661 = vmul.f32 %v7629, %v7407
      %v7662 = vmul.f32 %v7630, %v7409
      %v7663 = vmul.f32 %v7631, %v7411
      %v7664 = vmul.f32 %v7632, %v7413
      %v7665 = vmul.f32 %v7633, %v7415
      %v7666 = vmul.f32 %v7634, %v7417
      %v7667 = vmul.f32 %v7635, %v7419
      %v7668 = vmul.f32 %v7636, %v7421
      %v7669 = vmul.f32 %v7637, %v7423
      %v7670 = vmul.f32 %v7638, %v7425
      %v7671 = vmul.f32 %v7639, %v7427
      %v7672 = vmul.f32 %v7640, %v7429
      %v7673 = vmul.f32 %v7641, %v7431
      %v7674 = vmul.f32 %v7642, %v7433
      %v7675 = vmul.f32 %v7643, %v7435
      %v7676 = vmul.f32 %v7644, %v7437
      %v7677 = vmul.f32 %v7645, %v7439
      %v7678 = vmul.f32 %v7646, %v7441
      %v7679 = vmul.f32 %v7647, %v7443
      %v7680 = vmul.f32 %v7648, %v7445
      %v7681 = vmul.f32 %v7649, %v7447
      %v7682 = vmul.f32 %v7650, %v7449
      %v7683 = vmul.f32 %v7651, %v7451
      %v7684 = vmul.f32 %v7652, %v7453
      %v7685 = vmul.f32 %v7653, %v7455
      %v7686 = vmul.f32 %v7654, %v7457
      %v7687 = vmul.f32 %v7655, %v7459
      %v7688 = vmul.f32 %v7656, %v7461
      %v7689 = vmul.f32 %v7657, %v7463
      %v7690 = vmul.f32 %v7658, %v7465
      %v7691 = vmul.f32 %v7659, %v7467
      %v7692 = vadd.f32 %v7660, 0.2548296
      %v7693 = vadd.f32 %v7661, 0.2548296
      %v7694 = vadd.f32 %v7662, 0.2548296
      %v7695 = vadd.f32 %v7663, 0.2548296
      %v7696 = vadd.f32 %v7664, 0.2548296
      %v7697 = vadd.f32 %v7665, 0.2548296
      %v7698 = vadd.f32 %v7666, 0.2548296
      %v7699 = vadd.f32 %v7667, 0.2548296
      %v7700 = vadd.f32 %v7668, 0.2548296
      %v7701 = vadd.f32 %v7669, 0.2548296
      %v7702 = vadd.f32 %v7670, 0.2548296
      %v7703 = vadd.f32 %v7671, 0.2548296
      %v7704 = vadd.f32 %v7672, 0.2548296
      %v7705 = vadd.f32 %v7673, 0.2548296
      %v7706 = vadd.f32 %v7674, 0.2548296
      %v7707 = vadd.f32 %v7675, 0.2548296
      %v7708 = vadd.f32 %v7676, 0.2548296
      %v7709 = vadd.f32 %v7677, 0.2548296
      %v7710 = vadd.f32 %v7678, 0.2548296
      %v7711 = vadd.f32 %v7679, 0.2548296
      %v7712 = vadd.f32 %v7680, 0.2548296
      %v7713 = vadd.f32 %v7681, 0.2548296
      %v7714 = vadd.f32 %v7682, 0.2548296
      %v7715 = vadd.f32 %v7683, 0.2548296
      %v7716 = vadd.f32 %v7684, 0.2548296
      %v7717 = vadd.f32 %v7685, 0.2548296
      %v7718 = vadd.f32 %v7686, 0.2548296
      %v7719 = vadd.f32 %v7687, 0.2548296
      %v7720 = vadd.f32 %v7688, 0.2548296
      %v7721 = vadd.f32 %v7689, 0.2548296
      %v7722 = vadd.f32 %v7690, 0.2548296
      %v7723 = vadd.f32 %v7691, 0.2548296
      %v7724 = vmul.f32 %v7692, %v7405
      %v7725 = vmul.f32 %v7693, %v7407
      %v7726 = vmul.f32 %v7694, %v7409
      %v7727 = vmul.f32 %v7695, %v7411
      %v7728 = vmul.f32 %v7696, %v7413
      %v7729 = vmul.f32 %v7697, %v7415
      %v7730 = vmul.f32 %v7698, %v7417
      %v7731 = vmul.f32 %v7699, %v7419
      %v7732 = vmul.f32 %v7700, %v7421
      %v7733 = vmul.f32 %v7701, %v7423
      %v7734 = vmul.f32 %v7702, %v7425
      %v7735 = vmul.f32 %v7703, %v7427
      %v7736 = vmul.f32 %v7704, %v7429
      %v7737 = vmul.f32 %v7705, %v7431
      %v7738 = vmul.f32 %v7706, %v7433
      %v7739 = vmul.f32 %v7707, %v7435
      %v7740 = vmul.f32 %v7708, %v7437
      %v7741 = vmul.f32 %v7709, %v7439
      %v7742 = vmul.f32 %v7710, %v7441
      %v7743 = vmul.f32 %v7711, %v7443
      %v7744 = vmul.f32 %v7712, %v7445
      %v7745 = vmul.f32 %v7713, %v7447
      %v7746 = vmul.f32 %v7714, %v7449
      %v7747 = vmul.f32 %v7715, %v7451
      %v7748 = vmul.f32 %v7716, %v7453
      %v7749 = vmul.f32 %v7717, %v7455
      %v7750 = vmul.f32 %v7718, %v7457
      %v7751 = vmul.f32 %v7719, %v7459
      %v7752 = vmul.f32 %v7720, %v7461
      %v7753 = vmul.f32 %v7721, %v7463
      %v7754 = vmul.f32 %v7722, %v7465
      %v7755 = vmul.f32 %v7723, %v7467
      %v7756 = vsub.f32 0.0, %v7308
      %v7757 = vsub.f32 0.0, %v7309
      %v7758 = vsub.f32 0.0, %v7310
      %v7759 = vsub.f32 0.0, %v7311
      %v7760 = vsub.f32 0.0, %v7312
      %v7761 = vsub.f32 0.0, %v7313
      %v7762 = vsub.f32 0.0, %v7314
      %v7763 = vsub.f32 0.0, %v7315
      %v7764 = vsub.f32 0.0, %v7316
      %v7765 = vsub.f32 0.0, %v7317
      %v7766 = vsub.f32 0.0, %v7318
      %v7767 = vsub.f32 0.0, %v7319
      %v7768 = vsub.f32 0.0, %v7320
      %v7769 = vsub.f32 0.0, %v7321
      %v7770 = vsub.f32 0.0, %v7322
      %v7771 = vsub.f32 0.0, %v7323
      %v7772 = vsub.f32 0.0, %v7324
      %v7773 = vsub.f32 0.0, %v7325
      %v7774 = vsub.f32 0.0, %v7326
      %v7775 = vsub.f32 0.0, %v7327
      %v7776 = vsub.f32 0.0, %v7328
      %v7777 = vsub.f32 0.0, %v7329
      %v7778 = vsub.f32 0.0, %v7330
      %v7779 = vsub.f32 0.0, %v7331
      %v7780 = vsub.f32 0.0, %v7332
      %v7781 = vsub.f32 0.0, %v7333
      %v7782 = vsub.f32 0.0, %v7334
      %v7783 = vsub.f32 0.0, %v7335
      %v7784 = vsub.f32 0.0, %v7336
      %v7785 = vsub.f32 0.0, %v7337
      %v7786 = vsub.f32 0.0, %v7338
      %v7787 = vsub.f32 0.0, %v7339
      %v7788 = vmul.f32 %v7756, %v7308
      %v7789 = vmul.f32 %v7757, %v7309
      %v7790 = vmul.f32 %v7758, %v7310
      %v7791 = vmul.f32 %v7759, %v7311
      %v7792 = vmul.f32 %v7760, %v7312
      %v7793 = vmul.f32 %v7761, %v7313
      %v7794 = vmul.f32 %v7762, %v7314
      %v7795 = vmul.f32 %v7763, %v7315
      %v7796 = vmul.f32 %v7764, %v7316
      %v7797 = vmul.f32 %v7765, %v7317
      %v7798 = vmul.f32 %v7766, %v7318
      %v7799 = vmul.f32 %v7767, %v7319
      %v7800 = vmul.f32 %v7768, %v7320
      %v7801 = vmul.f32 %v7769, %v7321
      %v7802 = vmul.f32 %v7770, %v7322
      %v7803 = vmul.f32 %v7771, %v7323
      %v7804 = vmul.f32 %v7772, %v7324
      %v7805 = vmul.f32 %v7773, %v7325
      %v7806 = vmul.f32 %v7774, %v7326
      %v7807 = vmul.f32 %v7775, %v7327
      %v7808 = vmul.f32 %v7776, %v7328
      %v7809 = vmul.f32 %v7777, %v7329
      %v7810 = vmul.f32 %v7778, %v7330
      %v7811 = vmul.f32 %v7779, %v7331
      %v7812 = vmul.f32 %v7780, %v7332
      %v7813 = vmul.f32 %v7781, %v7333
      %v7814 = vmul.f32 %v7782, %v7334
      %v7815 = vmul.f32 %v7783, %v7335
      %v7816 = vmul.f32 %v7784, %v7336
      %v7817 = vmul.f32 %v7785, %v7337
      %v7818 = vmul.f32 %v7786, %v7338
      %v7819 = vmul.f32 %v7787, %v7339
      %v7820 = vmul.f32 %v7788, 1.442695
      %v7821 = vpow.pop %v7820
      %v7822 = vmul.f32 %v7789, 1.442695
      %v7823 = vpow.pop %v7822
      %v7824 = vmul.f32 %v7790, 1.442695
      %v7825 = vpow.pop %v7824
      %v7826 = vmul.f32 %v7791, 1.442695
      %v7827 = vpow.pop %v7826
      %v7828 = vmul.f32 %v7792, 1.442695
      %v7829 = vpow.pop %v7828
      %v7830 = vmul.f32 %v7793, 1.442695
      %v7831 = vpow.pop %v7830
      %v7832 = vmul.f32 %v7794, 1.442695
      %v7833 = vpow.pop %v7832
      %v7834 = vmul.f32 %v7795, 1.442695
      %v7835 = vpow.pop %v7834
      %v7836 = vmul.f32 %v7796, 1.442695
      %v7837 = vpow.pop %v7836
      %v7838 = vmul.f32 %v7797, 1.442695
      %v7839 = vpow.pop %v7838
      %v7840 = vmul.f32 %v7798, 1.442695
      %v7841 = vpow.pop %v7840
      %v7842 = vmul.f32 %v7799, 1.442695
      %v7843 = vpow.pop %v7842
      %v7844 = vmul.f32 %v7800, 1.442695
      %v7845 = vpow.pop %v7844
      %v7846 = vmul.f32 %v7801, 1.442695
      %v7847 = vpow.pop %v7846
      %v7848 = vmul.f32 %v7802, 1.442695
      %v7849 = vpow.pop %v7848
      %v7850 = vmul.f32 %v7803, 1.442695
      %v7851 = vpow.pop %v7850
      %v7852 = vmul.f32 %v7804, 1.442695
      %v7853 = vpow.pop %v7852
      %v7854 = vmul.f32 %v7805, 1.442695
      %v7855 = vpow.pop %v7854
      %v7856 = vmul.f32 %v7806, 1.442695
      %v7857 = vpow.pop %v7856
      %v7858 = vmul.f32 %v7807, 1.442695
      %v7859 = vpow.pop %v7858
      %v7860 = vmul.f32 %v7808, 1.442695
      %v7861 = vpow.pop %v7860
      %v7862 = vmul.f32 %v7809, 1.442695
      %v7863 = vpow.pop %v7862
      %v7864 = vmul.f32 %v7810, 1.442695
      %v7865 = vpow.pop %v7864
      %v7866 = vmul.f32 %v7811, 1.442695
      %v7867 = vpow.pop %v7866
      %v7868 = vmul.f32 %v7812, 1.442695
      %v7869 = vpow.pop %v7868
      %v7870 = vmul.f32 %v7813, 1.442695
      %v7871 = vpow.pop %v7870
      %v7872 = vmul.f32 %v7814, 1.442695
      %v7873 = vpow.pop %v7872
      %v7874 = vmul.f32 %v7815, 1.442695
      %v7875 = vpow.pop %v7874
      %v7876 = vmul.f32 %v7816, 1.442695
      %v7877 = vpow.pop %v7876
      %v7878 = vmul.f32 %v7817, 1.442695
      %v7879 = vpow.pop %v7878
      %v7880 = vmul.f32 %v7818, 1.442695
      %v7881 = vpow.pop %v7880
      %v7882 = vmul.f32 %v7819, 1.442695
      %v7883 = vpow.pop %v7882
      %v7884 = vmul.f32 %v7724, %v7821
      %v7885 = vmul.f32 %v7725, %v7823
      %v7886 = vmul.f32 %v7726, %v7825
      %v7887 = vmul.f32 %v7727, %v7827
      %v7888 = vmul.f32 %v7728, %v7829
      %v7889 = vmul.f32 %v7729, %v7831
      %v7890 = vmul.f32 %v7730, %v7833
      %v7891 = vmul.f32 %v7731, %v7835
      %v7892 = vmul.f32 %v7732, %v7837
      %v7893 = vmul.f32 %v7733, %v7839
      %v7894 = vmul.f32 %v7734, %v7841
      %v7895 = vmul.f32 %v7735, %v7843
      %v7896 = vmul.f32 %v7736, %v7845
      %v7897 = vmul.f32 %v7737, %v7847
      %v7898 = vmul.f32 %v7738, %v7849
      %v7899 = vmul.f32 %v7739, %v7851
      %v7900 = vmul.f32 %v7740, %v7853
      %v7901 = vmul.f32 %v7741, %v7855
      %v7902 = vmul.f32 %v7742, %v7857
      %v7903 = vmul.f32 %v7743, %v7859
      %v7904 = vmul.f32 %v7744, %v7861
      %v7905 = vmul.f32 %v7745, %v7863
      %v7906 = vmul.f32 %v7746, %v7865
      %v7907 = vmul.f32 %v7747, %v7867
      %v7908 = vmul.f32 %v7748, %v7869
      %v7909 = vmul.f32 %v7749, %v7871
      %v7910 = vmul.f32 %v7750, %v7873
      %v7911 = vmul.f32 %v7751, %v7875
      %v7912 = vmul.f32 %v7752, %v7877
      %v7913 = vmul.f32 %v7753, %v7879
      %v7914 = vmul.f32 %v7754, %v7881
      %v7915 = vmul.f32 %v7755, %v7883
      %v7916 = vsub.f32 1.0, %v7884
      %v7917 = vsub.f32 1.0, %v7885
      %v7918 = vsub.f32 1.0, %v7886
      %v7919 = vsub.f32 1.0, %v7887
      %v7920 = vsub.f32 1.0, %v7888
      %v7921 = vsub.f32 1.0, %v7889
      %v7922 = vsub.f32 1.0, %v7890
      %v7923 = vsub.f32 1.0, %v7891
      %v7924 = vsub.f32 1.0, %v7892
      %v7925 = vsub.f32 1.0, %v7893
      %v7926 = vsub.f32 1.0, %v7894
      %v7927 = vsub.f32 1.0, %v7895
      %v7928 = vsub.f32 1.0, %v7896
      %v7929 = vsub.f32 1.0, %v7897
      %v7930 = vsub.f32 1.0, %v7898
      %v7931 = vsub.f32 1.0, %v7899
      %v7932 = vsub.f32 1.0, %v7900
      %v7933 = vsub.f32 1.0, %v7901
      %v7934 = vsub.f32 1.0, %v7902
      %v7935 = vsub.f32 1.0, %v7903
      %v7936 = vsub.f32 1.0, %v7904
      %v7937 = vsub.f32 1.0, %v7905
      %v7938 = vsub.f32 1.0, %v7906
      %v7939 = vsub.f32 1.0, %v7907
      %v7940 = vsub.f32 1.0, %v7908
      %v7941 = vsub.f32 1.0, %v7909
      %v7942 = vsub.f32 1.0, %v7910
      %v7943 = vsub.f32 1.0, %v7911
      %v7944 = vsub.f32 1.0, %v7912
      %v7945 = vsub.f32 1.0, %v7913
      %v7946 = vsub.f32 1.0, %v7914
      %v7947 = vsub.f32 1.0, %v7915
      %vm7948 = vcmp.lt.f32.partialorder %v7276, 0.0
      %vm7949 = vcmp.lt.f32.partialorder %v7277, 0.0
      %vm7950 = vcmp.lt.f32.partialorder %v7278, 0.0
      %vm7951 = vcmp.lt.f32.partialorder %v7279, 0.0
      %vm7952 = vcmp.lt.f32.partialorder %v7280, 0.0
      %vm7953 = vcmp.lt.f32.partialorder %v7281, 0.0
      %vm7954 = vcmp.lt.f32.partialorder %v7282, 0.0
      %vm7955 = vcmp.lt.f32.partialorder %v7283, 0.0
      %vm7956 = vcmp.lt.f32.partialorder %v7284, 0.0
      %vm7957 = vcmp.lt.f32.partialorder %v7285, 0.0
      %vm7958 = vcmp.lt.f32.partialorder %v7286, 0.0
      %vm7959 = vcmp.lt.f32.partialorder %v7287, 0.0
      %vm7960 = vcmp.lt.f32.partialorder %v7288, 0.0
      %vm7961 = vcmp.lt.f32.partialorder %v7289, 0.0
      %vm7962 = vcmp.lt.f32.partialorder %v7290, 0.0
      %vm7963 = vcmp.lt.f32.partialorder %v7291, 0.0
      %vm7964 = vcmp.lt.f32.partialorder %v7292, 0.0
      %vm7965 = vcmp.lt.f32.partialorder %v7293, 0.0
      %vm7966 = vcmp.lt.f32.partialorder %v7294, 0.0
      %vm7967 = vcmp.lt.f32.partialorder %v7295, 0.0
      %vm7968 = vcmp.lt.f32.partialorder %v7296, 0.0
      %vm7969 = vcmp.lt.f32.partialorder %v7297, 0.0
      %vm7970 = vcmp.lt.f32.partialorder %v7298, 0.0
      %vm7971 = vcmp.lt.f32.partialorder %v7299, 0.0
      %vm7972 = vcmp.lt.f32.partialorder %v7300, 0.0
      %vm7973 = vcmp.lt.f32.partialorder %v7301, 0.0
      %vm7974 = vcmp.lt.f32.partialorder %v7302, 0.0
      %vm7975 = vcmp.lt.f32.partialorder %v7303, 0.0
      %vm7976 = vcmp.lt.f32.partialorder %v7304, 0.0
      %vm7977 = vcmp.lt.f32.partialorder %v7305, 0.0
      %vm7978 = vcmp.lt.f32.partialorder %v7306, 0.0
      %vm7979 = vcmp.lt.f32.partialorder %v7307, 0.0
      %v7980 = vsub.f32 0.0, %v7916
      %v7981 = vsub.f32 0.0, %v7917
      %v7982 = vsub.f32 0.0, %v7918
      %v7983 = vsub.f32 0.0, %v7919
      %v7984 = vsub.f32 0.0, %v7920
      %v7985 = vsub.f32 0.0, %v7921
      %v7986 = vsub.f32 0.0, %v7922
      %v7987 = vsub.f32 0.0, %v7923
      %v7988 = vsub.f32 0.0, %v7924
      %v7989 = vsub.f32 0.0, %v7925
      %v7990 = vsub.f32 0.0, %v7926
      %v7991 = vsub.f32 0.0, %v7927
      %v7992 = vsub.f32 0.0, %v7928
      %v7993 = vsub.f32 0.0, %v7929
      %v7994 = vsub.f32 0.0, %v7930
      %v7995 = vsub.f32 0.0, %v7931
      %v7996 = vsub.f32 0.0, %v7932
      %v7997 = vsub.f32 0.0, %v7933
      %v7998 = vsub.f32 0.0, %v7934
      %v7999 = vsub.f32 0.0, %v7935
      %v8000 = vsub.f32 0.0, %v7936
      %v8001 = vsub.f32 0.0, %v7937
      %v8002 = vsub.f32 0.0, %v7938
      %v8003 = vsub.f32 0.0, %v7939
      %v8004 = vsub.f32 0.0, %v7940
      %v8005 = vsub.f32 0.0, %v7941
      %v8006 = vsub.f32 0.0, %v7942
      %v8007 = vsub.f32 0.0, %v7943
      %v8008 = vsub.f32 0.0, %v7944
      %v8009 = vsub.f32 0.0, %v7945
      %v8010 = vsub.f32 0.0, %v7946
      %v8011 = vsub.f32 0.0, %v7947
      %v8012 = vsel %vm7948, %v7980, %v7916
      %v8013 = vsel %vm7949, %v7981, %v7917
      %v8014 = vsel %vm7950, %v7982, %v7918
      %v8015 = vsel %vm7951, %v7983, %v7919
      %v8016 = vsel %vm7952, %v7984, %v7920
      %v8017 = vsel %vm7953, %v7985, %v7921
      %v8018 = vsel %vm7954, %v7986, %v7922
      %v8019 = vsel %vm7955, %v7987, %v7923
      %v8020 = vsel %vm7956, %v7988, %v7924
      %v8021 = vsel %vm7957, %v7989, %v7925
      %v8022 = vsel %vm7958, %v7990, %v7926
      %v8023 = vsel %vm7959, %v7991, %v7927
      %v8024 = vsel %vm7960, %v7992, %v7928
      %v8025 = vsel %vm7961, %v7993, %v7929
      %v8026 = vsel %vm7962, %v7994, %v7930
      %v8027 = vsel %vm7963, %v7995, %v7931
      %v8028 = vsel %vm7964, %v7996, %v7932
      %v8029 = vsel %vm7965, %v7997, %v7933
      %v8030 = vsel %vm7966, %v7998, %v7934
      %v8031 = vsel %vm7967, %v7999, %v7935
      %v8032 = vsel %vm7968, %v8000, %v7936
      %v8033 = vsel %vm7969, %v8001, %v7937
      %v8034 = vsel %vm7970, %v8002, %v7938
      %v8035 = vsel %vm7971, %v8003, %v7939
      %v8036 = vsel %vm7972, %v8004, %v7940
      %v8037 = vsel %vm7973, %v8005, %v7941
      %v8038 = vsel %vm7974, %v8006, %v7942
      %v8039 = vsel %vm7975, %v8007, %v7943
      %v8040 = vsel %vm7976, %v8008, %v7944
      %v8041 = vsel %vm7977, %v8009, %v7945
      %v8042 = vsel %vm7978, %v8010, %v7946
      %v8043 = vsel %vm7979, %v8011, %v7947
      %v8044 = vadd.f32 %v8012, 1.0
      %v8045 = vadd.f32 %v8013, 1.0
      %v8046 = vadd.f32 %v8014, 1.0
      %v8047 = vadd.f32 %v8015, 1.0
      %v8048 = vadd.f32 %v8016, 1.0
      %v8049 = vadd.f32 %v8017, 1.0
      %v8050 = vadd.f32 %v8018, 1.0
      %v8051 = vadd.f32 %v8019, 1.0
      %v8052 = vadd.f32 %v8020, 1.0
      %v8053 = vadd.f32 %v8021, 1.0
      %v8054 = vadd.f32 %v8022, 1.0
      %v8055 = vadd.f32 %v8023, 1.0
      %v8056 = vadd.f32 %v8024, 1.0
      %v8057 = vadd.f32 %v8025, 1.0
      %v8058 = vadd.f32 %v8026, 1.0
      %v8059 = vadd.f32 %v8027, 1.0
      %v8060 = vadd.f32 %v8028, 1.0
      %v8061 = vadd.f32 %v8029, 1.0
      %v8062 = vadd.f32 %v8030, 1.0
      %v8063 = vadd.f32 %v8031, 1.0
      %v8064 = vadd.f32 %v8032, 1.0
      %v8065 = vadd.f32 %v8033, 1.0
      %v8066 = vadd.f32 %v8034, 1.0
      %v8067 = vadd.f32 %v8035, 1.0
      %v8068 = vadd.f32 %v8036, 1.0
      %v8069 = vadd.f32 %v8037, 1.0
      %v8070 = vadd.f32 %v8038, 1.0
      %v8071 = vadd.f32 %v8039, 1.0
      %v8072 = vadd.f32 %v8040, 1.0
      %v8073 = vadd.f32 %v8041, 1.0
      %v8074 = vadd.f32 %v8042, 1.0
      %v8075 = vadd.f32 %v8043, 1.0
      %v8076 = vmul.f32 %v7244, %v8044
      %v8077 = vmul.f32 %v7245, %v8045
      %v8078 = vmul.f32 %v7246, %v8046
      %v8079 = vmul.f32 %v7247, %v8047
      %v8080 = vmul.f32 %v7248, %v8048
      %v8081 = vmul.f32 %v7249, %v8049
      %v8082 = vmul.f32 %v7250, %v8050
      %v8083 = vmul.f32 %v7251, %v8051
      %v8084 = vmul.f32 %v7252, %v8052
      %v8085 = vmul.f32 %v7253, %v8053
      %v8086 = vmul.f32 %v7254, %v8054
      %v8087 = vmul.f32 %v7255, %v8055
      %v8088 = vmul.f32 %v7256, %v8056
      %v8089 = vmul.f32 %v7257, %v8057
      %v8090 = vmul.f32 %v7258, %v8058
      %v8091 = vmul.f32 %v7259, %v8059
      %v8092 = vmul.f32 %v7260, %v8060
      %v8093 = vmul.f32 %v7261, %v8061
      %v8094 = vmul.f32 %v7262, %v8062
      %v8095 = vmul.f32 %v7263, %v8063
      %v8096 = vmul.f32 %v7264, %v8064
      %v8097 = vmul.f32 %v7265, %v8065
      %v8098 = vmul.f32 %v7266, %v8066
      %v8099 = vmul.f32 %v7267, %v8067
      %v8100 = vmul.f32 %v7268, %v8068
      %v8101 = vmul.f32 %v7269, %v8069
      %v8102 = vmul.f32 %v7270, %v8070
      %v8103 = vmul.f32 %v7271, %v8071
      %v8104 = vmul.f32 %v7272, %v8072
      %v8105 = vmul.f32 %v7273, %v8073
      %v8106 = vmul.f32 %v7274, %v8074
      %v8107 = vmul.f32 %v7275, %v8075
      %v8108 = vld [vmem:[%s9] sm:$0xf]
      %v8109 = vld [vmem:[%s9 + $0x4] sm:$0xf]
      %v8110 = vld [vmem:[%s9 + $0x8] sm:$0xf]
      %v8111 = vld [vmem:[%s9 + $0xc] sm:$0xf]
      %v8112 = vld [vmem:[%s9 + $0x10] sm:$0xf]
      %v8113 = vld [vmem:[%s9 + $0x14] sm:$0xf]
      %v8114 = vld [vmem:[%s9 + $0x18] sm:$0xf]
      %v8115 = vld [vmem:[%s9 + $0x1c] sm:$0xf]
      %v8116 = vld [vmem:[%s9 + $0x20] sm:$0xf]
      %v8117 = vld [vmem:[%s9 + $0x24] sm:$0xf]
      %v8118 = vld [vmem:[%s9 + $0x28] sm:$0xf]
      %v8119 = vld [vmem:[%s9 + $0x2c] sm:$0xf]
      %v8120 = vld [vmem:[%s9 + $0x30] sm:$0xf]
      %v8121 = vld [vmem:[%s9 + $0x34] sm:$0xf]
      %v8122 = vld [vmem:[%s9 + $0x38] sm:$0xf]
      %v8123 = vld [vmem:[%s9 + $0x3c] sm:$0xf]
      %v8124 = vld [vmem:[%s9 + $0x40] sm:$0xf]
      %v8125 = vld [vmem:[%s9 + $0x44] sm:$0xf]
      %v8126 = vld [vmem:[%s9 + $0x48] sm:$0xf]
      %v8127 = vld [vmem:[%s9 + $0x4c] sm:$0xf]
      %v8128 = vld [vmem:[%s9 + $0x50] sm:$0xf]
      %v8129 = vld [vmem:[%s9 + $0x54] sm:$0xf]
      %v8130 = vld [vmem:[%s9 + $0x58] sm:$0xf]
      %v8131 = vld [vmem:[%s9 + $0x5c] sm:$0xf]
      %v8132 = vld [vmem:[%s9 + $0x60] sm:$0xf]
      %v8133 = vld [vmem:[%s9 + $0x64] sm:$0xf]
      %v8134 = vld [vmem:[%s9 + $0x68] sm:$0xf]
      %v8135 = vld [vmem:[%s9 + $0x6c] sm:$0xf]
      %v8136 = vld [vmem:[%s9 + $0x70] sm:$0xf]
      %v8137 = vld [vmem:[%s9 + $0x74] sm:$0xf]
      %v8138 = vld [vmem:[%s9 + $0x78] sm:$0xf]
      %v8139 = vld [vmem:[%s9 + $0x7c] sm:$0xf]
      %v8140 = vpack.c.bf16 %v7217, %v7214
      %v8141 = vpack.c.bf16 %v7225, %v7222
      %v8142 = vpack.c.bf16 %v7233, %v7230
      %v8143 = vpack.c.bf16 %v7241, %v7238
      %v8176 = vunpack.c.l.b16 %v8108
      %v8177 = vunpack.c.l.b16 %v8109
      %v8178 = vunpack.c.l.b16 %v8110
      %v8179 = vunpack.c.l.b16 %v8111
      %v8180 = vunpack.c.l.b16 %v8112
      %v8181 = vunpack.c.l.b16 %v8113
      %v8182 = vunpack.c.l.b16 %v8114
      %v8183 = vunpack.c.l.b16 %v8115
      %v8184 = vunpack.c.l.b16 %v8116
      %v8185 = vunpack.c.l.b16 %v8117
      %v8186 = vunpack.c.l.b16 %v8118
      %v8187 = vunpack.c.l.b16 %v8119
      %v8188 = vunpack.c.l.b16 %v8120
      %v8189 = vunpack.c.l.b16 %v8121
      %v8190 = vunpack.c.l.b16 %v8122
      %v8191 = vunpack.c.l.b16 %v8123
      %v8192 = vunpack.c.l.b16 %v8124
      %v8193 = vunpack.c.l.b16 %v8125
      %v8194 = vunpack.c.l.b16 %v8126
      %v8195 = vunpack.c.l.b16 %v8127
      %v8196 = vunpack.c.l.b16 %v8128
      %v8197 = vunpack.c.l.b16 %v8129
      %v8198 = vunpack.c.l.b16 %v8130
      %v8199 = vunpack.c.l.b16 %v8131
      %v8200 = vunpack.c.l.b16 %v8132
      %v8201 = vunpack.c.l.b16 %v8133
      %v8202 = vunpack.c.l.b16 %v8134
      %v8203 = vunpack.c.l.b16 %v8135
      %v8204 = vunpack.c.l.b16 %v8136
      %v8205 = vunpack.c.l.b16 %v8137
      %v8206 = vunpack.c.l.b16 %v8138
      %v8207 = vunpack.c.l.b16 %v8139
      %v8208 = vpack.c.b16 %v8177, %v8176
      %v8209 = vpack.c.b16 %v8179, %v8178
      %v8210 = vpack.c.b16 %v8181, %v8180
      %v8211 = vpack.c.b16 %v8183, %v8182
      %v8212 = vpack.c.b16 %v8185, %v8184
      %v8213 = vpack.c.b16 %v8187, %v8186
      %v8214 = vpack.c.b16 %v8189, %v8188
      %v8215 = vpack.c.b16 %v8191, %v8190
      %v8216 = vpack.c.b16 %v8193, %v8192
      %v8217 = vpack.c.b16 %v8195, %v8194
      %v8218 = vpack.c.b16 %v8197, %v8196
      %v8219 = vpack.c.b16 %v8199, %v8198
      %v8220 = vpack.c.b16 %v8201, %v8200
      %v8221 = vpack.c.b16 %v8203, %v8202
      %v8222 = vpack.c.b16 %v8205, %v8204
      %v8223 = vpack.c.b16 %v8207, %v8206
      %vm8224 = vcmask 523264
      %v8226 = vsel %vm8224, %v8208, 0
      %v8229 = vsel %vm8224, %v8209, 0
      %v8232 = vsel %vm8224, %v8210, 0
      %v8235 = vsel %vm8224, %v8211, 0
      %v8238 = vsel %vm8224, %v8212, 0
      %v8241 = vsel %vm8224, %v8213, 0
      %v8244 = vsel %vm8224, %v8214, 0
      %v8247 = vsel %vm8224, %v8215, 0
      %v8250 = vsel %vm8224, %v8216, 0
      %v8253 = vsel %vm8224, %v8217, 0
      %v8256 = vsel %vm8224, %v8218, 0
      %v8259 = vsel %vm8224, %v8219, 0
      %v8262 = vsel %vm8224, %v8220, 0
      %v8265 = vsel %vm8224, %v8221, 0
      %v8268 = vsel %vm8224, %v8222, 0
      %v8271 = vsel %vm8224, %v8223, 0
      %8273 = vmatprep.subr.bf16.mxu0 0
      %8274 = vmatpush1.bf16.msra.mxu0 0
      %8275 = vmatprep.subr.bf16.mxu0 0
      %8276 = vmatpush1.bf16.msra.mxu0 0
      %8277 = vmatprep.subr.bf16.mxu0 0
      %8278 = vmatpush1.bf16.msra.mxu0 0
      %8279 = vmatprep.subr.bf16.mxu0 0
      %8280 = vmatpush1.bf16.msra.mxu0 0
      %8281 = vmatprep.subr.bf16.mxu0 0
      %8282 = vmatpush1.bf16.msra.mxu0 %v8143
      %8283 = vmatprep.subr.bf16.mxu0 0
      %8284 = vmatpush1.bf16.msra.mxu0 %v8142
      %8285 = vmatprep.subr.bf16.mxu0 0
      %8286 = vmatpush1.bf16.msra.mxu0 %v8141
      %8287 = vmatprep.subr.bf16.mxu0 0
      %8288 = vmatpush1.bf16.msra.mxu0 %v8140
      %8289 = vmatprep.subr.bf16.mxu0 0
      %8290 = vmatpush2.bf16.msra.mxu0 0
      %8291 = vmatprep.subr.bf16.mxu0 0
      %8292 = vmatpush2.bf16.msra.mxu0 0
      %8293 = vmatprep.subr.bf16.mxu0 0
      %8294 = vmatpush2.bf16.msra.mxu0 0
      %8295 = vmatprep.subr.bf16.mxu0 0
      %8296 = vmatpush2.bf16.msra.mxu0 0
      %8297 = vmatprep.subr.bf16.mxu0 0
      %8298 = vmatpush2.bf16.msra.mxu0 0
      %8299 = vmatprep.subr.bf16.mxu0 0
      %8300 = vmatpush2.bf16.msra.mxu0 0
      %8301 = vmatprep.subr.bf16.mxu0 0
      %8302 = vmatpush2.bf16.msra.mxu0 0
      %8303 = vmatprep.subr.bf16.mxu0 0
      %8304 = vmatpush2.bf16.msra.mxu0 0
      %8305 = vmatprep.mubr.bf16.mxu0 0
      %8306 = vmatmul.mubr.bf16.gmra.mxu0 %v8226
      %v8307 = vpop.f32.mrf.mxu0
      %v8308 = vadd.f32 0.0, %v8307
      %v8309 = vpop.f32.mrf.mxu0
      %v8310 = vpop.f32.mrf.mxu0
      %v8311 = vadd.f32 0.0, %v8310
      %v8312 = vpop.f32.mrf.mxu0
      %8313 = vmatprep.mubr.bf16.mxu0 0
      %8314 = vmatmul.mubr.bf16.gmra.mxu0 %v8229
      %v8315 = vpop.f32.mrf.mxu0
      %v8316 = vadd.f32 0.0, %v8315
      %v8317 = vpop.f32.mrf.mxu0
      %v8318 = vpop.f32.mrf.mxu0
      %v8319 = vadd.f32 0.0, %v8318
      %v8320 = vpop.f32.mrf.mxu0
      %8321 = vmatprep.mubr.bf16.mxu0 0
      %8322 = vmatmul.mubr.bf16.gmra.mxu0 %v8232
      %v8323 = vpop.f32.mrf.mxu0
      %v8324 = vadd.f32 0.0, %v8323
      %v8325 = vpop.f32.mrf.mxu0
      %v8326 = vpop.f32.mrf.mxu0
      %v8327 = vadd.f32 0.0, %v8326
      %v8328 = vpop.f32.mrf.mxu0
      %8329 = vmatprep.mubr.bf16.mxu0 0
      %8330 = vmatmul.mubr.bf16.gmra.mxu0 %v8235
      %v8331 = vpop.f32.mrf.mxu0
      %v8332 = vadd.f32 0.0, %v8331
      %v8333 = vpop.f32.mrf.mxu0
      %v8334 = vpop.f32.mrf.mxu0
      %v8335 = vadd.f32 0.0, %v8334
      %v8336 = vpop.f32.mrf.mxu0
      %8337 = vmatprep.mubr.bf16.mxu0 0
      %8338 = vmatmul.mubr.bf16.gmra.mxu0 %v8238
      %v8339 = vpop.f32.mrf.mxu0
      %v8340 = vadd.f32 0.0, %v8339
      %v8341 = vpop.f32.mrf.mxu0
      %v8342 = vpop.f32.mrf.mxu0
      %v8343 = vadd.f32 0.0, %v8342
      %v8344 = vpop.f32.mrf.mxu0
      %8345 = vmatprep.mubr.bf16.mxu0 0
      %8346 = vmatmul.mubr.bf16.gmra.mxu0 %v8241
      %v8347 = vpop.f32.mrf.mxu0
      %v8348 = vadd.f32 0.0, %v8347
      %v8349 = vpop.f32.mrf.mxu0
      %v8350 = vpop.f32.mrf.mxu0
      %v8351 = vadd.f32 0.0, %v8350
      %v8352 = vpop.f32.mrf.mxu0
      %8353 = vmatprep.mubr.bf16.mxu0 0
      %8354 = vmatmul.mubr.bf16.gmra.mxu0 %v8244
      %v8355 = vpop.f32.mrf.mxu0
      %v8356 = vadd.f32 0.0, %v8355
      %v8357 = vpop.f32.mrf.mxu0
      %v8358 = vpop.f32.mrf.mxu0
      %v8359 = vadd.f32 0.0, %v8358
      %v8360 = vpop.f32.mrf.mxu0
      %8361 = vmatprep.mubr.bf16.mxu0 0
      %8362 = vmatmul.mubr.bf16.gmra.mxu0 %v8247
      %v8363 = vpop.f32.mrf.mxu0
      %v8364 = vadd.f32 0.0, %v8363
      %v8365 = vpop.f32.mrf.mxu0
      %v8366 = vpop.f32.mrf.mxu0
      %v8367 = vadd.f32 0.0, %v8366
      %v8368 = vpop.f32.mrf.mxu0
      %8369 = vmatprep.mubr.bf16.mxu0 0
      %8370 = vmatmul.mubr.bf16.gmra.mxu0 %v8250
      %v8371 = vpop.f32.mrf.mxu0
      %v8372 = vadd.f32 0.0, %v8371
      %v8373 = vpop.f32.mrf.mxu0
      %v8374 = vpop.f32.mrf.mxu0
      %v8375 = vadd.f32 0.0, %v8374
      %v8376 = vpop.f32.mrf.mxu0
      %8377 = vmatprep.mubr.bf16.mxu0 0
      %8378 = vmatmul.mubr.bf16.gmra.mxu0 %v8253
      %v8379 = vpop.f32.mrf.mxu0
      %v8380 = vadd.f32 0.0, %v8379
      %v8381 = vpop.f32.mrf.mxu0
      %v8382 = vpop.f32.mrf.mxu0
      %v8383 = vadd.f32 0.0, %v8382
      %v8384 = vpop.f32.mrf.mxu0
      %8385 = vmatprep.mubr.bf16.mxu0 0
      %8386 = vmatmul.mubr.bf16.gmra.mxu0 %v8256
      %v8387 = vpop.f32.mrf.mxu0
      %v8388 = vadd.f32 0.0, %v8387
      %v8389 = vpop.f32.mrf.mxu0
      %v8390 = vpop.f32.mrf.mxu0
      %v8391 = vadd.f32 0.0, %v8390
      %v8392 = vpop.f32.mrf.mxu0
      %8393 = vmatprep.mubr.bf16.mxu0 0
      %8394 = vmatmul.mubr.bf16.gmra.mxu0 %v8259
      %v8395 = vpop.f32.mrf.mxu0
      %v8396 = vadd.f32 0.0, %v8395
      %v8397 = vpop.f32.mrf.mxu0
      %v8398 = vpop.f32.mrf.mxu0
      %v8399 = vadd.f32 0.0, %v8398
      %v8400 = vpop.f32.mrf.mxu0
      %8401 = vmatprep.mubr.bf16.mxu0 0
      %8402 = vmatmul.mubr.bf16.gmra.mxu0 %v8262
      %v8403 = vpop.f32.mrf.mxu0
      %v8404 = vadd.f32 0.0, %v8403
      %v8405 = vpop.f32.mrf.mxu0
      %v8406 = vpop.f32.mrf.mxu0
      %v8407 = vadd.f32 0.0, %v8406
      %v8408 = vpop.f32.mrf.mxu0
      %8409 = vmatprep.mubr.bf16.mxu0 0
      %8410 = vmatmul.mubr.bf16.gmra.mxu0 %v8265
      %v8411 = vpop.f32.mrf.mxu0
      %v8412 = vadd.f32 0.0, %v8411
      %v8413 = vpop.f32.mrf.mxu0
      %v8414 = vpop.f32.mrf.mxu0
      %v8415 = vadd.f32 0.0, %v8414
      %v8416 = vpop.f32.mrf.mxu0
      %8417 = vmatprep.mubr.bf16.mxu0 0
      %8418 = vmatmul.mubr.bf16.gmra.mxu0 %v8268
      %v8419 = vpop.f32.mrf.mxu0
      %v8420 = vadd.f32 0.0, %v8419
      %v8421 = vpop.f32.mrf.mxu0
      %v8422 = vpop.f32.mrf.mxu0
      %v8423 = vadd.f32 0.0, %v8422
      %v8424 = vpop.f32.mrf.mxu0
      %8425 = vmatprep.mubr.bf16.mxu0 0
      %8426 = vmatmul.mubr.bf16.gmra.mxu0 %v8271
      %v8427 = vpop.f32.mrf.mxu0
      %v8428 = vadd.f32 0.0, %v8427
      %v8429 = vpop.f32.mrf.mxu0
      %v8430 = vpop.f32.mrf.mxu0
      %v8431 = vadd.f32 0.0, %v8430
      %v8432 = vpop.f32.mrf.mxu0
      %8433 = vdwg.mxu0
      %v8434 = vpack.c.bf16 %v3874, %v3873
      %v8435 = vpack.c.bf16 %v3876, %v3875
      %v8436 = vpack.c.bf16 %v3878, %v3877
      %v8437 = vpack.c.bf16 %v3880, %v3879
      %v8438 = vpack.c.bf16 %v8311, %v8308
      %v8439 = vpack.c.bf16 %v8319, %v8316
      %v8440 = vpack.c.bf16 %v8327, %v8324
      %v8441 = vpack.c.bf16 %v8335, %v8332
      %v8442 = vpack.c.bf16 %v8343, %v8340
      %v8443 = vpack.c.bf16 %v8351, %v8348
      %v8444 = vpack.c.bf16 %v8359, %v8356
      %v8445 = vpack.c.bf16 %v8367, %v8364
      %v8446 = vpack.c.bf16 %v8375, %v8372
      %v8447 = vpack.c.bf16 %v8383, %v8380
      %v8448 = vpack.c.bf16 %v8391, %v8388
      %v8449 = vpack.c.bf16 %v8399, %v8396
      %v8450 = vpack.c.bf16 %v8407, %v8404
      %v8451 = vpack.c.bf16 %v8415, %v8412
      %v8452 = vpack.c.bf16 %v8423, %v8420
      %v8453 = vpack.c.bf16 %v8431, %v8428
      %vm8454 = vcmask 130048
      %v8456 = vsel %vm8454, %v8434, 0
      %v8459 = vsel %vm8454, %v8435, 0
      %v8462 = vsel %vm8454, %v8436, 0
      %v8465 = vsel %vm8454, %v8437, 0
      %v8468 = vsel %vm8454, %v8438, 0
      %v8471 = vsel %vm8454, %v8439, 0
      %v8474 = vsel %vm8454, %v8440, 0
      %v8477 = vsel %vm8454, %v8441, 0
      %v8480 = vsel %vm8454, %v8442, 0
      %v8483 = vsel %vm8454, %v8443, 0
      %v8486 = vsel %vm8454, %v8444, 0
      %v8489 = vsel %vm8454, %v8445, 0
      %v8492 = vsel %vm8454, %v8446, 0
      %v8495 = vsel %vm8454, %v8447, 0
      %v8498 = vsel %vm8454, %v8448, 0
      %v8501 = vsel %vm8454, %v8449, 0
      %v8504 = vsel %vm8454, %v8450, 0
      %v8507 = vsel %vm8454, %v8451, 0
      %v8510 = vsel %vm8454, %v8452, 0
      %v8513 = vsel %vm8454, %v8453, 0
      %8515 = vmatprep.subr.bf16.mxu0 0
      %8516 = vmatpush1.bf16.xpose.msra.mxu0 %v8489
      %8517 = vmatprep.subr.bf16.mxu0 0
      %8518 = vmatpush1.bf16.xpose.msra.mxu0 %v8486
      %8519 = vmatprep.subr.bf16.mxu0 0
      %8520 = vmatpush1.bf16.xpose.msra.mxu0 %v8483
      %8521 = vmatprep.subr.bf16.mxu0 0
      %8522 = vmatpush1.bf16.xpose.msra.mxu0 %v8480
      %8523 = vmatprep.subr.bf16.mxu0 0
      %8524 = vmatpush1.bf16.xpose.msra.mxu0 %v8477
      %8525 = vmatprep.subr.bf16.mxu0 0
      %8526 = vmatpush1.bf16.xpose.msra.mxu0 %v8474
      %8527 = vmatprep.subr.bf16.mxu0 0
      %8528 = vmatpush1.bf16.xpose.msra.mxu0 %v8471
      %8529 = vmatprep.subr.bf16.mxu0 0
      %8530 = vmatpush1.bf16.xpose.msra.mxu0 %v8468
      %8531 = vmatprep.subr.bf16.mxu0 0
      %8532 = vmatpush2.bf16.xpose.msra.mxu0 %v8513
      %8533 = vmatprep.subr.bf16.mxu0 0
      %8534 = vmatpush2.bf16.xpose.msra.mxu0 %v8510
      %8535 = vmatprep.subr.bf16.mxu0 0
      %8536 = vmatpush2.bf16.xpose.msra.mxu0 %v8507
      %8537 = vmatprep.subr.bf16.mxu0 0
      %8538 = vmatpush2.bf16.xpose.msra.mxu0 %v8504
      %8539 = vmatprep.subr.bf16.mxu0 0
      %8540 = vmatpush2.bf16.xpose.msra.mxu0 %v8501
      %8541 = vmatprep.subr.bf16.mxu0 0
      %8542 = vmatpush2.bf16.xpose.msra.mxu0 %v8498
      %8543 = vmatprep.subr.bf16.mxu0 0
      %8544 = vmatpush2.bf16.xpose.msra.mxu0 %v8495
      %8545 = vmatprep.subr.bf16.mxu0 0
      %8546 = vmatpush2.bf16.xpose.msra.mxu0 %v8492
      %8547 = vmatprep.mubr.bf16.mxu0 0
      %8548 = vmatmul.mubr.bf16.gmra.mxu0 %v8456
      %v8549 = vpop.f32.mrf.mxu0
      %v8550 = vadd.f32 0.0, %v8549
      %v8551 = vpop.f32.mrf.mxu0
      %v8552 = vadd.f32 0.0, %v8551
      %v8553 = vpop.f32.mrf.mxu0
      %v8554 = vadd.f32 0.0, %v8553
      %v8555 = vpop.f32.mrf.mxu0
      %v8556 = vadd.f32 0.0, %v8555
      %8557 = vmatprep.mubr.bf16.mxu0 0
      %8558 = vmatmul.mubr.bf16.gmra.mxu0 %v8459
      %v8559 = vpop.f32.mrf.mxu0
      %v8560 = vadd.f32 0.0, %v8559
      %v8561 = vpop.f32.mrf.mxu0
      %v8562 = vadd.f32 0.0, %v8561
      %v8563 = vpop.f32.mrf.mxu0
      %v8564 = vadd.f32 0.0, %v8563
      %v8565 = vpop.f32.mrf.mxu0
      %v8566 = vadd.f32 0.0, %v8565
      %8567 = vmatprep.mubr.bf16.mxu0 0
      %8568 = vmatmul.mubr.bf16.gmra.mxu0 %v8462
      %v8569 = vpop.f32.mrf.mxu0
      %v8570 = vadd.f32 0.0, %v8569
      %v8571 = vpop.f32.mrf.mxu0
      %v8572 = vadd.f32 0.0, %v8571
      %v8573 = vpop.f32.mrf.mxu0
      %v8574 = vadd.f32 0.0, %v8573
      %v8575 = vpop.f32.mrf.mxu0
      %v8576 = vadd.f32 0.0, %v8575
      %8577 = vmatprep.mubr.bf16.mxu0 0
      %8578 = vmatmul.mubr.bf16.gmra.mxu0 %v8465
      %v8579 = vpop.f32.mrf.mxu0
      %v8580 = vadd.f32 0.0, %v8579
      %v8581 = vpop.f32.mrf.mxu0
      %v8582 = vadd.f32 0.0, %v8581
      %v8583 = vpop.f32.mrf.mxu0
      %v8584 = vadd.f32 0.0, %v8583
      %v8585 = vpop.f32.mrf.mxu0
      %v8586 = vadd.f32 0.0, %v8585
      %8587 = vdwg.mxu0
      %v8588 = vmax.f32 %v8550, %v8552
      %8589 = vmax.xlane.f32.xlu0 %v8588
      %v8590 = vpop.xlane.xlu0 %8589
      %v8591 = vmax.f32 %v8554, %v8556
      %8592 = vmax.xlane.f32.xlu0 %v8591
      %v8593 = vpop.xlane.xlu0 %8592
      %v8594 = vmax.f32 %v8560, %v8562
      %8595 = vmax.xlane.f32.xlu0 %v8594
      %v8596 = vpop.xlane.xlu0 %8595
      %v8597 = vmax.f32 %v8564, %v8566
      %8598 = vmax.xlane.f32.xlu0 %v8597
      %v8599 = vpop.xlane.xlu0 %8598
      %v8600 = vmax.f32 %v8570, %v8572
      %8601 = vmax.xlane.f32.xlu0 %v8600
      %v8602 = vpop.xlane.xlu0 %8601
      %v8603 = vmax.f32 %v8574, %v8576
      %8604 = vmax.xlane.f32.xlu0 %v8603
      %v8605 = vpop.xlane.xlu0 %8604
      %v8606 = vmax.f32 %v8580, %v8582
      %8607 = vmax.xlane.f32.xlu0 %v8606
      %v8608 = vpop.xlane.xlu0 %8607
      %v8609 = vmax.f32 %v8584, %v8586
      %8610 = vmax.xlane.f32.xlu0 %v8609
      %v8611 = vpop.xlane.xlu0 %8610
      %v8612 = vsub.f32 %v8550, %v8590
      %v8613 = vsub.f32 %v8552, %v8590
      %v8614 = vsub.f32 %v8554, %v8593
      %v8615 = vsub.f32 %v8556, %v8593
      %v8616 = vsub.f32 %v8560, %v8596
      %v8617 = vsub.f32 %v8562, %v8596
      %v8618 = vsub.f32 %v8564, %v8599
      %v8619 = vsub.f32 %v8566, %v8599
      %v8620 = vsub.f32 %v8570, %v8602
      %v8621 = vsub.f32 %v8572, %v8602
      %v8622 = vsub.f32 %v8574, %v8605
      %v8623 = vsub.f32 %v8576, %v8605
      %v8624 = vsub.f32 %v8580, %v8608
      %v8625 = vsub.f32 %v8582, %v8608
      %v8626 = vsub.f32 %v8584, %v8611
      %v8627 = vsub.f32 %v8586, %v8611
      %v8628 = vmul.f32 %v8612, 1.442695
      %v8629 = vpow.pop %v8628
      %v8630 = vmul.f32 %v8613, 1.442695
      %v8631 = vpow.pop %v8630
      %v8632 = vmul.f32 %v8614, 1.442695
      %v8633 = vpow.pop %v8632
      %v8634 = vmul.f32 %v8615, 1.442695
      %v8635 = vpow.pop %v8634
      %v8636 = vmul.f32 %v8616, 1.442695
      %v8637 = vpow.pop %v8636
      %v8638 = vmul.f32 %v8617, 1.442695
      %v8639 = vpow.pop %v8638
      %v8640 = vmul.f32 %v8618, 1.442695
      %v8641 = vpow.pop %v8640
      %v8642 = vmul.f32 %v8619, 1.442695
      %v8643 = vpow.pop %v8642
      %v8644 = vmul.f32 %v8620, 1.442695
      %v8645 = vpow.pop %v8644
      %v8646 = vmul.f32 %v8621, 1.442695
      %v8647 = vpow.pop %v8646
      %v8648 = vmul.f32 %v8622, 1.442695
      %v8649 = vpow.pop %v8648
      %v8650 = vmul.f32 %v8623, 1.442695
      %v8651 = vpow.pop %v8650
      %v8652 = vmul.f32 %v8624, 1.442695
      %v8653 = vpow.pop %v8652
      %v8654 = vmul.f32 %v8625, 1.442695
      %v8655 = vpow.pop %v8654
      %v8656 = vmul.f32 %v8626, 1.442695
      %v8657 = vpow.pop %v8656
      %v8658 = vmul.f32 %v8627, 1.442695
      %v8659 = vpow.pop %v8658
      %v8660 = vadd.f32 %v8629, %v8631
      %8661 = vadd.xlane.f32.xlu0 %v8660
      %v8662 = vpop.xlane.xlu0 %8661
      %v8663 = vadd.f32 %v8633, %v8635
      %8664 = vadd.xlane.f32.xlu0 %v8663
      %v8665 = vpop.xlane.xlu0 %8664
      %v8666 = vadd.f32 %v8637, %v8639
      %8667 = vadd.xlane.f32.xlu0 %v8666
      %v8668 = vpop.xlane.xlu0 %8667
      %v8669 = vadd.f32 %v8641, %v8643
      %8670 = vadd.xlane.f32.xlu0 %v8669
      %v8671 = vpop.xlane.xlu0 %8670
      %v8672 = vadd.f32 %v8645, %v8647
      %8673 = vadd.xlane.f32.xlu0 %v8672
      %v8674 = vpop.xlane.xlu0 %8673
      %v8675 = vadd.f32 %v8649, %v8651
      %8676 = vadd.xlane.f32.xlu0 %v8675
      %v8677 = vpop.xlane.xlu0 %8676
      %v8678 = vadd.f32 %v8653, %v8655
      %8679 = vadd.xlane.f32.xlu0 %v8678
      %v8680 = vpop.xlane.xlu0 %8679
      %v8681 = vadd.f32 %v8657, %v8659
      %8682 = vadd.xlane.f32.xlu0 %v8681
      %v8683 = vpop.xlane.xlu0 %8682
      %v8684 = vrcp.pop %v8662
      %v8685 = vrcp.pop %v8665
      %v8686 = vrcp.pop %v8668
      %v8687 = vrcp.pop %v8671
      %v8688 = vrcp.pop %v8674
      %v8689 = vrcp.pop %v8677
      %v8690 = vrcp.pop %v8680
      %v8691 = vrcp.pop %v8683
      %v8692 = vmul.f32 %v8629, %v8684
      %v8693 = vmul.f32 %v8631, %v8684
      %v8694 = vmul.f32 %v8633, %v8685
      %v8695 = vmul.f32 %v8635, %v8685
      %v8696 = vmul.f32 %v8637, %v8686
      %v8697 = vmul.f32 %v8639, %v8686
      %v8698 = vmul.f32 %v8641, %v8687
      %v8699 = vmul.f32 %v8643, %v8687
      %v8700 = vmul.f32 %v8645, %v8688
      %v8701 = vmul.f32 %v8647, %v8688
      %v8702 = vmul.f32 %v8649, %v8689
      %v8703 = vmul.f32 %v8651, %v8689
      %v8704 = vmul.f32 %v8653, %v8690
      %v8705 = vmul.f32 %v8655, %v8690
      %v8706 = vmul.f32 %v8657, %v8691
      %v8707 = vmul.f32 %v8659, %v8691
      %v8708 = vpack.c.bf16 %v8694, %v8692
      %v8709 = vpack.c.bf16 %v8695, %v8693
      %v8710 = vpack.c.bf16 %v8698, %v8696
      %v8711 = vpack.c.bf16 %v8699, %v8697
      %v8712 = vpack.c.bf16 %v8702, %v8700
      %v8713 = vpack.c.bf16 %v8703, %v8701
      %v8714 = vpack.c.bf16 %v8706, %v8704
      %v8715 = vpack.c.bf16 %v8707, %v8705
      %8716 = vmatprep.subr.bf16.mxu0 0
      %8717 = vmatpush1.bf16.msra.mxu0 %v1308
      %8718 = vmatprep.subr.bf16.mxu0 0
      %8719 = vmatpush1.bf16.msra.mxu0 %v1307
      %8720 = vmatprep.subr.bf16.mxu0 0
      %8721 = vmatpush1.bf16.msra.mxu0 %v1306
      %8722 = vmatprep.subr.bf16.mxu0 0
      %8723 = vmatpush1.bf16.msra.mxu0 %v1305
      %8724 = vmatprep.subr.bf16.mxu0 0
      %8725 = vmatpush1.bf16.msra.mxu0 %v1304
      %8726 = vmatprep.subr.bf16.mxu0 0
      %8727 = vmatpush1.bf16.msra.mxu0 %v1303
      %8728 = vmatprep.subr.bf16.mxu0 0
      %8729 = vmatpush1.bf16.msra.mxu0 %v1302
      %8730 = vmatprep.subr.bf16.mxu0 0
      %8731 = vmatpush1.bf16.msra.mxu0 %v1301
      %8732 = vmatprep.subr.bf16.mxu0 0
      %8733 = vmatpush2.bf16.msra.mxu0 %v1316
      %8734 = vmatprep.subr.bf16.mxu0 0
      %8735 = vmatpush2.bf16.msra.mxu0 %v1315
      %8736 = vmatprep.subr.bf16.mxu0 0
      %8737 = vmatpush2.bf16.msra.mxu0 %v1314
      %8738 = vmatprep.subr.bf16.mxu0 0
      %8739 = vmatpush2.bf16.msra.mxu0 %v1313
      %8740 = vmatprep.subr.bf16.mxu0 0
      %8741 = vmatpush2.bf16.msra.mxu0 %v1312
      %8742 = vmatprep.subr.bf16.mxu0 0
      %8743 = vmatpush2.bf16.msra.mxu0 %v1311
      %8744 = vmatprep.subr.bf16.mxu0 0
      %8745 = vmatpush2.bf16.msra.mxu0 %v1310
      %8746 = vmatprep.subr.bf16.mxu0 0
      %8747 = vmatpush2.bf16.msra.mxu0 %v1309
      %8748 = vmatprep.mubr.bf16.mxu0 %v8709
      %8749 = vmatmul.mubr.bf16.gmra.mxu0 %v8708
      %v8750 = vpop.f32.mrf.mxu0
      %v8751 = vadd.f32 0.0, %v8750
      %v8752 = vpop.f32.mrf.mxu0
      %v8753 = vpop.f32.mrf.mxu0
      %v8754 = vadd.f32 0.0, %v8753
      %v8755 = vpop.f32.mrf.mxu0
      %8756 = vmatprep.mubr.bf16.mxu0 %v8711
      %8757 = vmatmul.mubr.bf16.gmra.mxu0 %v8710
      %v8758 = vpop.f32.mrf.mxu0
      %v8759 = vadd.f32 0.0, %v8758
      %v8760 = vpop.f32.mrf.mxu0
      %v8761 = vpop.f32.mrf.mxu0
      %v8762 = vadd.f32 0.0, %v8761
      %v8763 = vpop.f32.mrf.mxu0
      %8764 = vmatprep.mubr.bf16.mxu0 %v8713
      %8765 = vmatmul.mubr.bf16.gmra.mxu0 %v8712
      %v8766 = vpop.f32.mrf.mxu0
      %v8767 = vadd.f32 0.0, %v8766
      %v8768 = vpop.f32.mrf.mxu0
      %v8769 = vpop.f32.mrf.mxu0
      %v8770 = vadd.f32 0.0, %v8769
      %v8771 = vpop.f32.mrf.mxu0
      %8772 = vmatprep.mubr.bf16.mxu0 %v8715
      %8773 = vmatmul.mubr.bf16.gmra.mxu0 %v8714
      %v8774 = vpop.f32.mrf.mxu0
      %v8775 = vadd.f32 0.0, %v8774
      %v8776 = vpop.f32.mrf.mxu0
      %v8777 = vpop.f32.mrf.mxu0
      %v8778 = vadd.f32 0.0, %v8777
      %v8779 = vpop.f32.mrf.mxu0
      %8780 = vdwg.mxu0
      %8781 = vst.msk [vmem:[#allocation2] sm:$0xff] %vm8454, %v8751
      %8782 = vst.msk [vmem:[#allocation2 + $0x8] sm:$0xff] %vm8454, %v8754
      %8783 = vst.msk [vmem:[#allocation2 + $0x10] sm:$0xff] %vm8454, %v8759
      %8784 = vst.msk [vmem:[#allocation2 + $0x18] sm:$0xff] %vm8454, %v8762
      %8785 = vst.msk [vmem:[#allocation2 + $0x20] sm:$0xff] %vm8454, %v8767
      %8786 = vst.msk [vmem:[#allocation2 + $0x28] sm:$0xff] %vm8454, %v8770
      %8787 = vst.msk [vmem:[#allocation2 + $0x30] sm:$0xff] %vm8454, %v8775
      %8788 = vst.msk [vmem:[#allocation2 + $0x38] sm:$0xff] %vm8454, %v8778
      %8793 = vrot.lane.b32.xlu0 %v8434, 112
      %v8794 = vpop.permute.xlu0 %8793
      %8795 = vrot.lane.b32.xlu0 %v8435, 112
      %v8796 = vpop.permute.xlu0 %8795
      %8797 = vrot.lane.b32.xlu0 %v8436, 112
      %v8798 = vpop.permute.xlu0 %8797
      %8799 = vrot.lane.b32.xlu0 %v8437, 112
      %v8800 = vpop.permute.xlu0 %8799
      %8817 = vrot.lane.b32.xlu0 %v8438, 112
      %v8818 = vpop.permute.xlu0 %8817
      %8819 = vrot.lane.b32.xlu0 %v8439, 112
      %v8820 = vpop.permute.xlu0 %8819
      %8821 = vrot.lane.b32.xlu0 %v8440, 112
      %v8822 = vpop.permute.xlu0 %8821
      %8823 = vrot.lane.b32.xlu0 %v8441, 112
      %v8824 = vpop.permute.xlu0 %8823
      %8825 = vrot.lane.b32.xlu0 %v8442, 112
      %v8826 = vpop.permute.xlu0 %8825
      %8827 = vrot.lane.b32.xlu0 %v8443, 112
      %v8828 = vpop.permute.xlu0 %8827
      %8829 = vrot.lane.b32.xlu0 %v8444, 112
      %v8830 = vpop.permute.xlu0 %8829
      %8831 = vrot.lane.b32.xlu0 %v8445, 112
      %v8832 = vpop.permute.xlu0 %8831
      %8833 = vrot.lane.b32.xlu0 %v8446, 112
      %v8834 = vpop.permute.xlu0 %8833
      %8835 = vrot.lane.b32.xlu0 %v8447, 112
      %v8836 = vpop.permute.xlu0 %8835
      %8837 = vrot.lane.b32.xlu0 %v8448, 112
      %v8838 = vpop.permute.xlu0 %8837
      %8839 = vrot.lane.b32.xlu0 %v8449, 112
      %v8840 = vpop.permute.xlu0 %8839
      %8841 = vrot.lane.b32.xlu0 %v8450, 112
      %v8842 = vpop.permute.xlu0 %8841
      %8843 = vrot.lane.b32.xlu0 %v8451, 112
      %v8844 = vpop.permute.xlu0 %8843
      %8845 = vrot.lane.b32.xlu0 %v8452, 112
      %v8846 = vpop.permute.xlu0 %8845
      %8847 = vrot.lane.b32.xlu0 %v8453, 112
      %v8848 = vpop.permute.xlu0 %8847
      %v8850 = vsel %vm8454, %v8794, 0
      %v8853 = vsel %vm8454, %v8796, 0
      %v8856 = vsel %vm8454, %v8798, 0
      %v8859 = vsel %vm8454, %v8800, 0
      %v8862 = vsel %vm8454, %v8818, 0
      %v8865 = vsel %vm8454, %v8820, 0
      %v8868 = vsel %vm8454, %v8822, 0
      %v8871 = vsel %vm8454, %v8824, 0
      %v8874 = vsel %vm8454, %v8826, 0
      %v8877 = vsel %vm8454, %v8828, 0
      %v8880 = vsel %vm8454, %v8830, 0
      %v8883 = vsel %vm8454, %v8832, 0
      %v8886 = vsel %vm8454, %v8834, 0
      %v8889 = vsel %vm8454, %v8836, 0
      %v8892 = vsel %vm8454, %v8838, 0
      %v8895 = vsel %vm8454, %v8840, 0
      %v8898 = vsel %vm8454, %v8842, 0
      %v8901 = vsel %vm8454, %v8844, 0
      %v8904 = vsel %vm8454, %v8846, 0
      %v8907 = vsel %vm8454, %v8848, 0
      %8909 = vmatprep.subr.bf16.mxu0 0
      %8910 = vmatpush1.bf16.xpose.msra.mxu0 %v8883
      %8911 = vmatprep.subr.bf16.mxu0 0
      %8912 = vmatpush1.bf16.xpose.msra.mxu0 %v8880
      %8913 = vmatprep.subr.bf16.mxu0 0
      %8914 = vmatpush1.bf16.xpose.msra.mxu0 %v8877
      %8915 = vmatprep.subr.bf16.mxu0 0
      %8916 = vmatpush1.bf16.xpose.msra.mxu0 %v8874
      %8917 = vmatprep.subr.bf16.mxu0 0
      %8918 = vmatpush1.bf16.xpose.msra.mxu0 %v8871
      %8919 = vmatprep.subr.bf16.mxu0 0
      %8920 = vmatpush1.bf16.xpose.msra.mxu0 %v8868
      %8921 = vmatprep.subr.bf16.mxu0 0
      %8922 = vmatpush1.bf16.xpose.msra.mxu0 %v8865
      %8923 = vmatprep.subr.bf16.mxu0 0
      %8924 = vmatpush1.bf16.xpose.msra.mxu0 %v8862
      %8925 = vmatprep.subr.bf16.mxu0 0
      %8926 = vmatpush2.bf16.xpose.msra.mxu0 %v8907
      %8927 = vmatprep.subr.bf16.mxu0 0
      %8928 = vmatpush2.bf16.xpose.msra.mxu0 %v8904
      %8929 = vmatprep.subr.bf16.mxu0 0
      %8930 = vmatpush2.bf16.xpose.msra.mxu0 %v8901
      %8931 = vmatprep.subr.bf16.mxu0 0
      %8932 = vmatpush2.bf16.xpose.msra.mxu0 %v8898
      %8933 = vmatprep.subr.bf16.mxu0 0
      %8934 = vmatpush2.bf16.xpose.msra.mxu0 %v8895
      %8935 = vmatprep.subr.bf16.mxu0 0
      %8936 = vmatpush2.bf16.xpose.msra.mxu0 %v8892
      %8937 = vmatprep.subr.bf16.mxu0 0
      %8938 = vmatpush2.bf16.xpose.msra.mxu0 %v8889
      %8939 = vmatprep.subr.bf16.mxu0 0
      %8940 = vmatpush2.bf16.xpose.msra.mxu0 %v8886
      %8941 = vmatprep.mubr.bf16.mxu0 0
      %8942 = vmatmul.mubr.bf16.gmra.mxu0 %v8850
      %v8943 = vpop.f32.mrf.mxu0
      %v8944 = vadd.f32 0.0, %v8943
      %v8945 = vpop.f32.mrf.mxu0
      %v8946 = vadd.f32 0.0, %v8945
      %v8947 = vpop.f32.mrf.mxu0
      %v8948 = vadd.f32 0.0, %v8947
      %v8949 = vpop.f32.mrf.mxu0
      %v8950 = vadd.f32 0.0, %v8949
      %8951 = vmatprep.mubr.bf16.mxu0 0
      %8952 = vmatmul.mubr.bf16.gmra.mxu0 %v8853
      %v8953 = vpop.f32.mrf.mxu0
      %v8954 = vadd.f32 0.0, %v8953
      %v8955 = vpop.f32.mrf.mxu0
      %v8956 = vadd.f32 0.0, %v8955
      %v8957 = vpop.f32.mrf.mxu0
      %v8958 = vadd.f32 0.0, %v8957
      %v8959 = vpop.f32.mrf.mxu0
      %v8960 = vadd.f32 0.0, %v8959
      %8961 = vmatprep.mubr.bf16.mxu0 0
      %8962 = vmatmul.mubr.bf16.gmra.mxu0 %v8856
      %v8963 = vpop.f32.mrf.mxu0
      %v8964 = vadd.f32 0.0, %v8963
      %v8965 = vpop.f32.mrf.mxu0
      %v8966 = vadd.f32 0.0, %v8965
      %v8967 = vpop.f32.mrf.mxu0
      %v8968 = vadd.f32 0.0, %v8967
      %v8969 = vpop.f32.mrf.mxu0
      %v8970 = vadd.f32 0.0, %v8969
      %8971 = vmatprep.mubr.bf16.mxu0 0
      %8972 = vmatmul.mubr.bf16.gmra.mxu0 %v8859
      %v8973 = vpop.f32.mrf.mxu0
      %v8974 = vadd.f32 0.0, %v8973
      %v8975 = vpop.f32.mrf.mxu0
      %v8976 = vadd.f32 0.0, %v8975
      %v8977 = vpop.f32.mrf.mxu0
      %v8978 = vadd.f32 0.0, %v8977
      %v8979 = vpop.f32.mrf.mxu0
      %v8980 = vadd.f32 0.0, %v8979
      %8981 = vdwg.mxu0
      %v8982 = vmax.f32 %v8944, %v8946
      %8983 = vmax.xlane.f32.xlu0 %v8982
      %v8984 = vpop.xlane.xlu0 %8983
      %v8985 = vmax.f32 %v8948, %v8950
      %8986 = vmax.xlane.f32.xlu0 %v8985
      %v8987 = vpop.xlane.xlu0 %8986
      %v8988 = vmax.f32 %v8954, %v8956
      %8989 = vmax.xlane.f32.xlu0 %v8988
      %v8990 = vpop.xlane.xlu0 %8989
      %v8991 = vmax.f32 %v8958, %v8960
      %8992 = vmax.xlane.f32.xlu0 %v8991
      %v8993 = vpop.xlane.xlu0 %8992
      %v8994 = vmax.f32 %v8964, %v8966
      %8995 = vmax.xlane.f32.xlu0 %v8994
      %v8996 = vpop.xlane.xlu0 %8995
      %v8997 = vmax.f32 %v8968, %v8970
      %8998 = vmax.xlane.f32.xlu0 %v8997
      %v8999 = vpop.xlane.xlu0 %8998
      %v9000 = vmax.f32 %v8974, %v8976
      %9001 = vmax.xlane.f32.xlu0 %v9000
      %v9002 = vpop.xlane.xlu0 %9001
      %v9003 = vmax.f32 %v8978, %v8980
      %9004 = vmax.xlane.f32.xlu0 %v9003
      %v9005 = vpop.xlane.xlu0 %9004
      %v9006 = vsub.f32 %v8944, %v8984
      %v9007 = vsub.f32 %v8946, %v8984
      %v9008 = vsub.f32 %v8948, %v8987
      %v9009 = vsub.f32 %v8950, %v8987
      %v9010 = vsub.f32 %v8954, %v8990
      %v9011 = vsub.f32 %v8956, %v8990
      %v9012 = vsub.f32 %v8958, %v8993
      %v9013 = vsub.f32 %v8960, %v8993
      %v9014 = vsub.f32 %v8964, %v8996
      %v9015 = vsub.f32 %v8966, %v8996
      %v9016 = vsub.f32 %v8968, %v8999
      %v9017 = vsub.f32 %v8970, %v8999
      %v9018 = vsub.f32 %v8974, %v9002
      %v9019 = vsub.f32 %v8976, %v9002
      %v9020 = vsub.f32 %v8978, %v9005
      %v9021 = vsub.f32 %v8980, %v9005
      %v9022 = vmul.f32 %v9006, 1.442695
      %v9023 = vpow.pop %v9022
      %v9024 = vmul.f32 %v9007, 1.442695
      %v9025 = vpow.pop %v9024
      %v9026 = vmul.f32 %v9008, 1.442695
      %v9027 = vpow.pop %v9026
      %v9028 = vmul.f32 %v9009, 1.442695
      %v9029 = vpow.pop %v9028
      %v9030 = vmul.f32 %v9010, 1.442695
      %v9031 = vpow.pop %v9030
      %v9032 = vmul.f32 %v9011, 1.442695
      %v9033 = vpow.pop %v9032
      %v9034 = vmul.f32 %v9012, 1.442695
      %v9035 = vpow.pop %v9034
      %v9036 = vmul.f32 %v9013, 1.442695
      %v9037 = vpow.pop %v9036
      %v9038 = vmul.f32 %v9014, 1.442695
      %v9039 = vpow.pop %v9038
      %v9040 = vmul.f32 %v9015, 1.442695
      %v9041 = vpow.pop %v9040
      %v9042 = vmul.f32 %v9016, 1.442695
      %v9043 = vpow.pop %v9042
      %v9044 = vmul.f32 %v9017, 1.442695
      %v9045 = vpow.pop %v9044
      %v9046 = vmul.f32 %v9018, 1.442695
      %v9047 = vpow.pop %v9046
      %v9048 = vmul.f32 %v9019, 1.442695
      %v9049 = vpow.pop %v9048
      %v9050 = vmul.f32 %v9020, 1.442695
      %v9051 = vpow.pop %v9050
      %v9052 = vmul.f32 %v9021, 1.442695
      %v9053 = vpow.pop %v9052
      %v9054 = vadd.f32 %v9023, %v9025
      %9055 = vadd.xlane.f32.xlu0 %v9054
      %v9056 = vpop.xlane.xlu0 %9055
      %v9057 = vadd.f32 %v9027, %v9029
      %9058 = vadd.xlane.f32.xlu0 %v9057
      %v9059 = vpop.xlane.xlu0 %9058
      %v9060 = vadd.f32 %v9031, %v9033
      %9061 = vadd.xlane.f32.xlu0 %v9060
      %v9062 = vpop.xlane.xlu0 %9061
      %v9063 = vadd.f32 %v9035, %v9037
      %9064 = vadd.xlane.f32.xlu0 %v9063
      %v9065 = vpop.xlane.xlu0 %9064
      %v9066 = vadd.f32 %v9039, %v9041
      %9067 = vadd.xlane.f32.xlu0 %v9066
      %v9068 = vpop.xlane.xlu0 %9067
      %v9069 = vadd.f32 %v9043, %v9045
      %9070 = vadd.xlane.f32.xlu0 %v9069
      %v9071 = vpop.xlane.xlu0 %9070
      %v9072 = vadd.f32 %v9047, %v9049
      %9073 = vadd.xlane.f32.xlu0 %v9072
      %v9074 = vpop.xlane.xlu0 %9073
      %v9075 = vadd.f32 %v9051, %v9053
      %9076 = vadd.xlane.f32.xlu0 %v9075
      %v9077 = vpop.xlane.xlu0 %9076
      %v9078 = vrcp.pop %v9056
      %v9079 = vrcp.pop %v9059
      %v9080 = vrcp.pop %v9062
      %v9081 = vrcp.pop %v9065
      %v9082 = vrcp.pop %v9068
      %v9083 = vrcp.pop %v9071
      %v9084 = vrcp.pop %v9074
      %v9085 = vrcp.pop %v9077
      %v9086 = vmul.f32 %v9023, %v9078
      %v9087 = vmul.f32 %v9025, %v9078
      %v9088 = vmul.f32 %v9027, %v9079
      %v9089 = vmul.f32 %v9029, %v9079
      %v9090 = vmul.f32 %v9031, %v9080
      %v9091 = vmul.f32 %v9033, %v9080
      %v9092 = vmul.f32 %v9035, %v9081
      %v9093 = vmul.f32 %v9037, %v9081
      %v9094 = vmul.f32 %v9039, %v9082
      %v9095 = vmul.f32 %v9041, %v9082
      %v9096 = vmul.f32 %v9043, %v9083
      %v9097 = vmul.f32 %v9045, %v9083
      %v9098 = vmul.f32 %v9047, %v9084
      %v9099 = vmul.f32 %v9049, %v9084
      %v9100 = vmul.f32 %v9051, %v9085
      %v9101 = vmul.f32 %v9053, %v9085
      %v9102 = vpack.c.bf16 %v9088, %v9086
      %v9103 = vpack.c.bf16 %v9089, %v9087
      %v9104 = vpack.c.bf16 %v9092, %v9090
      %v9105 = vpack.c.bf16 %v9093, %v9091
      %v9106 = vpack.c.bf16 %v9096, %v9094
      %v9107 = vpack.c.bf16 %v9097, %v9095
      %v9108 = vpack.c.bf16 %v9100, %v9098
      %v9109 = vpack.c.bf16 %v9101, %v9099
      %9126 = vrot.lane.b32.xlu0 %v1301, 112
      %v9127 = vpop.permute.xlu0 %9126
      %9128 = vrot.lane.b32.xlu0 %v1302, 112
      %v9129 = vpop.permute.xlu0 %9128
      %9130 = vrot.lane.b32.xlu0 %v1303, 112
      %v9131 = vpop.permute.xlu0 %9130
      %9132 = vrot.lane.b32.xlu0 %v1304, 112
      %v9133 = vpop.permute.xlu0 %9132
      %9134 = vrot.lane.b32.xlu0 %v1305, 112
      %v9135 = vpop.permute.xlu0 %9134
      %9136 = vrot.lane.b32.xlu0 %v1306, 112
      %v9137 = vpop.permute.xlu0 %9136
      %9138 = vrot.lane.b32.xlu0 %v1307, 112
      %v9139 = vpop.permute.xlu0 %9138
      %9140 = vrot.lane.b32.xlu0 %v1308, 112
      %v9141 = vpop.permute.xlu0 %9140
      %9142 = vrot.lane.b32.xlu0 %v1309, 112
      %v9143 = vpop.permute.xlu0 %9142
      %9144 = vrot.lane.b32.xlu0 %v1310, 112
      %v9145 = vpop.permute.xlu0 %9144
      %9146 = vrot.lane.b32.xlu0 %v1311, 112
      %v9147 = vpop.permute.xlu0 %9146
      %9148 = vrot.lane.b32.xlu0 %v1312, 112
      %v9149 = vpop.permute.xlu0 %9148
      %9150 = vrot.lane.b32.xlu0 %v1313, 112
      %v9151 = vpop.permute.xlu0 %9150
      %9152 = vrot.lane.b32.xlu0 %v1314, 112
      %v9153 = vpop.permute.xlu0 %9152
      %9154 = vrot.lane.b32.xlu0 %v1315, 112
      %v9155 = vpop.permute.xlu0 %9154
      %9156 = vrot.lane.b32.xlu0 %v1316, 112
      %v9157 = vpop.permute.xlu0 %9156
      %9174 = vmatprep.subr.bf16.mxu0 0
      %9175 = vmatpush1.bf16.msra.mxu0 %v9141
      %9176 = vmatprep.subr.bf16.mxu0 0
      %9177 = vmatpush1.bf16.msra.mxu0 %v9139
      %9178 = vmatprep.subr.bf16.mxu0 0
      %9179 = vmatpush1.bf16.msra.mxu0 %v9137
      %9180 = vmatprep.subr.bf16.mxu0 0
      %9181 = vmatpush1.bf16.msra.mxu0 %v9135
      %9182 = vmatprep.subr.bf16.mxu0 0
      %9183 = vmatpush1.bf16.msra.mxu0 %v9133
      %9184 = vmatprep.subr.bf16.mxu0 0
      %9185 = vmatpush1.bf16.msra.mxu0 %v9131
      %9186 = vmatprep.subr.bf16.mxu0 0
      %9187 = vmatpush1.bf16.msra.mxu0 %v9129
      %9188 = vmatprep.subr.bf16.mxu0 0
      %9189 = vmatpush1.bf16.msra.mxu0 %v9127
      %9190 = vmatprep.subr.bf16.mxu0 0
      %9191 = vmatpush2.bf16.msra.mxu0 %v9157
      %9192 = vmatprep.subr.bf16.mxu0 0
      %9193 = vmatpush2.bf16.msra.mxu0 %v9155
      %9194 = vmatprep.subr.bf16.mxu0 0
      %9195 = vmatpush2.bf16.msra.mxu0 %v9153
      %9196 = vmatprep.subr.bf16.mxu0 0
      %9197 = vmatpush2.bf16.msra.mxu0 %v9151
      %9198 = vmatprep.subr.bf16.mxu0 0
      %9199 = vmatpush2.bf16.msra.mxu0 %v9149
      %9200 = vmatprep.subr.bf16.mxu0 0
      %9201 = vmatpush2.bf16.msra.mxu0 %v9147
      %9202 = vmatprep.subr.bf16.mxu0 0
      %9203 = vmatpush2.bf16.msra.mxu0 %v9145
      %9204 = vmatprep.subr.bf16.mxu0 0
      %9205 = vmatpush2.bf16.msra.mxu0 %v9143
      %9206 = vmatprep.mubr.bf16.mxu0 %v9103
      %9207 = vmatmul.mubr.bf16.gmra.mxu0 %v9102
      %v9208 = vpop.f32.mrf.mxu0
      %v9209 = vadd.f32 0.0, %v9208
      %v9210 = vpop.f32.mrf.mxu0
      %v9211 = vpop.f32.mrf.mxu0
      %v9212 = vadd.f32 0.0, %v9211
      %v9213 = vpop.f32.mrf.mxu0
      %9214 = vmatprep.mubr.bf16.mxu0 %v9105
      %9215 = vmatmul.mubr.bf16.gmra.mxu0 %v9104
      %v9216 = vpop.f32.mrf.mxu0
      %v9217 = vadd.f32 0.0, %v9216
      %v9218 = vpop.f32.mrf.mxu0
      %v9219 = vpop.f32.mrf.mxu0
      %v9220 = vadd.f32 0.0, %v9219
      %v9221 = vpop.f32.mrf.mxu0
      %9222 = vmatprep.mubr.bf16.mxu0 %v9107
      %9223 = vmatmul.mubr.bf16.gmra.mxu0 %v9106
      %v9224 = vpop.f32.mrf.mxu0
      %v9225 = vadd.f32 0.0, %v9224
      %v9226 = vpop.f32.mrf.mxu0
      %v9227 = vpop.f32.mrf.mxu0
      %v9228 = vadd.f32 0.0, %v9227
      %v9229 = vpop.f32.mrf.mxu0
      %9230 = vmatprep.mubr.bf16.mxu0 %v9109
      %9231 = vmatmul.mubr.bf16.gmra.mxu0 %v9108
      %v9232 = vpop.f32.mrf.mxu0
      %v9233 = vadd.f32 0.0, %v9232
      %v9234 = vpop.f32.mrf.mxu0
      %v9235 = vpop.f32.mrf.mxu0
      %v9236 = vadd.f32 0.0, %v9235
      %v9237 = vpop.f32.mrf.mxu0
      %9238 = vdwg.mxu0
      %9247 = vrot.lane.b32.xlu0 %v9209, 16
      %v9248 = vpop.permute.xlu0 %9247
      %9249 = vrot.lane.b32.xlu0 %v9212, 16
      %v9250 = vpop.permute.xlu0 %9249
      %9251 = vrot.lane.b32.xlu0 %v9217, 16
      %v9252 = vpop.permute.xlu0 %9251
      %9253 = vrot.lane.b32.xlu0 %v9220, 16
      %v9254 = vpop.permute.xlu0 %9253
      %9255 = vrot.lane.b32.xlu0 %v9225, 16
      %v9256 = vpop.permute.xlu0 %9255
      %9257 = vrot.lane.b32.xlu0 %v9228, 16
      %v9258 = vpop.permute.xlu0 %9257
      %9259 = vrot.lane.b32.xlu0 %v9233, 16
      %v9260 = vpop.permute.xlu0 %9259
      %9261 = vrot.lane.b32.xlu0 %v9236, 16
      %v9262 = vpop.permute.xlu0 %9261
      %vm9271 = vcmask 261248
      %9272 = vst.msk [vmem:[#allocation2] sm:$0xff] %vm9271, %v9248
      %9273 = vst.msk [vmem:[#allocation2 + $0x8] sm:$0xff] %vm9271, %v9250
      %9274 = vst.msk [vmem:[#allocation2 + $0x10] sm:$0xff] %vm9271, %v9252
      %9275 = vst.msk [vmem:[#allocation2 + $0x18] sm:$0xff] %vm9271, %v9254
      %9276 = vst.msk [vmem:[#allocation2 + $0x20] sm:$0xff] %vm9271, %v9256
      %9277 = vst.msk [vmem:[#allocation2 + $0x28] sm:$0xff] %vm9271, %v9258
      %9278 = vst.msk [vmem:[#allocation2 + $0x30] sm:$0xff] %vm9271, %v9260
      %9279 = vst.msk [vmem:[#allocation2 + $0x38] sm:$0xff] %vm9271, %v9262
      %v9280 = vld [vmem:[%s10] sm:$0xf]
      %v9281 = vld [vmem:[%s10 + $0x4] sm:$0xf]
      %v9282 = vld [vmem:[%s10 + $0x8] sm:$0xf]
      %v9283 = vld [vmem:[%s10 + $0xc] sm:$0xf]
      %v9284 = vld [vmem:[%s10 + $0x10] sm:$0xf]
      %v9285 = vld [vmem:[%s10 + $0x14] sm:$0xf]
      %v9286 = vld [vmem:[%s10 + $0x18] sm:$0xf]
      %v9287 = vld [vmem:[%s10 + $0x1c] sm:$0xf]
      %v9288 = vld [vmem:[%s10 + $0x20] sm:$0xf]
      %v9289 = vld [vmem:[%s10 + $0x24] sm:$0xf]
      %v9290 = vld [vmem:[%s10 + $0x28] sm:$0xf]
      %v9291 = vld [vmem:[%s10 + $0x2c] sm:$0xf]
      %v9292 = vld [vmem:[%s10 + $0x30] sm:$0xf]
      %v9293 = vld [vmem:[%s10 + $0x34] sm:$0xf]
      %v9294 = vld [vmem:[%s10 + $0x38] sm:$0xf]
      %v9295 = vld [vmem:[%s10 + $0x3c] sm:$0xf]
      %v9296 = vld [vmem:[%s10 + $0x40] sm:$0xf]
      %v9297 = vld [vmem:[%s10 + $0x44] sm:$0xf]
      %v9298 = vld [vmem:[%s10 + $0x48] sm:$0xf]
      %v9299 = vld [vmem:[%s10 + $0x4c] sm:$0xf]
      %v9300 = vld [vmem:[%s10 + $0x50] sm:$0xf]
      %v9301 = vld [vmem:[%s10 + $0x54] sm:$0xf]
      %v9302 = vld [vmem:[%s10 + $0x58] sm:$0xf]
      %v9303 = vld [vmem:[%s10 + $0x5c] sm:$0xf]
      %v9304 = vld [vmem:[%s10 + $0x60] sm:$0xf]
      %v9305 = vld [vmem:[%s10 + $0x64] sm:$0xf]
      %v9306 = vld [vmem:[%s10 + $0x68] sm:$0xf]
      %v9307 = vld [vmem:[%s10 + $0x6c] sm:$0xf]
      %v9308 = vld [vmem:[%s10 + $0x70] sm:$0xf]
      %v9309 = vld [vmem:[%s10 + $0x74] sm:$0xf]
      %v9310 = vld [vmem:[%s10 + $0x78] sm:$0xf]
      %v9311 = vld [vmem:[%s10 + $0x7c] sm:$0xf]
      %v9312 = vld [vmem:[%s10 + $0x80] sm:$0xf]
      %v9313 = vld [vmem:[%s10 + $0x84] sm:$0xf]
      %v9314 = vld [vmem:[%s10 + $0x88] sm:$0xf]
      %v9315 = vld [vmem:[%s10 + $0x8c] sm:$0xf]
      %v9316 = vld [vmem:[%s10 + $0x90] sm:$0xf]
      %v9317 = vld [vmem:[%s10 + $0x94] sm:$0xf]
      %v9318 = vld [vmem:[%s10 + $0x98] sm:$0xf]
      %v9319 = vld [vmem:[%s10 + $0x9c] sm:$0xf]
      %v9320 = vld [vmem:[%s10 + $0xa0] sm:$0xf]
      %v9321 = vld [vmem:[%s10 + $0xa4] sm:$0xf]
      %v9322 = vld [vmem:[%s10 + $0xa8] sm:$0xf]
      %v9323 = vld [vmem:[%s10 + $0xac] sm:$0xf]
      %v9324 = vld [vmem:[%s10 + $0xb0] sm:$0xf]
      %v9325 = vld [vmem:[%s10 + $0xb4] sm:$0xf]
      %v9326 = vld [vmem:[%s10 + $0xb8] sm:$0xf]
      %v9327 = vld [vmem:[%s10 + $0xbc] sm:$0xf]
      %v9328 = vld [vmem:[%s10 + $0xc0] sm:$0xf]
      %v9329 = vld [vmem:[%s10 + $0xc4] sm:$0xf]
      %v9330 = vld [vmem:[%s10 + $0xc8] sm:$0xf]
      %v9331 = vld [vmem:[%s10 + $0xcc] sm:$0xf]
      %v9332 = vld [vmem:[%s10 + $0xd0] sm:$0xf]
      %v9333 = vld [vmem:[%s10 + $0xd4] sm:$0xf]
      %v9334 = vld [vmem:[#allocation2] sm:$0xff]
      %v9335 = vld [vmem:[#allocation2 + $0x8] sm:$0xff]
      %v9336 = vld [vmem:[#allocation2 + $0x10] sm:$0xff]
      %v9337 = vld [vmem:[#allocation2 + $0x18] sm:$0xff]
      %v9338 = vld [vmem:[#allocation2 + $0x20] sm:$0xff]
      %v9339 = vld [vmem:[#allocation2 + $0x28] sm:$0xff]
      %v9340 = vld [vmem:[#allocation2 + $0x30] sm:$0xff]
      %v9341 = vld [vmem:[#allocation2 + $0x38] sm:$0xff]
      %v9342 = vpack.c.bf16 %v9335, %v9334
      %v9343 = vpack.c.bf16 %v9337, %v9336
      %v9344 = vpack.c.bf16 %v9339, %v9338
      %v9345 = vpack.c.bf16 %v9341, %v9340
      %v9400 = vunpack.c.l.b16 %v9280
      %v9401 = vunpack.c.l.b16 %v9281
      %v9402 = vunpack.c.l.b16 %v9282
      %v9403 = vunpack.c.l.b16 %v9283
      %v9404 = vunpack.c.l.b16 %v9284
      %v9405 = vunpack.c.l.b16 %v9285
      %v9406 = vunpack.c.l.b16 %v9286
      %v9407 = vunpack.c.l.b16 %v9287
      %v9408 = vunpack.c.l.b16 %v9288
      %v9409 = vunpack.c.l.b16 %v9289
      %v9410 = vunpack.c.l.b16 %v9290
      %v9411 = vunpack.c.l.b16 %v9291
      %v9412 = vunpack.c.l.b16 %v9292
      %v9413 = vunpack.c.l.b16 %v9293
      %v9414 = vunpack.c.l.b16 %v9294
      %v9415 = vunpack.c.l.b16 %v9295
      %v9416 = vunpack.c.l.b16 %v9296
      %v9417 = vunpack.c.l.b16 %v9297
      %v9418 = vunpack.c.l.b16 %v9298
      %v9419 = vunpack.c.l.b16 %v9299
      %v9420 = vunpack.c.l.b16 %v9300
      %v9421 = vunpack.c.l.b16 %v9301
      %v9422 = vunpack.c.l.b16 %v9302
      %v9423 = vunpack.c.l.b16 %v9303
      %v9424 = vunpack.c.l.b16 %v9304
      %v9425 = vunpack.c.l.b16 %v9305
      %v9426 = vunpack.c.l.b16 %v9306
      %v9427 = vunpack.c.l.b16 %v9307
      %v9428 = vunpack.c.l.b16 %v9308
      %v9429 = vunpack.c.l.b16 %v9309
      %v9430 = vunpack.c.l.b16 %v9310
      %v9431 = vunpack.c.l.b16 %v9311
      %v9432 = vunpack.c.l.b16 %v9312
      %v9433 = vunpack.c.l.b16 %v9313
      %v9434 = vunpack.c.l.b16 %v9314
      %v9435 = vunpack.c.l.b16 %v9315
      %v9436 = vunpack.c.l.b16 %v9316
      %v9437 = vunpack.c.l.b16 %v9317
      %v9438 = vunpack.c.l.b16 %v9318
      %v9439 = vunpack.c.l.b16 %v9319
      %v9440 = vunpack.c.l.b16 %v9320
      %v9441 = vunpack.c.l.b16 %v9321
      %v9442 = vunpack.c.l.b16 %v9322
      %v9443 = vunpack.c.l.b16 %v9323
      %v9444 = vunpack.c.l.b16 %v9324
      %v9445 = vunpack.c.l.b16 %v9325
      %v9446 = vunpack.c.l.b16 %v9326
      %v9447 = vunpack.c.l.b16 %v9327
      %v9448 = vunpack.c.l.b16 %v9328
      %v9449 = vunpack.c.l.b16 %v9329
      %v9450 = vunpack.c.l.b16 %v9330
      %v9451 = vunpack.c.l.b16 %v9331
      %v9452 = vunpack.c.l.b16 %v9332
      %v9453 = vunpack.c.l.b16 %v9333
      %v9454 = vpack.c.b16 %v9401, %v9400
      %v9455 = vpack.c.b16 %v9403, %v9402
      %v9456 = vpack.c.b16 %v9405, %v9404
      %v9457 = vpack.c.b16 %v9407, %v9406
      %v9458 = vpack.c.b16 %v9409, %v9408
      %v9459 = vpack.c.b16 %v9411, %v9410
      %v9460 = vpack.c.b16 %v9413, %v9412
      %v9461 = vpack.c.b16 %v9415, %v9414
      %v9462 = vpack.c.b16 %v9417, %v9416
      %v9463 = vpack.c.b16 %v9419, %v9418
      %v9464 = vpack.c.b16 %v9421, %v9420
      %v9465 = vpack.c.b16 %v9423, %v9422
      %v9466 = vpack.c.b16 %v9425, %v9424
      %v9467 = vpack.c.b16 %v9427, %v9426
      %v9468 = vpack.c.b16 %v9429, %v9428
      %v9469 = vpack.c.b16 %v9431, %v9430
      %v9470 = vpack.c.b16 %v9433, %v9432
      %v9471 = vpack.c.b16 %v9435, %v9434
      %v9472 = vpack.c.b16 %v9437, %v9436
      %v9473 = vpack.c.b16 %v9439, %v9438
      %v9474 = vpack.c.b16 %v9441, %v9440
      %v9475 = vpack.c.b16 %v9443, %v9442
      %v9476 = vpack.c.b16 %v9445, %v9444
      %v9477 = vpack.c.b16 %v9447, %v9446
      %v9478 = vpack.c.b16 %v9449, %v9448
      %v9479 = vpack.c.b16 %v9451, %v9450
      %v9480 = vpack.c.b16 %v9453, %v9452
      %v9482 = vsel %vm8224, %v9454, 0
      %v9485 = vsel %vm8224, %v9455, 0
      %v9488 = vsel %vm8224, %v9456, 0
      %v9491 = vsel %vm8224, %v9457, 0
      %v9494 = vsel %vm8224, %v9458, 0
      %v9497 = vsel %vm8224, %v9459, 0
      %v9500 = vsel %vm8224, %v9460, 0
      %v9503 = vsel %vm8224, %v9461, 0
      %v9506 = vsel %vm8224, %v9462, 0
      %v9509 = vsel %vm8224, %v9463, 0
      %v9512 = vsel %vm8224, %v9464, 0
      %v9515 = vsel %vm8224, %v9465, 0
      %v9518 = vsel %vm8224, %v9466, 0
      %v9521 = vsel %vm8224, %v9467, 0
      %v9524 = vsel %vm8224, %v9468, 0
      %v9527 = vsel %vm8224, %v9469, 0
      %v9530 = vsel %vm8224, %v9470, 0
      %v9533 = vsel %vm8224, %v9471, 0
      %v9536 = vsel %vm8224, %v9472, 0
      %v9539 = vsel %vm8224, %v9473, 0
      %v9542 = vsel %vm8224, %v9474, 0
      %v9545 = vsel %vm8224, %v9475, 0
      %v9548 = vsel %vm8224, %v9476, 0
      %v9551 = vsel %vm8224, %v9477, 0
      %v9554 = vsel %vm8224, %v9478, 0
      %v9557 = vsel %vm8224, %v9479, 0
      %v9560 = vsel %vm8224, %v9480, 0
      %9562 = vmatprep.subr.bf16.mxu0 0
      %9563 = vmatpush1.bf16.msra.mxu0 0
      %9564 = vmatprep.subr.bf16.mxu0 0
      %9565 = vmatpush1.bf16.msra.mxu0 0
      %9566 = vmatprep.subr.bf16.mxu0 0
      %9567 = vmatpush1.bf16.msra.mxu0 0
      %9568 = vmatprep.subr.bf16.mxu0 0
      %9569 = vmatpush1.bf16.msra.mxu0 0
      %9570 = vmatprep.subr.bf16.mxu0 0
      %9571 = vmatpush1.bf16.msra.mxu0 %v9345
      %9572 = vmatprep.subr.bf16.mxu0 0
      %9573 = vmatpush1.bf16.msra.mxu0 %v9344
      %9574 = vmatprep.subr.bf16.mxu0 0
      %9575 = vmatpush1.bf16.msra.mxu0 %v9343
      %9576 = vmatprep.subr.bf16.mxu0 0
      %9577 = vmatpush1.bf16.msra.mxu0 %v9342
      %9578 = vmatprep.subr.bf16.mxu0 0
      %9579 = vmatpush2.bf16.msra.mxu0 0
      %9580 = vmatprep.subr.bf16.mxu0 0
      %9581 = vmatpush2.bf16.msra.mxu0 0
      %9582 = vmatprep.subr.bf16.mxu0 0
      %9583 = vmatpush2.bf16.msra.mxu0 0
      %9584 = vmatprep.subr.bf16.mxu0 0
      %9585 = vmatpush2.bf16.msra.mxu0 0
      %9586 = vmatprep.subr.bf16.mxu0 0
      %9587 = vmatpush2.bf16.msra.mxu0 0
      %9588 = vmatprep.subr.bf16.mxu0 0
      %9589 = vmatpush2.bf16.msra.mxu0 0
      %9590 = vmatprep.subr.bf16.mxu0 0
      %9591 = vmatpush2.bf16.msra.mxu0 0
      %9592 = vmatprep.subr.bf16.mxu0 0
      %9593 = vmatpush2.bf16.msra.mxu0 0
      %9594 = vmatprep.mubr.bf16.mxu0 0
      %9595 = vmatmul.mubr.bf16.gmra.mxu0 %v9482
      %v9596 = vpop.f32.mrf.mxu0
      %v9597 = vadd.f32 0.0, %v9596
      %v9598 = vpop.f32.mrf.mxu0
      %v9599 = vpop.f32.mrf.mxu0
      %v9600 = vadd.f32 0.0, %v9599
      %v9601 = vpop.f32.mrf.mxu0
      %9602 = vmatprep.mubr.bf16.mxu0 0
      %9603 = vmatmul.mubr.bf16.gmra.mxu0 %v9485
      %v9604 = vpop.f32.mrf.mxu0
      %v9605 = vadd.f32 0.0, %v9604
      %v9606 = vpop.f32.mrf.mxu0
      %v9607 = vpop.f32.mrf.mxu0
      %v9608 = vadd.f32 0.0, %v9607
      %v9609 = vpop.f32.mrf.mxu0
      %9610 = vmatprep.mubr.bf16.mxu0 0
      %9611 = vmatmul.mubr.bf16.gmra.mxu0 %v9488
      %v9612 = vpop.f32.mrf.mxu0
      %v9613 = vadd.f32 0.0, %v9612
      %v9614 = vpop.f32.mrf.mxu0
      %v9615 = vpop.f32.mrf.mxu0
      %v9616 = vadd.f32 0.0, %v9615
      %v9617 = vpop.f32.mrf.mxu0
      %9618 = vmatprep.mubr.bf16.mxu0 0
      %9619 = vmatmul.mubr.bf16.gmra.mxu0 %v9491
      %v9620 = vpop.f32.mrf.mxu0
      %v9621 = vadd.f32 0.0, %v9620
      %v9622 = vpop.f32.mrf.mxu0
      %v9623 = vpop.f32.mrf.mxu0
      %v9624 = vadd.f32 0.0, %v9623
      %v9625 = vpop.f32.mrf.mxu0
      %9626 = vmatprep.mubr.bf16.mxu0 0
      %9627 = vmatmul.mubr.bf16.gmra.mxu0 %v9494
      %v9628 = vpop.f32.mrf.mxu0
      %v9629 = vadd.f32 0.0, %v9628
      %v9630 = vpop.f32.mrf.mxu0
      %v9631 = vpop.f32.mrf.mxu0
      %v9632 = vadd.f32 0.0, %v9631
      %v9633 = vpop.f32.mrf.mxu0
      %9634 = vmatprep.mubr.bf16.mxu0 0
      %9635 = vmatmul.mubr.bf16.gmra.mxu0 %v9497
      %v9636 = vpop.f32.mrf.mxu0
      %v9637 = vadd.f32 0.0, %v9636
      %v9638 = vpop.f32.mrf.mxu0
      %v9639 = vpop.f32.mrf.mxu0
      %v9640 = vadd.f32 0.0, %v9639
      %v9641 = vpop.f32.mrf.mxu0
      %9642 = vmatprep.mubr.bf16.mxu0 0
      %9643 = vmatmul.mubr.bf16.gmra.mxu0 %v9500
      %v9644 = vpop.f32.mrf.mxu0
      %v9645 = vadd.f32 0.0, %v9644
      %v9646 = vpop.f32.mrf.mxu0
      %v9647 = vpop.f32.mrf.mxu0
      %v9648 = vadd.f32 0.0, %v9647
      %v9649 = vpop.f32.mrf.mxu0
      %9650 = vmatprep.mubr.bf16.mxu0 0
      %9651 = vmatmul.mubr.bf16.gmra.mxu0 %v9503
      %v9652 = vpop.f32.mrf.mxu0
      %v9653 = vadd.f32 0.0, %v9652
      %v9654 = vpop.f32.mrf.mxu0
      %v9655 = vpop.f32.mrf.mxu0
      %v9656 = vadd.f32 0.0, %v9655
      %v9657 = vpop.f32.mrf.mxu0
      %9658 = vmatprep.mubr.bf16.mxu0 0
      %9659 = vmatmul.mubr.bf16.gmra.mxu0 %v9506
      %v9660 = vpop.f32.mrf.mxu0
      %v9661 = vadd.f32 0.0, %v9660
      %v9662 = vpop.f32.mrf.mxu0
      %v9663 = vpop.f32.mrf.mxu0
      %v9664 = vadd.f32 0.0, %v9663
      %v9665 = vpop.f32.mrf.mxu0
      %9666 = vmatprep.mubr.bf16.mxu0 0
      %9667 = vmatmul.mubr.bf16.gmra.mxu0 %v9509
      %v9668 = vpop.f32.mrf.mxu0
      %v9669 = vadd.f32 0.0, %v9668
      %v9670 = vpop.f32.mrf.mxu0
      %v9671 = vpop.f32.mrf.mxu0
      %v9672 = vadd.f32 0.0, %v9671
      %v9673 = vpop.f32.mrf.mxu0
      %9674 = vmatprep.mubr.bf16.mxu0 0
      %9675 = vmatmul.mubr.bf16.gmra.mxu0 %v9512
      %v9676 = vpop.f32.mrf.mxu0
      %v9677 = vadd.f32 0.0, %v9676
      %v9678 = vpop.f32.mrf.mxu0
      %v9679 = vpop.f32.mrf.mxu0
      %v9680 = vadd.f32 0.0, %v9679
      %v9681 = vpop.f32.mrf.mxu0
      %9682 = vmatprep.mubr.bf16.mxu0 0
      %9683 = vmatmul.mubr.bf16.gmra.mxu0 %v9515
      %v9684 = vpop.f32.mrf.mxu0
      %v9685 = vadd.f32 0.0, %v9684
      %v9686 = vpop.f32.mrf.mxu0
      %v9687 = vpop.f32.mrf.mxu0
      %v9688 = vadd.f32 0.0, %v9687
      %v9689 = vpop.f32.mrf.mxu0
      %9690 = vmatprep.mubr.bf16.mxu0 0
      %9691 = vmatmul.mubr.bf16.gmra.mxu0 %v9518
      %v9692 = vpop.f32.mrf.mxu0
      %v9693 = vadd.f32 0.0, %v9692
      %v9694 = vpop.f32.mrf.mxu0
      %v9695 = vpop.f32.mrf.mxu0
      %v9696 = vadd.f32 0.0, %v9695
      %v9697 = vpop.f32.mrf.mxu0
      %9698 = vmatprep.mubr.bf16.mxu0 0
      %9699 = vmatmul.mubr.bf16.gmra.mxu0 %v9521
      %v9700 = vpop.f32.mrf.mxu0
      %v9701 = vadd.f32 0.0, %v9700
      %v9702 = vpop.f32.mrf.mxu0
      %v9703 = vpop.f32.mrf.mxu0
      %v9704 = vadd.f32 0.0, %v9703
      %v9705 = vpop.f32.mrf.mxu0
      %9706 = vmatprep.mubr.bf16.mxu0 0
      %9707 = vmatmul.mubr.bf16.gmra.mxu0 %v9524
      %v9708 = vpop.f32.mrf.mxu0
      %v9709 = vadd.f32 0.0, %v9708
      %v9710 = vpop.f32.mrf.mxu0
      %v9711 = vpop.f32.mrf.mxu0
      %v9712 = vadd.f32 0.0, %v9711
      %v9713 = vpop.f32.mrf.mxu0
      %9714 = vmatprep.mubr.bf16.mxu0 0
      %9715 = vmatmul.mubr.bf16.gmra.mxu0 %v9527
      %v9716 = vpop.f32.mrf.mxu0
      %v9717 = vadd.f32 0.0, %v9716
      %v9718 = vpop.f32.mrf.mxu0
      %v9719 = vpop.f32.mrf.mxu0
      %v9720 = vadd.f32 0.0, %v9719
      %v9721 = vpop.f32.mrf.mxu0
      %9722 = vmatprep.mubr.bf16.mxu0 0
      %9723 = vmatmul.mubr.bf16.gmra.mxu0 %v9530
      %v9724 = vpop.f32.mrf.mxu0
      %v9725 = vadd.f32 0.0, %v9724
      %v9726 = vpop.f32.mrf.mxu0
      %v9727 = vpop.f32.mrf.mxu0
      %v9728 = vadd.f32 0.0, %v9727
      %v9729 = vpop.f32.mrf.mxu0
      %9730 = vmatprep.mubr.bf16.mxu0 0
      %9731 = vmatmul.mubr.bf16.gmra.mxu0 %v9533
      %v9732 = vpop.f32.mrf.mxu0
      %v9733 = vadd.f32 0.0, %v9732
      %v9734 = vpop.f32.mrf.mxu0
      %v9735 = vpop.f32.mrf.mxu0
      %v9736 = vadd.f32 0.0, %v9735
      %v9737 = vpop.f32.mrf.mxu0
      %9738 = vmatprep.mubr.bf16.mxu0 0
      %9739 = vmatmul.mubr.bf16.gmra.mxu0 %v9536
      %v9740 = vpop.f32.mrf.mxu0
      %v9741 = vadd.f32 0.0, %v9740
      %v9742 = vpop.f32.mrf.mxu0
      %v9743 = vpop.f32.mrf.mxu0
      %v9744 = vadd.f32 0.0, %v9743
      %v9745 = vpop.f32.mrf.mxu0
      %9746 = vmatprep.mubr.bf16.mxu0 0
      %9747 = vmatmul.mubr.bf16.gmra.mxu0 %v9539
      %v9748 = vpop.f32.mrf.mxu0
      %v9749 = vadd.f32 0.0, %v9748
      %v9750 = vpop.f32.mrf.mxu0
      %v9751 = vpop.f32.mrf.mxu0
      %v9752 = vadd.f32 0.0, %v9751
      %v9753 = vpop.f32.mrf.mxu0
      %9754 = vmatprep.mubr.bf16.mxu0 0
      %9755 = vmatmul.mubr.bf16.gmra.mxu0 %v9542
      %v9756 = vpop.f32.mrf.mxu0
      %v9757 = vadd.f32 0.0, %v9756
      %v9758 = vpop.f32.mrf.mxu0
      %v9759 = vpop.f32.mrf.mxu0
      %v9760 = vadd.f32 0.0, %v9759
      %v9761 = vpop.f32.mrf.mxu0
      %9762 = vmatprep.mubr.bf16.mxu0 0
      %9763 = vmatmul.mubr.bf16.gmra.mxu0 %v9545
      %v9764 = vpop.f32.mrf.mxu0
      %v9765 = vadd.f32 0.0, %v9764
      %v9766 = vpop.f32.mrf.mxu0
      %v9767 = vpop.f32.mrf.mxu0
      %v9768 = vadd.f32 0.0, %v9767
      %v9769 = vpop.f32.mrf.mxu0
      %9770 = vmatprep.mubr.bf16.mxu0 0
      %9771 = vmatmul.mubr.bf16.gmra.mxu0 %v9548
      %v9772 = vpop.f32.mrf.mxu0
      %v9773 = vadd.f32 0.0, %v9772
      %v9774 = vpop.f32.mrf.mxu0
      %v9775 = vpop.f32.mrf.mxu0
      %v9776 = vadd.f32 0.0, %v9775
      %v9777 = vpop.f32.mrf.mxu0
      %9778 = vmatprep.mubr.bf16.mxu0 0
      %9779 = vmatmul.mubr.bf16.gmra.mxu0 %v9551
      %v9780 = vpop.f32.mrf.mxu0
      %v9781 = vadd.f32 0.0, %v9780
      %v9782 = vpop.f32.mrf.mxu0
      %v9783 = vpop.f32.mrf.mxu0
      %v9784 = vadd.f32 0.0, %v9783
      %v9785 = vpop.f32.mrf.mxu0
      %9786 = vmatprep.mubr.bf16.mxu0 0
      %9787 = vmatmul.mubr.bf16.gmra.mxu0 %v9554
      %v9788 = vpop.f32.mrf.mxu0
      %v9789 = vadd.f32 0.0, %v9788
      %v9790 = vpop.f32.mrf.mxu0
      %v9791 = vpop.f32.mrf.mxu0
      %v9792 = vadd.f32 0.0, %v9791
      %v9793 = vpop.f32.mrf.mxu0
      %9794 = vmatprep.mubr.bf16.mxu0 0
      %9795 = vmatmul.mubr.bf16.gmra.mxu0 %v9557
      %v9796 = vpop.f32.mrf.mxu0
      %v9797 = vadd.f32 0.0, %v9796
      %v9798 = vpop.f32.mrf.mxu0
      %v9799 = vpop.f32.mrf.mxu0
      %v9800 = vadd.f32 0.0, %v9799
      %v9801 = vpop.f32.mrf.mxu0
      %9802 = vmatprep.mubr.bf16.mxu0 0
      %9803 = vmatmul.mubr.bf16.gmra.mxu0 %v9560
      %v9804 = vpop.f32.mrf.mxu0
      %v9805 = vadd.f32 0.0, %v9804
      %v9806 = vpop.f32.mrf.mxu0
      %v9807 = vpop.f32.mrf.mxu0
      %v9808 = vadd.f32 0.0, %v9807
      %v9809 = vpop.f32.mrf.mxu0
      %9810 = vdwg.mxu0
      %v9811 = vld [vmem:[%s12] sm:$0xff]
      %v9812 = vld [vmem:[%s12 + $0x8] sm:$0x1]
      %v9813 = vlaneseq
      %v9814 = vshrl.u32 %v9813, 7
      %v9815 = vsub.s32 0, %v9814
      %v9816 = vrot.slane %v9811, %v9815
      %v9817 = vmul.f32 %v9597, %v9816
      %v9818 = vmul.f32 %v9600, %v9816
      %v9819 = vmul.f32 %v9608, %v9816
      %v9820 = vmul.f32 %v9613, %v9816
      %v9821 = vmul.f32 %v9621, %v9816
      %v9822 = vmul.f32 %v9624, %v9816
      %v9823 = vmul.f32 %v9632, %v9816
      %v9824 = vmul.f32 %v9637, %v9816
      %v9825 = vmul.f32 %v9645, %v9816
      %v9826 = vmul.f32 %v9648, %v9816
      %v9827 = vmul.f32 %v9656, %v9816
      %v9828 = vmul.f32 %v9661, %v9816
      %v9829 = vmul.f32 %v9669, %v9816
      %v9830 = vmul.f32 %v9672, %v9816
      %v9831 = vmul.f32 %v9680, %v9816
      %v9832 = vmul.f32 %v9685, %v9816
      %v9833 = vmul.f32 %v9693, %v9816
      %v9834 = vmul.f32 %v9696, %v9816
      %v9835 = vmul.f32 %v9704, %v9816
      %v9836 = vmul.f32 %v9709, %v9816
      %v9837 = vmul.f32 %v9717, %v9816
      %v9838 = vmul.f32 %v9720, %v9816
      %v9839 = vmul.f32 %v9728, %v9816
      %v9840 = vmul.f32 %v9733, %v9816
      %v9841 = vmul.f32 %v9741, %v9816
      %v9842 = vmul.f32 %v9744, %v9816
      %v9843 = vmul.f32 %v9752, %v9816
      %v9844 = vmul.f32 %v9757, %v9816
      %v9845 = vmul.f32 %v9765, %v9816
      %v9846 = vmul.f32 %v9768, %v9816
      %v9847 = vmul.f32 %v9776, %v9816
      %v9848 = vmul.f32 %v9781, %v9816
      %v9849 = vlaneseq
      %v9850 = vshrl.u32 %v9849, 7
      %v9851 = vsub.s32 3, %v9850
      %v9852 = vrot.slane %v9811, %v9851
      %v9853 = vmul.f32 %v9608, %v9852
      %v9854 = vmul.f32 %v9613, %v9852
      %v9855 = vmul.f32 %v9621, %v9852
      %v9856 = vmul.f32 %v9624, %v9852
      %v9857 = vmul.f32 %v9632, %v9852
      %v9858 = vmul.f32 %v9637, %v9852
      %v9859 = vmul.f32 %v9645, %v9852
      %v9860 = vmul.f32 %v9648, %v9852
      %v9861 = vmul.f32 %v9656, %v9852
      %v9862 = vmul.f32 %v9661, %v9852
      %v9863 = vmul.f32 %v9669, %v9852
      %v9864 = vmul.f32 %v9672, %v9852
      %v9865 = vmul.f32 %v9680, %v9852
      %v9866 = vmul.f32 %v9685, %v9852
      %v9867 = vmul.f32 %v9693, %v9852
      %v9868 = vmul.f32 %v9696, %v9852
      %v9869 = vmul.f32 %v9704, %v9852
      %v9870 = vmul.f32 %v9709, %v9852
      %v9871 = vmul.f32 %v9717, %v9852
      %v9872 = vmul.f32 %v9720, %v9852
      %v9873 = vmul.f32 %v9728, %v9852
      %v9874 = vmul.f32 %v9733, %v9852
      %v9875 = vmul.f32 %v9741, %v9852
      %v9876 = vmul.f32 %v9744, %v9852
      %v9877 = vmul.f32 %v9752, %v9852
      %v9878 = vmul.f32 %v9757, %v9852
      %v9879 = vmul.f32 %v9765, %v9852
      %v9880 = vmul.f32 %v9768, %v9852
      %v9881 = vmul.f32 %v9776, %v9852
      %v9882 = vmul.f32 %v9781, %v9852
      %v9883 = vmul.f32 %v9789, %v9852
      %v9884 = vmul.f32 %v9792, %v9852
      %v9885 = vadd.f32 %v9817, %v9853
      %v9886 = vadd.f32 %v9818, %v9854
      %v9887 = vadd.f32 %v9819, %v9855
      %v9888 = vadd.f32 %v9820, %v9856
      %v9889 = vadd.f32 %v9821, %v9857
      %v9890 = vadd.f32 %v9822, %v9858
      %v9891 = vadd.f32 %v9823, %v9859
      %v9892 = vadd.f32 %v9824, %v9860
      %v9893 = vadd.f32 %v9825, %v9861
      %v9894 = vadd.f32 %v9826, %v9862
      %v9895 = vadd.f32 %v9827, %v9863
      %v9896 = vadd.f32 %v9828, %v9864
      %v9897 = vadd.f32 %v9829, %v9865
      %v9898 = vadd.f32 %v9830, %v9866
      %v9899 = vadd.f32 %v9831, %v9867
      %v9900 = vadd.f32 %v9832, %v9868
      %v9901 = vadd.f32 %v9833, %v9869
      %v9902 = vadd.f32 %v9834, %v9870
      %v9903 = vadd.f32 %v9835, %v9871
      %v9904 = vadd.f32 %v9836, %v9872
      %v9905 = vadd.f32 %v9837, %v9873
      %v9906 = vadd.f32 %v9838, %v9874
      %v9907 = vadd.f32 %v9839, %v9875
      %v9908 = vadd.f32 %v9840, %v9876
      %v9909 = vadd.f32 %v9841, %v9877
      %v9910 = vadd.f32 %v9842, %v9878
      %v9911 = vadd.f32 %v9843, %v9879
      %v9912 = vadd.f32 %v9844, %v9880
      %v9913 = vadd.f32 %v9845, %v9881
      %v9914 = vadd.f32 %v9846, %v9882
      %v9915 = vadd.f32 %v9847, %v9883
      %v9916 = vadd.f32 %v9848, %v9884
      %v9917 = vlaneseq
      %v9918 = vshrl.u32 %v9917, 7
      %v9919 = vsub.s32 6, %v9918
      %v9920 = vrot.slane %v9811, %v9919
      %v9921 = vmul.f32 %v9621, %v9920
      %v9922 = vmul.f32 %v9624, %v9920
      %v9923 = vmul.f32 %v9632, %v9920
      %v9924 = vmul.f32 %v9637, %v9920
      %v9925 = vmul.f32 %v9645, %v9920
      %v9926 = vmul.f32 %v9648, %v9920
      %v9927 = vmul.f32 %v9656, %v9920
      %v9928 = vmul.f32 %v9661, %v9920
      %v9929 = vmul.f32 %v9669, %v9920
      %v9930 = vmul.f32 %v9672, %v9920
      %v9931 = vmul.f32 %v9680, %v9920
      %v9932 = vmul.f32 %v9685, %v9920
      %v9933 = vmul.f32 %v9693, %v9920
      %v9934 = vmul.f32 %v9696, %v9920
      %v9935 = vmul.f32 %v9704, %v9920
      %v9936 = vmul.f32 %v9709, %v9920
      %v9937 = vmul.f32 %v9717, %v9920
      %v9938 = vmul.f32 %v9720, %v9920
      %v9939 = vmul.f32 %v9728, %v9920
      %v9940 = vmul.f32 %v9733, %v9920
      %v9941 = vmul.f32 %v9741, %v9920
      %v9942 = vmul.f32 %v9744, %v9920
      %v9943 = vmul.f32 %v9752, %v9920
      %v9944 = vmul.f32 %v9757, %v9920
      %v9945 = vmul.f32 %v9765, %v9920
      %v9946 = vmul.f32 %v9768, %v9920
      %v9947 = vmul.f32 %v9776, %v9920
      %v9948 = vmul.f32 %v9781, %v9920
      %v9949 = vmul.f32 %v9789, %v9920
      %v9950 = vmul.f32 %v9792, %v9920
      %v9951 = vmul.f32 %v9800, %v9920
      %v9952 = vmul.f32 %v9805, %v9920
      %v9953 = vadd.f32 %v9885, %v9921
      %v9954 = vadd.f32 %v9886, %v9922
      %v9955 = vadd.f32 %v9887, %v9923
      %v9956 = vadd.f32 %v9888, %v9924
      %v9957 = vadd.f32 %v9889, %v9925
      %v9958 = vadd.f32 %v9890, %v9926
      %v9959 = vadd.f32 %v9891, %v9927
      %v9960 = vadd.f32 %v9892, %v9928
      %v9961 = vadd.f32 %v9893, %v9929
      %v9962 = vadd.f32 %v9894, %v9930
      %v9963 = vadd.f32 %v9895, %v9931
      %v9964 = vadd.f32 %v9896, %v9932
      %v9965 = vadd.f32 %v9897, %v9933
      %v9966 = vadd.f32 %v9898, %v9934
      %v9967 = vadd.f32 %v9899, %v9935
      %v9968 = vadd.f32 %v9900, %v9936
      %v9969 = vadd.f32 %v9901, %v9937
      %v9970 = vadd.f32 %v9902, %v9938
      %v9971 = vadd.f32 %v9903, %v9939
      %v9972 = vadd.f32 %v9904, %v9940
      %v9973 = vadd.f32 %v9905, %v9941
      %v9974 = vadd.f32 %v9906, %v9942
      %v9975 = vadd.f32 %v9907, %v9943
      %v9976 = vadd.f32 %v9908, %v9944
      %v9977 = vadd.f32 %v9909, %v9945
      %v9978 = vadd.f32 %v9910, %v9946
      %v9979 = vadd.f32 %v9911, %v9947
      %v9980 = vadd.f32 %v9912, %v9948
      %v9981 = vadd.f32 %v9913, %v9949
      %v9982 = vadd.f32 %v9914, %v9950
      %v9983 = vadd.f32 %v9915, %v9951
      %v9984 = vadd.f32 %v9916, %v9952
      %v9985 = vlaneseq
      %v9986 = vshrl.u32 %v9985, 7
      %v9987 = vsub.s32 1, %v9986
      %v9988 = vrot.slane %v9811, %v9987
      %v9989 = vmul.f32 %v9597, %v9988
      %v9990 = vmul.f32 %v9600, %v9988
      %v9991 = vmul.f32 %v9605, %v9988
      %v9992 = vmul.f32 %v9608, %v9988
      %v9993 = vmul.f32 %v9613, %v9988
      %v9994 = vmul.f32 %v9616, %v9988
      %v9995 = vmul.f32 %v9621, %v9988
      %v9996 = vmul.f32 %v9624, %v9988
      %v9997 = vmul.f32 %v9629, %v9988
      %v9998 = vmul.f32 %v9632, %v9988
      %v9999 = vmul.f32 %v9637, %v9988
      %v10000 = vmul.f32 %v9640, %v9988
      %v10001 = vmul.f32 %v9645, %v9988
      %v10002 = vmul.f32 %v9648, %v9988
      %v10003 = vmul.f32 %v9653, %v9988
      %v10004 = vmul.f32 %v9656, %v9988
      %v10005 = vmul.f32 %v9661, %v9988
      %v10006 = vmul.f32 %v9664, %v9988
      %v10007 = vmul.f32 %v9669, %v9988
      %v10008 = vmul.f32 %v9672, %v9988
      %v10009 = vmul.f32 %v9677, %v9988
      %v10010 = vmul.f32 %v9680, %v9988
      %v10011 = vmul.f32 %v9685, %v9988
      %v10012 = vmul.f32 %v9688, %v9988
      %v10013 = vmul.f32 %v9693, %v9988
      %v10014 = vmul.f32 %v9696, %v9988
      %v10015 = vmul.f32 %v9701, %v9988
      %v10016 = vmul.f32 %v9704, %v9988
      %v10017 = vmul.f32 %v9709, %v9988
      %v10018 = vmul.f32 %v9712, %v9988
      %v10019 = vmul.f32 %v9717, %v9988
      %v10020 = vmul.f32 %v9720, %v9988
      %v10021 = vmul.f32 %v9725, %v9988
      %v10022 = vmul.f32 %v9728, %v9988
      %v10023 = vmul.f32 %v9733, %v9988
      %v10024 = vmul.f32 %v9736, %v9988
      %v10025 = vmul.f32 %v9741, %v9988
      %v10026 = vmul.f32 %v9744, %v9988
      %v10027 = vmul.f32 %v9749, %v9988
      %v10028 = vmul.f32 %v9752, %v9988
      %v10029 = vmul.f32 %v9757, %v9988
      %v10030 = vmul.f32 %v9760, %v9988
      %v10031 = vmul.f32 %v9765, %v9988
      %v10032 = vmul.f32 %v9768, %v9988
      %v10033 = vmul.f32 %v9773, %v9988
      %v10034 = vmul.f32 %v9776, %v9988
      %v10035 = vmul.f32 %v9781, %v9988
      %v10036 = vmul.f32 %v9784, %v9988
      %v10085 = vrot.slane %v9989, 1
      %v10086 = vrot.slane %v9990, 1
      %v10087 = vsel %vm1713, %v10085, %v10086
      %v10088 = vrot.slane %v9991, 1
      %v10089 = vsel %vm1713, %v10086, %v10088
      %v10090 = vrot.slane %v9992, 1
      %v10091 = vrot.slane %v9993, 1
      %v10092 = vsel %vm1713, %v10090, %v10091
      %v10093 = vrot.slane %v9994, 1
      %v10094 = vsel %vm1713, %v10091, %v10093
      %v10095 = vrot.slane %v9995, 1
      %v10096 = vrot.slane %v9996, 1
      %v10097 = vsel %vm1713, %v10095, %v10096
      %v10098 = vrot.slane %v9997, 1
      %v10099 = vsel %vm1713, %v10096, %v10098
      %v10100 = vrot.slane %v9998, 1
      %v10101 = vrot.slane %v9999, 1
      %v10102 = vsel %vm1713, %v10100, %v10101
      %v10103 = vrot.slane %v10000, 1
      %v10104 = vsel %vm1713, %v10101, %v10103
      %v10105 = vrot.slane %v10001, 1
      %v10106 = vrot.slane %v10002, 1
      %v10107 = vsel %vm1713, %v10105, %v10106
      %v10108 = vrot.slane %v10003, 1
      %v10109 = vsel %vm1713, %v10106, %v10108
      %v10110 = vrot.slane %v10004, 1
      %v10111 = vrot.slane %v10005, 1
      %v10112 = vsel %vm1713, %v10110, %v10111
      %v10113 = vrot.slane %v10006, 1
      %v10114 = vsel %vm1713, %v10111, %v10113
      %v10115 = vrot.slane %v10007, 1
      %v10116 = vrot.slane %v10008, 1
      %v10117 = vsel %vm1713, %v10115, %v10116
      %v10118 = vrot.slane %v10009, 1
      %v10119 = vsel %vm1713, %v10116, %v10118
      %v10120 = vrot.slane %v10010, 1
      %v10121 = vrot.slane %v10011, 1
      %v10122 = vsel %vm1713, %v10120, %v10121
      %v10123 = vrot.slane %v10012, 1
      %v10124 = vsel %vm1713, %v10121, %v10123
      %v10125 = vrot.slane %v10013, 1
      %v10126 = vrot.slane %v10014, 1
      %v10127 = vsel %vm1713, %v10125, %v10126
      %v10128 = vrot.slane %v10015, 1
      %v10129 = vsel %vm1713, %v10126, %v10128
      %v10130 = vrot.slane %v10016, 1
      %v10131 = vrot.slane %v10017, 1
      %v10132 = vsel %vm1713, %v10130, %v10131
      %v10133 = vrot.slane %v10018, 1
      %v10134 = vsel %vm1713, %v10131, %v10133
      %v10135 = vrot.slane %v10019, 1
      %v10136 = vrot.slane %v10020, 1
      %v10137 = vsel %vm1713, %v10135, %v10136
      %v10138 = vrot.slane %v10021, 1
      %v10139 = vsel %vm1713, %v10136, %v10138
      %v10140 = vrot.slane %v10022, 1
      %v10141 = vrot.slane %v10023, 1
      %v10142 = vsel %vm1713, %v10140, %v10141
      %v10143 = vrot.slane %v10024, 1
      %v10144 = vsel %vm1713, %v10141, %v10143
      %v10145 = vrot.slane %v10025, 1
      %v10146 = vrot.slane %v10026, 1
      %v10147 = vsel %vm1713, %v10145, %v10146
      %v10148 = vrot.slane %v10027, 1
      %v10149 = vsel %vm1713, %v10146, %v10148
      %v10150 = vrot.slane %v10028, 1
      %v10151 = vrot.slane %v10029, 1
      %v10152 = vsel %vm1713, %v10150, %v10151
      %v10153 = vrot.slane %v10030, 1
      %v10154 = vsel %vm1713, %v10151, %v10153
      %v10155 = vrot.slane %v10031, 1
      %v10156 = vrot.slane %v10032, 1
      %v10157 = vsel %vm1713, %v10155, %v10156
      %v10158 = vrot.slane %v10033, 1
      %v10159 = vsel %vm1713, %v10156, %v10158
      %v10160 = vrot.slane %v10034, 1
      %v10161 = vrot.slane %v10035, 1
      %v10162 = vsel %vm1713, %v10160, %v10161
      %v10163 = vrot.slane %v10036, 1
      %v10164 = vsel %vm1713, %v10161, %v10163
      %v10197 = vadd.f32 %v9953, %v10087
      %v10198 = vadd.f32 %v9954, %v10089
      %v10199 = vadd.f32 %v9955, %v10092
      %v10200 = vadd.f32 %v9956, %v10094
      %v10201 = vadd.f32 %v9957, %v10097
      %v10202 = vadd.f32 %v9958, %v10099
      %v10203 = vadd.f32 %v9959, %v10102
      %v10204 = vadd.f32 %v9960, %v10104
      %v10205 = vadd.f32 %v9961, %v10107
      %v10206 = vadd.f32 %v9962, %v10109
      %v10207 = vadd.f32 %v9963, %v10112
      %v10208 = vadd.f32 %v9964, %v10114
      %v10209 = vadd.f32 %v9965, %v10117
      %v10210 = vadd.f32 %v9966, %v10119
      %v10211 = vadd.f32 %v9967, %v10122
      %v10212 = vadd.f32 %v9968, %v10124
      %v10213 = vadd.f32 %v9969, %v10127
      %v10214 = vadd.f32 %v9970, %v10129
      %v10215 = vadd.f32 %v9971, %v10132
      %v10216 = vadd.f32 %v9972, %v10134
      %v10217 = vadd.f32 %v9973, %v10137
      %v10218 = vadd.f32 %v9974, %v10139
      %v10219 = vadd.f32 %v9975, %v10142
      %v10220 = vadd.f32 %v9976, %v10144
      %v10221 = vadd.f32 %v9977, %v10147
      %v10222 = vadd.f32 %v9978, %v10149
      %v10223 = vadd.f32 %v9979, %v10152
      %v10224 = vadd.f32 %v9980, %v10154
      %v10225 = vadd.f32 %v9981, %v10157
      %v10226 = vadd.f32 %v9982, %v10159
      %v10227 = vadd.f32 %v9983, %v10162
      %v10228 = vadd.f32 %v9984, %v10164
      %v10229 = vlaneseq
      %v10230 = vshrl.u32 %v10229, 7
      %v10231 = vsub.s32 4, %v10230
      %v10232 = vrot.slane %v9811, %v10231
      %v10233 = vmul.f32 %v9608, %v10232
      %v10234 = vmul.f32 %v9613, %v10232
      %v10235 = vmul.f32 %v9616, %v10232
      %v10236 = vmul.f32 %v9621, %v10232
      %v10237 = vmul.f32 %v9624, %v10232
      %v10238 = vmul.f32 %v9629, %v10232
      %v10239 = vmul.f32 %v9632, %v10232
      %v10240 = vmul.f32 %v9637, %v10232
      %v10241 = vmul.f32 %v9640, %v10232
      %v10242 = vmul.f32 %v9645, %v10232
      %v10243 = vmul.f32 %v9648, %v10232
      %v10244 = vmul.f32 %v9653, %v10232
      %v10245 = vmul.f32 %v9656, %v10232
      %v10246 = vmul.f32 %v9661, %v10232
      %v10247 = vmul.f32 %v9664, %v10232
      %v10248 = vmul.f32 %v9669, %v10232
      %v10249 = vmul.f32 %v9672, %v10232
      %v10250 = vmul.f32 %v9677, %v10232
      %v10251 = vmul.f32 %v9680, %v10232
      %v10252 = vmul.f32 %v9685, %v10232
      %v10253 = vmul.f32 %v9688, %v10232
      %v10254 = vmul.f32 %v9693, %v10232
      %v10255 = vmul.f32 %v9696, %v10232
      %v10256 = vmul.f32 %v9701, %v10232
      %v10257 = vmul.f32 %v9704, %v10232
      %v10258 = vmul.f32 %v9709, %v10232
      %v10259 = vmul.f32 %v9712, %v10232
      %v10260 = vmul.f32 %v9717, %v10232
      %v10261 = vmul.f32 %v9720, %v10232
      %v10262 = vmul.f32 %v9725, %v10232
      %v10263 = vmul.f32 %v9728, %v10232
      %v10264 = vmul.f32 %v9733, %v10232
      %v10265 = vmul.f32 %v9736, %v10232
      %v10266 = vmul.f32 %v9741, %v10232
      %v10267 = vmul.f32 %v9744, %v10232
      %v10268 = vmul.f32 %v9749, %v10232
      %v10269 = vmul.f32 %v9752, %v10232
      %v10270 = vmul.f32 %v9757, %v10232
      %v10271 = vmul.f32 %v9760, %v10232
      %v10272 = vmul.f32 %v9765, %v10232
      %v10273 = vmul.f32 %v9768, %v10232
      %v10274 = vmul.f32 %v9773, %v10232
      %v10275 = vmul.f32 %v9776, %v10232
      %v10276 = vmul.f32 %v9781, %v10232
      %v10277 = vmul.f32 %v9784, %v10232
      %v10278 = vmul.f32 %v9789, %v10232
      %v10279 = vmul.f32 %v9792, %v10232
      %v10280 = vmul.f32 %v9797, %v10232
      %v10329 = vrot.slane %v10233, 1
      %v10330 = vrot.slane %v10234, 1
      %v10331 = vsel %vm1713, %v10329, %v10330
      %v10332 = vrot.slane %v10235, 1
      %v10333 = vsel %vm1713, %v10330, %v10332
      %v10334 = vrot.slane %v10236, 1
      %v10335 = vrot.slane %v10237, 1
      %v10336 = vsel %vm1713, %v10334, %v10335
      %v10337 = vrot.slane %v10238, 1
      %v10338 = vsel %vm1713, %v10335, %v10337
      %v10339 = vrot.slane %v10239, 1
      %v10340 = vrot.slane %v10240, 1
      %v10341 = vsel %vm1713, %v10339, %v10340
      %v10342 = vrot.slane %v10241, 1
      %v10343 = vsel %vm1713, %v10340, %v10342
      %v10344 = vrot.slane %v10242, 1
      %v10345 = vrot.slane %v10243, 1
      %v10346 = vsel %vm1713, %v10344, %v10345
      %v10347 = vrot.slane %v10244, 1
      %v10348 = vsel %vm1713, %v10345, %v10347
      %v10349 = vrot.slane %v10245, 1
      %v10350 = vrot.slane %v10246, 1
      %v10351 = vsel %vm1713, %v10349, %v10350
      %v10352 = vrot.slane %v10247, 1
      %v10353 = vsel %vm1713, %v10350, %v10352
      %v10354 = vrot.slane %v10248, 1
      %v10355 = vrot.slane %v10249, 1
      %v10356 = vsel %vm1713, %v10354, %v10355
      %v10357 = vrot.slane %v10250, 1
      %v10358 = vsel %vm1713, %v10355, %v10357
      %v10359 = vrot.slane %v10251, 1
      %v10360 = vrot.slane %v10252, 1
      %v10361 = vsel %vm1713, %v10359, %v10360
      %v10362 = vrot.slane %v10253, 1
      %v10363 = vsel %vm1713, %v10360, %v10362
      %v10364 = vrot.slane %v10254, 1
      %v10365 = vrot.slane %v10255, 1
      %v10366 = vsel %vm1713, %v10364, %v10365
      %v10367 = vrot.slane %v10256, 1
      %v10368 = vsel %vm1713, %v10365, %v10367
      %v10369 = vrot.slane %v10257, 1
      %v10370 = vrot.slane %v10258, 1
      %v10371 = vsel %vm1713, %v10369, %v10370
      %v10372 = vrot.slane %v10259, 1
      %v10373 = vsel %vm1713, %v10370, %v10372
      %v10374 = vrot.slane %v10260, 1
      %v10375 = vrot.slane %v10261, 1
      %v10376 = vsel %vm1713, %v10374, %v10375
      %v10377 = vrot.slane %v10262, 1
      %v10378 = vsel %vm1713, %v10375, %v10377
      %v10379 = vrot.slane %v10263, 1
      %v10380 = vrot.slane %v10264, 1
      %v10381 = vsel %vm1713, %v10379, %v10380
      %v10382 = vrot.slane %v10265, 1
      %v10383 = vsel %vm1713, %v10380, %v10382
      %v10384 = vrot.slane %v10266, 1
      %v10385 = vrot.slane %v10267, 1
      %v10386 = vsel %vm1713, %v10384, %v10385
      %v10387 = vrot.slane %v10268, 1
      %v10388 = vsel %vm1713, %v10385, %v10387
      %v10389 = vrot.slane %v10269, 1
      %v10390 = vrot.slane %v10270, 1
      %v10391 = vsel %vm1713, %v10389, %v10390
      %v10392 = vrot.slane %v10271, 1
      %v10393 = vsel %vm1713, %v10390, %v10392
      %v10394 = vrot.slane %v10272, 1
      %v10395 = vrot.slane %v10273, 1
      %v10396 = vsel %vm1713, %v10394, %v10395
      %v10397 = vrot.slane %v10274, 1
      %v10398 = vsel %vm1713, %v10395, %v10397
      %v10399 = vrot.slane %v10275, 1
      %v10400 = vrot.slane %v10276, 1
      %v10401 = vsel %vm1713, %v10399, %v10400
      %v10402 = vrot.slane %v10277, 1
      %v10403 = vsel %vm1713, %v10400, %v10402
      %v10404 = vrot.slane %v10278, 1
      %v10405 = vrot.slane %v10279, 1
      %v10406 = vsel %vm1713, %v10404, %v10405
      %v10407 = vrot.slane %v10280, 1
      %v10408 = vsel %vm1713, %v10405, %v10407
      %v10441 = vadd.f32 %v10197, %v10331
      %v10442 = vadd.f32 %v10198, %v10333
      %v10443 = vadd.f32 %v10199, %v10336
      %v10444 = vadd.f32 %v10200, %v10338
      %v10445 = vadd.f32 %v10201, %v10341
      %v10446 = vadd.f32 %v10202, %v10343
      %v10447 = vadd.f32 %v10203, %v10346
      %v10448 = vadd.f32 %v10204, %v10348
      %v10449 = vadd.f32 %v10205, %v10351
      %v10450 = vadd.f32 %v10206, %v10353
      %v10451 = vadd.f32 %v10207, %v10356
      %v10452 = vadd.f32 %v10208, %v10358
      %v10453 = vadd.f32 %v10209, %v10361
      %v10454 = vadd.f32 %v10210, %v10363
      %v10455 = vadd.f32 %v10211, %v10366
      %v10456 = vadd.f32 %v10212, %v10368
      %v10457 = vadd.f32 %v10213, %v10371
      %v10458 = vadd.f32 %v10214, %v10373
      %v10459 = vadd.f32 %v10215, %v10376
      %v10460 = vadd.f32 %v10216, %v10378
      %v10461 = vadd.f32 %v10217, %v10381
      %v10462 = vadd.f32 %v10218, %v10383
      %v10463 = vadd.f32 %v10219, %v10386
      %v10464 = vadd.f32 %v10220, %v10388
      %v10465 = vadd.f32 %v10221, %v10391
      %v10466 = vadd.f32 %v10222, %v10393
      %v10467 = vadd.f32 %v10223, %v10396
      %v10468 = vadd.f32 %v10224, %v10398
      %v10469 = vadd.f32 %v10225, %v10401
      %v10470 = vadd.f32 %v10226, %v10403
      %v10471 = vadd.f32 %v10227, %v10406
      %v10472 = vadd.f32 %v10228, %v10408
      %v10473 = vlaneseq
      %v10474 = vshrl.u32 %v10473, 7
      %v10475 = vsub.s32 7, %v10474
      %v10476 = vrot.slane %v9811, %v10475
      %v10477 = vmul.f32 %v9621, %v10476
      %v10478 = vmul.f32 %v9624, %v10476
      %v10479 = vmul.f32 %v9629, %v10476
      %v10480 = vmul.f32 %v9632, %v10476
      %v10481 = vmul.f32 %v9637, %v10476
      %v10482 = vmul.f32 %v9640, %v10476
      %v10483 = vmul.f32 %v9645, %v10476
      %v10484 = vmul.f32 %v9648, %v10476
      %v10485 = vmul.f32 %v9653, %v10476
      %v10486 = vmul.f32 %v9656, %v10476
      %v10487 = vmul.f32 %v9661, %v10476
      %v10488 = vmul.f32 %v9664, %v10476
      %v10489 = vmul.f32 %v9669, %v10476
      %v10490 = vmul.f32 %v9672, %v10476
      %v10491 = vmul.f32 %v9677, %v10476
      %v10492 = vmul.f32 %v9680, %v10476
      %v10493 = vmul.f32 %v9685, %v10476
      %v10494 = vmul.f32 %v9688, %v10476
      %v10495 = vmul.f32 %v9693, %v10476
      %v10496 = vmul.f32 %v9696, %v10476
      %v10497 = vmul.f32 %v9701, %v10476
      %v10498 = vmul.f32 %v9704, %v10476
      %v10499 = vmul.f32 %v9709, %v10476
      %v10500 = vmul.f32 %v9712, %v10476
      %v10501 = vmul.f32 %v9717, %v10476
      %v10502 = vmul.f32 %v9720, %v10476
      %v10503 = vmul.f32 %v9725, %v10476
      %v10504 = vmul.f32 %v9728, %v10476
      %v10505 = vmul.f32 %v9733, %v10476
      %v10506 = vmul.f32 %v9736, %v10476
      %v10507 = vmul.f32 %v9741, %v10476
      %v10508 = vmul.f32 %v9744, %v10476
      %v10509 = vmul.f32 %v9749, %v10476
      %v10510 = vmul.f32 %v9752, %v10476
      %v10511 = vmul.f32 %v9757, %v10476
      %v10512 = vmul.f32 %v9760, %v10476
      %v10513 = vmul.f32 %v9765, %v10476
      %v10514 = vmul.f32 %v9768, %v10476
      %v10515 = vmul.f32 %v9773, %v10476
      %v10516 = vmul.f32 %v9776, %v10476
      %v10517 = vmul.f32 %v9781, %v10476
      %v10518 = vmul.f32 %v9784, %v10476
      %v10519 = vmul.f32 %v9789, %v10476
      %v10520 = vmul.f32 %v9792, %v10476
      %v10521 = vmul.f32 %v9797, %v10476
      %v10522 = vmul.f32 %v9800, %v10476
      %v10523 = vmul.f32 %v9805, %v10476
      %v10524 = vmul.f32 %v9808, %v10476
      %v10573 = vrot.slane %v10477, 1
      %v10574 = vrot.slane %v10478, 1
      %v10575 = vsel %vm1713, %v10573, %v10574
      %v10576 = vrot.slane %v10479, 1
      %v10577 = vsel %vm1713, %v10574, %v10576
      %v10578 = vrot.slane %v10480, 1
      %v10579 = vrot.slane %v10481, 1
      %v10580 = vsel %vm1713, %v10578, %v10579
      %v10581 = vrot.slane %v10482, 1
      %v10582 = vsel %vm1713, %v10579, %v10581
      %v10583 = vrot.slane %v10483, 1
      %v10584 = vrot.slane %v10484, 1
      %v10585 = vsel %vm1713, %v10583, %v10584
      %v10586 = vrot.slane %v10485, 1
      %v10587 = vsel %vm1713, %v10584, %v10586
      %v10588 = vrot.slane %v10486, 1
      %v10589 = vrot.slane %v10487, 1
      %v10590 = vsel %vm1713, %v10588, %v10589
      %v10591 = vrot.slane %v10488, 1
      %v10592 = vsel %vm1713, %v10589, %v10591
      %v10593 = vrot.slane %v10489, 1
      %v10594 = vrot.slane %v10490, 1
      %v10595 = vsel %vm1713, %v10593, %v10594
      %v10596 = vrot.slane %v10491, 1
      %v10597 = vsel %vm1713, %v10594, %v10596
      %v10598 = vrot.slane %v10492, 1
      %v10599 = vrot.slane %v10493, 1
      %v10600 = vsel %vm1713, %v10598, %v10599
      %v10601 = vrot.slane %v10494, 1
      %v10602 = vsel %vm1713, %v10599, %v10601
      %v10603 = vrot.slane %v10495, 1
      %v10604 = vrot.slane %v10496, 1
      %v10605 = vsel %vm1713, %v10603, %v10604
      %v10606 = vrot.slane %v10497, 1
      %v10607 = vsel %vm1713, %v10604, %v10606
      %v10608 = vrot.slane %v10498, 1
      %v10609 = vrot.slane %v10499, 1
      %v10610 = vsel %vm1713, %v10608, %v10609
      %v10611 = vrot.slane %v10500, 1
      %v10612 = vsel %vm1713, %v10609, %v10611
      %v10613 = vrot.slane %v10501, 1
      %v10614 = vrot.slane %v10502, 1
      %v10615 = vsel %vm1713, %v10613, %v10614
      %v10616 = vrot.slane %v10503, 1
      %v10617 = vsel %vm1713, %v10614, %v10616
      %v10618 = vrot.slane %v10504, 1
      %v10619 = vrot.slane %v10505, 1
      %v10620 = vsel %vm1713, %v10618, %v10619
      %v10621 = vrot.slane %v10506, 1
      %v10622 = vsel %vm1713, %v10619, %v10621
      %v10623 = vrot.slane %v10507, 1
      %v10624 = vrot.slane %v10508, 1
      %v10625 = vsel %vm1713, %v10623, %v10624
      %v10626 = vrot.slane %v10509, 1
      %v10627 = vsel %vm1713, %v10624, %v10626
      %v10628 = vrot.slane %v10510, 1
      %v10629 = vrot.slane %v10511, 1
      %v10630 = vsel %vm1713, %v10628, %v10629
      %v10631 = vrot.slane %v10512, 1
      %v10632 = vsel %vm1713, %v10629, %v10631
      %v10633 = vrot.slane %v10513, 1
      %v10634 = vrot.slane %v10514, 1
      %v10635 = vsel %vm1713, %v10633, %v10634
      %v10636 = vrot.slane %v10515, 1
      %v10637 = vsel %vm1713, %v10634, %v10636
      %v10638 = vrot.slane %v10516, 1
      %v10639 = vrot.slane %v10517, 1
      %v10640 = vsel %vm1713, %v10638, %v10639
      %v10641 = vrot.slane %v10518, 1
      %v10642 = vsel %vm1713, %v10639, %v10641
      %v10643 = vrot.slane %v10519, 1
      %v10644 = vrot.slane %v10520, 1
      %v10645 = vsel %vm1713, %v10643, %v10644
      %v10646 = vrot.slane %v10521, 1
      %v10647 = vsel %vm1713, %v10644, %v10646
      %v10648 = vrot.slane %v10522, 1
      %v10649 = vrot.slane %v10523, 1
      %v10650 = vsel %vm1713, %v10648, %v10649
      %v10651 = vrot.slane %v10524, 1
      %v10652 = vsel %vm1713, %v10649, %v10651
      %v10685 = vadd.f32 %v10441, %v10575
      %v10686 = vadd.f32 %v10442, %v10577
      %v10687 = vadd.f32 %v10443, %v10580
      %v10688 = vadd.f32 %v10444, %v10582
      %v10689 = vadd.f32 %v10445, %v10585
      %v10690 = vadd.f32 %v10446, %v10587
      %v10691 = vadd.f32 %v10447, %v10590
      %v10692 = vadd.f32 %v10448, %v10592
      %v10693 = vadd.f32 %v10449, %v10595
      %v10694 = vadd.f32 %v10450, %v10597
      %v10695 = vadd.f32 %v10451, %v10600
      %v10696 = vadd.f32 %v10452, %v10602
      %v10697 = vadd.f32 %v10453, %v10605
      %v10698 = vadd.f32 %v10454, %v10607
      %v10699 = vadd.f32 %v10455, %v10610
      %v10700 = vadd.f32 %v10456, %v10612
      %v10701 = vadd.f32 %v10457, %v10615
      %v10702 = vadd.f32 %v10458, %v10617
      %v10703 = vadd.f32 %v10459, %v10620
      %v10704 = vadd.f32 %v10460, %v10622
      %v10705 = vadd.f32 %v10461, %v10625
      %v10706 = vadd.f32 %v10462, %v10627
      %v10707 = vadd.f32 %v10463, %v10630
      %v10708 = vadd.f32 %v10464, %v10632
      %v10709 = vadd.f32 %v10465, %v10635
      %v10710 = vadd.f32 %v10466, %v10637
      %v10711 = vadd.f32 %v10467, %v10640
      %v10712 = vadd.f32 %v10468, %v10642
      %v10713 = vadd.f32 %v10469, %v10645
      %v10714 = vadd.f32 %v10470, %v10647
      %v10715 = vadd.f32 %v10471, %v10650
      %v10716 = vadd.f32 %v10472, %v10652
      %v10717 = vlaneseq
      %v10718 = vshrl.u32 %v10717, 7
      %v10719 = vsub.s32 2, %v10718
      %v10720 = vrot.slane %v9811, %v10719
      %v10721 = vmul.f32 %v9597, %v10720
      %v10722 = vmul.f32 %v9600, %v10720
      %v10723 = vmul.f32 %v9605, %v10720
      %v10724 = vmul.f32 %v9608, %v10720
      %v10725 = vmul.f32 %v9613, %v10720
      %v10726 = vmul.f32 %v9616, %v10720
      %v10727 = vmul.f32 %v9621, %v10720
      %v10728 = vmul.f32 %v9624, %v10720
      %v10729 = vmul.f32 %v9629, %v10720
      %v10730 = vmul.f32 %v9632, %v10720
      %v10731 = vmul.f32 %v9637, %v10720
      %v10732 = vmul.f32 %v9640, %v10720
      %v10733 = vmul.f32 %v9645, %v10720
      %v10734 = vmul.f32 %v9648, %v10720
      %v10735 = vmul.f32 %v9653, %v10720
      %v10736 = vmul.f32 %v9656, %v10720
      %v10737 = vmul.f32 %v9661, %v10720
      %v10738 = vmul.f32 %v9664, %v10720
      %v10739 = vmul.f32 %v9669, %v10720
      %v10740 = vmul.f32 %v9672, %v10720
      %v10741 = vmul.f32 %v9677, %v10720
      %v10742 = vmul.f32 %v9680, %v10720
      %v10743 = vmul.f32 %v9685, %v10720
      %v10744 = vmul.f32 %v9688, %v10720
      %v10745 = vmul.f32 %v9693, %v10720
      %v10746 = vmul.f32 %v9696, %v10720
      %v10747 = vmul.f32 %v9701, %v10720
      %v10748 = vmul.f32 %v9704, %v10720
      %v10749 = vmul.f32 %v9709, %v10720
      %v10750 = vmul.f32 %v9712, %v10720
      %v10751 = vmul.f32 %v9717, %v10720
      %v10752 = vmul.f32 %v9720, %v10720
      %v10753 = vmul.f32 %v9725, %v10720
      %v10754 = vmul.f32 %v9728, %v10720
      %v10755 = vmul.f32 %v9733, %v10720
      %v10756 = vmul.f32 %v9736, %v10720
      %v10757 = vmul.f32 %v9741, %v10720
      %v10758 = vmul.f32 %v9744, %v10720
      %v10759 = vmul.f32 %v9749, %v10720
      %v10760 = vmul.f32 %v9752, %v10720
      %v10761 = vmul.f32 %v9757, %v10720
      %v10762 = vmul.f32 %v9760, %v10720
      %v10763 = vmul.f32 %v9765, %v10720
      %v10764 = vmul.f32 %v9768, %v10720
      %v10765 = vmul.f32 %v9773, %v10720
      %v10766 = vmul.f32 %v9776, %v10720
      %v10767 = vmul.f32 %v9781, %v10720
      %v10768 = vmul.f32 %v9784, %v10720
      %v10817 = vrot.slane %v10721, 2
      %v10818 = vrot.slane %v10722, 2
      %v10819 = vsel %vm1188, %v10817, %v10818
      %v10820 = vrot.slane %v10723, 2
      %v10821 = vsel %vm1188, %v10818, %v10820
      %v10822 = vrot.slane %v10724, 2
      %v10823 = vrot.slane %v10725, 2
      %v10824 = vsel %vm1188, %v10822, %v10823
      %v10825 = vrot.slane %v10726, 2
      %v10826 = vsel %vm1188, %v10823, %v10825
      %v10827 = vrot.slane %v10727, 2
      %v10828 = vrot.slane %v10728, 2
      %v10829 = vsel %vm1188, %v10827, %v10828
      %v10830 = vrot.slane %v10729, 2
      %v10831 = vsel %vm1188, %v10828, %v10830
      %v10832 = vrot.slane %v10730, 2
      %v10833 = vrot.slane %v10731, 2
      %v10834 = vsel %vm1188, %v10832, %v10833
      %v10835 = vrot.slane %v10732, 2
      %v10836 = vsel %vm1188, %v10833, %v10835
      %v10837 = vrot.slane %v10733, 2
      %v10838 = vrot.slane %v10734, 2
      %v10839 = vsel %vm1188, %v10837, %v10838
      %v10840 = vrot.slane %v10735, 2
      %v10841 = vsel %vm1188, %v10838, %v10840
      %v10842 = vrot.slane %v10736, 2
      %v10843 = vrot.slane %v10737, 2
      %v10844 = vsel %vm1188, %v10842, %v10843
      %v10845 = vrot.slane %v10738, 2
      %v10846 = vsel %vm1188, %v10843, %v10845
      %v10847 = vrot.slane %v10739, 2
      %v10848 = vrot.slane %v10740, 2
      %v10849 = vsel %vm1188, %v10847, %v10848
      %v10850 = vrot.slane %v10741, 2
      %v10851 = vsel %vm1188, %v10848, %v10850
      %v10852 = vrot.slane %v10742, 2
      %v10853 = vrot.slane %v10743, 2
      %v10854 = vsel %vm1188, %v10852, %v10853
      %v10855 = vrot.slane %v10744, 2
      %v10856 = vsel %vm1188, %v10853, %v10855
      %v10857 = vrot.slane %v10745, 2
      %v10858 = vrot.slane %v10746, 2
      %v10859 = vsel %vm1188, %v10857, %v10858
      %v10860 = vrot.slane %v10747, 2
      %v10861 = vsel %vm1188, %v10858, %v10860
      %v10862 = vrot.slane %v10748, 2
      %v10863 = vrot.slane %v10749, 2
      %v10864 = vsel %vm1188, %v10862, %v10863
      %v10865 = vrot.slane %v10750, 2
      %v10866 = vsel %vm1188, %v10863, %v10865
      %v10867 = vrot.slane %v10751, 2
      %v10868 = vrot.slane %v10752, 2
      %v10869 = vsel %vm1188, %v10867, %v10868
      %v10870 = vrot.slane %v10753, 2
      %v10871 = vsel %vm1188, %v10868, %v10870
      %v10872 = vrot.slane %v10754, 2
      %v10873 = vrot.slane %v10755, 2
      %v10874 = vsel %vm1188, %v10872, %v10873
      %v10875 = vrot.slane %v10756, 2
      %v10876 = vsel %vm1188, %v10873, %v10875
      %v10877 = vrot.slane %v10757, 2
      %v10878 = vrot.slane %v10758, 2
      %v10879 = vsel %vm1188, %v10877, %v10878
      %v10880 = vrot.slane %v10759, 2
      %v10881 = vsel %vm1188, %v10878, %v10880
      %v10882 = vrot.slane %v10760, 2
      %v10883 = vrot.slane %v10761, 2
      %v10884 = vsel %vm1188, %v10882, %v10883
      %v10885 = vrot.slane %v10762, 2
      %v10886 = vsel %vm1188, %v10883, %v10885
      %v10887 = vrot.slane %v10763, 2
      %v10888 = vrot.slane %v10764, 2
      %v10889 = vsel %vm1188, %v10887, %v10888
      %v10890 = vrot.slane %v10765, 2
      %v10891 = vsel %vm1188, %v10888, %v10890
      %v10892 = vrot.slane %v10766, 2
      %v10893 = vrot.slane %v10767, 2
      %v10894 = vsel %vm1188, %v10892, %v10893
      %v10895 = vrot.slane %v10768, 2
      %v10896 = vsel %vm1188, %v10893, %v10895
      %v10929 = vadd.f32 %v10685, %v10819
      %v10930 = vadd.f32 %v10686, %v10821
      %v10931 = vadd.f32 %v10687, %v10824
      %v10932 = vadd.f32 %v10688, %v10826
      %v10933 = vadd.f32 %v10689, %v10829
      %v10934 = vadd.f32 %v10690, %v10831
      %v10935 = vadd.f32 %v10691, %v10834
      %v10936 = vadd.f32 %v10692, %v10836
      %v10937 = vadd.f32 %v10693, %v10839
      %v10938 = vadd.f32 %v10694, %v10841
      %v10939 = vadd.f32 %v10695, %v10844
      %v10940 = vadd.f32 %v10696, %v10846
      %v10941 = vadd.f32 %v10697, %v10849
      %v10942 = vadd.f32 %v10698, %v10851
      %v10943 = vadd.f32 %v10699, %v10854
      %v10944 = vadd.f32 %v10700, %v10856
      %v10945 = vadd.f32 %v10701, %v10859
      %v10946 = vadd.f32 %v10702, %v10861
      %v10947 = vadd.f32 %v10703, %v10864
      %v10948 = vadd.f32 %v10704, %v10866
      %v10949 = vadd.f32 %v10705, %v10869
      %v10950 = vadd.f32 %v10706, %v10871
      %v10951 = vadd.f32 %v10707, %v10874
      %v10952 = vadd.f32 %v10708, %v10876
      %v10953 = vadd.f32 %v10709, %v10879
      %v10954 = vadd.f32 %v10710, %v10881
      %v10955 = vadd.f32 %v10711, %v10884
      %v10956 = vadd.f32 %v10712, %v10886
      %v10957 = vadd.f32 %v10713, %v10889
      %v10958 = vadd.f32 %v10714, %v10891
      %v10959 = vadd.f32 %v10715, %v10894
      %v10960 = vadd.f32 %v10716, %v10896
      %v10961 = vlaneseq
      %v10962 = vshrl.u32 %v10961, 7
      %v10963 = vsub.s32 5, %v10962
      %v10964 = vrot.slane %v9811, %v10963
      %v10965 = vmul.f32 %v9608, %v10964
      %v10966 = vmul.f32 %v9613, %v10964
      %v10967 = vmul.f32 %v9616, %v10964
      %v10968 = vmul.f32 %v9621, %v10964
      %v10969 = vmul.f32 %v9624, %v10964
      %v10970 = vmul.f32 %v9629, %v10964
      %v10971 = vmul.f32 %v9632, %v10964
      %v10972 = vmul.f32 %v9637, %v10964
      %v10973 = vmul.f32 %v9640, %v10964
      %v10974 = vmul.f32 %v9645, %v10964
      %v10975 = vmul.f32 %v9648, %v10964
      %v10976 = vmul.f32 %v9653, %v10964
      %v10977 = vmul.f32 %v9656, %v10964
      %v10978 = vmul.f32 %v9661, %v10964
      %v10979 = vmul.f32 %v9664, %v10964
      %v10980 = vmul.f32 %v9669, %v10964
      %v10981 = vmul.f32 %v9672, %v10964
      %v10982 = vmul.f32 %v9677, %v10964
      %v10983 = vmul.f32 %v9680, %v10964
      %v10984 = vmul.f32 %v9685, %v10964
      %v10985 = vmul.f32 %v9688, %v10964
      %v10986 = vmul.f32 %v9693, %v10964
      %v10987 = vmul.f32 %v9696, %v10964
      %v10988 = vmul.f32 %v9701, %v10964
      %v10989 = vmul.f32 %v9704, %v10964
      %v10990 = vmul.f32 %v9709, %v10964
      %v10991 = vmul.f32 %v9712, %v10964
      %v10992 = vmul.f32 %v9717, %v10964
      %v10993 = vmul.f32 %v9720, %v10964
      %v10994 = vmul.f32 %v9725, %v10964
      %v10995 = vmul.f32 %v9728, %v10964
      %v10996 = vmul.f32 %v9733, %v10964
      %v10997 = vmul.f32 %v9736, %v10964
      %v10998 = vmul.f32 %v9741, %v10964
      %v10999 = vmul.f32 %v9744, %v10964
      %v11000 = vmul.f32 %v9749, %v10964
      %v11001 = vmul.f32 %v9752, %v10964
      %v11002 = vmul.f32 %v9757, %v10964
      %v11003 = vmul.f32 %v9760, %v10964
      %v11004 = vmul.f32 %v9765, %v10964
      %v11005 = vmul.f32 %v9768, %v10964
      %v11006 = vmul.f32 %v9773, %v10964
      %v11007 = vmul.f32 %v9776, %v10964
      %v11008 = vmul.f32 %v9781, %v10964
      %v11009 = vmul.f32 %v9784, %v10964
      %v11010 = vmul.f32 %v9789, %v10964
      %v11011 = vmul.f32 %v9792, %v10964
      %v11012 = vmul.f32 %v9797, %v10964
      %v11061 = vrot.slane %v10965, 2
      %v11062 = vrot.slane %v10966, 2
      %v11063 = vsel %vm1188, %v11061, %v11062
      %v11064 = vrot.slane %v10967, 2
      %v11065 = vsel %vm1188, %v11062, %v11064
      %v11066 = vrot.slane %v10968, 2
      %v11067 = vrot.slane %v10969, 2
      %v11068 = vsel %vm1188, %v11066, %v11067
      %v11069 = vrot.slane %v10970, 2
      %v11070 = vsel %vm1188, %v11067, %v11069
      %v11071 = vrot.slane %v10971, 2
      %v11072 = vrot.slane %v10972, 2
      %v11073 = vsel %vm1188, %v11071, %v11072
      %v11074 = vrot.slane %v10973, 2
      %v11075 = vsel %vm1188, %v11072, %v11074
      %v11076 = vrot.slane %v10974, 2
      %v11077 = vrot.slane %v10975, 2
      %v11078 = vsel %vm1188, %v11076, %v11077
      %v11079 = vrot.slane %v10976, 2
      %v11080 = vsel %vm1188, %v11077, %v11079
      %v11081 = vrot.slane %v10977, 2
      %v11082 = vrot.slane %v10978, 2
      %v11083 = vsel %vm1188, %v11081, %v11082
      %v11084 = vrot.slane %v10979, 2
      %v11085 = vsel %vm1188, %v11082, %v11084
      %v11086 = vrot.slane %v10980, 2
      %v11087 = vrot.slane %v10981, 2
      %v11088 = vsel %vm1188, %v11086, %v11087
      %v11089 = vrot.slane %v10982, 2
      %v11090 = vsel %vm1188, %v11087, %v11089
      %v11091 = vrot.slane %v10983, 2
      %v11092 = vrot.slane %v10984, 2
      %v11093 = vsel %vm1188, %v11091, %v11092
      %v11094 = vrot.slane %v10985, 2
      %v11095 = vsel %vm1188, %v11092, %v11094
      %v11096 = vrot.slane %v10986, 2
      %v11097 = vrot.slane %v10987, 2
      %v11098 = vsel %vm1188, %v11096, %v11097
      %v11099 = vrot.slane %v10988, 2
      %v11100 = vsel %vm1188, %v11097, %v11099
      %v11101 = vrot.slane %v10989, 2
      %v11102 = vrot.slane %v10990, 2
      %v11103 = vsel %vm1188, %v11101, %v11102
      %v11104 = vrot.slane %v10991, 2
      %v11105 = vsel %vm1188, %v11102, %v11104
      %v11106 = vrot.slane %v10992, 2
      %v11107 = vrot.slane %v10993, 2
      %v11108 = vsel %vm1188, %v11106, %v11107
      %v11109 = vrot.slane %v10994, 2
      %v11110 = vsel %vm1188, %v11107, %v11109
      %v11111 = vrot.slane %v10995, 2
      %v11112 = vrot.slane %v10996, 2
      %v11113 = vsel %vm1188, %v11111, %v11112
      %v11114 = vrot.slane %v10997, 2
      %v11115 = vsel %vm1188, %v11112, %v11114
      %v11116 = vrot.slane %v10998, 2
      %v11117 = vrot.slane %v10999, 2
      %v11118 = vsel %vm1188, %v11116, %v11117
      %v11119 = vrot.slane %v11000, 2
      %v11120 = vsel %vm1188, %v11117, %v11119
      %v11121 = vrot.slane %v11001, 2
      %v11122 = vrot.slane %v11002, 2
      %v11123 = vsel %vm1188, %v11121, %v11122
      %v11124 = vrot.slane %v11003, 2
      %v11125 = vsel %vm1188, %v11122, %v11124
      %v11126 = vrot.slane %v11004, 2
      %v11127 = vrot.slane %v11005, 2
      %v11128 = vsel %vm1188, %v11126, %v11127
      %v11129 = vrot.slane %v11006, 2
      %v11130 = vsel %vm1188, %v11127, %v11129
      %v11131 = vrot.slane %v11007, 2
      %v11132 = vrot.slane %v11008, 2
      %v11133 = vsel %vm1188, %v11131, %v11132
      %v11134 = vrot.slane %v11009, 2
      %v11135 = vsel %vm1188, %v11132, %v11134
      %v11136 = vrot.slane %v11010, 2
      %v11137 = vrot.slane %v11011, 2
      %v11138 = vsel %vm1188, %v11136, %v11137
      %v11139 = vrot.slane %v11012, 2
      %v11140 = vsel %vm1188, %v11137, %v11139
      %v11173 = vadd.f32 %v10929, %v11063
      %v11174 = vadd.f32 %v10930, %v11065
      %v11175 = vadd.f32 %v10931, %v11068
      %v11176 = vadd.f32 %v10932, %v11070
      %v11177 = vadd.f32 %v10933, %v11073
      %v11178 = vadd.f32 %v10934, %v11075
      %v11179 = vadd.f32 %v10935, %v11078
      %v11180 = vadd.f32 %v10936, %v11080
      %v11181 = vadd.f32 %v10937, %v11083
      %v11182 = vadd.f32 %v10938, %v11085
      %v11183 = vadd.f32 %v10939, %v11088
      %v11184 = vadd.f32 %v10940, %v11090
      %v11185 = vadd.f32 %v10941, %v11093
      %v11186 = vadd.f32 %v10942, %v11095
      %v11187 = vadd.f32 %v10943, %v11098
      %v11188 = vadd.f32 %v10944, %v11100
      %v11189 = vadd.f32 %v10945, %v11103
      %v11190 = vadd.f32 %v10946, %v11105
      %v11191 = vadd.f32 %v10947, %v11108
      %v11192 = vadd.f32 %v10948, %v11110
      %v11193 = vadd.f32 %v10949, %v11113
      %v11194 = vadd.f32 %v10950, %v11115
      %v11195 = vadd.f32 %v10951, %v11118
      %v11196 = vadd.f32 %v10952, %v11120
      %v11197 = vadd.f32 %v10953, %v11123
      %v11198 = vadd.f32 %v10954, %v11125
      %v11199 = vadd.f32 %v10955, %v11128
      %v11200 = vadd.f32 %v10956, %v11130
      %v11201 = vadd.f32 %v10957, %v11133
      %v11202 = vadd.f32 %v10958, %v11135
      %v11203 = vadd.f32 %v10959, %v11138
      %v11204 = vadd.f32 %v10960, %v11140
      %v11205 = vlaneseq
      %v11206 = vshrl.u32 %v11205, 7
      %v11207 = vsub.s32 0, %v11206
      %v11208 = vrot.slane %v9812, %v11207
      %v11209 = vmul.f32 %v9621, %v11208
      %v11210 = vmul.f32 %v9624, %v11208
      %v11211 = vmul.f32 %v9629, %v11208
      %v11212 = vmul.f32 %v9632, %v11208
      %v11213 = vmul.f32 %v9637, %v11208
      %v11214 = vmul.f32 %v9640, %v11208
      %v11215 = vmul.f32 %v9645, %v11208
      %v11216 = vmul.f32 %v9648, %v11208
      %v11217 = vmul.f32 %v9653, %v11208
      %v11218 = vmul.f32 %v9656, %v11208
      %v11219 = vmul.f32 %v9661, %v11208
      %v11220 = vmul.f32 %v9664, %v11208
      %v11221 = vmul.f32 %v9669, %v11208
      %v11222 = vmul.f32 %v9672, %v11208
      %v11223 = vmul.f32 %v9677, %v11208
      %v11224 = vmul.f32 %v9680, %v11208
      %v11225 = vmul.f32 %v9685, %v11208
      %v11226 = vmul.f32 %v9688, %v11208
      %v11227 = vmul.f32 %v9693, %v11208
      %v11228 = vmul.f32 %v9696, %v11208
      %v11229 = vmul.f32 %v9701, %v11208
      %v11230 = vmul.f32 %v9704, %v11208
      %v11231 = vmul.f32 %v9709, %v11208
      %v11232 = vmul.f32 %v9712, %v11208
      %v11233 = vmul.f32 %v9717, %v11208
      %v11234 = vmul.f32 %v9720, %v11208
      %v11235 = vmul.f32 %v9725, %v11208
      %v11236 = vmul.f32 %v9728, %v11208
      %v11237 = vmul.f32 %v9733, %v11208
      %v11238 = vmul.f32 %v9736, %v11208
      %v11239 = vmul.f32 %v9741, %v11208
      %v11240 = vmul.f32 %v9744, %v11208
      %v11241 = vmul.f32 %v9749, %v11208
      %v11242 = vmul.f32 %v9752, %v11208
      %v11243 = vmul.f32 %v9757, %v11208
      %v11244 = vmul.f32 %v9760, %v11208
      %v11245 = vmul.f32 %v9765, %v11208
      %v11246 = vmul.f32 %v9768, %v11208
      %v11247 = vmul.f32 %v9773, %v11208
      %v11248 = vmul.f32 %v9776, %v11208
      %v11249 = vmul.f32 %v9781, %v11208
      %v11250 = vmul.f32 %v9784, %v11208
      %v11251 = vmul.f32 %v9789, %v11208
      %v11252 = vmul.f32 %v9792, %v11208
      %v11253 = vmul.f32 %v9797, %v11208
      %v11254 = vmul.f32 %v9800, %v11208
      %v11255 = vmul.f32 %v9805, %v11208
      %v11256 = vmul.f32 %v9808, %v11208
      %v11305 = vrot.slane %v11209, 2
      %v11306 = vrot.slane %v11210, 2
      %v11307 = vsel %vm1188, %v11305, %v11306
      %v11308 = vrot.slane %v11211, 2
      %v11309 = vsel %vm1188, %v11306, %v11308
      %v11310 = vrot.slane %v11212, 2
      %v11311 = vrot.slane %v11213, 2
      %v11312 = vsel %vm1188, %v11310, %v11311
      %v11313 = vrot.slane %v11214, 2
      %v11314 = vsel %vm1188, %v11311, %v11313
      %v11315 = vrot.slane %v11215, 2
      %v11316 = vrot.slane %v11216, 2
      %v11317 = vsel %vm1188, %v11315, %v11316
      %v11318 = vrot.slane %v11217, 2
      %v11319 = vsel %vm1188, %v11316, %v11318
      %v11320 = vrot.slane %v11218, 2
      %v11321 = vrot.slane %v11219, 2
      %v11322 = vsel %vm1188, %v11320, %v11321
      %v11323 = vrot.slane %v11220, 2
      %v11324 = vsel %vm1188, %v11321, %v11323
      %v11325 = vrot.slane %v11221, 2
      %v11326 = vrot.slane %v11222, 2
      %v11327 = vsel %vm1188, %v11325, %v11326
      %v11328 = vrot.slane %v11223, 2
      %v11329 = vsel %vm1188, %v11326, %v11328
      %v11330 = vrot.slane %v11224, 2
      %v11331 = vrot.slane %v11225, 2
      %v11332 = vsel %vm1188, %v11330, %v11331
      %v11333 = vrot.slane %v11226, 2
      %v11334 = vsel %vm1188, %v11331, %v11333
      %v11335 = vrot.slane %v11227, 2
      %v11336 = vrot.slane %v11228, 2
      %v11337 = vsel %vm1188, %v11335, %v11336
      %v11338 = vrot.slane %v11229, 2
      %v11339 = vsel %vm1188, %v11336, %v11338
      %v11340 = vrot.slane %v11230, 2
      %v11341 = vrot.slane %v11231, 2
      %v11342 = vsel %vm1188, %v11340, %v11341
      %v11343 = vrot.slane %v11232, 2
      %v11344 = vsel %vm1188, %v11341, %v11343
      %v11345 = vrot.slane %v11233, 2
      %v11346 = vrot.slane %v11234, 2
      %v11347 = vsel %vm1188, %v11345, %v11346
      %v11348 = vrot.slane %v11235, 2
      %v11349 = vsel %vm1188, %v11346, %v11348
      %v11350 = vrot.slane %v11236, 2
      %v11351 = vrot.slane %v11237, 2
      %v11352 = vsel %vm1188, %v11350, %v11351
      %v11353 = vrot.slane %v11238, 2
      %v11354 = vsel %vm1188, %v11351, %v11353
      %v11355 = vrot.slane %v11239, 2
      %v11356 = vrot.slane %v11240, 2
      %v11357 = vsel %vm1188, %v11355, %v11356
      %v11358 = vrot.slane %v11241, 2
      %v11359 = vsel %vm1188, %v11356, %v11358
      %v11360 = vrot.slane %v11242, 2
      %v11361 = vrot.slane %v11243, 2
      %v11362 = vsel %vm1188, %v11360, %v11361
      %v11363 = vrot.slane %v11244, 2
      %v11364 = vsel %vm1188, %v11361, %v11363
      %v11365 = vrot.slane %v11245, 2
      %v11366 = vrot.slane %v11246, 2
      %v11367 = vsel %vm1188, %v11365, %v11366
      %v11368 = vrot.slane %v11247, 2
      %v11369 = vsel %vm1188, %v11366, %v11368
      %v11370 = vrot.slane %v11248, 2
      %v11371 = vrot.slane %v11249, 2
      %v11372 = vsel %vm1188, %v11370, %v11371
      %v11373 = vrot.slane %v11250, 2
      %v11374 = vsel %vm1188, %v11371, %v11373
      %v11375 = vrot.slane %v11251, 2
      %v11376 = vrot.slane %v11252, 2
      %v11377 = vsel %vm1188, %v11375, %v11376
      %v11378 = vrot.slane %v11253, 2
      %v11379 = vsel %vm1188, %v11376, %v11378
      %v11380 = vrot.slane %v11254, 2
      %v11381 = vrot.slane %v11255, 2
      %v11382 = vsel %vm1188, %v11380, %v11381
      %v11383 = vrot.slane %v11256, 2
      %v11384 = vsel %vm1188, %v11381, %v11383
      %v11417 = vadd.f32 %v11173, %v11307
      %v11418 = vadd.f32 %v11174, %v11309
      %v11419 = vadd.f32 %v11175, %v11312
      %v11420 = vadd.f32 %v11176, %v11314
      %v11421 = vadd.f32 %v11177, %v11317
      %v11422 = vadd.f32 %v11178, %v11319
      %v11423 = vadd.f32 %v11179, %v11322
      %v11424 = vadd.f32 %v11180, %v11324
      %v11425 = vadd.f32 %v11181, %v11327
      %v11426 = vadd.f32 %v11182, %v11329
      %v11427 = vadd.f32 %v11183, %v11332
      %v11428 = vadd.f32 %v11184, %v11334
      %v11429 = vadd.f32 %v11185, %v11337
      %v11430 = vadd.f32 %v11186, %v11339
      %v11431 = vadd.f32 %v11187, %v11342
      %v11432 = vadd.f32 %v11188, %v11344
      %v11433 = vadd.f32 %v11189, %v11347
      %v11434 = vadd.f32 %v11190, %v11349
      %v11435 = vadd.f32 %v11191, %v11352
      %v11436 = vadd.f32 %v11192, %v11354
      %v11437 = vadd.f32 %v11193, %v11357
      %v11438 = vadd.f32 %v11194, %v11359
      %v11439 = vadd.f32 %v11195, %v11362
      %v11440 = vadd.f32 %v11196, %v11364
      %v11441 = vadd.f32 %v11197, %v11367
      %v11442 = vadd.f32 %v11198, %v11369
      %v11443 = vadd.f32 %v11199, %v11372
      %v11444 = vadd.f32 %v11200, %v11374
      %v11445 = vadd.f32 %v11201, %v11377
      %v11446 = vadd.f32 %v11202, %v11379
      %v11447 = vadd.f32 %v11203, %v11382
      %v11448 = vadd.f32 %v11204, %v11384
      %v11449 = vld [vmem:[%s13] sm:$0x1]
      %v11451 = vlaneseq
      %v11452 = vshrl.u32 %v11451, 7
      %v11453 = vsub.s32 0, %v11452
      %v11454 = vrot.slane %v11449, %v11453
      %v11456 = vmul.f32 %v11417, %v11454
      %v11457 = vmul.f32 %v11418, %v11454
      %v11458 = vmul.f32 %v11419, %v11454
      %v11459 = vmul.f32 %v11420, %v11454
      %v11460 = vmul.f32 %v11421, %v11454
      %v11461 = vmul.f32 %v11422, %v11454
      %v11462 = vmul.f32 %v11423, %v11454
      %v11463 = vmul.f32 %v11424, %v11454
      %v11464 = vmul.f32 %v11425, %v11454
      %v11465 = vmul.f32 %v11426, %v11454
      %v11466 = vmul.f32 %v11427, %v11454
      %v11467 = vmul.f32 %v11428, %v11454
      %v11468 = vmul.f32 %v11429, %v11454
      %v11469 = vmul.f32 %v11430, %v11454
      %v11470 = vmul.f32 %v11431, %v11454
      %v11471 = vmul.f32 %v11432, %v11454
      %v11472 = vmul.f32 %v11433, %v11454
      %v11473 = vmul.f32 %v11434, %v11454
      %v11474 = vmul.f32 %v11435, %v11454
      %v11475 = vmul.f32 %v11436, %v11454
      %v11476 = vmul.f32 %v11437, %v11454
      %v11477 = vmul.f32 %v11438, %v11454
      %v11478 = vmul.f32 %v11439, %v11454
      %v11479 = vmul.f32 %v11440, %v11454
      %v11480 = vmul.f32 %v11441, %v11454
      %v11481 = vmul.f32 %v11442, %v11454
      %v11482 = vmul.f32 %v11443, %v11454
      %v11483 = vmul.f32 %v11444, %v11454
      %v11484 = vmul.f32 %v11445, %v11454
      %v11485 = vmul.f32 %v11446, %v11454
      %v11486 = vmul.f32 %v11447, %v11454
      %v11487 = vmul.f32 %v11448, %v11454
      %v11488 = vld [vmem:[%s14] sm:$0x1]
      %v11490 = vlaneseq
      %v11491 = vshrl.u32 %v11490, 7
      %v11492 = vsub.s32 0, %v11491
      %v11493 = vrot.slane %v11488, %v11492
      %v11495 = vadd.f32 %v11456, %v11493
      %v11496 = vadd.f32 %v11457, %v11493
      %v11497 = vadd.f32 %v11458, %v11493
      %v11498 = vadd.f32 %v11459, %v11493
      %v11499 = vadd.f32 %v11460, %v11493
      %v11500 = vadd.f32 %v11461, %v11493
      %v11501 = vadd.f32 %v11462, %v11493
      %v11502 = vadd.f32 %v11463, %v11493
      %v11503 = vadd.f32 %v11464, %v11493
      %v11504 = vadd.f32 %v11465, %v11493
      %v11505 = vadd.f32 %v11466, %v11493
      %v11506 = vadd.f32 %v11467, %v11493
      %v11507 = vadd.f32 %v11468, %v11493
      %v11508 = vadd.f32 %v11469, %v11493
      %v11509 = vadd.f32 %v11470, %v11493
      %v11510 = vadd.f32 %v11471, %v11493
      %v11511 = vadd.f32 %v11472, %v11493
      %v11512 = vadd.f32 %v11473, %v11493
      %v11513 = vadd.f32 %v11474, %v11493
      %v11514 = vadd.f32 %v11475, %v11493
      %v11515 = vadd.f32 %v11476, %v11493
      %v11516 = vadd.f32 %v11477, %v11493
      %v11517 = vadd.f32 %v11478, %v11493
      %v11518 = vadd.f32 %v11479, %v11493
      %v11519 = vadd.f32 %v11480, %v11493
      %v11520 = vadd.f32 %v11481, %v11493
      %v11521 = vadd.f32 %v11482, %v11493
      %v11522 = vadd.f32 %v11483, %v11493
      %v11523 = vadd.f32 %v11484, %v11493
      %v11524 = vadd.f32 %v11485, %v11493
      %v11525 = vadd.f32 %v11486, %v11493
      %v11526 = vadd.f32 %v11487, %v11493
      %v11527 = vadd.f32 %v11495, %v8076
      %v11528 = vadd.f32 %v11496, %v8077
      %v11529 = vadd.f32 %v11497, %v8078
      %v11530 = vadd.f32 %v11498, %v8079
      %v11531 = vadd.f32 %v11499, %v8080
      %v11532 = vadd.f32 %v11500, %v8081
      %v11533 = vadd.f32 %v11501, %v8082
      %v11534 = vadd.f32 %v11502, %v8083
      %v11535 = vadd.f32 %v11503, %v8084
      %v11536 = vadd.f32 %v11504, %v8085
      %v11537 = vadd.f32 %v11505, %v8086
      %v11538 = vadd.f32 %v11506, %v8087
      %v11539 = vadd.f32 %v11507, %v8088
      %v11540 = vadd.f32 %v11508, %v8089
      %v11541 = vadd.f32 %v11509, %v8090
      %v11542 = vadd.f32 %v11510, %v8091
      %v11543 = vadd.f32 %v11511, %v8092
      %v11544 = vadd.f32 %v11512, %v8093
      %v11545 = vadd.f32 %v11513, %v8094
      %v11546 = vadd.f32 %v11514, %v8095
      %v11547 = vadd.f32 %v11515, %v8096
      %v11548 = vadd.f32 %v11516, %v8097
      %v11549 = vadd.f32 %v11517, %v8098
      %v11550 = vadd.f32 %v11518, %v8099
      %v11551 = vadd.f32 %v11519, %v8100
      %v11552 = vadd.f32 %v11520, %v8101
      %v11553 = vadd.f32 %v11521, %v8102
      %v11554 = vadd.f32 %v11522, %v8103
      %v11555 = vadd.f32 %v11523, %v8104
      %v11556 = vadd.f32 %v11524, %v8105
      %v11557 = vadd.f32 %v11525, %v8106
      %v11558 = vadd.f32 %v11526, %v8107
      %v11559 = vpack.c.bf16 %v11528, %v11527
      %v11560 = vpack.c.bf16 %v11530, %v11529
      %v11561 = vpack.c.bf16 %v11532, %v11531
      %v11562 = vpack.c.bf16 %v11534, %v11533
      %v11563 = vpack.c.bf16 %v11536, %v11535
      %v11564 = vpack.c.bf16 %v11538, %v11537
      %v11565 = vpack.c.bf16 %v11540, %v11539
      %v11566 = vpack.c.bf16 %v11542, %v11541
      %v11567 = vpack.c.bf16 %v11544, %v11543
      %v11568 = vpack.c.bf16 %v11546, %v11545
      %v11569 = vpack.c.bf16 %v11548, %v11547
      %v11570 = vpack.c.bf16 %v11550, %v11549
      %v11571 = vpack.c.bf16 %v11552, %v11551
      %v11572 = vpack.c.bf16 %v11554, %v11553
      %v11573 = vpack.c.bf16 %v11556, %v11555
      %v11574 = vpack.c.bf16 %v11558, %v11557
      %v11575 = vld [vmem:[%s15] sm:$0xf]
      %v11576 = vld [vmem:[%s15 + $0x4] sm:$0xf]
      %v11577 = vld [vmem:[%s15 + $0x8] sm:$0xf]
      %v11578 = vld [vmem:[%s15 + $0xc] sm:$0xf]
      %v11579 = vld [vmem:[%s16] sm:$0x1]
      %v11581 = vlaneseq
      %v11582 = vshrl.u32 %v11581, 7
      %v11583 = vsub.s32 0, %v11582
      %v11584 = vrot.slane %v11579, %v11583
      %v11590 = vunpack.c.l.b16 %v11575
      %v11591 = vunpack.c.l.b16 %v11576
      %v11592 = vunpack.c.l.b16 %v11577
      %v11593 = vunpack.c.l.b16 %v11578
      %v11594 = vpack.c.b16 %v11591, %v11590
      %v11595 = vpack.c.b16 %v11593, %v11592
      %v11599 = vsel %vm776, %v11559, 0
      %v11602 = vsel %vm776, %v11560, 0
      %v11605 = vsel %vm776, %v11561, 0
      %v11608 = vsel %vm776, %v11562, 0
      %v11611 = vsel %vm776, %v11563, 0
      %v11614 = vsel %vm776, %v11564, 0
      %v11617 = vsel %vm776, %v11565, 0
      %v11620 = vsel %vm776, %v11566, 0
      %v11623 = vsel %vm776, %v11567, 0
      %v11626 = vsel %vm776, %v11568, 0
      %v11629 = vsel %vm776, %v11569, 0
      %v11632 = vsel %vm776, %v11570, 0
      %v11635 = vsel %vm776, %v11571, 0
      %v11638 = vsel %vm776, %v11572, 0
      %v11641 = vsel %vm776, %v11573, 0
      %v11644 = vsel %vm776, %v11574, 0
      %11646 = vmatprep.subr.bf16.mxu0 0
      %11647 = vmatpush1.bf16.msra.mxu0 0
      %11648 = vmatprep.subr.bf16.mxu0 0
      %11649 = vmatpush1.bf16.msra.mxu0 0
      %11650 = vmatprep.subr.bf16.mxu0 0
      %11651 = vmatpush1.bf16.msra.mxu0 0
      %11652 = vmatprep.subr.bf16.mxu0 0
      %11653 = vmatpush1.bf16.msra.mxu0 0
      %11654 = vmatprep.subr.bf16.mxu0 0
      %11655 = vmatpush1.bf16.msra.mxu0 0
      %11656 = vmatprep.subr.bf16.mxu0 0
      %11657 = vmatpush1.bf16.msra.mxu0 0
      %11658 = vmatprep.subr.bf16.mxu0 0
      %11659 = vmatpush1.bf16.msra.mxu0 %v11595
      %11660 = vmatprep.subr.bf16.mxu0 0
      %11661 = vmatpush1.bf16.msra.mxu0 %v11594
      %11662 = vmatprep.subr.bf16.mxu0 0
      %11663 = vmatpush2.bf16.msra.mxu0 0
      %11664 = vmatprep.subr.bf16.mxu0 0
      %11665 = vmatpush2.bf16.msra.mxu0 0
      %11666 = vmatprep.subr.bf16.mxu0 0
      %11667 = vmatpush2.bf16.msra.mxu0 0
      %11668 = vmatprep.subr.bf16.mxu0 0
      %11669 = vmatpush2.bf16.msra.mxu0 0
      %11670 = vmatprep.subr.bf16.mxu0 0
      %11671 = vmatpush2.bf16.msra.mxu0 0
      %11672 = vmatprep.subr.bf16.mxu0 0
      %11673 = vmatpush2.bf16.msra.mxu0 0
      %11674 = vmatprep.subr.bf16.mxu0 0
      %11675 = vmatpush2.bf16.msra.mxu0 0
      %11676 = vmatprep.subr.bf16.mxu0 0
      %11677 = vmatpush2.bf16.msra.mxu0 0
      %11678 = vmatprep.mubr.bf16.mxu0 0
      %11679 = vmatmul.mubr.bf16.gmra.mxu0 %v11599
      %v11680 = vpop.f32.mrf.mxu0
      %v11681 = vadd.f32 %v11584, %v11680
      %v11682 = vpop.f32.mrf.mxu0
      %v11683 = vpop.f32.mrf.mxu0
      %v11684 = vadd.f32 %v11584, %v11683
      %v11685 = vpop.f32.mrf.mxu0
      %11686 = vmatprep.mubr.bf16.mxu0 0
      %11687 = vmatmul.mubr.bf16.gmra.mxu0 %v11602
      %v11688 = vpop.f32.mrf.mxu0
      %v11689 = vadd.f32 %v11584, %v11688
      %v11690 = vpop.f32.mrf.mxu0
      %v11691 = vpop.f32.mrf.mxu0
      %v11692 = vadd.f32 %v11584, %v11691
      %v11693 = vpop.f32.mrf.mxu0
      %11694 = vmatprep.mubr.bf16.mxu0 0
      %11695 = vmatmul.mubr.bf16.gmra.mxu0 %v11605
      %v11696 = vpop.f32.mrf.mxu0
      %v11697 = vadd.f32 %v11584, %v11696
      %v11698 = vpop.f32.mrf.mxu0
      %v11699 = vpop.f32.mrf.mxu0
      %v11700 = vadd.f32 %v11584, %v11699
      %v11701 = vpop.f32.mrf.mxu0
      %11702 = vmatprep.mubr.bf16.mxu0 0
      %11703 = vmatmul.mubr.bf16.gmra.mxu0 %v11608
      %v11704 = vpop.f32.mrf.mxu0
      %v11705 = vadd.f32 %v11584, %v11704
      %v11706 = vpop.f32.mrf.mxu0
      %v11707 = vpop.f32.mrf.mxu0
      %v11708 = vadd.f32 %v11584, %v11707
      %v11709 = vpop.f32.mrf.mxu0
      %11710 = vmatprep.mubr.bf16.mxu0 0
      %11711 = vmatmul.mubr.bf16.gmra.mxu0 %v11611
      %v11712 = vpop.f32.mrf.mxu0
      %v11713 = vadd.f32 %v11584, %v11712
      %v11714 = vpop.f32.mrf.mxu0
      %v11715 = vpop.f32.mrf.mxu0
      %v11716 = vadd.f32 %v11584, %v11715
      %v11717 = vpop.f32.mrf.mxu0
      %11718 = vmatprep.mubr.bf16.mxu0 0
      %11719 = vmatmul.mubr.bf16.gmra.mxu0 %v11614
      %v11720 = vpop.f32.mrf.mxu0
      %v11721 = vadd.f32 %v11584, %v11720
      %v11722 = vpop.f32.mrf.mxu0
      %v11723 = vpop.f32.mrf.mxu0
      %v11724 = vadd.f32 %v11584, %v11723
      %v11725 = vpop.f32.mrf.mxu0
      %11726 = vmatprep.mubr.bf16.mxu0 0
      %11727 = vmatmul.mubr.bf16.gmra.mxu0 %v11617
      %v11728 = vpop.f32.mrf.mxu0
      %v11729 = vadd.f32 %v11584, %v11728
      %v11730 = vpop.f32.mrf.mxu0
      %v11731 = vpop.f32.mrf.mxu0
      %v11732 = vadd.f32 %v11584, %v11731
      %v11733 = vpop.f32.mrf.mxu0
      %11734 = vmatprep.mubr.bf16.mxu0 0
      %11735 = vmatmul.mubr.bf16.gmra.mxu0 %v11620
      %v11736 = vpop.f32.mrf.mxu0
      %v11737 = vadd.f32 %v11584, %v11736
      %v11738 = vpop.f32.mrf.mxu0
      %v11739 = vpop.f32.mrf.mxu0
      %v11740 = vadd.f32 %v11584, %v11739
      %v11741 = vpop.f32.mrf.mxu0
      %11742 = vmatprep.mubr.bf16.mxu0 0
      %11743 = vmatmul.mubr.bf16.gmra.mxu0 %v11623
      %v11744 = vpop.f32.mrf.mxu0
      %v11745 = vadd.f32 %v11584, %v11744
      %v11746 = vpop.f32.mrf.mxu0
      %v11747 = vpop.f32.mrf.mxu0
      %v11748 = vadd.f32 %v11584, %v11747
      %v11749 = vpop.f32.mrf.mxu0
      %11750 = vmatprep.mubr.bf16.mxu0 0
      %11751 = vmatmul.mubr.bf16.gmra.mxu0 %v11626
      %v11752 = vpop.f32.mrf.mxu0
      %v11753 = vadd.f32 %v11584, %v11752
      %v11754 = vpop.f32.mrf.mxu0
      %v11755 = vpop.f32.mrf.mxu0
      %v11756 = vadd.f32 %v11584, %v11755
      %v11757 = vpop.f32.mrf.mxu0
      %11758 = vmatprep.mubr.bf16.mxu0 0
      %11759 = vmatmul.mubr.bf16.gmra.mxu0 %v11629
      %v11760 = vpop.f32.mrf.mxu0
      %v11761 = vadd.f32 %v11584, %v11760
      %v11762 = vpop.f32.mrf.mxu0
      %v11763 = vpop.f32.mrf.mxu0
      %v11764 = vadd.f32 %v11584, %v11763
      %v11765 = vpop.f32.mrf.mxu0
      %11766 = vmatprep.mubr.bf16.mxu0 0
      %11767 = vmatmul.mubr.bf16.gmra.mxu0 %v11632
      %v11768 = vpop.f32.mrf.mxu0
      %v11769 = vadd.f32 %v11584, %v11768
      %v11770 = vpop.f32.mrf.mxu0
      %v11771 = vpop.f32.mrf.mxu0
      %v11772 = vadd.f32 %v11584, %v11771
      %v11773 = vpop.f32.mrf.mxu0
      %11774 = vmatprep.mubr.bf16.mxu0 0
      %11775 = vmatmul.mubr.bf16.gmra.mxu0 %v11635
      %v11776 = vpop.f32.mrf.mxu0
      %v11777 = vadd.f32 %v11584, %v11776
      %v11778 = vpop.f32.mrf.mxu0
      %v11779 = vpop.f32.mrf.mxu0
      %v11780 = vadd.f32 %v11584, %v11779
      %v11781 = vpop.f32.mrf.mxu0
      %11782 = vmatprep.mubr.bf16.mxu0 0
      %11783 = vmatmul.mubr.bf16.gmra.mxu0 %v11638
      %v11784 = vpop.f32.mrf.mxu0
      %v11785 = vadd.f32 %v11584, %v11784
      %v11786 = vpop.f32.mrf.mxu0
      %v11787 = vpop.f32.mrf.mxu0
      %v11788 = vadd.f32 %v11584, %v11787
      %v11789 = vpop.f32.mrf.mxu0
      %11790 = vmatprep.mubr.bf16.mxu0 0
      %11791 = vmatmul.mubr.bf16.gmra.mxu0 %v11641
      %v11792 = vpop.f32.mrf.mxu0
      %v11793 = vadd.f32 %v11584, %v11792
      %v11794 = vpop.f32.mrf.mxu0
      %v11795 = vpop.f32.mrf.mxu0
      %v11796 = vadd.f32 %v11584, %v11795
      %v11797 = vpop.f32.mrf.mxu0
      %11798 = vmatprep.mubr.bf16.mxu0 0
      %11799 = vmatmul.mubr.bf16.gmra.mxu0 %v11644
      %v11800 = vpop.f32.mrf.mxu0
      %v11801 = vadd.f32 %v11584, %v11800
      %v11802 = vpop.f32.mrf.mxu0
      %v11803 = vpop.f32.mrf.mxu0
      %v11804 = vadd.f32 %v11584, %v11803
      %v11805 = vpop.f32.mrf.mxu0
      %11806 = vdwg.mxu0
      %11807 = vst.msk [vmem:[%s548] sm:$0xff] %vm776, %v11681
      %11808 = vst.msk [vmem:[%s548 + $0x8] sm:$0xff] %vm776, %v11684
      %11809 = vst.msk [vmem:[%s548 + $0x10] sm:$0xff] %vm776, %v11689
      %11810 = vst.msk [vmem:[%s548 + $0x18] sm:$0xff] %vm776, %v11692
      %11811 = vst.msk [vmem:[%s548 + $0x20] sm:$0xff] %vm776, %v11697
      %11812 = vst.msk [vmem:[%s548 + $0x28] sm:$0xff] %vm776, %v11700
      %11813 = vst.msk [vmem:[%s548 + $0x30] sm:$0xff] %vm776, %v11705
      %11814 = vst.msk [vmem:[%s548 + $0x38] sm:$0xff] %vm776, %v11708
      %11815 = vst.msk [vmem:[%s548 + $0x40] sm:$0xff] %vm776, %v11713
      %11816 = vst.msk [vmem:[%s548 + $0x48] sm:$0xff] %vm776, %v11716
      %11817 = vst.msk [vmem:[%s548 + $0x50] sm:$0xff] %vm776, %v11721
      %11818 = vst.msk [vmem:[%s548 + $0x58] sm:$0xff] %vm776, %v11724
      %11819 = vst.msk [vmem:[%s548 + $0x60] sm:$0xff] %vm776, %v11729
      %11820 = vst.msk [vmem:[%s548 + $0x68] sm:$0xff] %vm776, %v11732
      %11821 = vst.msk [vmem:[%s548 + $0x70] sm:$0xff] %vm776, %v11737
      %11822 = vst.msk [vmem:[%s548 + $0x78] sm:$0xff] %vm776, %v11740
      %11823 = vst.msk [vmem:[%s548 + $0x80] sm:$0xff] %vm776, %v11745
      %11824 = vst.msk [vmem:[%s548 + $0x88] sm:$0xff] %vm776, %v11748
      %11825 = vst.msk [vmem:[%s548 + $0x90] sm:$0xff] %vm776, %v11753
      %11826 = vst.msk [vmem:[%s548 + $0x98] sm:$0xff] %vm776, %v11756
      %11827 = vst.msk [vmem:[%s548 + $0xa0] sm:$0xff] %vm776, %v11761
      %11828 = vst.msk [vmem:[%s548 + $0xa8] sm:$0xff] %vm776, %v11764
      %11829 = vst.msk [vmem:[%s548 + $0xb0] sm:$0xff] %vm776, %v11769
      %11830 = vst.msk [vmem:[%s548 + $0xb8] sm:$0xff] %vm776, %v11772
      %11831 = vst.msk [vmem:[%s548 + $0xc0] sm:$0xff] %vm776, %v11777
      %11832 = vst.msk [vmem:[%s548 + $0xc8] sm:$0xff] %vm776, %v11780
      %11833 = vst.msk [vmem:[%s548 + $0xd0] sm:$0xff] %vm776, %v11785
      %11834 = vst.msk [vmem:[%s548 + $0xd8] sm:$0xff] %vm776, %v11788
      %11835 = vst.msk [vmem:[%s548 + $0xe0] sm:$0xff] %vm776, %v11793
      %11836 = vst.msk [vmem:[%s548 + $0xe8] sm:$0xff] %vm776, %v11796
      %11837 = vst.msk [vmem:[%s548 + $0xf0] sm:$0xff] %vm776, %v11801
      %11838 = vst.msk [vmem:[%s548 + $0xf8] sm:$0xff] %vm776, %v11804
      %p11839 = scmp.lt.s32.totalorder %s28, 1
      %s11840 = scalar_select %p11839, %s28, 1
      %s11841 = smul.addr %s11840, 32
      %s11842 = smul.addr %s11841, 8
      %s11843 = scalar_lea.vmem %s17, %s11842
      // Predicated region
      $region89: #{lea_forward.1} parent=87 // pred_check
        %p11844 = pneg %p408
      $region90: #{lea_forward.1} parent=87 // pred_check_branch
        %11846 = sbr.rel (%p11844) target = $region92
      $region91: #{lea_forward.1} parent=87 // pred_region
        _
      $region92: #{lea_forward.1} parent=87 // pred_fallthru
        _
    $region88: #{lea_forward.1} parent=5 // pred_fallthru
      _
    %p11847 = scmp.le.s32.totalorder 2, %s23
    // Predicated region
    $region93: #{lea_forward.1} parent=5 // pred_check
      %p11848 = pneg %p11847
    $region94: #{lea_forward.1} parent=5 // pred_check_branch
      %11850 = sbr.rel (%p11848) target = $region96
    $region95: #{lea_forward.1} parent=5 // pred_region
      %s11851 = ssub.s32 %s23, 2
      // Predicated region
      $region97: #{lea_forward.1} parent=95 // pred_check
        %p11852 = pneg %p414
      $region98: #{lea_forward.1} parent=95 // pred_check_branch
        %11854 = sbr.rel (%p11852) target = $region100
      $region99: #{lea_forward.1} parent=95 // pred_region
        %p11855 = scmp.lt.s32.totalorder %s29, 1
        %s11856 = scalar_select %p11855, %s29, 1
        %s11857 = smul.addr %s11856, 32
        %s11858 = smul.addr %s11857, 8
        %s11859 = scalar_lea.vmem %s17, %s11858
      $region100: #{lea_forward.1} parent=95 // pred_fallthru
        _
    $region96: #{lea_forward.1} parent=5 // pred_fallthru
      _
  $region6: #{lea_forward.1} parent=0 // loop_footer
    %s27 = sadd.s32 1, %s23
  $region7: #{lea_forward.1} parent=0 // loop_footer_branch
    %22 = sbr.rel target = $region3
  $region8: #{lea_forward.1} parent=0 // loop_exit
    _

</llo_original>
